<compile_context>
chip_gen: v6e
topology: v6e:2x2x1
jax: 0.10.0
libtpu: 0.0.40
codegen_flags: <defaults>
</compile_context>

<pallas_src>
import math

import jax
import jax.numpy as jnp
from jax.experimental import pallas as pl
from jax.experimental.pallas import tpu as pltpu

# ----------------------------- configuration -----------------------------
B = 2                                  # image batch
IMG_C, IMG_HW = 3, 16                  # NCHW input, 16x16 images
PATCH = 8                              # ViT patch size -> 4 patches + cls token
N_PATCH = (IMG_HW // PATCH) ** 2       # 4
PATCH_DIM = IMG_C * PATCH * PATCH      # 192
D = 32                                 # VIS_WIDTH == CTX_DIM == EMBED_DIM
VIS_WIDTH = CTX_DIM = EMBED_DIM = D
N_HEAD = 4
HEAD_DIM = D // N_HEAD                 # 8
N_CTX = 2                              # cfg.TRAINER.CoDoL.N_CTX
N_DMX = 2                              # cfg.TRAINER.CoDoL.N_DMX
N_TOT = N_CTX + N_DMX
N_CLS = 3                              # number of classnames
N_DM = 2                               # number of domains
N_PROMPT = N_CLS * N_DM                # 6
SEQ_LEN = 8                            # text context length
SV_REAL = 1 + N_PATCH                  # real visual sequence length (5)
SV_PAD = 8                             # padded to a full sublane
DTYPE = jnp.float32
MXU_DTYPE = jnp.bfloat16               # matmul operand dtype (f32 accumulation)

# NOTE: at real CLIP widths (D=512/768, SEQ=77, 12+ blocks) the slabs / per-head mask
# trick should be replaced by proper >=128-lane head tiling; at this synthetic size the
# binding constraint is launch/DMA/VPU overhead, not MXU shape.


# --------------------------- packed-operand layout ---------------------------
def _make_offsets(layout):
    table, off = {}, 0
    for name, rows in layout:
        table[name] = (off, rows)
        off += rows
    return table, off


# bf16 slab of every matmul weight whose output/last dim is 32 (row-concatenated,
# every chunk starts at a 32-row offset => bf16-sublane-tile aligned slices).
_W32_LAYOUT = (
    ('conv1', PATCH_DIM),
    ('v_wq', D), ('v_wk', D), ('v_wv', D), ('v_ow', D), ('v_pjw', 4 * D), ('v_proj', D),
    ('t_wq', D), ('t_wk', D), ('t_wv', D), ('t_ow', D), ('t_pjw', 4 * D), ('t_proj', D),
    ('meta_w1', D), ('meta_w2', D),
)
W32_OFF, W32_ROWS = _make_offsets(_W32_LAYOUT)

# f32 slab of all (rows, 32) vectors / small constants.
_VEC_LAYOUT = (
    ('v_ln_pre_w', 1), ('v_ln_pre_b', 1),
    ('v_ln1_w', 1), ('v_ln1_b', 1), ('v_bq', 1), ('v_bk', 1), ('v_bv', 1), ('v_ob', 1),
    ('v_ln2_w', 1), ('v_ln2_b', 1), ('v_pjb', 1), ('v_ln_post_w', 1), ('v_ln_post_b', 1),
    ('t_ln1_w', 1), ('t_ln1_b', 1), ('t_bq', 1), ('t_bk', 1), ('t_bv', 1), ('t_ob', 1),
    ('t_ln2_w', 1), ('t_ln2_b', 1), ('t_pjb', 1), ('t_ln_f_w', 1), ('t_ln_f_b', 1),
    ('meta_b1', 1), ('meta_b2', 1),
    ('dmx_slot', SEQ_LEN),      # 1.0 on rows holding dmx context, else 0
    ('hmask', N_HEAD),          # per-head lane masks (precomputed on host)
    ('seq_base', SV_PAD),       # cls + positional embedding, padded rows zero
)
VEC_OFF, VEC_ROWS = _make_offsets(_VEC_LAYOUT)

# f32 selector slab (rows, SEQ_LEN): visual key-pad bias | causal bias | EOT one-hots.
SEL_VBIAS = 0
SEL_CAUSAL = SV_PAD
SEL_EOT = SV_PAD + SEQ_LEN


# --------------------------- in-kernel helpers ---------------------------
def _layernorm(x, w, b):
    x = x.astype(jnp.float32)
    mu = jnp.mean(x, axis=-1, keepdims=True)
    xc = x - mu
    var = jnp.mean(xc * xc, axis=-1, keepdims=True)
    return (xc * jax.lax.rsqrt(var + 1e-5)) * w + b


def _softmax(s):
    s = s - jnp.max(s, axis=-1, keepdims=True)
    e = jnp.exp(s)
    return e * pl.reciprocal(jnp.sum(e, axis=-1, keepdims=True), approx=True)


def _mha(x, attn_bias, hmask, wmat, vrow, px):
    """Multi-head self-attention on (N, S, D).  Heads via full-D contractions and
    per-head lane masks (precomputed on host) so everything stays 32 lanes wide."""
    n, s, d = x.shape
    x2 = x.reshape(n * s, d).astype(MXU_DTYPE)                        # cast once
    q = (jnp.dot(x2, wmat(px + 'wq'), preferred_element_type=jnp.float32)
         + vrow(px + 'bq')).reshape(n, s, d)
    k = (jnp.dot(x2, wmat(px + 'wk'), preferred_element_type=jnp.float32)
         + vrow(px + 'bk')).reshape(n, s, d)
    v = (jnp.dot(x2, wmat(px + 'wv'), preferred_element_type=jnp.float32)
         + vrow(px + 'bv')).reshape(n, s, d)

    q_bf = (q * (HEAD_DIM ** -0.5)).astype(MXU_DTYPE)                 # cast once
    k_bf = k.astype(MXU_DTYPE)
    v_bf = v.astype(MXU_DTYPE)

    merged = jnp.zeros((n, s, d), jnp.float32)
    for h in range(N_HEAD):
        hm = hmask[h:h + 1, :][None]                                  # (1, 1, D) f32 0/1
        qh = q_bf * hm.astype(MXU_DTYPE)                              # zero other heads
        scores = jnp.einsum('nqd,nkd->nqk', qh, k_bf,
                            preferred_element_type=jnp.float32) + attn_bias[None]
        p = _softmax(scores)
        oh = jnp.einsum('nqk,nkd->nqd', p.astype(MXU_DTYPE), v_bf,
                        preferred_element_type=jnp.float32)
        merged = merged + oh * hm                                     # keep head-h lanes
    out = (jnp.dot(merged.reshape(n * s, d).astype(MXU_DTYPE), wmat(px + 'ow'),
                   preferred_element_type=jnp.float32) + vrow(px + 'ob'))
    return out.reshape(n, s, d)


def _block(x, attn_bias, hmask, wmat, vrow, fcw_ref, fcb_ref, px, fi):
    """CLIP ResidualAttentionBlock on (N, S, D), fully in VMEM/vregs."""
    n, s, d = x.shape
    x = x + _mha(_layernorm(x, vrow(px + 'ln1_w'), vrow(px + 'ln1_b')),
                 attn_bias, hmask, wmat, vrow, px)
    xn = _layernorm(x, vrow(px + 'ln2_w'), vrow(px + 'ln2_b')).reshape(n * s, d)
    h = (jnp.dot(xn.astype(MXU_DTYPE), fcw_ref[fi * D:(fi + 1) * D, :],
                 preferred_element_type=jnp.float32) + fcb_ref[fi:fi + 1, :])
    h = h * jax.nn.sigmoid(1.702 * h)                                 # QuickGELU
    out = (jnp.dot(h.astype(MXU_DTYPE), wmat(px + 'pjw'),
                   preferred_element_type=jnp.float32) + vrow(px + 'pjb'))
    return x + out.reshape(n, s, d)


# ------------------------------ fused kernel ------------------------------
def _codol_kernel(patches_ref, w32_ref, fcw_ref, vec_ref, fcb_ref,
                  tbase_ref, sel_ref, scale_ref, o_ref):
    b = patches_ref.shape[0] // SV_PAD
    vec = vec_ref[...]                                                # (VEC_ROWS, 32) f32
    sel = sel_ref[...]                                                # (16 + b*P, 8) f32

    def vrow(name):
        o, r = VEC_OFF[name]
        return vec[o:o + r, :]

    def wmat(name):                                                   # lazy bf16 weight load
        o, r = W32_OFF[name]
        return w32_ref[o:o + r, :]

    hmask = vrow('hmask')                                             # (N_HEAD, D)

    # ------------------------- visual encoder -------------------------
    pe = jnp.dot(patches_ref[...].astype(MXU_DTYPE), wmat('conv1'),
                 preferred_element_type=jnp.float32)                  # (B*8, 32), pad rows = 0
    x = pe.reshape(b, SV_PAD, D) + vrow('seq_base')[None, :, :]       # cls + pos embed
    x = _layernorm(x, vrow('v_ln_pre_w'), vrow('v_ln_pre_b'))
    vbias = sel[SEL_VBIAS:SEL_VBIAS + SV_PAD, :]                      # mask padded keys
    x = _block(x, vbias, hmask, wmat, vrow, fcw_ref, fcb_ref, 'v_', 0)

    cls = x[:, 0, :]                                                  # (B, 32)
    cls = _layernorm(cls, vrow('v_ln_post_w'), vrow('v_ln_post_b'))
    imf = jnp.dot(cls.astype(MXU_DTYPE), wmat('v_proj'),
                  preferred_element_type=jnp.float32)                 # (B, E)
    imf = imf * jax.lax.rsqrt(jnp.sum(imf * imf, axis=-1, keepdims=True) + 1e-12)

    # ------------------------- prompt learner -------------------------
    # dmx_meta_net: Linear -> ReLU -> Linear (hidden padded to 32 lanes with zeros)
    h = jnp.maximum(jnp.dot(imf.astype(MXU_DTYPE), wmat('meta_w1'),
                            preferred_element_type=jnp.float32) + vrow('meta_b1'), 0.0)
    bias = (jnp.dot(h.astype(MXU_DTYPE), wmat('meta_w2'),
                    preferred_element_type=jnp.float32) + vrow('meta_b2'))     # (B, D)
    # dmx itself is folded into tbase on the host; only the per-image bias is added
    # at the dmx slots via a precomputed slot mask (same bias for every dmx token).
    dmx_add = vrow('dmx_slot')[None, :, :] * bias[:, None, :]         # (B, L, D)
    xt = tbase_ref[...][None, :, :, :] + dmx_add[:, None, :, :]       # (B, P, L, D)
    xt = xt.reshape(b * N_PROMPT, SEQ_LEN, D)

    # -------------------------- text encoder --------------------------
    causal = sel[SEL_CAUSAL:SEL_CAUSAL + SEQ_LEN, :]
    xt = _block(xt, causal, hmask, wmat, vrow, fcw_ref, fcb_ref, 't_', 1)
    xt = _layernorm(xt, vrow('t_ln_f_w'), vrow('t_ln_f_b'))           # (B*P, L, D)

    # EOT gather (one-hot reduce over the sequence axis) + text projection
    eot = sel[SEL_EOT:, :]                                            # (B*P, L)
    x_eot = jnp.sum(xt * eot[:, :, None], axis=1)                     # (B*P, D)
    tf = jnp.dot(x_eot.astype(MXU_DTYPE), wmat('t_proj'),
                 preferred_element_type=jnp.float32)                  # (B*P, E)
    tf = tf * jax.lax.rsqrt(jnp.sum(tf * tf, axis=-1, keepdims=True) + 1e-12)
    tf = tf.reshape(b, N_PROMPT, D)

    logits = scale_ref[0, 0] * jnp.sum(imf[:, None, :] * tf, axis=-1)  # (B, P)
    o_ref[...] = logits.astype(o_ref.dtype)


# ------------------------------ host wrapper ------------------------------
def custom_clip_forward(image, params):
    vp, tp, plp = params['visual'], params['text'], params['prompt_learner']
    b = image.shape[0]
    gh = gw = IMG_HW // PATCH

    # patchify and pad/shift so the patch-embed matmul lands directly at rows 1..4
    patches = image.reshape(b, IMG_C, gh, PATCH, gw, PATCH)
    patches = patches.transpose(0, 2, 4, 1, 3, 5).reshape(b, N_PATCH, PATCH_DIM)
    patches_pad = jnp.zeros((b, SV_PAD, PATCH_DIM), DTYPE).at[:, 1:1 + N_PATCH, :].set(patches)
    patches_pad = patches_pad.reshape(b * SV_PAD, PATCH_DIM)

    vblk, tblk = vp['block'], tp['block']
    v_wq, v_wk, v_wv = jnp.split(vblk['in_proj_w'], 3, axis=1)
    v_bq, v_bk, v_bv = jnp.split(vblk['in_proj_b'], 3, axis=1)
    t_wq, t_wk, t_wv = jnp.split(tblk['in_proj_w'], 3, axis=1)
    t_bq, t_bk, t_bv = jnp.split(tblk['in_proj_b'], 3, axis=1)

    # meta-net padded to a 32-wide hidden (zero pad columns/rows -> exact same result)
    vis_hidden = plp['meta_w1'].shape[1]
    meta_w1p = jnp.zeros((EMBED_DIM, CTX_DIM), DTYPE).at[:, :vis_hidden].set(plp['meta_w1'])
    meta_w2p = jnp.zeros((CTX_DIM, CTX_DIM), DTYPE).at[:vis_hidden, :].set(plp['meta_w2'])
    meta_b1p = jnp.zeros((1, CTX_DIM), DTYPE).at[:, :vis_hidden].set(plp['meta_b1'])

    # bf16 matmul-weight slab
    w32_parts = dict(
        conv1=vp['conv1_w'],
        v_wq=v_wq, v_wk=v_wk, v_wv=v_wv, v_ow=vblk['out_proj_w'],
        v_pjw=vblk['proj_w'], v_proj=vp['proj'],
        t_wq=t_wq, t_wk=t_wk, t_wv=t_wv, t_ow=tblk['out_proj_w'],
        t_pjw=tblk['proj_w'], t_proj=tp['text_projection'],
        meta_w1=meta_w1p, meta_w2=meta_w2p)
    w32 = jnp.concatenate([w32_parts[n] for n, _ in _W32_LAYOUT], axis=0).astype(MXU_DTYPE)
    assert w32.shape == (W32_ROWS, D)

    fcw = jnp.concatenate([vblk['fc_w'], tblk['fc_w']], axis=0).astype(MXU_DTYPE)   # (64, 128)
    fcb = jnp.concatenate([vblk['fc_b'], tblk['fc_b']], axis=0)                     # (2, 128) f32

    # f32 vector/constant slab
    seq_base = jnp.zeros((SV_PAD, VIS_WIDTH), DTYPE).at[:SV_REAL].set(vp['pos_embed'])
    seq_base = seq_base.at[0].add(vp['class_embedding'])
    hmask = (jnp.arange(D)[None, :] // HEAD_DIM == jnp.arange(N_HEAD)[:, None]).astype(DTYPE)
    dmx_slot = jnp.zeros((SEQ_LEN, CTX_DIM), DTYPE).at[1 + N_CTX:1 + N_CTX + N_DMX, :].set(1.0)
    vec_parts = dict(
        v_ln_pre_w=vp['ln_pre_w'], v_ln_pre_b=vp['ln_pre_b'],
        v_ln1_w=vblk['ln1_w'], v_ln1_b=vblk['ln1_b'],
        v_bq=v_bq, v_bk=v_bk, v_bv=v_bv, v_ob=vblk['out_proj_b'],
        v_ln2_w=vblk['ln2_w'], v_ln2_b=vblk['ln2_b'], v_pjb=vblk['proj_b'],
        v_ln_post_w=vp['ln_post_w'], v_ln_post_b=vp['ln_post_b'],
        t_ln1_w=tblk['ln1_w'], t_ln1_b=tblk['ln1_b'],
        t_bq=t_bq, t_bk=t_bk, t_bv=t_bv, t_ob=tblk['out_proj_b'],
        t_ln2_w=tblk['ln2_w'], t_ln2_b=tblk['ln2_b'], t_pjb=tblk['proj_b'],
        t_ln_f_w=tp['ln_final_w'], t_ln_f_b=tp['ln_final_b'],
        meta_b1=meta_b1p, meta_b2=plp['meta_b2'],
        dmx_slot=dmx_slot, hmask=hmask, seq_base=seq_base)
    vec32 = jnp.concatenate([vec_parts[n] for n, _ in _VEC_LAYOUT], axis=0)
    assert vec32.shape == (VEC_ROWS, D)

    # prompt scaffold: prefix | ctx | dmx | suffix, + positional embedding (per prompt)
    ctx = jnp.broadcast_to(plp['ctx'][None], (N_PROMPT, N_CTX, CTX_DIM))
    dmx = jnp.broadcast_to(plp['dmx'][None], (N_PROMPT, N_DMX, CTX_DIM))
    text_base = jnp.concatenate(
        [plp['token_prefix'], ctx, dmx, plp['token_suffix']], axis=1) + tp['pos_embed'][None]

    # selector slab: visual key-pad bias | causal bias | EOT one-hot per (image, prompt)
    vbias = jnp.broadcast_to(
        jnp.where(jnp.arange(SV_PAD)[None, :] >= SV_REAL, -1e9, 0.0), (SV_PAD, SV_PAD))
    causal = jnp.where(jnp.triu(jnp.ones((SEQ_LEN, SEQ_LEN), bool), k=1), -1e9, 0.0)
    eot = jax.nn.one_hot(jnp.argmax(plp['tokenized_prompts'], axis=-1), SEQ_LEN, dtype=DTYPE)
    sel = jnp.concatenate(
        [vbias.astype(DTYPE), causal.astype(DTYPE), jnp.tile(eot, (b, 1))], axis=0)

    scale = jnp.reshape(jnp.exp(params['logit_scale']), (1, 1)).astype(DTYPE)

    return pl.pallas_call(
        _codol_kernel,
        in_specs=[pl.BlockSpec(memory_space=pltpu.MemorySpace.VMEM)] * 7
                 + [pl.BlockSpec(memory_space=pltpu.MemorySpace.SMEM)],
        out_specs=pl.BlockSpec(memory_space=pltpu.MemorySpace.VMEM),
        out_shape=jax.ShapeDtypeStruct((b, N_PROMPT), DTYPE),
    )(patches_pad, w32, fcw, vec32, fcb, text_base, sel, scale)


# ------------------------------- parameters -------------------------------
def _init_block(key, d):
    ks = jax.random.split(key, 4)
    nrm = lambda k, shape, std=0.02: jax.random.normal(k, shape, DTYPE) * std
    return dict(
        ln1_w=jnp.ones((1, d), DTYPE), ln1_b=jnp.zeros((1, d), DTYPE),
        in_proj_w=nrm(ks[0], (d, 3 * d)), in_proj_b=jnp.zeros((1, 3 * d), DTYPE),
        out_proj_w=nrm(ks[1], (d, d)), out_proj_b=jnp.zeros((1, d), DTYPE),
        ln2_w=jnp.ones((1, d), DTYPE), ln2_b=jnp.zeros((1, d), DTYPE),
        fc_w=nrm(ks[2], (d, 4 * d)), fc_b=jnp.zeros((1, 4 * d), DTYPE),
        proj_w=nrm(ks[3], (4 * d, d)), proj_b=jnp.zeros((1, d), DTYPE),
    )


def _make_tokenized_prompts():
    rows = []
    for pidx in range(N_PROMPT):
        eot_pos = 5 + (pidx % 3)             # varying EOT position (argmax target)
        row = [0] * SEQ_LEN
        row[0] = 49406                       # SOT
        for j in range(1, eot_pos):
            row[j] = 500 + pidx * 7 + j
        row[eot_pos] = 49407                 # EOT (max token id)
        rows.append(row)
    return jnp.array(rows, dtype=jnp.int32)


def init_params(seed=0):
    key = jax.random.PRNGKey(seed)
    ks = jax.random.split(key, 16)
    nrm = lambda k, shape, std=0.02: jax.random.normal(k, shape, DTYPE) * std

    visual = dict(
        conv1_w=nrm(ks[0], (PATCH_DIM, VIS_WIDTH)),
        class_embedding=nrm(ks[1], (VIS_WIDTH,)),
        pos_embed=nrm(ks[2], (SV_REAL, VIS_WIDTH)),
        ln_pre_w=jnp.ones((1, VIS_WIDTH), DTYPE), ln_pre_b=jnp.zeros((1, VIS_WIDTH), DTYPE),
        block=_init_block(ks[3], VIS_WIDTH),
        ln_post_w=jnp.ones((1, VIS_WIDTH), DTYPE), ln_post_b=jnp.zeros((1, VIS_WIDTH), DTYPE),
        proj=nrm(ks[4], (VIS_WIDTH, EMBED_DIM)),
    )

    text = dict(
        pos_embed=nrm(ks[5], (SEQ_LEN, CTX_DIM)),
        block=_init_block(ks[6], CTX_DIM),
        ln_final_w=jnp.ones((1, CTX_DIM), DTYPE), ln_final_b=jnp.zeros((1, CTX_DIM), DTYPE),
        text_projection=nrm(ks[7], (CTX_DIM, EMBED_DIM)),
    )

    vis_hidden = EMBED_DIM // 16     # vis_dim // 16
    prompt_learner = dict(
        ctx=nrm(ks[8], (N_CTX, CTX_DIM)),
        dmx=nrm(ks[9], (N_DMX, CTX_DIM)),
        meta_w1=nrm(ks[10], (EMBED_DIM, vis_hidden)),
        meta_b1=jnp.zeros((1, vis_hidden), DTYPE),
        meta_w2=nrm(ks[11], (vis_hidden, CTX_DIM)),
        meta_b2=jnp.zeros((1, CTX_DIM), DTYPE),
        token_prefix=nrm(ks[12], (N_PROMPT, 1, CTX_DIM)),
        token_suffix=nrm(ks[13], (N_PROMPT, SEQ_LEN - 1 - N_TOT, CTX_DIM)),
        tokenized_prompts=_make_tokenized_prompts(),
    )

    return dict(
        visual=visual,
        text=text,
        prompt_learner=prompt_learner,
        logit_scale=jnp.asarray(math.log(1.0 / 0.07), DTYPE),
    )


# ---------------------------------- main ----------------------------------
if __name__ == "__main__":
    params = init_params(seed=0)
    image = jax.random.normal(jax.random.PRNGKey(0), (B, IMG_C, IMG_HW, IMG_HW), DTYPE)

    logits = jax.jit(custom_clip_forward)(image, params)
    logits = jax.block_until_ready(logits)

    assert logits.shape == (B, N_PROMPT), logits.shape
    assert bool(jnp.all(jnp.isfinite(logits)))
    print("KERNEL_OK")
</pallas_src>

<mosaic_0001>
module attributes {stable_mosaic.version = 11 : i64} {
  func.func @_codol_kernel(%arg0: memref<16x192xf32, #tpu.memory_space<vmem>>, %arg1: memref<832x32xbf16, #tpu.memory_space<vmem>>, %arg2: memref<64x128xbf16, #tpu.memory_space<vmem>>, %arg3: memref<46x32xf32, #tpu.memory_space<vmem>>, %arg4: memref<2x128xf32, #tpu.memory_space<vmem>>, %arg5: memref<6x8x32xf32, #tpu.memory_space<vmem>>, %arg6: memref<28x8xf32, #tpu.memory_space<vmem>>, %arg7: memref<1x1xf32, #tpu.memory_space<smem>>, %arg8: memref<2x6xf32, #tpu.memory_space<vmem>>) attributes {dimension_semantics = [], scalar_prefetch = 0 : i64, scratch_operands = 0 : i64, tpu.core_type = #tpu.core_type<tc>} {
    %c0 = arith.constant 0 : index
    %c0_0 = arith.constant 0 : index
    %0 = vector.load %arg3[%c0, %c0_0] : memref<46x32xf32, #tpu.memory_space<vmem>>, vector<46x32xf32>
    %c0_1 = arith.constant 0 : index
    %c0_2 = arith.constant 0 : index
    %1 = vector.load %arg6[%c0_1, %c0_2] : memref<28x8xf32, #tpu.memory_space<vmem>>, vector<28x8xf32>
    %2 = vector.extract_strided_slice %0 {offsets = [34, 0], sizes = [4, 32], strides = [1, 1]} : vector<46x32xf32> to vector<4x32xf32>
    %c0_3 = arith.constant 0 : index
    %c0_4 = arith.constant 0 : index
    %3 = vector.load %arg0[%c0_3, %c0_4] : memref<16x192xf32, #tpu.memory_space<vmem>>, vector<16x192xf32>
    %4 = arith.truncf %3 : vector<16x192xf32> to vector<16x192xbf16>
    %c0_5 = arith.constant 0 : index
    %c0_6 = arith.constant 0 : index
    %5 = vector.load %arg1[%c0_5, %c0_6] : memref<832x32xbf16, #tpu.memory_space<vmem>>, vector<192x32xbf16>
    %cst = arith.constant dense<0.000000e+00> : vector<16x32xf32>
    %6 = tpu.matmul %4, %5, %cst {dimension_numbers = #tpu.dot_dimension_numbers<[1], [0], [0], [1], [0, 0, 1, 1], [], []>} : vector<16x192xbf16>, vector<192x32xbf16>, vector<16x32xf32> -> vector<16x32xf32>
    %7 = vector.shape_cast %6 : vector<16x32xf32> to vector<2x8x32xf32>
    %8 = vector.extract_strided_slice %0 {offsets = [38, 0], sizes = [8, 32], strides = [1, 1]} : vector<46x32xf32> to vector<8x32xf32>
    %9 = vector.shape_cast %8 : vector<8x32xf32> to vector<1x8x32xf32>
    %10 = vector.broadcast %9 : vector<1x8x32xf32> to vector<2x8x32xf32>
    %11 = arith.addf %7, %10 : vector<2x8x32xf32>
    %12 = vector.extract_strided_slice %0 {offsets = [0, 0], sizes = [1, 32], strides = [1, 1]} : vector<46x32xf32> to vector<1x32xf32>
    %13 = vector.extract_strided_slice %0 {offsets = [1, 0], sizes = [1, 32], strides = [1, 1]} : vector<46x32xf32> to vector<1x32xf32>
    %cst_7 = arith.constant dense<0.000000e+00> : vector<2x8xf32>
    %14 = vector.multi_reduction <add>, %11, %cst_7 [2] : vector<2x8x32xf32> to vector<2x8xf32>
    %15 = vector.shape_cast %14 : vector<2x8xf32> to vector<2x8x1xf32>
    %cst_8 = arith.constant 3.200000e+01 : f32
    %16 = vector.broadcast %cst_8 : f32 to vector<2x8x1xf32>
    %17 = arith.divf %15, %16 : vector<2x8x1xf32>
    %18 = vector.broadcast %17 : vector<2x8x1xf32> to vector<2x8x32xf32>
    %19 = arith.subf %11, %18 : vector<2x8x32xf32>
    %20 = arith.mulf %19, %19 : vector<2x8x32xf32>
    %cst_9 = arith.constant dense<0.000000e+00> : vector<2x8xf32>
    %21 = vector.multi_reduction <add>, %20, %cst_9 [2] : vector<2x8x32xf32> to vector<2x8xf32>
    %22 = vector.shape_cast %21 : vector<2x8xf32> to vector<2x8x1xf32>
    %cst_10 = arith.constant 3.200000e+01 : f32
    %23 = vector.broadcast %cst_10 : f32 to vector<2x8x1xf32>
    %24 = arith.divf %22, %23 : vector<2x8x1xf32>
    %cst_11 = arith.constant 9.99999974E-6 : f32
    %25 = vector.broadcast %cst_11 : f32 to vector<2x8x1xf32>
    %26 = arith.addf %24, %25 : vector<2x8x1xf32>
    %27 = math.rsqrt %26 : vector<2x8x1xf32>
    %28 = vector.broadcast %27 : vector<2x8x1xf32> to vector<2x8x32xf32>
    %29 = arith.mulf %19, %28 : vector<2x8x32xf32>
    %30 = vector.shape_cast %12 : vector<1x32xf32> to vector<1x1x32xf32>
    %31 = vector.broadcast %30 : vector<1x1x32xf32> to vector<2x8x32xf32>
    %32 = arith.mulf %29, %31 : vector<2x8x32xf32>
    %33 = vector.shape_cast %13 : vector<1x32xf32> to vector<1x1x32xf32>
    %34 = vector.broadcast %33 : vector<1x1x32xf32> to vector<2x8x32xf32>
    %35 = arith.addf %32, %34 : vector<2x8x32xf32>
    %36 = vector.extract_strided_slice %1 {offsets = [0, 0], sizes = [8, 8], strides = [1, 1]} : vector<28x8xf32> to vector<8x8xf32>
    %37 = vector.extract_strided_slice %0 {offsets = [2, 0], sizes = [1, 32], strides = [1, 1]} : vector<46x32xf32> to vector<1x32xf32>
    %38 = vector.extract_strided_slice %0 {offsets = [3, 0], sizes = [1, 32], strides = [1, 1]} : vector<46x32xf32> to vector<1x32xf32>
    %cst_12 = arith.constant dense<0.000000e+00> : vector<2x8xf32>
    %39 = vector.multi_reduction <add>, %35, %cst_12 [2] : vector<2x8x32xf32> to vector<2x8xf32>
    %40 = vector.shape_cast %39 : vector<2x8xf32> to vector<2x8x1xf32>
    %cst_13 = arith.constant 3.200000e+01 : f32
    %41 = vector.broadcast %cst_13 : f32 to vector<2x8x1xf32>
    %42 = arith.divf %40, %41 : vector<2x8x1xf32>
    %43 = vector.broadcast %42 : vector<2x8x1xf32> to vector<2x8x32xf32>
    %44 = arith.subf %35, %43 : vector<2x8x32xf32>
    %45 = arith.mulf %44, %44 : vector<2x8x32xf32>
    %cst_14 = arith.constant dense<0.000000e+00> : vector<2x8xf32>
    %46 = vector.multi_reduction <add>, %45, %cst_14 [2] : vector<2x8x32xf32> to vector<2x8xf32>
    %47 = vector.shape_cast %46 : vector<2x8xf32> to vector<2x8x1xf32>
    %cst_15 = arith.constant 3.200000e+01 : f32
    %48 = vector.broadcast %cst_15 : f32 to vector<2x8x1xf32>
    %49 = arith.divf %47, %48 : vector<2x8x1xf32>
    %cst_16 = arith.constant 9.99999974E-6 : f32
    %50 = vector.broadcast %cst_16 : f32 to vector<2x8x1xf32>
    %51 = arith.addf %49, %50 : vector<2x8x1xf32>
    %52 = math.rsqrt %51 : vector<2x8x1xf32>
    %53 = vector.broadcast %52 : vector<2x8x1xf32> to vector<2x8x32xf32>
    %54 = arith.mulf %44, %53 : vector<2x8x32xf32>
    %55 = vector.shape_cast %37 : vector<1x32xf32> to vector<1x1x32xf32>
    %56 = vector.broadcast %55 : vector<1x1x32xf32> to vector<2x8x32xf32>
    %57 = arith.mulf %54, %56 : vector<2x8x32xf32>
    %58 = vector.shape_cast %38 : vector<1x32xf32> to vector<1x1x32xf32>
    %59 = vector.broadcast %58 : vector<1x1x32xf32> to vector<2x8x32xf32>
    %60 = arith.addf %57, %59 : vector<2x8x32xf32>
    %61 = vector.shape_cast %60 : vector<2x8x32xf32> to vector<16x32xf32>
    %62 = arith.truncf %61 : vector<16x32xf32> to vector<16x32xbf16>
    %c192 = arith.constant 192 : index
    %c0_17 = arith.constant 0 : index
    %63 = vector.load %arg1[%c192, %c0_17] : memref<832x32xbf16, #tpu.memory_space<vmem>>, vector<32x32xbf16>
    %cst_18 = arith.constant dense<0.000000e+00> : vector<16x32xf32>
    %64 = tpu.matmul %62, %63, %cst_18 {dimension_numbers = #tpu.dot_dimension_numbers<[1], [0], [0], [1], [0, 0, 1, 1], [], []>} : vector<16x32xbf16>, vector<32x32xbf16>, vector<16x32xf32> -> vector<16x32xf32>
    %65 = vector.extract_strided_slice %0 {offsets = [4, 0], sizes = [1, 32], strides = [1, 1]} : vector<46x32xf32> to vector<1x32xf32>
    %66 = vector.broadcast %65 : vector<1x32xf32> to vector<16x32xf32>
    %67 = arith.addf %64, %66 : vector<16x32xf32>
    %68 = vector.shape_cast %67 : vector<16x32xf32> to vector<2x8x32xf32>
    %c224 = arith.constant 224 : index
    %c0_19 = arith.constant 0 : index
    %69 = vector.load %arg1[%c224, %c0_19] : memref<832x32xbf16, #tpu.memory_space<vmem>>, vector<32x32xbf16>
    %cst_20 = arith.constant dense<0.000000e+00> : vector<16x32xf32>
    %70 = tpu.matmul %62, %69, %cst_20 {dimension_numbers = #tpu.dot_dimension_numbers<[1], [0], [0], [1], [0, 0, 1, 1], [], []>} : vector<16x32xbf16>, vector<32x32xbf16>, vector<16x32xf32> -> vector<16x32xf32>
    %71 = vector.extract_strided_slice %0 {offsets = [5, 0], sizes = [1, 32], strides = [1, 1]} : vector<46x32xf32> to vector<1x32xf32>
    %72 = vector.broadcast %71 : vector<1x32xf32> to vector<16x32xf32>
    %73 = arith.addf %70, %72 : vector<16x32xf32>
    %74 = vector.shape_cast %73 : vector<16x32xf32> to vector<2x8x32xf32>
    %c256 = arith.constant 256 : index
    %c0_21 = arith.constant 0 : index
    %75 = vector.load %arg1[%c256, %c0_21] : memref<832x32xbf16, #tpu.memory_space<vmem>>, vector<32x32xbf16>
    %cst_22 = arith.constant dense<0.000000e+00> : vector<16x32xf32>
    %76 = tpu.matmul %62, %75, %cst_22 {dimension_numbers = #tpu.dot_dimension_numbers<[1], [0], [0], [1], [0, 0, 1, 1], [], []>} : vector<16x32xbf16>, vector<32x32xbf16>, vector<16x32xf32> -> vector<16x32xf32>
    %77 = vector.extract_strided_slice %0 {offsets = [6, 0], sizes = [1, 32], strides = [1, 1]} : vector<46x32xf32> to vector<1x32xf32>
    %78 = vector.broadcast %77 : vector<1x32xf32> to vector<16x32xf32>
    %79 = arith.addf %76, %78 : vector<16x32xf32>
    %80 = vector.shape_cast %79 : vector<16x32xf32> to vector<2x8x32xf32>
    %cst_23 = arith.constant 0.353553385 : f32
    %81 = vector.broadcast %cst_23 : f32 to vector<2x8x32xf32>
    %82 = arith.mulf %68, %81 : vector<2x8x32xf32>
    %83 = arith.truncf %82 : vector<2x8x32xf32> to vector<2x8x32xbf16>
    %84 = arith.truncf %74 : vector<2x8x32xf32> to vector<2x8x32xbf16>
    %85 = arith.truncf %80 : vector<2x8x32xf32> to vector<2x8x32xbf16>
    %cst_24 = arith.constant 0.000000e+00 : f32
    %86 = vector.broadcast %cst_24 : f32 to vector<2x8x32xf32>
    %87 = vector.extract_strided_slice %2 {offsets = [0, 0], sizes = [1, 32], strides = [1, 1]} : vector<4x32xf32> to vector<1x32xf32>
    %88 = vector.shape_cast %87 : vector<1x32xf32> to vector<1x1x32xf32>
    %89 = arith.truncf %88 : vector<1x1x32xf32> to vector<1x1x32xbf16>
    %90 = vector.broadcast %89 : vector<1x1x32xbf16> to vector<2x8x32xbf16>
    %91 = arith.mulf %83, %90 : vector<2x8x32xbf16>
    "tpu.trace_start"() <{level = 10 : i32, message = "nqd,nkd->nqk"}> : () -> ()
    %cst_25 = arith.constant dense<0.000000e+00> : vector<2x8x8xf32>
    %92 = tpu.matmul %91, %84, %cst_25 {dimension_numbers = #tpu.dot_dimension_numbers<[2], [2], [1], [1], [0, 0, 0, 1, 1, 1], [0], [0]>} : vector<2x8x32xbf16>, vector<2x8x32xbf16>, vector<2x8x8xf32> -> vector<2x8x8xf32>
    "tpu.trace_stop"() : () -> ()
    %93 = vector.shape_cast %36 : vector<8x8xf32> to vector<1x8x8xf32>
    %94 = vector.broadcast %93 : vector<1x8x8xf32> to vector<2x8x8xf32>
    %95 = arith.addf %92, %94 : vector<2x8x8xf32>
    %cst_26 = arith.constant dense<0xFF800000> : vector<2x8xf32>
    %96 = vector.multi_reduction <maximumf>, %95, %cst_26 [2] : vector<2x8x8xf32> to vector<2x8xf32>
    %97 = vector.shape_cast %96 : vector<2x8xf32> to vector<2x8x1xf32>
    %98 = vector.broadcast %97 : vector<2x8x1xf32> to vector<2x8x8xf32>
    %99 = arith.subf %95, %98 : vector<2x8x8xf32>
    %100 = math.exp %99 : vector<2x8x8xf32>
    %cst_27 = arith.constant dense<0.000000e+00> : vector<2x8xf32>
    %101 = vector.multi_reduction <add>, %100, %cst_27 [2] : vector<2x8x8xf32> to vector<2x8xf32>
    %102 = vector.shape_cast %101 : vector<2x8xf32> to vector<2x8x1xf32>
    %103 = tpu.reciprocal %102 {approx = true} : vector<2x8x1xf32> -> vector<2x8x1xf32>
    %104 = vector.broadcast %103 : vector<2x8x1xf32> to vector<2x8x8xf32>
    %105 = arith.mulf %100, %104 : vector<2x8x8xf32>
    %106 = arith.truncf %105 : vector<2x8x8xf32> to vector<2x8x8xbf16>
    "tpu.trace_start"() <{level = 10 : i32, message = "nqk,nkd->nqd"}> : () -> ()
    %cst_28 = arith.constant dense<0.000000e+00> : vector<2x8x32xf32>
    %107 = tpu.matmul %106, %85, %cst_28 {dimension_numbers = #tpu.dot_dimension_numbers<[2], [1], [1], [2], [0, 0, 0, 1, 1, 2], [0], [0]>} : vector<2x8x8xbf16>, vector<2x8x32xbf16>, vector<2x8x32xf32> -> vector<2x8x32xf32>
    "tpu.trace_stop"() : () -> ()
    %108 = vector.broadcast %88 : vector<1x1x32xf32> to vector<2x8x32xf32>
    %109 = arith.mulf %107, %108 : vector<2x8x32xf32>
    %110 = arith.addf %86, %109 : vector<2x8x32xf32>
    %111 = vector.extract_strided_slice %2 {offsets = [1, 0], sizes = [1, 32], strides = [1, 1]} : vector<4x32xf32> to vector<1x32xf32>
    %112 = vector.shape_cast %111 : vector<1x32xf32> to vector<1x1x32xf32>
    %113 = arith.truncf %112 : vector<1x1x32xf32> to vector<1x1x32xbf16>
    %114 = vector.broadcast %113 : vector<1x1x32xbf16> to vector<2x8x32xbf16>
    %115 = arith.mulf %83, %114 : vector<2x8x32xbf16>
    "tpu.trace_start"() <{level = 10 : i32, message = "nqd,nkd->nqk"}> : () -> ()
    %cst_29 = arith.constant dense<0.000000e+00> : vector<2x8x8xf32>
    %116 = tpu.matmul %115, %84, %cst_29 {dimension_numbers = #tpu.dot_dimension_numbers<[2], [2], [1], [1], [0, 0, 0, 1, 1, 1], [0], [0]>} : vector<2x8x32xbf16>, vector<2x8x32xbf16>, vector<2x8x8xf32> -> vector<2x8x8xf32>
    "tpu.trace_stop"() : () -> ()
    %117 = vector.shape_cast %36 : vector<8x8xf32> to vector<1x8x8xf32>
    %118 = vector.broadcast %117 : vector<1x8x8xf32> to vector<2x8x8xf32>
    %119 = arith.addf %116, %118 : vector<2x8x8xf32>
    %cst_30 = arith.constant dense<0xFF800000> : vector<2x8xf32>
    %120 = vector.multi_reduction <maximumf>, %119, %cst_30 [2] : vector<2x8x8xf32> to vector<2x8xf32>
    %121 = vector.shape_cast %120 : vector<2x8xf32> to vector<2x8x1xf32>
    %122 = vector.broadcast %121 : vector<2x8x1xf32> to vector<2x8x8xf32>
    %123 = arith.subf %119, %122 : vector<2x8x8xf32>
    %124 = math.exp %123 : vector<2x8x8xf32>
    %cst_31 = arith.constant dense<0.000000e+00> : vector<2x8xf32>
    %125 = vector.multi_reduction <add>, %124, %cst_31 [2] : vector<2x8x8xf32> to vector<2x8xf32>
    %126 = vector.shape_cast %125 : vector<2x8xf32> to vector<2x8x1xf32>
    %127 = tpu.reciprocal %126 {approx = true} : vector<2x8x1xf32> -> vector<2x8x1xf32>
    %128 = vector.broadcast %127 : vector<2x8x1xf32> to vector<2x8x8xf32>
    %129 = arith.mulf %124, %128 : vector<2x8x8xf32>
    %130 = arith.truncf %129 : vector<2x8x8xf32> to vector<2x8x8xbf16>
    "tpu.trace_start"() <{level = 10 : i32, message = "nqk,nkd->nqd"}> : () -> ()
    %cst_32 = arith.constant dense<0.000000e+00> : vector<2x8x32xf32>
    %131 = tpu.matmul %130, %85, %cst_32 {dimension_numbers = #tpu.dot_dimension_numbers<[2], [1], [1], [2], [0, 0, 0, 1, 1, 2], [0], [0]>} : vector<2x8x8xbf16>, vector<2x8x32xbf16>, vector<2x8x32xf32> -> vector<2x8x32xf32>
    "tpu.trace_stop"() : () -> ()
    %132 = vector.broadcast %112 : vector<1x1x32xf32> to vector<2x8x32xf32>
    %133 = arith.mulf %131, %132 : vector<2x8x32xf32>
    %134 = arith.addf %110, %133 : vector<2x8x32xf32>
    %135 = vector.extract_strided_slice %2 {offsets = [2, 0], sizes = [1, 32], strides = [1, 1]} : vector<4x32xf32> to vector<1x32xf32>
    %136 = vector.shape_cast %135 : vector<1x32xf32> to vector<1x1x32xf32>
    %137 = arith.truncf %136 : vector<1x1x32xf32> to vector<1x1x32xbf16>
    %138 = vector.broadcast %137 : vector<1x1x32xbf16> to vector<2x8x32xbf16>
    %139 = arith.mulf %83, %138 : vector<2x8x32xbf16>
    "tpu.trace_start"() <{level = 10 : i32, message = "nqd,nkd->nqk"}> : () -> ()
    %cst_33 = arith.constant dense<0.000000e+00> : vector<2x8x8xf32>
    %140 = tpu.matmul %139, %84, %cst_33 {dimension_numbers = #tpu.dot_dimension_numbers<[2], [2], [1], [1], [0, 0, 0, 1, 1, 1], [0], [0]>} : vector<2x8x32xbf16>, vector<2x8x32xbf16>, vector<2x8x8xf32> -> vector<2x8x8xf32>
    "tpu.trace_stop"() : () -> ()
    %141 = vector.shape_cast %36 : vector<8x8xf32> to vector<1x8x8xf32>
    %142 = vector.broadcast %141 : vector<1x8x8xf32> to vector<2x8x8xf32>
    %143 = arith.addf %140, %142 : vector<2x8x8xf32>
    %cst_34 = arith.constant dense<0xFF800000> : vector<2x8xf32>
    %144 = vector.multi_reduction <maximumf>, %143, %cst_34 [2] : vector<2x8x8xf32> to vector<2x8xf32>
    %145 = vector.shape_cast %144 : vector<2x8xf32> to vector<2x8x1xf32>
    %146 = vector.broadcast %145 : vector<2x8x1xf32> to vector<2x8x8xf32>
    %147 = arith.subf %143, %146 : vector<2x8x8xf32>
    %148 = math.exp %147 : vector<2x8x8xf32>
    %cst_35 = arith.constant dense<0.000000e+00> : vector<2x8xf32>
    %149 = vector.multi_reduction <add>, %148, %cst_35 [2] : vector<2x8x8xf32> to vector<2x8xf32>
    %150 = vector.shape_cast %149 : vector<2x8xf32> to vector<2x8x1xf32>
    %151 = tpu.reciprocal %150 {approx = true} : vector<2x8x1xf32> -> vector<2x8x1xf32>
    %152 = vector.broadcast %151 : vector<2x8x1xf32> to vector<2x8x8xf32>
    %153 = arith.mulf %148, %152 : vector<2x8x8xf32>
    %154 = arith.truncf %153 : vector<2x8x8xf32> to vector<2x8x8xbf16>
    "tpu.trace_start"() <{level = 10 : i32, message = "nqk,nkd->nqd"}> : () -> ()
    %cst_36 = arith.constant dense<0.000000e+00> : vector<2x8x32xf32>
    %155 = tpu.matmul %154, %85, %cst_36 {dimension_numbers = #tpu.dot_dimension_numbers<[2], [1], [1], [2], [0, 0, 0, 1, 1, 2], [0], [0]>} : vector<2x8x8xbf16>, vector<2x8x32xbf16>, vector<2x8x32xf32> -> vector<2x8x32xf32>
    "tpu.trace_stop"() : () -> ()
    %156 = vector.broadcast %136 : vector<1x1x32xf32> to vector<2x8x32xf32>
    %157 = arith.mulf %155, %156 : vector<2x8x32xf32>
    %158 = arith.addf %134, %157 : vector<2x8x32xf32>
    %159 = vector.extract_strided_slice %2 {offsets = [3, 0], sizes = [1, 32], strides = [1, 1]} : vector<4x32xf32> to vector<1x32xf32>
    %160 = vector.shape_cast %159 : vector<1x32xf32> to vector<1x1x32xf32>
    %161 = arith.truncf %160 : vector<1x1x32xf32> to vector<1x1x32xbf16>
    %162 = vector.broadcast %161 : vector<1x1x32xbf16> to vector<2x8x32xbf16>
    %163 = arith.mulf %83, %162 : vector<2x8x32xbf16>
    "tpu.trace_start"() <{level = 10 : i32, message = "nqd,nkd->nqk"}> : () -> ()
    %cst_37 = arith.constant dense<0.000000e+00> : vector<2x8x8xf32>
    %164 = tpu.matmul %163, %84, %cst_37 {dimension_numbers = #tpu.dot_dimension_numbers<[2], [2], [1], [1], [0, 0, 0, 1, 1, 1], [0], [0]>} : vector<2x8x32xbf16>, vector<2x8x32xbf16>, vector<2x8x8xf32> -> vector<2x8x8xf32>
    "tpu.trace_stop"() : () -> ()
    %165 = vector.shape_cast %36 : vector<8x8xf32> to vector<1x8x8xf32>
    %166 = vector.broadcast %165 : vector<1x8x8xf32> to vector<2x8x8xf32>
    %167 = arith.addf %164, %166 : vector<2x8x8xf32>
    %cst_38 = arith.constant dense<0xFF800000> : vector<2x8xf32>
    %168 = vector.multi_reduction <maximumf>, %167, %cst_38 [2] : vector<2x8x8xf32> to vector<2x8xf32>
    %169 = vector.shape_cast %168 : vector<2x8xf32> to vector<2x8x1xf32>
    %170 = vector.broadcast %169 : vector<2x8x1xf32> to vector<2x8x8xf32>
    %171 = arith.subf %167, %170 : vector<2x8x8xf32>
    %172 = math.exp %171 : vector<2x8x8xf32>
    %cst_39 = arith.constant dense<0.000000e+00> : vector<2x8xf32>
    %173 = vector.multi_reduction <add>, %172, %cst_39 [2] : vector<2x8x8xf32> to vector<2x8xf32>
    %174 = vector.shape_cast %173 : vector<2x8xf32> to vector<2x8x1xf32>
    %175 = tpu.reciprocal %174 {approx = true} : vector<2x8x1xf32> -> vector<2x8x1xf32>
    %176 = vector.broadcast %175 : vector<2x8x1xf32> to vector<2x8x8xf32>
    %177 = arith.mulf %172, %176 : vector<2x8x8xf32>
    %178 = arith.truncf %177 : vector<2x8x8xf32> to vector<2x8x8xbf16>
    "tpu.trace_start"() <{level = 10 : i32, message = "nqk,nkd->nqd"}> : () -> ()
    %cst_40 = arith.constant dense<0.000000e+00> : vector<2x8x32xf32>
    %179 = tpu.matmul %178, %85, %cst_40 {dimension_numbers = #tpu.dot_dimension_numbers<[2], [1], [1], [2], [0, 0, 0, 1, 1, 2], [0], [0]>} : vector<2x8x8xbf16>, vector<2x8x32xbf16>, vector<2x8x32xf32> -> vector<2x8x32xf32>
    "tpu.trace_stop"() : () -> ()
    %180 = vector.broadcast %160 : vector<1x1x32xf32> to vector<2x8x32xf32>
    %181 = arith.mulf %179, %180 : vector<2x8x32xf32>
    %182 = arith.addf %158, %181 : vector<2x8x32xf32>
    %183 = vector.shape_cast %182 : vector<2x8x32xf32> to vector<16x32xf32>
    %184 = arith.truncf %183 : vector<16x32xf32> to vector<16x32xbf16>
    %c288 = arith.constant 288 : index
    %c0_41 = arith.constant 0 : index
    %185 = vector.load %arg1[%c288, %c0_41] : memref<832x32xbf16, #tpu.memory_space<vmem>>, vector<32x32xbf16>
    %cst_42 = arith.constant dense<0.000000e+00> : vector<16x32xf32>
    %186 = tpu.matmul %184, %185, %cst_42 {dimension_numbers = #tpu.dot_dimension_numbers<[1], [0], [0], [1], [0, 0, 1, 1], [], []>} : vector<16x32xbf16>, vector<32x32xbf16>, vector<16x32xf32> -> vector<16x32xf32>
    %187 = vector.extract_strided_slice %0 {offsets = [7, 0], sizes = [1, 32], strides = [1, 1]} : vector<46x32xf32> to vector<1x32xf32>
    %188 = vector.broadcast %187 : vector<1x32xf32> to vector<16x32xf32>
    %189 = arith.addf %186, %188 : vector<16x32xf32>
    %190 = vector.shape_cast %189 : vector<16x32xf32> to vector<2x8x32xf32>
    %191 = arith.addf %35, %190 : vector<2x8x32xf32>
    %192 = vector.extract_strided_slice %0 {offsets = [8, 0], sizes = [1, 32], strides = [1, 1]} : vector<46x32xf32> to vector<1x32xf32>
    %193 = vector.extract_strided_slice %0 {offsets = [9, 0], sizes = [1, 32], strides = [1, 1]} : vector<46x32xf32> to vector<1x32xf32>
    %cst_43 = arith.constant dense<0.000000e+00> : vector<2x8xf32>
    %194 = vector.multi_reduction <add>, %191, %cst_43 [2] : vector<2x8x32xf32> to vector<2x8xf32>
    %195 = vector.shape_cast %194 : vector<2x8xf32> to vector<2x8x1xf32>
    %cst_44 = arith.constant 3.200000e+01 : f32
    %196 = vector.broadcast %cst_44 : f32 to vector<2x8x1xf32>
    %197 = arith.divf %195, %196 : vector<2x8x1xf32>
    %198 = vector.broadcast %197 : vector<2x8x1xf32> to vector<2x8x32xf32>
    %199 = arith.subf %191, %198 : vector<2x8x32xf32>
    %200 = arith.mulf %199, %199 : vector<2x8x32xf32>
    %cst_45 = arith.constant dense<0.000000e+00> : vector<2x8xf32>
    %201 = vector.multi_reduction <add>, %200, %cst_45 [2] : vector<2x8x32xf32> to vector<2x8xf32>
    %202 = vector.shape_cast %201 : vector<2x8xf32> to vector<2x8x1xf32>
    %cst_46 = arith.constant 3.200000e+01 : f32
    %203 = vector.broadcast %cst_46 : f32 to vector<2x8x1xf32>
    %204 = arith.divf %202, %203 : vector<2x8x1xf32>
    %cst_47 = arith.constant 9.99999974E-6 : f32
    %205 = vector.broadcast %cst_47 : f32 to vector<2x8x1xf32>
    %206 = arith.addf %204, %205 : vector<2x8x1xf32>
    %207 = math.rsqrt %206 : vector<2x8x1xf32>
    %208 = vector.broadcast %207 : vector<2x8x1xf32> to vector<2x8x32xf32>
    %209 = arith.mulf %199, %208 : vector<2x8x32xf32>
    %210 = vector.shape_cast %192 : vector<1x32xf32> to vector<1x1x32xf32>
    %211 = vector.broadcast %210 : vector<1x1x32xf32> to vector<2x8x32xf32>
    %212 = arith.mulf %209, %211 : vector<2x8x32xf32>
    %213 = vector.shape_cast %193 : vector<1x32xf32> to vector<1x1x32xf32>
    %214 = vector.broadcast %213 : vector<1x1x32xf32> to vector<2x8x32xf32>
    %215 = arith.addf %212, %214 : vector<2x8x32xf32>
    %216 = vector.shape_cast %215 : vector<2x8x32xf32> to vector<16x32xf32>
    %217 = arith.truncf %216 : vector<16x32xf32> to vector<16x32xbf16>
    %c0_48 = arith.constant 0 : index
    %c0_49 = arith.constant 0 : index
    %218 = vector.load %arg2[%c0_48, %c0_49] : memref<64x128xbf16, #tpu.memory_space<vmem>>, vector<32x128xbf16>
    %cst_50 = arith.constant dense<0.000000e+00> : vector<16x128xf32>
    %219 = tpu.matmul %217, %218, %cst_50 {dimension_numbers = #tpu.dot_dimension_numbers<[1], [0], [0], [1], [0, 0, 1, 1], [], []>} : vector<16x32xbf16>, vector<32x128xbf16>, vector<16x128xf32> -> vector<16x128xf32>
    %c0_51 = arith.constant 0 : index
    %c0_52 = arith.constant 0 : index
    %220 = vector.load %arg4[%c0_51, %c0_52] : memref<2x128xf32, #tpu.memory_space<vmem>>, vector<1x128xf32>
    %221 = vector.broadcast %220 : vector<1x128xf32> to vector<16x128xf32>
    %222 = arith.addf %219, %221 : vector<16x128xf32>
    %cst_53 = arith.constant 1.702000e+00 : f32
    %223 = vector.broadcast %cst_53 : f32 to vector<16x128xf32>
    %224 = arith.mulf %223, %222 : vector<16x128xf32>
    %225 = arith.negf %224 : vector<16x128xf32>
    %226 = math.exp %225 : vector<16x128xf32>
    %cst_54 = arith.constant 1.000000e+00 : f32
    %227 = vector.broadcast %cst_54 : f32 to vector<16x128xf32>
    %228 = arith.addf %227, %226 : vector<16x128xf32>
    %229 = arith.divf %227, %228 : vector<16x128xf32>
    %230 = arith.mulf %222, %229 : vector<16x128xf32>
    %231 = arith.truncf %230 : vector<16x128xf32> to vector<16x128xbf16>
    %c320 = arith.constant 320 : index
    %c0_55 = arith.constant 0 : index
    %232 = vector.load %arg1[%c320, %c0_55] : memref<832x32xbf16, #tpu.memory_space<vmem>>, vector<128x32xbf16>
    %cst_56 = arith.constant dense<0.000000e+00> : vector<16x32xf32>
    %233 = tpu.matmul %231, %232, %cst_56 {dimension_numbers = #tpu.dot_dimension_numbers<[1], [0], [0], [1], [0, 0, 1, 1], [], []>} : vector<16x128xbf16>, vector<128x32xbf16>, vector<16x32xf32> -> vector<16x32xf32>
    %234 = vector.extract_strided_slice %0 {offsets = [10, 0], sizes = [1, 32], strides = [1, 1]} : vector<46x32xf32> to vector<1x32xf32>
    %235 = vector.broadcast %234 : vector<1x32xf32> to vector<16x32xf32>
    %236 = arith.addf %233, %235 : vector<16x32xf32>
    %237 = vector.shape_cast %236 : vector<16x32xf32> to vector<2x8x32xf32>
    %238 = arith.addf %191, %237 : vector<2x8x32xf32>
    %239 = vector.extract_strided_slice %238 {offsets = [0, 0, 0], sizes = [2, 1, 32], strides = [1, 1, 1]} : vector<2x8x32xf32> to vector<2x1x32xf32>
    %240 = vector.shape_cast %239 : vector<2x1x32xf32> to vector<2x32xf32>
    %241 = vector.extract_strided_slice %0 {offsets = [11, 0], sizes = [1, 32], strides = [1, 1]} : vector<46x32xf32> to vector<1x32xf32>
    %242 = vector.extract_strided_slice %0 {offsets = [12, 0], sizes = [1, 32], strides = [1, 1]} : vector<46x32xf32> to vector<1x32xf32>
    %cst_57 = arith.constant dense<0.000000e+00> : vector<2xf32>
    %243 = vector.multi_reduction <add>, %240, %cst_57 [1] : vector<2x32xf32> to vector<2xf32>
    %244 = vector.shape_cast %243 : vector<2xf32> to vector<2x1xf32>
    %cst_58 = arith.constant 3.200000e+01 : f32
    %245 = vector.broadcast %cst_58 : f32 to vector<2x1xf32>
    %246 = arith.divf %244, %245 : vector<2x1xf32>
    %247 = vector.broadcast %246 : vector<2x1xf32> to vector<2x32xf32>
    %248 = arith.subf %240, %247 : vector<2x32xf32>
    %249 = arith.mulf %248, %248 : vector<2x32xf32>
    %cst_59 = arith.constant dense<0.000000e+00> : vector<2xf32>
    %250 = vector.multi_reduction <add>, %249, %cst_59 [1] : vector<2x32xf32> to vector<2xf32>
    %251 = vector.shape_cast %250 : vector<2xf32> to vector<2x1xf32>
    %cst_60 = arith.constant 3.200000e+01 : f32
    %252 = vector.broadcast %cst_60 : f32 to vector<2x1xf32>
    %253 = arith.divf %251, %252 : vector<2x1xf32>
    %cst_61 = arith.constant 9.99999974E-6 : f32
    %254 = vector.broadcast %cst_61 : f32 to vector<2x1xf32>
    %255 = arith.addf %253, %254 : vector<2x1xf32>
    %256 = math.rsqrt %255 : vector<2x1xf32>
    %257 = vector.broadcast %256 : vector<2x1xf32> to vector<2x32xf32>
    %258 = arith.mulf %248, %257 : vector<2x32xf32>
    %259 = vector.broadcast %241 : vector<1x32xf32> to vector<2x32xf32>
    %260 = arith.mulf %258, %259 : vector<2x32xf32>
    %261 = vector.broadcast %242 : vector<1x32xf32> to vector<2x32xf32>
    %262 = arith.addf %260, %261 : vector<2x32xf32>
    %263 = arith.truncf %262 : vector<2x32xf32> to vector<2x32xbf16>
    %c448 = arith.constant 448 : index
    %c0_62 = arith.constant 0 : index
    %264 = vector.load %arg1[%c448, %c0_62] : memref<832x32xbf16, #tpu.memory_space<vmem>>, vector<32x32xbf16>
    %cst_63 = arith.constant dense<0.000000e+00> : vector<2x32xf32>
    %265 = tpu.matmul %263, %264, %cst_63 {dimension_numbers = #tpu.dot_dimension_numbers<[1], [0], [0], [1], [0, 0, 1, 1], [], []>} : vector<2x32xbf16>, vector<32x32xbf16>, vector<2x32xf32> -> vector<2x32xf32>
    %266 = arith.mulf %265, %265 : vector<2x32xf32>
    %cst_64 = arith.constant dense<0.000000e+00> : vector<2xf32>
    %267 = vector.multi_reduction <add>, %266, %cst_64 [1] : vector<2x32xf32> to vector<2xf32>
    %268 = vector.shape_cast %267 : vector<2xf32> to vector<2x1xf32>
    %cst_65 = arith.constant 9.99999996E-13 : f32
    %269 = vector.broadcast %cst_65 : f32 to vector<2x1xf32>
    %270 = arith.addf %268, %269 : vector<2x1xf32>
    %271 = math.rsqrt %270 : vector<2x1xf32>
    %272 = vector.broadcast %271 : vector<2x1xf32> to vector<2x32xf32>
    %273 = arith.mulf %265, %272 : vector<2x32xf32>
    %274 = arith.truncf %273 : vector<2x32xf32> to vector<2x32xbf16>
    %c768 = arith.constant 768 : index
    %c0_66 = arith.constant 0 : index
    %275 = vector.load %arg1[%c768, %c0_66] : memref<832x32xbf16, #tpu.memory_space<vmem>>, vector<32x32xbf16>
    %cst_67 = arith.constant dense<0.000000e+00> : vector<2x32xf32>
    %276 = tpu.matmul %274, %275, %cst_67 {dimension_numbers = #tpu.dot_dimension_numbers<[1], [0], [0], [1], [0, 0, 1, 1], [], []>} : vector<2x32xbf16>, vector<32x32xbf16>, vector<2x32xf32> -> vector<2x32xf32>
    %277 = vector.extract_strided_slice %0 {offsets = [24, 0], sizes = [1, 32], strides = [1, 1]} : vector<46x32xf32> to vector<1x32xf32>
    %278 = vector.broadcast %277 : vector<1x32xf32> to vector<2x32xf32>
    %279 = arith.addf %276, %278 : vector<2x32xf32>
    %cst_68 = arith.constant 0.000000e+00 : f32
    %280 = vector.broadcast %cst_68 : f32 to vector<2x32xf32>
    %281 = arith.maximumf %279, %280 : vector<2x32xf32>
    %282 = arith.truncf %281 : vector<2x32xf32> to vector<2x32xbf16>
    %c800 = arith.constant 800 : index
    %c0_69 = arith.constant 0 : index
    %283 = vector.load %arg1[%c800, %c0_69] : memref<832x32xbf16, #tpu.memory_space<vmem>>, vector<32x32xbf16>
    %cst_70 = arith.constant dense<0.000000e+00> : vector<2x32xf32>
    %284 = tpu.matmul %282, %283, %cst_70 {dimension_numbers = #tpu.dot_dimension_numbers<[1], [0], [0], [1], [0, 0, 1, 1], [], []>} : vector<2x32xbf16>, vector<32x32xbf16>, vector<2x32xf32> -> vector<2x32xf32>
    %285 = vector.extract_strided_slice %0 {offsets = [25, 0], sizes = [1, 32], strides = [1, 1]} : vector<46x32xf32> to vector<1x32xf32>
    %286 = vector.broadcast %285 : vector<1x32xf32> to vector<2x32xf32>
    %287 = arith.addf %284, %286 : vector<2x32xf32>
    %288 = vector.extract_strided_slice %0 {offsets = [26, 0], sizes = [8, 32], strides = [1, 1]} : vector<46x32xf32> to vector<8x32xf32>
    %289 = vector.shape_cast %288 : vector<8x32xf32> to vector<1x8x32xf32>
    %290 = vector.shape_cast %287 : vector<2x32xf32> to vector<2x1x32xf32>
    %291 = vector.broadcast %289 : vector<1x8x32xf32> to vector<2x8x32xf32>
    %292 = vector.broadcast %290 : vector<2x1x32xf32> to vector<2x8x32xf32>
    %293 = arith.mulf %291, %292 : vector<2x8x32xf32>
    %c0_71 = arith.constant 0 : index
    %c0_72 = arith.constant 0 : index
    %c0_73 = arith.constant 0 : index
    %294 = vector.load %arg5[%c0_71, %c0_72, %c0_73] : memref<6x8x32xf32, #tpu.memory_space<vmem>>, vector<6x8x32xf32>
    %295 = vector.shape_cast %294 : vector<6x8x32xf32> to vector<1x6x8x32xf32>
    %296 = vector.shape_cast %293 : vector<2x8x32xf32> to vector<2x1x8x32xf32>
    %297 = vector.broadcast %295 : vector<1x6x8x32xf32> to vector<2x6x8x32xf32>
    %298 = vector.broadcast %296 : vector<2x1x8x32xf32> to vector<2x6x8x32xf32>
    %299 = arith.addf %297, %298 : vector<2x6x8x32xf32>
    %300 = vector.shape_cast %299 : vector<2x6x8x32xf32> to vector<12x8x32xf32>
    %301 = vector.extract_strided_slice %1 {offsets = [8, 0], sizes = [8, 8], strides = [1, 1]} : vector<28x8xf32> to vector<8x8xf32>
    %302 = vector.extract_strided_slice %0 {offsets = [13, 0], sizes = [1, 32], strides = [1, 1]} : vector<46x32xf32> to vector<1x32xf32>
    %303 = vector.extract_strided_slice %0 {offsets = [14, 0], sizes = [1, 32], strides = [1, 1]} : vector<46x32xf32> to vector<1x32xf32>
    %cst_74 = arith.constant dense<0.000000e+00> : vector<12x8xf32>
    %304 = vector.multi_reduction <add>, %300, %cst_74 [2] : vector<12x8x32xf32> to vector<12x8xf32>
    %305 = vector.shape_cast %304 : vector<12x8xf32> to vector<12x8x1xf32>
    %cst_75 = arith.constant 3.200000e+01 : f32
    %306 = vector.broadcast %cst_75 : f32 to vector<12x8x1xf32>
    %307 = arith.divf %305, %306 : vector<12x8x1xf32>
    %308 = vector.broadcast %307 : vector<12x8x1xf32> to vector<12x8x32xf32>
    %309 = arith.subf %300, %308 : vector<12x8x32xf32>
    %310 = arith.mulf %309, %309 : vector<12x8x32xf32>
    %cst_76 = arith.constant dense<0.000000e+00> : vector<12x8xf32>
    %311 = vector.multi_reduction <add>, %310, %cst_76 [2] : vector<12x8x32xf32> to vector<12x8xf32>
    %312 = vector.shape_cast %311 : vector<12x8xf32> to vector<12x8x1xf32>
    %cst_77 = arith.constant 3.200000e+01 : f32
    %313 = vector.broadcast %cst_77 : f32 to vector<12x8x1xf32>
    %314 = arith.divf %312, %313 : vector<12x8x1xf32>
    %cst_78 = arith.constant 9.99999974E-6 : f32
    %315 = vector.broadcast %cst_78 : f32 to vector<12x8x1xf32>
    %316 = arith.addf %314, %315 : vector<12x8x1xf32>
    %317 = math.rsqrt %316 : vector<12x8x1xf32>
    %318 = vector.broadcast %317 : vector<12x8x1xf32> to vector<12x8x32xf32>
    %319 = arith.mulf %309, %318 : vector<12x8x32xf32>
    %320 = vector.shape_cast %302 : vector<1x32xf32> to vector<1x1x32xf32>
    %321 = vector.broadcast %320 : vector<1x1x32xf32> to vector<12x8x32xf32>
    %322 = arith.mulf %319, %321 : vector<12x8x32xf32>
    %323 = vector.shape_cast %303 : vector<1x32xf32> to vector<1x1x32xf32>
    %324 = vector.broadcast %323 : vector<1x1x32xf32> to vector<12x8x32xf32>
    %325 = arith.addf %322, %324 : vector<12x8x32xf32>
    %326 = vector.shape_cast %325 : vector<12x8x32xf32> to vector<96x32xf32>
    %327 = arith.truncf %326 : vector<96x32xf32> to vector<96x32xbf16>
    %c480 = arith.constant 480 : index
    %c0_79 = arith.constant 0 : index
    %328 = vector.load %arg1[%c480, %c0_79] : memref<832x32xbf16, #tpu.memory_space<vmem>>, vector<32x32xbf16>
    %cst_80 = arith.constant dense<0.000000e+00> : vector<96x32xf32>
    %329 = tpu.matmul %327, %328, %cst_80 {dimension_numbers = #tpu.dot_dimension_numbers<[1], [0], [0], [1], [0, 0, 1, 1], [], []>} : vector<96x32xbf16>, vector<32x32xbf16>, vector<96x32xf32> -> vector<96x32xf32>
    %330 = vector.extract_strided_slice %0 {offsets = [15, 0], sizes = [1, 32], strides = [1, 1]} : vector<46x32xf32> to vector<1x32xf32>
    %331 = vector.broadcast %330 : vector<1x32xf32> to vector<96x32xf32>
    %332 = arith.addf %329, %331 : vector<96x32xf32>
    %333 = vector.shape_cast %332 : vector<96x32xf32> to vector<12x8x32xf32>
    %c512 = arith.constant 512 : index
    %c0_81 = arith.constant 0 : index
    %334 = vector.load %arg1[%c512, %c0_81] : memref<832x32xbf16, #tpu.memory_space<vmem>>, vector<32x32xbf16>
    %cst_82 = arith.constant dense<0.000000e+00> : vector<96x32xf32>
    %335 = tpu.matmul %327, %334, %cst_82 {dimension_numbers = #tpu.dot_dimension_numbers<[1], [0], [0], [1], [0, 0, 1, 1], [], []>} : vector<96x32xbf16>, vector<32x32xbf16>, vector<96x32xf32> -> vector<96x32xf32>
    %336 = vector.extract_strided_slice %0 {offsets = [16, 0], sizes = [1, 32], strides = [1, 1]} : vector<46x32xf32> to vector<1x32xf32>
    %337 = vector.broadcast %336 : vector<1x32xf32> to vector<96x32xf32>
    %338 = arith.addf %335, %337 : vector<96x32xf32>
    %339 = vector.shape_cast %338 : vector<96x32xf32> to vector<12x8x32xf32>
    %c544 = arith.constant 544 : index
    %c0_83 = arith.constant 0 : index
    %340 = vector.load %arg1[%c544, %c0_83] : memref<832x32xbf16, #tpu.memory_space<vmem>>, vector<32x32xbf16>
    %cst_84 = arith.constant dense<0.000000e+00> : vector<96x32xf32>
    %341 = tpu.matmul %327, %340, %cst_84 {dimension_numbers = #tpu.dot_dimension_numbers<[1], [0], [0], [1], [0, 0, 1, 1], [], []>} : vector<96x32xbf16>, vector<32x32xbf16>, vector<96x32xf32> -> vector<96x32xf32>
    %342 = vector.extract_strided_slice %0 {offsets = [17, 0], sizes = [1, 32], strides = [1, 1]} : vector<46x32xf32> to vector<1x32xf32>
    %343 = vector.broadcast %342 : vector<1x32xf32> to vector<96x32xf32>
    %344 = arith.addf %341, %343 : vector<96x32xf32>
    %345 = vector.shape_cast %344 : vector<96x32xf32> to vector<12x8x32xf32>
    %cst_85 = arith.constant 0.353553385 : f32
    %346 = vector.broadcast %cst_85 : f32 to vector<12x8x32xf32>
    %347 = arith.mulf %333, %346 : vector<12x8x32xf32>
    %348 = arith.truncf %347 : vector<12x8x32xf32> to vector<12x8x32xbf16>
    %349 = arith.truncf %339 : vector<12x8x32xf32> to vector<12x8x32xbf16>
    %350 = arith.truncf %345 : vector<12x8x32xf32> to vector<12x8x32xbf16>
    %cst_86 = arith.constant 0.000000e+00 : f32
    %351 = vector.broadcast %cst_86 : f32 to vector<12x8x32xf32>
    %352 = vector.extract_strided_slice %2 {offsets = [0, 0], sizes = [1, 32], strides = [1, 1]} : vector<4x32xf32> to vector<1x32xf32>
    %353 = vector.shape_cast %352 : vector<1x32xf32> to vector<1x1x32xf32>
    %354 = arith.truncf %353 : vector<1x1x32xf32> to vector<1x1x32xbf16>
    %355 = vector.broadcast %354 : vector<1x1x32xbf16> to vector<12x8x32xbf16>
    %356 = arith.mulf %348, %355 : vector<12x8x32xbf16>
    "tpu.trace_start"() <{level = 10 : i32, message = "nqd,nkd->nqk"}> : () -> ()
    %cst_87 = arith.constant dense<0.000000e+00> : vector<12x8x8xf32>
    %357 = tpu.matmul %356, %349, %cst_87 {dimension_numbers = #tpu.dot_dimension_numbers<[2], [2], [1], [1], [0, 0, 0, 1, 1, 1], [0], [0]>} : vector<12x8x32xbf16>, vector<12x8x32xbf16>, vector<12x8x8xf32> -> vector<12x8x8xf32>
    "tpu.trace_stop"() : () -> ()
    %358 = vector.shape_cast %301 : vector<8x8xf32> to vector<1x8x8xf32>
    %359 = vector.broadcast %358 : vector<1x8x8xf32> to vector<12x8x8xf32>
    %360 = arith.addf %357, %359 : vector<12x8x8xf32>
    %cst_88 = arith.constant dense<0xFF800000> : vector<12x8xf32>
    %361 = vector.multi_reduction <maximumf>, %360, %cst_88 [2] : vector<12x8x8xf32> to vector<12x8xf32>
    %362 = vector.shape_cast %361 : vector<12x8xf32> to vector<12x8x1xf32>
    %363 = vector.broadcast %362 : vector<12x8x1xf32> to vector<12x8x8xf32>
    %364 = arith.subf %360, %363 : vector<12x8x8xf32>
    %365 = math.exp %364 : vector<12x8x8xf32>
    %cst_89 = arith.constant dense<0.000000e+00> : vector<12x8xf32>
    %366 = vector.multi_reduction <add>, %365, %cst_89 [2] : vector<12x8x8xf32> to vector<12x8xf32>
    %367 = vector.shape_cast %366 : vector<12x8xf32> to vector<12x8x1xf32>
    %368 = tpu.reciprocal %367 {approx = true} : vector<12x8x1xf32> -> vector<12x8x1xf32>
    %369 = vector.broadcast %368 : vector<12x8x1xf32> to vector<12x8x8xf32>
    %370 = arith.mulf %365, %369 : vector<12x8x8xf32>
    %371 = arith.truncf %370 : vector<12x8x8xf32> to vector<12x8x8xbf16>
    "tpu.trace_start"() <{level = 10 : i32, message = "nqk,nkd->nqd"}> : () -> ()
    %cst_90 = arith.constant dense<0.000000e+00> : vector<12x8x32xf32>
    %372 = tpu.matmul %371, %350, %cst_90 {dimension_numbers = #tpu.dot_dimension_numbers<[2], [1], [1], [2], [0, 0, 0, 1, 1, 2], [0], [0]>} : vector<12x8x8xbf16>, vector<12x8x32xbf16>, vector<12x8x32xf32> -> vector<12x8x32xf32>
    "tpu.trace_stop"() : () -> ()
    %373 = vector.broadcast %353 : vector<1x1x32xf32> to vector<12x8x32xf32>
    %374 = arith.mulf %372, %373 : vector<12x8x32xf32>
    %375 = arith.addf %351, %374 : vector<12x8x32xf32>
    %376 = vector.extract_strided_slice %2 {offsets = [1, 0], sizes = [1, 32], strides = [1, 1]} : vector<4x32xf32> to vector<1x32xf32>
    %377 = vector.shape_cast %376 : vector<1x32xf32> to vector<1x1x32xf32>
    %378 = arith.truncf %377 : vector<1x1x32xf32> to vector<1x1x32xbf16>
    %379 = vector.broadcast %378 : vector<1x1x32xbf16> to vector<12x8x32xbf16>
    %380 = arith.mulf %348, %379 : vector<12x8x32xbf16>
    "tpu.trace_start"() <{level = 10 : i32, message = "nqd,nkd->nqk"}> : () -> ()
    %cst_91 = arith.constant dense<0.000000e+00> : vector<12x8x8xf32>
    %381 = tpu.matmul %380, %349, %cst_91 {dimension_numbers = #tpu.dot_dimension_numbers<[2], [2], [1], [1], [0, 0, 0, 1, 1, 1], [0], [0]>} : vector<12x8x32xbf16>, vector<12x8x32xbf16>, vector<12x8x8xf32> -> vector<12x8x8xf32>
    "tpu.trace_stop"() : () -> ()
    %382 = vector.shape_cast %301 : vector<8x8xf32> to vector<1x8x8xf32>
    %383 = vector.broadcast %382 : vector<1x8x8xf32> to vector<12x8x8xf32>
    %384 = arith.addf %381, %383 : vector<12x8x8xf32>
    %cst_92 = arith.constant dense<0xFF800000> : vector<12x8xf32>
    %385 = vector.multi_reduction <maximumf>, %384, %cst_92 [2] : vector<12x8x8xf32> to vector<12x8xf32>
    %386 = vector.shape_cast %385 : vector<12x8xf32> to vector<12x8x1xf32>
    %387 = vector.broadcast %386 : vector<12x8x1xf32> to vector<12x8x8xf32>
    %388 = arith.subf %384, %387 : vector<12x8x8xf32>
    %389 = math.exp %388 : vector<12x8x8xf32>
    %cst_93 = arith.constant dense<0.000000e+00> : vector<12x8xf32>
    %390 = vector.multi_reduction <add>, %389, %cst_93 [2] : vector<12x8x8xf32> to vector<12x8xf32>
    %391 = vector.shape_cast %390 : vector<12x8xf32> to vector<12x8x1xf32>
    %392 = tpu.reciprocal %391 {approx = true} : vector<12x8x1xf32> -> vector<12x8x1xf32>
    %393 = vector.broadcast %392 : vector<12x8x1xf32> to vector<12x8x8xf32>
    %394 = arith.mulf %389, %393 : vector<12x8x8xf32>
    %395 = arith.truncf %394 : vector<12x8x8xf32> to vector<12x8x8xbf16>
    "tpu.trace_start"() <{level = 10 : i32, message = "nqk,nkd->nqd"}> : () -> ()
    %cst_94 = arith.constant dense<0.000000e+00> : vector<12x8x32xf32>
    %396 = tpu.matmul %395, %350, %cst_94 {dimension_numbers = #tpu.dot_dimension_numbers<[2], [1], [1], [2], [0, 0, 0, 1, 1, 2], [0], [0]>} : vector<12x8x8xbf16>, vector<12x8x32xbf16>, vector<12x8x32xf32> -> vector<12x8x32xf32>
    "tpu.trace_stop"() : () -> ()
    %397 = vector.broadcast %377 : vector<1x1x32xf32> to vector<12x8x32xf32>
    %398 = arith.mulf %396, %397 : vector<12x8x32xf32>
    %399 = arith.addf %375, %398 : vector<12x8x32xf32>
    %400 = vector.extract_strided_slice %2 {offsets = [2, 0], sizes = [1, 32], strides = [1, 1]} : vector<4x32xf32> to vector<1x32xf32>
    %401 = vector.shape_cast %400 : vector<1x32xf32> to vector<1x1x32xf32>
    %402 = arith.truncf %401 : vector<1x1x32xf32> to vector<1x1x32xbf16>
    %403 = vector.broadcast %402 : vector<1x1x32xbf16> to vector<12x8x32xbf16>
    %404 = arith.mulf %348, %403 : vector<12x8x32xbf16>
    "tpu.trace_start"() <{level = 10 : i32, message = "nqd,nkd->nqk"}> : () -> ()
    %cst_95 = arith.constant dense<0.000000e+00> : vector<12x8x8xf32>
    %405 = tpu.matmul %404, %349, %cst_95 {dimension_numbers = #tpu.dot_dimension_numbers<[2], [2], [1], [1], [0, 0, 0, 1, 1, 1], [0], [0]>} : vector<12x8x32xbf16>, vector<12x8x32xbf16>, vector<12x8x8xf32> -> vector<12x8x8xf32>
    "tpu.trace_stop"() : () -> ()
    %406 = vector.shape_cast %301 : vector<8x8xf32> to vector<1x8x8xf32>
    %407 = vector.broadcast %406 : vector<1x8x8xf32> to vector<12x8x8xf32>
    %408 = arith.addf %405, %407 : vector<12x8x8xf32>
    %cst_96 = arith.constant dense<0xFF800000> : vector<12x8xf32>
    %409 = vector.multi_reduction <maximumf>, %408, %cst_96 [2] : vector<12x8x8xf32> to vector<12x8xf32>
    %410 = vector.shape_cast %409 : vector<12x8xf32> to vector<12x8x1xf32>
    %411 = vector.broadcast %410 : vector<12x8x1xf32> to vector<12x8x8xf32>
    %412 = arith.subf %408, %411 : vector<12x8x8xf32>
    %413 = math.exp %412 : vector<12x8x8xf32>
    %cst_97 = arith.constant dense<0.000000e+00> : vector<12x8xf32>
    %414 = vector.multi_reduction <add>, %413, %cst_97 [2] : vector<12x8x8xf32> to vector<12x8xf32>
    %415 = vector.shape_cast %414 : vector<12x8xf32> to vector<12x8x1xf32>
    %416 = tpu.reciprocal %415 {approx = true} : vector<12x8x1xf32> -> vector<12x8x1xf32>
    %417 = vector.broadcast %416 : vector<12x8x1xf32> to vector<12x8x8xf32>
    %418 = arith.mulf %413, %417 : vector<12x8x8xf32>
    %419 = arith.truncf %418 : vector<12x8x8xf32> to vector<12x8x8xbf16>
    "tpu.trace_start"() <{level = 10 : i32, message = "nqk,nkd->nqd"}> : () -> ()
    %cst_98 = arith.constant dense<0.000000e+00> : vector<12x8x32xf32>
    %420 = tpu.matmul %419, %350, %cst_98 {dimension_numbers = #tpu.dot_dimension_numbers<[2], [1], [1], [2], [0, 0, 0, 1, 1, 2], [0], [0]>} : vector<12x8x8xbf16>, vector<12x8x32xbf16>, vector<12x8x32xf32> -> vector<12x8x32xf32>
    "tpu.trace_stop"() : () -> ()
    %421 = vector.broadcast %401 : vector<1x1x32xf32> to vector<12x8x32xf32>
    %422 = arith.mulf %420, %421 : vector<12x8x32xf32>
    %423 = arith.addf %399, %422 : vector<12x8x32xf32>
    %424 = vector.extract_strided_slice %2 {offsets = [3, 0], sizes = [1, 32], strides = [1, 1]} : vector<4x32xf32> to vector<1x32xf32>
    %425 = vector.shape_cast %424 : vector<1x32xf32> to vector<1x1x32xf32>
    %426 = arith.truncf %425 : vector<1x1x32xf32> to vector<1x1x32xbf16>
    %427 = vector.broadcast %426 : vector<1x1x32xbf16> to vector<12x8x32xbf16>
    %428 = arith.mulf %348, %427 : vector<12x8x32xbf16>
    "tpu.trace_start"() <{level = 10 : i32, message = "nqd,nkd->nqk"}> : () -> ()
    %cst_99 = arith.constant dense<0.000000e+00> : vector<12x8x8xf32>
    %429 = tpu.matmul %428, %349, %cst_99 {dimension_numbers = #tpu.dot_dimension_numbers<[2], [2], [1], [1], [0, 0, 0, 1, 1, 1], [0], [0]>} : vector<12x8x32xbf16>, vector<12x8x32xbf16>, vector<12x8x8xf32> -> vector<12x8x8xf32>
    "tpu.trace_stop"() : () -> ()
    %430 = vector.shape_cast %301 : vector<8x8xf32> to vector<1x8x8xf32>
    %431 = vector.broadcast %430 : vector<1x8x8xf32> to vector<12x8x8xf32>
    %432 = arith.addf %429, %431 : vector<12x8x8xf32>
    %cst_100 = arith.constant dense<0xFF800000> : vector<12x8xf32>
    %433 = vector.multi_reduction <maximumf>, %432, %cst_100 [2] : vector<12x8x8xf32> to vector<12x8xf32>
    %434 = vector.shape_cast %433 : vector<12x8xf32> to vector<12x8x1xf32>
    %435 = vector.broadcast %434 : vector<12x8x1xf32> to vector<12x8x8xf32>
    %436 = arith.subf %432, %435 : vector<12x8x8xf32>
    %437 = math.exp %436 : vector<12x8x8xf32>
    %cst_101 = arith.constant dense<0.000000e+00> : vector<12x8xf32>
    %438 = vector.multi_reduction <add>, %437, %cst_101 [2] : vector<12x8x8xf32> to vector<12x8xf32>
    %439 = vector.shape_cast %438 : vector<12x8xf32> to vector<12x8x1xf32>
    %440 = tpu.reciprocal %439 {approx = true} : vector<12x8x1xf32> -> vector<12x8x1xf32>
    %441 = vector.broadcast %440 : vector<12x8x1xf32> to vector<12x8x8xf32>
    %442 = arith.mulf %437, %441 : vector<12x8x8xf32>
    %443 = arith.truncf %442 : vector<12x8x8xf32> to vector<12x8x8xbf16>
    "tpu.trace_start"() <{level = 10 : i32, message = "nqk,nkd->nqd"}> : () -> ()
    %cst_102 = arith.constant dense<0.000000e+00> : vector<12x8x32xf32>
    %444 = tpu.matmul %443, %350, %cst_102 {dimension_numbers = #tpu.dot_dimension_numbers<[2], [1], [1], [2], [0, 0, 0, 1, 1, 2], [0], [0]>} : vector<12x8x8xbf16>, vector<12x8x32xbf16>, vector<12x8x32xf32> -> vector<12x8x32xf32>
    "tpu.trace_stop"() : () -> ()
    %445 = vector.broadcast %425 : vector<1x1x32xf32> to vector<12x8x32xf32>
    %446 = arith.mulf %444, %445 : vector<12x8x32xf32>
    %447 = arith.addf %423, %446 : vector<12x8x32xf32>
    %448 = vector.shape_cast %447 : vector<12x8x32xf32> to vector<96x32xf32>
    %449 = arith.truncf %448 : vector<96x32xf32> to vector<96x32xbf16>
    %c576 = arith.constant 576 : index
    %c0_103 = arith.constant 0 : index
    %450 = vector.load %arg1[%c576, %c0_103] : memref<832x32xbf16, #tpu.memory_space<vmem>>, vector<32x32xbf16>
    %cst_104 = arith.constant dense<0.000000e+00> : vector<96x32xf32>
    %451 = tpu.matmul %449, %450, %cst_104 {dimension_numbers = #tpu.dot_dimension_numbers<[1], [0], [0], [1], [0, 0, 1, 1], [], []>} : vector<96x32xbf16>, vector<32x32xbf16>, vector<96x32xf32> -> vector<96x32xf32>
    %452 = vector.extract_strided_slice %0 {offsets = [18, 0], sizes = [1, 32], strides = [1, 1]} : vector<46x32xf32> to vector<1x32xf32>
    %453 = vector.broadcast %452 : vector<1x32xf32> to vector<96x32xf32>
    %454 = arith.addf %451, %453 : vector<96x32xf32>
    %455 = vector.shape_cast %454 : vector<96x32xf32> to vector<12x8x32xf32>
    %456 = arith.addf %300, %455 : vector<12x8x32xf32>
    %457 = vector.extract_strided_slice %0 {offsets = [19, 0], sizes = [1, 32], strides = [1, 1]} : vector<46x32xf32> to vector<1x32xf32>
    %458 = vector.extract_strided_slice %0 {offsets = [20, 0], sizes = [1, 32], strides = [1, 1]} : vector<46x32xf32> to vector<1x32xf32>
    %cst_105 = arith.constant dense<0.000000e+00> : vector<12x8xf32>
    %459 = vector.multi_reduction <add>, %456, %cst_105 [2] : vector<12x8x32xf32> to vector<12x8xf32>
    %460 = vector.shape_cast %459 : vector<12x8xf32> to vector<12x8x1xf32>
    %cst_106 = arith.constant 3.200000e+01 : f32
    %461 = vector.broadcast %cst_106 : f32 to vector<12x8x1xf32>
    %462 = arith.divf %460, %461 : vector<12x8x1xf32>
    %463 = vector.broadcast %462 : vector<12x8x1xf32> to vector<12x8x32xf32>
    %464 = arith.subf %456, %463 : vector<12x8x32xf32>
    %465 = arith.mulf %464, %464 : vector<12x8x32xf32>
    %cst_107 = arith.constant dense<0.000000e+00> : vector<12x8xf32>
    %466 = vector.multi_reduction <add>, %465, %cst_107 [2] : vector<12x8x32xf32> to vector<12x8xf32>
    %467 = vector.shape_cast %466 : vector<12x8xf32> to vector<12x8x1xf32>
    %cst_108 = arith.constant 3.200000e+01 : f32
    %468 = vector.broadcast %cst_108 : f32 to vector<12x8x1xf32>
    %469 = arith.divf %467, %468 : vector<12x8x1xf32>
    %cst_109 = arith.constant 9.99999974E-6 : f32
    %470 = vector.broadcast %cst_109 : f32 to vector<12x8x1xf32>
    %471 = arith.addf %469, %470 : vector<12x8x1xf32>
    %472 = math.rsqrt %471 : vector<12x8x1xf32>
    %473 = vector.broadcast %472 : vector<12x8x1xf32> to vector<12x8x32xf32>
    %474 = arith.mulf %464, %473 : vector<12x8x32xf32>
    %475 = vector.shape_cast %457 : vector<1x32xf32> to vector<1x1x32xf32>
    %476 = vector.broadcast %475 : vector<1x1x32xf32> to vector<12x8x32xf32>
    %477 = arith.mulf %474, %476 : vector<12x8x32xf32>
    %478 = vector.shape_cast %458 : vector<1x32xf32> to vector<1x1x32xf32>
    %479 = vector.broadcast %478 : vector<1x1x32xf32> to vector<12x8x32xf32>
    %480 = arith.addf %477, %479 : vector<12x8x32xf32>
    %481 = vector.shape_cast %480 : vector<12x8x32xf32> to vector<96x32xf32>
    %482 = arith.truncf %481 : vector<96x32xf32> to vector<96x32xbf16>
    %c32 = arith.constant 32 : index
    %c0_110 = arith.constant 0 : index
    %483 = vector.load %arg2[%c32, %c0_110] : memref<64x128xbf16, #tpu.memory_space<vmem>>, vector<32x128xbf16>
    %cst_111 = arith.constant dense<0.000000e+00> : vector<96x128xf32>
    %484 = tpu.matmul %482, %483, %cst_111 {dimension_numbers = #tpu.dot_dimension_numbers<[1], [0], [0], [1], [0, 0, 1, 1], [], []>} : vector<96x32xbf16>, vector<32x128xbf16>, vector<96x128xf32> -> vector<96x128xf32>
    %c1 = arith.constant 1 : index
    %c0_112 = arith.constant 0 : index
    %485 = vector.load %arg4[%c1, %c0_112] : memref<2x128xf32, #tpu.memory_space<vmem>>, vector<1x128xf32>
    %486 = vector.broadcast %485 : vector<1x128xf32> to vector<96x128xf32>
    %487 = arith.addf %484, %486 : vector<96x128xf32>
    %cst_113 = arith.constant 1.702000e+00 : f32
    %488 = vector.broadcast %cst_113 : f32 to vector<96x128xf32>
    %489 = arith.mulf %488, %487 : vector<96x128xf32>
    %490 = arith.negf %489 : vector<96x128xf32>
    %491 = math.exp %490 : vector<96x128xf32>
    %cst_114 = arith.constant 1.000000e+00 : f32
    %492 = vector.broadcast %cst_114 : f32 to vector<96x128xf32>
    %493 = arith.addf %492, %491 : vector<96x128xf32>
    %494 = arith.divf %492, %493 : vector<96x128xf32>
    %495 = arith.mulf %487, %494 : vector<96x128xf32>
    %496 = arith.truncf %495 : vector<96x128xf32> to vector<96x128xbf16>
    %c608 = arith.constant 608 : index
    %c0_115 = arith.constant 0 : index
    %497 = vector.load %arg1[%c608, %c0_115] : memref<832x32xbf16, #tpu.memory_space<vmem>>, vector<128x32xbf16>
    %cst_116 = arith.constant dense<0.000000e+00> : vector<96x32xf32>
    %498 = tpu.matmul %496, %497, %cst_116 {dimension_numbers = #tpu.dot_dimension_numbers<[1], [0], [0], [1], [0, 0, 1, 1], [], []>} : vector<96x128xbf16>, vector<128x32xbf16>, vector<96x32xf32> -> vector<96x32xf32>
    %499 = vector.extract_strided_slice %0 {offsets = [21, 0], sizes = [1, 32], strides = [1, 1]} : vector<46x32xf32> to vector<1x32xf32>
    %500 = vector.broadcast %499 : vector<1x32xf32> to vector<96x32xf32>
    %501 = arith.addf %498, %500 : vector<96x32xf32>
    %502 = vector.shape_cast %501 : vector<96x32xf32> to vector<12x8x32xf32>
    %503 = arith.addf %456, %502 : vector<12x8x32xf32>
    %504 = vector.extract_strided_slice %0 {offsets = [22, 0], sizes = [1, 32], strides = [1, 1]} : vector<46x32xf32> to vector<1x32xf32>
    %505 = vector.extract_strided_slice %0 {offsets = [23, 0], sizes = [1, 32], strides = [1, 1]} : vector<46x32xf32> to vector<1x32xf32>
    %cst_117 = arith.constant dense<0.000000e+00> : vector<12x8xf32>
    %506 = vector.multi_reduction <add>, %503, %cst_117 [2] : vector<12x8x32xf32> to vector<12x8xf32>
    %507 = vector.shape_cast %506 : vector<12x8xf32> to vector<12x8x1xf32>
    %cst_118 = arith.constant 3.200000e+01 : f32
    %508 = vector.broadcast %cst_118 : f32 to vector<12x8x1xf32>
    %509 = arith.divf %507, %508 : vector<12x8x1xf32>
    %510 = vector.broadcast %509 : vector<12x8x1xf32> to vector<12x8x32xf32>
    %511 = arith.subf %503, %510 : vector<12x8x32xf32>
    %512 = arith.mulf %511, %511 : vector<12x8x32xf32>
    %cst_119 = arith.constant dense<0.000000e+00> : vector<12x8xf32>
    %513 = vector.multi_reduction <add>, %512, %cst_119 [2] : vector<12x8x32xf32> to vector<12x8xf32>
    %514 = vector.shape_cast %513 : vector<12x8xf32> to vector<12x8x1xf32>
    %cst_120 = arith.constant 3.200000e+01 : f32
    %515 = vector.broadcast %cst_120 : f32 to vector<12x8x1xf32>
    %516 = arith.divf %514, %515 : vector<12x8x1xf32>
    %cst_121 = arith.constant 9.99999974E-6 : f32
    %517 = vector.broadcast %cst_121 : f32 to vector<12x8x1xf32>
    %518 = arith.addf %516, %517 : vector<12x8x1xf32>
    %519 = math.rsqrt %518 : vector<12x8x1xf32>
    %520 = vector.broadcast %519 : vector<12x8x1xf32> to vector<12x8x32xf32>
    %521 = arith.mulf %511, %520 : vector<12x8x32xf32>
    %522 = vector.shape_cast %504 : vector<1x32xf32> to vector<1x1x32xf32>
    %523 = vector.broadcast %522 : vector<1x1x32xf32> to vector<12x8x32xf32>
    %524 = arith.mulf %521, %523 : vector<12x8x32xf32>
    %525 = vector.shape_cast %505 : vector<1x32xf32> to vector<1x1x32xf32>
    %526 = vector.broadcast %525 : vector<1x1x32xf32> to vector<12x8x32xf32>
    %527 = arith.addf %524, %526 : vector<12x8x32xf32>
    %528 = vector.extract_strided_slice %1 {offsets = [16, 0], sizes = [12, 8], strides = [1, 1]} : vector<28x8xf32> to vector<12x8xf32>
    %529 = vector.shape_cast %528 : vector<12x8xf32> to vector<12x8x1xf32>
    %530 = vector.broadcast %529 : vector<12x8x1xf32> to vector<12x8x32xf32>
    %531 = arith.mulf %527, %530 : vector<12x8x32xf32>
    %cst_122 = arith.constant dense<0.000000e+00> : vector<12x32xf32>
    %532 = vector.multi_reduction <add>, %531, %cst_122 [1] : vector<12x8x32xf32> to vector<12x32xf32>
    %533 = arith.truncf %532 : vector<12x32xf32> to vector<12x32xbf16>
    %c736 = arith.constant 736 : index
    %c0_123 = arith.constant 0 : index
    %534 = vector.load %arg1[%c736, %c0_123] : memref<832x32xbf16, #tpu.memory_space<vmem>>, vector<32x32xbf16>
    %cst_124 = arith.constant dense<0.000000e+00> : vector<12x32xf32>
    %535 = tpu.matmul %533, %534, %cst_124 {dimension_numbers = #tpu.dot_dimension_numbers<[1], [0], [0], [1], [0, 0, 1, 1], [], []>} : vector<12x32xbf16>, vector<32x32xbf16>, vector<12x32xf32> -> vector<12x32xf32>
    %536 = arith.mulf %535, %535 : vector<12x32xf32>
    %cst_125 = arith.constant dense<0.000000e+00> : vector<12xf32>
    %537 = vector.multi_reduction <add>, %536, %cst_125 [1] : vector<12x32xf32> to vector<12xf32>
    %538 = vector.shape_cast %537 : vector<12xf32> to vector<12x1xf32>
    %cst_126 = arith.constant 9.99999996E-13 : f32
    %539 = vector.broadcast %cst_126 : f32 to vector<12x1xf32>
    %540 = arith.addf %538, %539 : vector<12x1xf32>
    %541 = math.rsqrt %540 : vector<12x1xf32>
    %542 = vector.broadcast %541 : vector<12x1xf32> to vector<12x32xf32>
    %543 = arith.mulf %535, %542 : vector<12x32xf32>
    %544 = vector.shape_cast %543 : vector<12x32xf32> to vector<2x6x32xf32>
    %c0_127 = arith.constant 0 : index
    %c0_128 = arith.constant 0 : index
    %545 = memref.load %arg7[%c0_127, %c0_128] : memref<1x1xf32, #tpu.memory_space<smem>>
    %546 = vector.shape_cast %273 : vector<2x32xf32> to vector<2x1x32xf32>
    %547 = vector.broadcast %546 : vector<2x1x32xf32> to vector<2x6x32xf32>
    %548 = arith.mulf %547, %544 : vector<2x6x32xf32>
    %cst_129 = arith.constant dense<0.000000e+00> : vector<2x6xf32>
    %549 = vector.multi_reduction <add>, %548, %cst_129 [2] : vector<2x6x32xf32> to vector<2x6xf32>
    %550 = vector.broadcast %545 : f32 to vector<2x6xf32>
    %551 = arith.mulf %550, %549 : vector<2x6xf32>
    %c0_130 = arith.constant 0 : index
    %c0_131 = arith.constant 0 : index
    %552 = vector.load %arg8[%c0_130, %c0_131] : memref<2x6xf32, #tpu.memory_space<vmem>>, vector<2x6xf32>
    tpu.vector_store %arg8[%c0_130, %c0_131], %551 {strides = array<i32>} : memref<2x6xf32, #tpu.memory_space<vmem>>, vector<2x6xf32>,
    return
  }
}

</mosaic_0001>

<llo_original>
// kernel: tile.9
$region0: #{tile.9}
  %s0 = inlined_call_operand.vmem [shape: f32[2,6,8], index: 0, kind: input, shape index: {}]
  %s1 = inlined_call_operand.vmem [shape: f32[12,8], index: 1, kind: output, shape index: {}]
  $region1: #{tile.9} parent=0
    #allocation0 [shape = 'u8[32768]{0}', space=vmem, size = 0x8000, scoped, tag = 'scoped mem for input reshape']
    %s3 = sshll.u32 1, 2
    %s4 = ssub.s32 %s3, 1
    %s5 = smul.addr 2, 7
    %s6 = scalar_lea.vmem %s0, %s5
    %v7 = vld [vmem:[%s6] sm:%s4]
    %s8 = scalar_lea.vmem [#allocation0], 56
    %9 = vst [vmem:[%s8] sm:%s4] %v7
    %s10 = smul.addr 2, 6
    %s11 = scalar_lea.vmem %s0, %s10
    %v12 = vld [vmem:[%s11] sm:%s4]
    %s13 = scalar_lea.vmem [#allocation0], 48
    %14 = vst [vmem:[%s13] sm:%s4] %v12
    %s15 = smul.addr 2, 5
    %s16 = scalar_lea.vmem %s0, %s15
    %v17 = vld [vmem:[%s16] sm:%s4]
    %s18 = scalar_lea.vmem [#allocation0], 40
    %19 = vst [vmem:[%s18] sm:%s4] %v17
    %s20 = smul.addr 2, 4
    %s21 = scalar_lea.vmem %s0, %s20
    %v22 = vld [vmem:[%s21] sm:%s4]
    %s23 = scalar_lea.vmem [#allocation0], 32
    %24 = vst [vmem:[%s23] sm:%s4] %v22
    %s25 = smul.addr 2, 3
    %s26 = scalar_lea.vmem %s0, %s25
    %v27 = vld [vmem:[%s26] sm:%s4]
    %s28 = scalar_lea.vmem [#allocation0], 24
    %29 = vst [vmem:[%s28] sm:%s4] %v27
    %s30 = smul.addr 2, 2
    %s31 = scalar_lea.vmem %s0, %s30
    %v32 = vld [vmem:[%s31] sm:%s4]
    %s33 = scalar_lea.vmem [#allocation0], 16
    %34 = vst [vmem:[%s33] sm:%s4] %v32
    %s35 = scalar_lea.vmem %s0, 2
    %v36 = vld [vmem:[%s35] sm:%s4]
    %s37 = scalar_lea.vmem [#allocation0], 8
    %38 = vst [vmem:[%s37] sm:%s4] %v36
    %v39 = vld [vmem:[%s0] sm:%s4]
    %40 = vst [vmem:[#allocation0] sm:%s4] %v39
    %v41 = vld [vmem:[#allocation0] ss:$8 sm:$0xf]
    %v42 = vld [vmem:[#allocation0] ss:$8 sm:$0xf0]
    %vm43 = vcmask 1047556
    %v44 = vsel %vm43, %v42, %v41
    %vm45 = vcmask 48128
    %46 = vst.msk [vmem:[%s1] sm:$0xff] %vm45, %v44
    %s47 = scalar_lea.vmem [#allocation0], 1
    %v48 = vld [vmem:[%s47] ss:$8 sm:$0xf]
    %s49 = scalar_lea.vmem [#allocation0], 1
    %v50 = vld [vmem:[%s49] ss:$8 sm:$0xf0]
    %vm51 = vcmask 1047556
    %v52 = vsel %vm51, %v50, %v48
    %53 = vrot.lane.b32.xlu0 %v52, 6
    %v54 = vpop.permute.xlu0 %53
    %vm55 = vcmask 97328
    %56 = vst.msk [vmem:[%s1] sm:$0xff] %vm55, %v54

// kernel: custom_clip_forward.1
$region0: #{custom_clip_forward.1}
  #allocation0 [shape = 'u32[]', space=smem, size = 0x4, offset = 0x4, fixed_abs, tag = 'smem constant byte address 0x4 - core index']
  #allocation1 [shape = 'u32[144,128]{1,0:T(1,128)}', space=vmem, size = 0x12000, scoped, tag = 'internal scratch']
  #allocation2 [shape = 'f32[1,1]{1,0:T(1,128)S(6)}', space=smem, size = 0x200, scoped, tag = 'scoped memory for custom_clip_forward.1']
  %s0 = inlined_call_operand.vmem [shape: f32[16,192], index: 0, kind: input, shape index: {}]
  %s1 = inlined_call_operand.vmem [shape: bf16[832,32], index: 1, kind: input, shape index: {}]
  %s2 = inlined_call_operand.vmem [shape: bf16[64,128], index: 2, kind: input, shape index: {}]
  %s3 = inlined_call_operand.vmem [shape: f32[46,32], index: 3, kind: input, shape index: {}]
  %s4 = inlined_call_operand.vmem [shape: f32[2,128], index: 4, kind: input, shape index: {}]
  %s5 = inlined_call_operand.vmem [shape: f32[6,8,32], index: 5, kind: input, shape index: {}]
  %s6 = inlined_call_operand.vmem [shape: f32[28,8], index: 6, kind: input, shape index: {}]
  %s7 = inlined_call_operand.<no memory space> [shape: f32[1,1], index: 7, kind: input, shape index: {}]
  %s8 = inlined_call_operand.hbm [shape: f32[2,6], index: 8, kind: output, shape index: {}]
  %s9 = sld [smem:[#allocation0]]
  $region42: #{custom_clip_forward.1} parent=0
    _
  %s11 = ssub.s32 1, %s9
  %s12 = scalar_select 0, %s11, %s9
  %13 = sst [smem:[#allocation2]] %s7
  $region1: #{custom_clip_forward.1} parent=0
    #allocation3 [shape = 'u8[1024]{0}', space=vmem, size = 0x400, scoped, tag = 'output window, operand 0, single buffered']
    #allocation4 [shape = 's32[1]{0}', space=sflag, size = 0x4, scoped, tag = 'scoped memory for custom_clip_forward.1']
    %14 = vsyncpa [#allocation4], 0
    // Predicated region
    $region2: #{custom_clip_forward.1} parent=1 // pred_check
      _
    $region3: #{custom_clip_forward.1} parent=1 // pred_check_branch
      %16 = sbr.rel (0) target = $region5
    $region4: #{custom_clip_forward.1} parent=1 // pred_region
      _
    $region5: #{custom_clip_forward.1} parent=1 // pred_fallthru
      _
    // Predicated region
    $region6: #{custom_clip_forward.1} parent=1 // pred_check
      _
    $region7: #{custom_clip_forward.1} parent=1 // pred_check_branch
      %18 = sbr.rel (0) target = $region9
    $region8: #{custom_clip_forward.1} parent=1 // pred_region
      _
    $region9: #{custom_clip_forward.1} parent=1 // pred_fallthru
      _
    // Predicated region
    $region10: #{custom_clip_forward.1} parent=1 // pred_check
      _
    $region11: #{custom_clip_forward.1} parent=1 // pred_check_branch
      %20 = sbr.rel (0) target = $region13
    $region12: #{custom_clip_forward.1} parent=1 // pred_region
      _
    $region13: #{custom_clip_forward.1} parent=1 // pred_fallthru
      _
    // Predicated region
    $region14: #{custom_clip_forward.1} parent=1 // pred_check
      _
    $region15: #{custom_clip_forward.1} parent=1 // pred_check_branch
      %22 = sbr.rel (0) target = $region17
    $region16: #{custom_clip_forward.1} parent=1 // pred_region
      _
    $region17: #{custom_clip_forward.1} parent=1 // pred_fallthru
      _
    // Predicated region
    $region18: #{custom_clip_forward.1} parent=1 // pred_check
      _
    $region19: #{custom_clip_forward.1} parent=1 // pred_check_branch
      %24 = sbr.rel (0) target = $region21
    $region20: #{custom_clip_forward.1} parent=1 // pred_region
      _
    $region21: #{custom_clip_forward.1} parent=1 // pred_fallthru
      _
    // Predicated region
    $region22: #{custom_clip_forward.1} parent=1 // pred_check
      _
    $region23: #{custom_clip_forward.1} parent=1 // pred_check_branch
      %26 = sbr.rel (0) target = $region25
    $region24: #{custom_clip_forward.1} parent=1 // pred_region
      _
    $region25: #{custom_clip_forward.1} parent=1 // pred_fallthru
      _
    // Predicated region
    $region26: #{custom_clip_forward.1} parent=1 // pred_check
      _
    $region27: #{custom_clip_forward.1} parent=1 // pred_check_branch
      %28 = sbr.rel (0) target = $region29
    $region28: #{custom_clip_forward.1} parent=1 // pred_region
      _
    $region29: #{custom_clip_forward.1} parent=1 // pred_fallthru
      _
    // Predicated region
    $region30: #{custom_clip_forward.1} parent=1 // pred_check
      _
    $region31: #{custom_clip_forward.1} parent=1 // pred_check_branch
      %30 = sbr.rel (0) target = $region33
    $region32: #{custom_clip_forward.1} parent=1 // pred_region
      _
    $region33: #{custom_clip_forward.1} parent=1 // pred_fallthru
      _
    %v32 = vld [vmem:[%s3] sm:$0xff]
    %v33 = vld [vmem:[%s3 + $0x8] sm:$0xff]
    %v34 = vld [vmem:[%s3 + $0x10] sm:$0xff]
    %v35 = vld [vmem:[%s3 + $0x18] sm:$0xff]
    %v36 = vld [vmem:[%s3 + $0x20] sm:$0xff]
    %v37 = vld [vmem:[%s3 + $0x28] sm:$0x3f]
    %v38 = vld [vmem:[%s6] sm:$0xff]
    %v39 = vld [vmem:[%s6 + $0x8] sm:$0xff]
    %v40 = vld [vmem:[%s6 + $0x10] sm:$0xff]
    %v41 = vld [vmem:[%s6 + $0x18] sm:$0xf]
    %v42 = vld [vmem:[%s0] sm:$0xff]
    %v43 = vld [vmem:[%s0 + $0x8] sm:$0xff]
    %v44 = vld [vmem:[%s0 + $0x10] sm:$0xff]
    %v45 = vld [vmem:[%s0 + $0x18] sm:$0xff]
    %v46 = vpack.c.bf16 %v44, %v42
    %v47 = vpack.c.bf16 %v45, %v43
    %v48 = vld [vmem:[%s1] sm:$0xf]
    %v49 = vld [vmem:[%s1 + $0x4] sm:$0xf]
    %v50 = vld [vmem:[%s1 + $0x8] sm:$0xf]
    %v51 = vld [vmem:[%s1 + $0xc] sm:$0xf]
    %v52 = vld [vmem:[%s1 + $0x10] sm:$0xf]
    %v53 = vld [vmem:[%s1 + $0x14] sm:$0xf]
    %v54 = vld [vmem:[%s1 + $0x18] sm:$0xf]
    %v55 = vld [vmem:[%s1 + $0x1c] sm:$0xf]
    %v56 = vld [vmem:[%s1 + $0x20] sm:$0xf]
    %v57 = vld [vmem:[%s1 + $0x24] sm:$0xf]
    %v58 = vld [vmem:[%s1 + $0x28] sm:$0xf]
    %v59 = vld [vmem:[%s1 + $0x2c] sm:$0xf]
    %v60 = vld [vmem:[%s1 + $0x30] sm:$0xf]
    %v61 = vld [vmem:[%s1 + $0x34] sm:$0xf]
    %v62 = vld [vmem:[%s1 + $0x38] sm:$0xf]
    %v63 = vld [vmem:[%s1 + $0x3c] sm:$0xf]
    %v64 = vld [vmem:[%s1 + $0x40] sm:$0xf]
    %v65 = vld [vmem:[%s1 + $0x44] sm:$0xf]
    %v66 = vld [vmem:[%s1 + $0x48] sm:$0xf]
    %v67 = vld [vmem:[%s1 + $0x4c] sm:$0xf]
    %v68 = vld [vmem:[%s1 + $0x50] sm:$0xf]
    %v69 = vld [vmem:[%s1 + $0x54] sm:$0xf]
    %v70 = vld [vmem:[%s1 + $0x58] sm:$0xf]
    %v71 = vld [vmem:[%s1 + $0x5c] sm:$0xf]
    %v96 = vunpack.c.l.b16 %v48
    %v97 = vunpack.c.l.b16 %v49
    %v98 = vunpack.c.l.b16 %v50
    %v99 = vunpack.c.l.b16 %v51
    %v100 = vunpack.c.l.b16 %v52
    %v101 = vunpack.c.l.b16 %v53
    %v102 = vunpack.c.l.b16 %v54
    %v103 = vunpack.c.l.b16 %v55
    %v104 = vunpack.c.l.b16 %v56
    %v105 = vunpack.c.l.b16 %v57
    %v106 = vunpack.c.l.b16 %v58
    %v107 = vunpack.c.l.b16 %v59
    %v108 = vunpack.c.l.b16 %v60
    %v109 = vunpack.c.l.b16 %v61
    %v110 = vunpack.c.l.b16 %v62
    %v111 = vunpack.c.l.b16 %v63
    %v112 = vunpack.c.l.b16 %v64
    %v113 = vunpack.c.l.b16 %v65
    %v114 = vunpack.c.l.b16 %v66
    %v115 = vunpack.c.l.b16 %v67
    %v116 = vunpack.c.l.b16 %v68
    %v117 = vunpack.c.l.b16 %v69
    %v118 = vunpack.c.l.b16 %v70
    %v119 = vunpack.c.l.b16 %v71
    %v120 = vpack.c.b16 %v97, %v96
    %v121 = vpack.c.b16 %v99, %v98
    %v122 = vpack.c.b16 %v101, %v100
    %v123 = vpack.c.b16 %v103, %v102
    %v124 = vpack.c.b16 %v105, %v104
    %v125 = vpack.c.b16 %v107, %v106
    %v126 = vpack.c.b16 %v109, %v108
    %v127 = vpack.c.b16 %v111, %v110
    %v128 = vpack.c.b16 %v113, %v112
    %v129 = vpack.c.b16 %v115, %v114
    %v130 = vpack.c.b16 %v117, %v116
    %v131 = vpack.c.b16 %v119, %v118
    %vm144 = vcmask 523264
    %v146 = vsel %vm144, %v47, 0
    %148 = vmatprep.subr.bf16.mxu0 0
    %149 = vmatpush1.bf16.msra.mxu0 %v127
    %150 = vmatprep.subr.bf16.mxu0 0
    %151 = vmatpush1.bf16.msra.mxu0 %v126
    %152 = vmatprep.subr.bf16.mxu0 0
    %153 = vmatpush1.bf16.msra.mxu0 %v125
    %154 = vmatprep.subr.bf16.mxu0 0
    %155 = vmatpush1.bf16.msra.mxu0 %v124
    %156 = vmatprep.subr.bf16.mxu0 0
    %157 = vmatpush1.bf16.msra.mxu0 %v123
    %158 = vmatprep.subr.bf16.mxu0 0
    %159 = vmatpush1.bf16.msra.mxu0 %v122
    %160 = vmatprep.subr.bf16.mxu0 0
    %161 = vmatpush1.bf16.msra.mxu0 %v121
    %162 = vmatprep.subr.bf16.mxu0 0
    %163 = vmatpush1.bf16.msra.mxu0 %v120
    %164 = vmatprep.subr.bf16.mxu0 0
    %165 = vmatpush2.bf16.msra.mxu0 0
    %166 = vmatprep.subr.bf16.mxu0 0
    %167 = vmatpush2.bf16.msra.mxu0 0
    %168 = vmatprep.subr.bf16.mxu0 0
    %169 = vmatpush2.bf16.msra.mxu0 0
    %170 = vmatprep.subr.bf16.mxu0 0
    %171 = vmatpush2.bf16.msra.mxu0 0
    %172 = vmatprep.subr.bf16.mxu0 0
    %173 = vmatpush2.bf16.msra.mxu0 %v131
    %174 = vmatprep.subr.bf16.mxu0 0
    %175 = vmatpush2.bf16.msra.mxu0 %v130
    %176 = vmatprep.subr.bf16.mxu0 0
    %177 = vmatpush2.bf16.msra.mxu0 %v129
    %178 = vmatprep.subr.bf16.mxu0 0
    %179 = vmatpush2.bf16.msra.mxu0 %v128
    %180 = vmatprep.mubr.bf16.mxu0 %v146
    %181 = vmatmul.mubr.bf16.gmra.mxu0 %v46
    %v182 = vpop.f32.mrf.mxu0
    %v183 = vadd.f32 0.0, %v182
    %v184 = vpop.f32.mrf.mxu0
    %v185 = vpop.f32.mrf.mxu0
    %v186 = vadd.f32 0.0, %v185
    %v187 = vpop.f32.mrf.mxu0
    %188 = vdwg.mxu0
    %vm191 = vcmask 1041408
    %v192 = vrot.slane %v36, 6
    %v193 = vrot.slane %v37, 6
    %v194 = vsel %vm191, %v192, %v193
    %v196 = vadd.f32 %v183, %v194
    %v197 = vadd.f32 %v186, %v194
    %vm198 = vcmask 261120
    %v199 = vsel %vm198, %v196, 0.0
    %200 = vadd.xlane.f32.xlu0 %v199
    %v201 = vpop.xlane.xlu0 %200
    %v202 = vsel %vm198, %v197, 0.0
    %203 = vadd.xlane.f32.xlu0 %v202
    %v204 = vpop.xlane.xlu0 %203
    %v205 = vrcp.pop 32.0
    %v206 = vmul.f32 %v201, %v205
    %v207 = vmul.f32 %v204, %v205
    %v208 = vsub.f32 %v196, %v206
    %v209 = vsub.f32 %v197, %v207
    %v210 = vmul.f32 %v208, %v208
    %v211 = vmul.f32 %v209, %v209
    %v212 = vsel %vm198, %v210, 0.0
    %213 = vadd.xlane.f32.xlu0 %v212
    %v214 = vpop.xlane.xlu0 %213
    %v215 = vsel %vm198, %v211, 0.0
    %216 = vadd.xlane.f32.xlu0 %v215
    %v217 = vpop.xlane.xlu0 %216
    %v218 = vmul.f32 %v214, %v205
    %v219 = vmul.f32 %v217, %v205
    %v220 = vadd.f32 %v218, 1e-05
    %v221 = vadd.f32 %v219, 1e-05
    %v222 = vrsqrt.pop %v220
    %v223 = vrsqrt.pop %v221
    %v224 = vmul.f32 %v208, %v222
    %v225 = vmul.f32 %v209, %v223
    %v226 = vlaneseq
    %v227 = vshrl.u32 %v226, 7
    %v228 = vsub.s32 0, %v227
    %v229 = vrot.slane %v32, %v228
    %v230 = vmul.f32 %v224, %v229
    %v231 = vmul.f32 %v225, %v229
    %v232 = vlaneseq
    %v233 = vshrl.u32 %v232, 7
    %v234 = vsub.s32 1, %v233
    %v235 = vrot.slane %v32, %v234
    %v236 = vadd.f32 %v230, %v235
    %v237 = vadd.f32 %v231, %v235
    %v238 = vsel %vm198, %v236, 0.0
    %239 = vadd.xlane.f32.xlu0 %v238
    %v240 = vpop.xlane.xlu0 %239
    %v241 = vsel %vm198, %v237, 0.0
    %242 = vadd.xlane.f32.xlu0 %v241
    %v243 = vpop.xlane.xlu0 %242
    %v244 = vmul.f32 %v240, %v205
    %v245 = vmul.f32 %v243, %v205
    %v246 = vsub.f32 %v236, %v244
    %v247 = vsub.f32 %v237, %v245
    %v248 = vmul.f32 %v246, %v246
    %v249 = vmul.f32 %v247, %v247
    %v250 = vsel %vm198, %v248, 0.0
    %251 = vadd.xlane.f32.xlu0 %v250
    %v252 = vpop.xlane.xlu0 %251
    %v253 = vsel %vm198, %v249, 0.0
    %254 = vadd.xlane.f32.xlu0 %v253
    %v255 = vpop.xlane.xlu0 %254
    %v256 = vmul.f32 %v252, %v205
    %v257 = vmul.f32 %v255, %v205
    %v258 = vadd.f32 %v256, 1e-05
    %v259 = vadd.f32 %v257, 1e-05
    %v260 = vrsqrt.pop %v258
    %v261 = vrsqrt.pop %v259
    %v262 = vmul.f32 %v246, %v260
    %v263 = vmul.f32 %v247, %v261
    %v264 = vlaneseq
    %v265 = vshrl.u32 %v264, 7
    %v266 = vsub.s32 2, %v265
    %v267 = vrot.slane %v32, %v266
    %v268 = vmul.f32 %v262, %v267
    %v269 = vmul.f32 %v263, %v267
    %v270 = vlaneseq
    %v271 = vshrl.u32 %v270, 7
    %v272 = vsub.s32 3, %v271
    %v273 = vrot.slane %v32, %v272
    %v274 = vadd.f32 %v268, %v273
    %v275 = vadd.f32 %v269, %v273
    %v276 = vpack.c.bf16 %v275, %v274
    %v277 = vld [vmem:[%s1 + $0x60] sm:$0xf]
    %v278 = vld [vmem:[%s1 + $0x64] sm:$0xf]
    %v279 = vld [vmem:[%s1 + $0x68] sm:$0xf]
    %v280 = vld [vmem:[%s1 + $0x6c] sm:$0xf]
    %v281 = vlaneseq
    %v282 = vshrl.u32 %v281, 7
    %v283 = vsub.s32 4, %v282
    %v284 = vrot.slane %v32, %v283
    %v289 = vunpack.c.l.b16 %v277
    %v290 = vunpack.c.l.b16 %v278
    %v291 = vunpack.c.l.b16 %v279
    %v292 = vunpack.c.l.b16 %v280
    %v293 = vpack.c.b16 %v290, %v289
    %v294 = vpack.c.b16 %v292, %v291
    %v298 = vsel %vm198, %v276, 0
    %300 = vmatprep.subr.bf16.mxu0 0
    %301 = vmatpush1.bf16.msra.mxu0 0
    %302 = vmatprep.subr.bf16.mxu0 0
    %303 = vmatpush1.bf16.msra.mxu0 0
    %304 = vmatprep.subr.bf16.mxu0 0
    %305 = vmatpush1.bf16.msra.mxu0 0
    %306 = vmatprep.subr.bf16.mxu0 0
    %307 = vmatpush1.bf16.msra.mxu0 0
    %308 = vmatprep.subr.bf16.mxu0 0
    %309 = vmatpush1.bf16.msra.mxu0 0
    %310 = vmatprep.subr.bf16.mxu0 0
    %311 = vmatpush1.bf16.msra.mxu0 0
    %312 = vmatprep.subr.bf16.mxu0 0
    %313 = vmatpush1.bf16.msra.mxu0 %v294
    %314 = vmatprep.subr.bf16.mxu0 0
    %315 = vmatpush1.bf16.msra.mxu0 %v293
    %316 = vmatprep.subr.bf16.mxu0 0
    %317 = vmatpush2.bf16.msra.mxu0 0
    %318 = vmatprep.subr.bf16.mxu0 0
    %319 = vmatpush2.bf16.msra.mxu0 0
    %320 = vmatprep.subr.bf16.mxu0 0
    %321 = vmatpush2.bf16.msra.mxu0 0
    %322 = vmatprep.subr.bf16.mxu0 0
    %323 = vmatpush2.bf16.msra.mxu0 0
    %324 = vmatprep.subr.bf16.mxu0 0
    %325 = vmatpush2.bf16.msra.mxu0 0
    %326 = vmatprep.subr.bf16.mxu0 0
    %327 = vmatpush2.bf16.msra.mxu0 0
    %328 = vmatprep.subr.bf16.mxu0 0
    %329 = vmatpush2.bf16.msra.mxu0 0
    %330 = vmatprep.subr.bf16.mxu0 0
    %331 = vmatpush2.bf16.msra.mxu0 0
    %332 = vmatprep.mubr.bf16.mxu0 0
    %333 = vmatmul.mubr.bf16.gmra.mxu0 %v298
    %v334 = vpop.f32.mrf.mxu0
    %v335 = vadd.f32 %v284, %v334
    %v336 = vpop.f32.mrf.mxu0
    %v337 = vpop.f32.mrf.mxu0
    %v338 = vadd.f32 %v284, %v337
    %v339 = vpop.f32.mrf.mxu0
    %340 = vdwg.mxu0
    %v341 = vld [vmem:[%s1 + $0x70] sm:$0xf]
    %v342 = vld [vmem:[%s1 + $0x74] sm:$0xf]
    %v343 = vld [vmem:[%s1 + $0x78] sm:$0xf]
    %v344 = vld [vmem:[%s1 + $0x7c] sm:$0xf]
    %v345 = vlaneseq
    %v346 = vshrl.u32 %v345, 7
    %v347 = vsub.s32 5, %v346
    %v348 = vrot.slane %v32, %v347
    %v353 = vunpack.c.l.b16 %v341
    %v354 = vunpack.c.l.b16 %v342
    %v355 = vunpack.c.l.b16 %v343
    %v356 = vunpack.c.l.b16 %v344
    %v357 = vpack.c.b16 %v354, %v353
    %v358 = vpack.c.b16 %v356, %v355
    %361 = vmatprep.subr.bf16.mxu0 0
    %362 = vmatpush1.bf16.msra.mxu0 0
    %363 = vmatprep.subr.bf16.mxu0 0
    %364 = vmatpush1.bf16.msra.mxu0 0
    %365 = vmatprep.subr.bf16.mxu0 0
    %366 = vmatpush1.bf16.msra.mxu0 0
    %367 = vmatprep.subr.bf16.mxu0 0
    %368 = vmatpush1.bf16.msra.mxu0 0
    %369 = vmatprep.subr.bf16.mxu0 0
    %370 = vmatpush1.bf16.msra.mxu0 0
    %371 = vmatprep.subr.bf16.mxu0 0
    %372 = vmatpush1.bf16.msra.mxu0 0
    %373 = vmatprep.subr.bf16.mxu0 0
    %374 = vmatpush1.bf16.msra.mxu0 %v358
    %375 = vmatprep.subr.bf16.mxu0 0
    %376 = vmatpush1.bf16.msra.mxu0 %v357
    %377 = vmatprep.subr.bf16.mxu0 0
    %378 = vmatpush2.bf16.msra.mxu0 0
    %379 = vmatprep.subr.bf16.mxu0 0
    %380 = vmatpush2.bf16.msra.mxu0 0
    %381 = vmatprep.subr.bf16.mxu0 0
    %382 = vmatpush2.bf16.msra.mxu0 0
    %383 = vmatprep.subr.bf16.mxu0 0
    %384 = vmatpush2.bf16.msra.mxu0 0
    %385 = vmatprep.subr.bf16.mxu0 0
    %386 = vmatpush2.bf16.msra.mxu0 0
    %387 = vmatprep.subr.bf16.mxu0 0
    %388 = vmatpush2.bf16.msra.mxu0 0
    %389 = vmatprep.subr.bf16.mxu0 0
    %390 = vmatpush2.bf16.msra.mxu0 0
    %391 = vmatprep.subr.bf16.mxu0 0
    %392 = vmatpush2.bf16.msra.mxu0 0
    %393 = vmatprep.mubr.bf16.mxu0 0
    %394 = vmatmul.mubr.bf16.gmra.mxu0 %v298
    %v395 = vpop.f32.mrf.mxu0
    %v396 = vadd.f32 %v348, %v395
    %v397 = vpop.f32.mrf.mxu0
    %v398 = vpop.f32.mrf.mxu0
    %v399 = vadd.f32 %v348, %v398
    %v400 = vpop.f32.mrf.mxu0
    %401 = vdwg.mxu0
    %v402 = vld [vmem:[%s1 + $0x80] sm:$0xf]
    %v403 = vld [vmem:[%s1 + $0x84] sm:$0xf]
    %v404 = vld [vmem:[%s1 + $0x88] sm:$0xf]
    %v405 = vld [vmem:[%s1 + $0x8c] sm:$0xf]
    %v406 = vlaneseq
    %v407 = vshrl.u32 %v406, 7
    %v408 = vsub.s32 6, %v407
    %v409 = vrot.slane %v32, %v408
    %v414 = vunpack.c.l.b16 %v402
    %v415 = vunpack.c.l.b16 %v403
    %v416 = vunpack.c.l.b16 %v404
    %v417 = vunpack.c.l.b16 %v405
    %v418 = vpack.c.b16 %v415, %v414
    %v419 = vpack.c.b16 %v417, %v416
    %422 = vmatprep.subr.bf16.mxu0 0
    %423 = vmatpush1.bf16.msra.mxu0 0
    %424 = vmatprep.subr.bf16.mxu0 0
    %425 = vmatpush1.bf16.msra.mxu0 0
    %426 = vmatprep.subr.bf16.mxu0 0
    %427 = vmatpush1.bf16.msra.mxu0 0
    %428 = vmatprep.subr.bf16.mxu0 0
    %429 = vmatpush1.bf16.msra.mxu0 0
    %430 = vmatprep.subr.bf16.mxu0 0
    %431 = vmatpush1.bf16.msra.mxu0 0
    %432 = vmatprep.subr.bf16.mxu0 0
    %433 = vmatpush1.bf16.msra.mxu0 0
    %434 = vmatprep.subr.bf16.mxu0 0
    %435 = vmatpush1.bf16.msra.mxu0 %v419
    %436 = vmatprep.subr.bf16.mxu0 0
    %437 = vmatpush1.bf16.msra.mxu0 %v418
    %438 = vmatprep.subr.bf16.mxu0 0
    %439 = vmatpush2.bf16.msra.mxu0 0
    %440 = vmatprep.subr.bf16.mxu0 0
    %441 = vmatpush2.bf16.msra.mxu0 0
    %442 = vmatprep.subr.bf16.mxu0 0
    %443 = vmatpush2.bf16.msra.mxu0 0
    %444 = vmatprep.subr.bf16.mxu0 0
    %445 = vmatpush2.bf16.msra.mxu0 0
    %446 = vmatprep.subr.bf16.mxu0 0
    %447 = vmatpush2.bf16.msra.mxu0 0
    %448 = vmatprep.subr.bf16.mxu0 0
    %449 = vmatpush2.bf16.msra.mxu0 0
    %450 = vmatprep.subr.bf16.mxu0 0
    %451 = vmatpush2.bf16.msra.mxu0 0
    %452 = vmatprep.subr.bf16.mxu0 0
    %453 = vmatpush2.bf16.msra.mxu0 0
    %454 = vmatprep.mubr.bf16.mxu0 0
    %455 = vmatmul.mubr.bf16.gmra.mxu0 %v298
    %v456 = vpop.f32.mrf.mxu0
    %v457 = vadd.f32 %v409, %v456
    %v458 = vpop.f32.mrf.mxu0
    %v459 = vpop.f32.mrf.mxu0
    %v460 = vadd.f32 %v409, %v459
    %v461 = vpop.f32.mrf.mxu0
    %462 = vdwg.mxu0
    %v463 = vmul.f32 %v335, 0.35355338
    %v464 = vmul.f32 %v338, 0.35355338
    %v465 = vpack.c.bf16 %v463, %v463
    %v466 = vpack.c.bf16 %v464, %v464
    %v467 = vpack.c.bf16 %v396, %v396
    %v468 = vpack.c.bf16 %v399, %v399
    %v469 = vpack.c.bf16 %v457, %v457
    %v470 = vpack.c.bf16 %v460, %v460
    %v471 = vpack.c.bf16 %v36, %v36
    %v473 = vpack.i.b16 %v471, %v471
    %v475 = vlaneseq
    %v476 = vshrl.u32 %v475, 7
    %v477 = vsub.s32 1, %v476
    %v478 = vrot.slane %v473, %v477
    %v479 = vmul.bf16 %v465, %v478
    %v480 = vmul.bf16 %v466, %v478
    %v482 = vsel %vm198, %v479, 0
    %v485 = vsel %vm198, %v467, 0
    %487 = vmatprep.subr.bf16.mxu0 0
    %488 = vmatpush1.bf16.xpose.msra.mxu0 0
    %489 = vmatprep.subr.bf16.mxu0 0
    %490 = vmatpush1.bf16.xpose.msra.mxu0 0
    %491 = vmatprep.subr.bf16.mxu0 0
    %492 = vmatpush1.bf16.xpose.msra.mxu0 0
    %493 = vmatprep.subr.bf16.mxu0 0
    %494 = vmatpush1.bf16.xpose.msra.mxu0 0
    %495 = vmatprep.subr.bf16.mxu0 0
    %496 = vmatpush1.bf16.xpose.msra.mxu0 0
    %497 = vmatprep.subr.bf16.mxu0 0
    %498 = vmatpush1.bf16.xpose.msra.mxu0 0
    %499 = vmatprep.subr.bf16.mxu0 0
    %500 = vmatpush1.bf16.xpose.msra.mxu0 0
    %501 = vmatprep.subr.bf16.mxu0 0
    %502 = vmatpush1.bf16.xpose.msra.mxu0 %v485
    %503 = vmatprep.subr.bf16.mxu0 0
    %504 = vmatpush2.bf16.xpose.msra.mxu0 0
    %505 = vmatprep.subr.bf16.mxu0 0
    %506 = vmatpush2.bf16.xpose.msra.mxu0 0
    %507 = vmatprep.subr.bf16.mxu0 0
    %508 = vmatpush2.bf16.xpose.msra.mxu0 0
    %509 = vmatprep.subr.bf16.mxu0 0
    %510 = vmatpush2.bf16.xpose.msra.mxu0 0
    %511 = vmatprep.subr.bf16.mxu0 0
    %512 = vmatpush2.bf16.xpose.msra.mxu0 0
    %513 = vmatprep.subr.bf16.mxu0 0
    %514 = vmatpush2.bf16.xpose.msra.mxu0 0
    %515 = vmatprep.subr.bf16.mxu0 0
    %516 = vmatpush2.bf16.xpose.msra.mxu0 0
    %517 = vmatprep.subr.bf16.mxu0 0
    %518 = vmatpush2.bf16.xpose.msra.mxu0 0
    %519 = vmatprep.mubr.bf16.mxu0 0
    %520 = vmatmul.mubr.bf16.gmra.mxu0 %v482
    %v521 = vpop.f32.mrf.mxu0
    %v522 = vadd.f32 %v38, %v521
    %v523 = vpop.f32.mrf.mxu0
    %v524 = vpop.f32.mrf.mxu0
    %v525 = vpop.f32.mrf.mxu0
    %526 = vdwg.mxu0
    %v528 = vsel %vm198, %v480, 0
    %v531 = vsel %vm198, %v468, 0
    %533 = vmatprep.subr.bf16.mxu0 0
    %534 = vmatpush1.bf16.xpose.msra.mxu0 0
    %535 = vmatprep.subr.bf16.mxu0 0
    %536 = vmatpush1.bf16.xpose.msra.mxu0 0
    %537 = vmatprep.subr.bf16.mxu0 0
    %538 = vmatpush1.bf16.xpose.msra.mxu0 0
    %539 = vmatprep.subr.bf16.mxu0 0
    %540 = vmatpush1.bf16.xpose.msra.mxu0 0
    %541 = vmatprep.subr.bf16.mxu0 0
    %542 = vmatpush1.bf16.xpose.msra.mxu0 0
    %543 = vmatprep.subr.bf16.mxu0 0
    %544 = vmatpush1.bf16.xpose.msra.mxu0 0
    %545 = vmatprep.subr.bf16.mxu0 0
    %546 = vmatpush1.bf16.xpose.msra.mxu0 0
    %547 = vmatprep.subr.bf16.mxu0 0
    %548 = vmatpush1.bf16.xpose.msra.mxu0 %v531
    %549 = vmatprep.subr.bf16.mxu0 0
    %550 = vmatpush2.bf16.xpose.msra.mxu0 0
    %551 = vmatprep.subr.bf16.mxu0 0
    %552 = vmatpush2.bf16.xpose.msra.mxu0 0
    %553 = vmatprep.subr.bf16.mxu0 0
    %554 = vmatpush2.bf16.xpose.msra.mxu0 0
    %555 = vmatprep.subr.bf16.mxu0 0
    %556 = vmatpush2.bf16.xpose.msra.mxu0 0
    %557 = vmatprep.subr.bf16.mxu0 0
    %558 = vmatpush2.bf16.xpose.msra.mxu0 0
    %559 = vmatprep.subr.bf16.mxu0 0
    %560 = vmatpush2.bf16.xpose.msra.mxu0 0
    %561 = vmatprep.subr.bf16.mxu0 0
    %562 = vmatpush2.bf16.xpose.msra.mxu0 0
    %563 = vmatprep.subr.bf16.mxu0 0
    %564 = vmatpush2.bf16.xpose.msra.mxu0 0
    %565 = vmatprep.mubr.bf16.mxu0 0
    %566 = vmatmul.mubr.bf16.gmra.mxu0 %v528
    %v567 = vpop.f32.mrf.mxu0
    %v568 = vadd.f32 %v38, %v567
    %v569 = vpop.f32.mrf.mxu0
    %v570 = vpop.f32.mrf.mxu0
    %v571 = vpop.f32.mrf.mxu0
    %572 = vdwg.mxu0
    %vm573 = vcmask 64512
    %v574 = vsel %vm573, %v522, -inf
    %575 = vmax.xlane.f32.xlu0 %v574
    %v576 = vpop.xlane.xlu0 %575
    %v577 = vsel %vm573, %v568, -inf
    %578 = vmax.xlane.f32.xlu0 %v577
    %v579 = vpop.xlane.xlu0 %578
    %v580 = vsub.f32 %v522, %v576
    %v581 = vsub.f32 %v568, %v579
    %v582 = vmul.f32 %v580, 1.442695
    %v583 = vpow.pop %v582
    %v584 = vmul.f32 %v581, 1.442695
    %v585 = vpow.pop %v584
    %v586 = vsel %vm573, %v583, 0.0
    %587 = vadd.xlane.f32.xlu0 %v586
    %v588 = vpop.xlane.xlu0 %587
    %v589 = vsel %vm573, %v585, 0.0
    %590 = vadd.xlane.f32.xlu0 %v589
    %v591 = vpop.xlane.xlu0 %590
    %v592 = vrcp.pop %v588
    %v593 = vrcp.pop %v591
    %v594 = vmul.f32 %v583, %v592
    %v595 = vmul.f32 %v585, %v593
    %v596 = vpack.c.bf16 %v594, %v594
    %v597 = vpack.c.bf16 %v595, %v595
    %v599 = vsel %vm573, %v596, 0
    %vm601 = vcmask 1043456
    %v603 = vsel %vm601, %v469, 0
    %605 = vmatprep.subr.bf16.mxu0 0
    %606 = vmatpush1.bf16.msra.mxu0 0
    %607 = vmatprep.subr.bf16.mxu0 0
    %608 = vmatpush1.bf16.msra.mxu0 0
    %609 = vmatprep.subr.bf16.mxu0 0
    %610 = vmatpush1.bf16.msra.mxu0 0
    %611 = vmatprep.subr.bf16.mxu0 0
    %612 = vmatpush1.bf16.msra.mxu0 0
    %613 = vmatprep.subr.bf16.mxu0 0
    %614 = vmatpush1.bf16.msra.mxu0 0
    %615 = vmatprep.subr.bf16.mxu0 0
    %616 = vmatpush1.bf16.msra.mxu0 0
    %617 = vmatprep.subr.bf16.mxu0 0
    %618 = vmatpush1.bf16.msra.mxu0 0
    %619 = vmatprep.subr.bf16.mxu0 0
    %620 = vmatpush1.bf16.msra.mxu0 %v603
    %621 = vmatprep.subr.bf16.mxu0 0
    %622 = vmatpush2.bf16.msra.mxu0 0
    %623 = vmatprep.subr.bf16.mxu0 0
    %624 = vmatpush2.bf16.msra.mxu0 0
    %625 = vmatprep.subr.bf16.mxu0 0
    %626 = vmatpush2.bf16.msra.mxu0 0
    %627 = vmatprep.subr.bf16.mxu0 0
    %628 = vmatpush2.bf16.msra.mxu0 0
    %629 = vmatprep.subr.bf16.mxu0 0
    %630 = vmatpush2.bf16.msra.mxu0 0
    %631 = vmatprep.subr.bf16.mxu0 0
    %632 = vmatpush2.bf16.msra.mxu0 0
    %633 = vmatprep.subr.bf16.mxu0 0
    %634 = vmatpush2.bf16.msra.mxu0 0
    %635 = vmatprep.subr.bf16.mxu0 0
    %636 = vmatpush2.bf16.msra.mxu0 0
    %637 = vmatprep.mubr.bf16.mxu0 0
    %638 = vmatmul.mubr.bf16.gmra.mxu0 %v599
    %v639 = vpop.f32.mrf.mxu0
    %v640 = vadd.f32 0.0, %v639
    %v641 = vpop.f32.mrf.mxu0
    %v642 = vpop.f32.mrf.mxu0
    %v643 = vpop.f32.mrf.mxu0
    %644 = vdwg.mxu0
    %v646 = vsel %vm573, %v597, 0
    %v649 = vsel %vm601, %v470, 0
    %651 = vmatprep.subr.bf16.mxu0 0
    %652 = vmatpush1.bf16.msra.mxu0 0
    %653 = vmatprep.subr.bf16.mxu0 0
    %654 = vmatpush1.bf16.msra.mxu0 0
    %655 = vmatprep.subr.bf16.mxu0 0
    %656 = vmatpush1.bf16.msra.mxu0 0
    %657 = vmatprep.subr.bf16.mxu0 0
    %658 = vmatpush1.bf16.msra.mxu0 0
    %659 = vmatprep.subr.bf16.mxu0 0
    %660 = vmatpush1.bf16.msra.mxu0 0
    %661 = vmatprep.subr.bf16.mxu0 0
    %662 = vmatpush1.bf16.msra.mxu0 0
    %663 = vmatprep.subr.bf16.mxu0 0
    %664 = vmatpush1.bf16.msra.mxu0 0
    %665 = vmatprep.subr.bf16.mxu0 0
    %666 = vmatpush1.bf16.msra.mxu0 %v649
    %667 = vmatprep.subr.bf16.mxu0 0
    %668 = vmatpush2.bf16.msra.mxu0 0
    %669 = vmatprep.subr.bf16.mxu0 0
    %670 = vmatpush2.bf16.msra.mxu0 0
    %671 = vmatprep.subr.bf16.mxu0 0
    %672 = vmatpush2.bf16.msra.mxu0 0
    %673 = vmatprep.subr.bf16.mxu0 0
    %674 = vmatpush2.bf16.msra.mxu0 0
    %675 = vmatprep.subr.bf16.mxu0 0
    %676 = vmatpush2.bf16.msra.mxu0 0
    %677 = vmatprep.subr.bf16.mxu0 0
    %678 = vmatpush2.bf16.msra.mxu0 0
    %679 = vmatprep.subr.bf16.mxu0 0
    %680 = vmatpush2.bf16.msra.mxu0 0
    %681 = vmatprep.subr.bf16.mxu0 0
    %682 = vmatpush2.bf16.msra.mxu0 0
    %683 = vmatprep.mubr.bf16.mxu0 0
    %684 = vmatmul.mubr.bf16.gmra.mxu0 %v646
    %v685 = vpop.f32.mrf.mxu0
    %v686 = vadd.f32 0.0, %v685
    %v687 = vpop.f32.mrf.mxu0
    %v688 = vpop.f32.mrf.mxu0
    %v689 = vpop.f32.mrf.mxu0
    %690 = vdwg.mxu0
    %v691 = vlaneseq
    %v692 = vshrl.u32 %v691, 7
    %v693 = vsub.s32 2, %v692
    %v694 = vrot.slane %v36, %v693
    %v695 = vmul.f32 %v640, %v694
    %v696 = vmul.f32 %v686, %v694
    %v697 = vadd.f32 %v695, 0.0
    %v698 = vadd.f32 %v696, 0.0
    %v699 = vshrl.u32 %v471, 16
    %v700 = vpack.i.b16 %v699, %v699
    %v702 = vlaneseq
    %v703 = vshrl.u32 %v702, 7
    %v704 = vsub.s32 1, %v703
    %v705 = vrot.slane %v700, %v704
    %v706 = vmul.bf16 %v465, %v705
    %v707 = vmul.bf16 %v466, %v705
    %v709 = vsel %vm198, %v706, 0
    %711 = vmatprep.subr.bf16.mxu0 0
    %712 = vmatpush1.bf16.xpose.msra.mxu0 0
    %713 = vmatprep.subr.bf16.mxu0 0
    %714 = vmatpush1.bf16.xpose.msra.mxu0 0
    %715 = vmatprep.subr.bf16.mxu0 0
    %716 = vmatpush1.bf16.xpose.msra.mxu0 0
    %717 = vmatprep.subr.bf16.mxu0 0
    %718 = vmatpush1.bf16.xpose.msra.mxu0 0
    %719 = vmatprep.subr.bf16.mxu0 0
    %720 = vmatpush1.bf16.xpose.msra.mxu0 0
    %721 = vmatprep.subr.bf16.mxu0 0
    %722 = vmatpush1.bf16.xpose.msra.mxu0 0
    %723 = vmatprep.subr.bf16.mxu0 0
    %724 = vmatpush1.bf16.xpose.msra.mxu0 0
    %725 = vmatprep.subr.bf16.mxu0 0
    %726 = vmatpush1.bf16.xpose.msra.mxu0 %v485
    %727 = vmatprep.subr.bf16.mxu0 0
    %728 = vmatpush2.bf16.xpose.msra.mxu0 0
    %729 = vmatprep.subr.bf16.mxu0 0
    %730 = vmatpush2.bf16.xpose.msra.mxu0 0
    %731 = vmatprep.subr.bf16.mxu0 0
    %732 = vmatpush2.bf16.xpose.msra.mxu0 0
    %733 = vmatprep.subr.bf16.mxu0 0
    %734 = vmatpush2.bf16.xpose.msra.mxu0 0
    %735 = vmatprep.subr.bf16.mxu0 0
    %736 = vmatpush2.bf16.xpose.msra.mxu0 0
    %737 = vmatprep.subr.bf16.mxu0 0
    %738 = vmatpush2.bf16.xpose.msra.mxu0 0
    %739 = vmatprep.subr.bf16.mxu0 0
    %740 = vmatpush2.bf16.xpose.msra.mxu0 0
    %741 = vmatprep.subr.bf16.mxu0 0
    %742 = vmatpush2.bf16.xpose.msra.mxu0 0
    %743 = vmatprep.mubr.bf16.mxu0 0
    %744 = vmatmul.mubr.bf16.gmra.mxu0 %v709
    %v745 = vpop.f32.mrf.mxu0
    %v746 = vadd.f32 %v38, %v745
    %v747 = vpop.f32.mrf.mxu0
    %v748 = vpop.f32.mrf.mxu0
    %v749 = vpop.f32.mrf.mxu0
    %750 = vdwg.mxu0
    %v752 = vsel %vm198, %v707, 0
    %754 = vmatprep.subr.bf16.mxu0 0
    %755 = vmatpush1.bf16.xpose.msra.mxu0 0
    %756 = vmatprep.subr.bf16.mxu0 0
    %757 = vmatpush1.bf16.xpose.msra.mxu0 0
    %758 = vmatprep.subr.bf16.mxu0 0
    %759 = vmatpush1.bf16.xpose.msra.mxu0 0
    %760 = vmatprep.subr.bf16.mxu0 0
    %761 = vmatpush1.bf16.xpose.msra.mxu0 0
    %762 = vmatprep.subr.bf16.mxu0 0
    %763 = vmatpush1.bf16.xpose.msra.mxu0 0
    %764 = vmatprep.subr.bf16.mxu0 0
    %765 = vmatpush1.bf16.xpose.msra.mxu0 0
    %766 = vmatprep.subr.bf16.mxu0 0
    %767 = vmatpush1.bf16.xpose.msra.mxu0 0
    %768 = vmatprep.subr.bf16.mxu0 0
    %769 = vmatpush1.bf16.xpose.msra.mxu0 %v531
    %770 = vmatprep.subr.bf16.mxu0 0
    %771 = vmatpush2.bf16.xpose.msra.mxu0 0
    %772 = vmatprep.subr.bf16.mxu0 0
    %773 = vmatpush2.bf16.xpose.msra.mxu0 0
    %774 = vmatprep.subr.bf16.mxu0 0
    %775 = vmatpush2.bf16.xpose.msra.mxu0 0
    %776 = vmatprep.subr.bf16.mxu0 0
    %777 = vmatpush2.bf16.xpose.msra.mxu0 0
    %778 = vmatprep.subr.bf16.mxu0 0
    %779 = vmatpush2.bf16.xpose.msra.mxu0 0
    %780 = vmatprep.subr.bf16.mxu0 0
    %781 = vmatpush2.bf16.xpose.msra.mxu0 0
    %782 = vmatprep.subr.bf16.mxu0 0
    %783 = vmatpush2.bf16.xpose.msra.mxu0 0
    %784 = vmatprep.subr.bf16.mxu0 0
    %785 = vmatpush2.bf16.xpose.msra.mxu0 0
    %786 = vmatprep.mubr.bf16.mxu0 0
    %787 = vmatmul.mubr.bf16.gmra.mxu0 %v752
    %v788 = vpop.f32.mrf.mxu0
    %v789 = vadd.f32 %v38, %v788
    %v790 = vpop.f32.mrf.mxu0
    %v791 = vpop.f32.mrf.mxu0
    %v792 = vpop.f32.mrf.mxu0
    %793 = vdwg.mxu0
    %v794 = vsel %vm573, %v746, -inf
    %795 = vmax.xlane.f32.xlu0 %v794
    %v796 = vpop.xlane.xlu0 %795
    %v797 = vsel %vm573, %v789, -inf
    %798 = vmax.xlane.f32.xlu0 %v797
    %v799 = vpop.xlane.xlu0 %798
    %v800 = vsub.f32 %v746, %v796
    %v801 = vsub.f32 %v789, %v799
    %v802 = vmul.f32 %v800, 1.442695
    %v803 = vpow.pop %v802
    %v804 = vmul.f32 %v801, 1.442695
    %v805 = vpow.pop %v804
    %v806 = vsel %vm573, %v803, 0.0
    %807 = vadd.xlane.f32.xlu0 %v806
    %v808 = vpop.xlane.xlu0 %807
    %v809 = vsel %vm573, %v805, 0.0
    %810 = vadd.xlane.f32.xlu0 %v809
    %v811 = vpop.xlane.xlu0 %810
    %v812 = vrcp.pop %v808
    %v813 = vrcp.pop %v811
    %v814 = vmul.f32 %v803, %v812
    %v815 = vmul.f32 %v805, %v813
    %v816 = vpack.c.bf16 %v814, %v814
    %v817 = vpack.c.bf16 %v815, %v815
    %v819 = vsel %vm573, %v816, 0
    %821 = vmatprep.subr.bf16.mxu0 0
    %822 = vmatpush1.bf16.msra.mxu0 0
    %823 = vmatprep.subr.bf16.mxu0 0
    %824 = vmatpush1.bf16.msra.mxu0 0
    %825 = vmatprep.subr.bf16.mxu0 0
    %826 = vmatpush1.bf16.msra.mxu0 0
    %827 = vmatprep.subr.bf16.mxu0 0
    %828 = vmatpush1.bf16.msra.mxu0 0
    %829 = vmatprep.subr.bf16.mxu0 0
    %830 = vmatpush1.bf16.msra.mxu0 0
    %831 = vmatprep.subr.bf16.mxu0 0
    %832 = vmatpush1.bf16.msra.mxu0 0
    %833 = vmatprep.subr.bf16.mxu0 0
    %834 = vmatpush1.bf16.msra.mxu0 0
    %835 = vmatprep.subr.bf16.mxu0 0
    %836 = vmatpush1.bf16.msra.mxu0 %v603
    %837 = vmatprep.subr.bf16.mxu0 0
    %838 = vmatpush2.bf16.msra.mxu0 0
    %839 = vmatprep.subr.bf16.mxu0 0
    %840 = vmatpush2.bf16.msra.mxu0 0
    %841 = vmatprep.subr.bf16.mxu0 0
    %842 = vmatpush2.bf16.msra.mxu0 0
    %843 = vmatprep.subr.bf16.mxu0 0
    %844 = vmatpush2.bf16.msra.mxu0 0
    %845 = vmatprep.subr.bf16.mxu0 0
    %846 = vmatpush2.bf16.msra.mxu0 0
    %847 = vmatprep.subr.bf16.mxu0 0
    %848 = vmatpush2.bf16.msra.mxu0 0
    %849 = vmatprep.subr.bf16.mxu0 0
    %850 = vmatpush2.bf16.msra.mxu0 0
    %851 = vmatprep.subr.bf16.mxu0 0
    %852 = vmatpush2.bf16.msra.mxu0 0
    %853 = vmatprep.mubr.bf16.mxu0 0
    %854 = vmatmul.mubr.bf16.gmra.mxu0 %v819
    %v855 = vpop.f32.mrf.mxu0
    %v856 = vadd.f32 0.0, %v855
    %v857 = vpop.f32.mrf.mxu0
    %v858 = vpop.f32.mrf.mxu0
    %v859 = vpop.f32.mrf.mxu0
    %860 = vdwg.mxu0
    %v862 = vsel %vm573, %v817, 0
    %864 = vmatprep.subr.bf16.mxu0 0
    %865 = vmatpush1.bf16.msra.mxu0 0
    %866 = vmatprep.subr.bf16.mxu0 0
    %867 = vmatpush1.bf16.msra.mxu0 0
    %868 = vmatprep.subr.bf16.mxu0 0
    %869 = vmatpush1.bf16.msra.mxu0 0
    %870 = vmatprep.subr.bf16.mxu0 0
    %871 = vmatpush1.bf16.msra.mxu0 0
    %872 = vmatprep.subr.bf16.mxu0 0
    %873 = vmatpush1.bf16.msra.mxu0 0
    %874 = vmatprep.subr.bf16.mxu0 0
    %875 = vmatpush1.bf16.msra.mxu0 0
    %876 = vmatprep.subr.bf16.mxu0 0
    %877 = vmatpush1.bf16.msra.mxu0 0
    %878 = vmatprep.subr.bf16.mxu0 0
    %879 = vmatpush1.bf16.msra.mxu0 %v649
    %880 = vmatprep.subr.bf16.mxu0 0
    %881 = vmatpush2.bf16.msra.mxu0 0
    %882 = vmatprep.subr.bf16.mxu0 0
    %883 = vmatpush2.bf16.msra.mxu0 0
    %884 = vmatprep.subr.bf16.mxu0 0
    %885 = vmatpush2.bf16.msra.mxu0 0
    %886 = vmatprep.subr.bf16.mxu0 0
    %887 = vmatpush2.bf16.msra.mxu0 0
    %888 = vmatprep.subr.bf16.mxu0 0
    %889 = vmatpush2.bf16.msra.mxu0 0
    %890 = vmatprep.subr.bf16.mxu0 0
    %891 = vmatpush2.bf16.msra.mxu0 0
    %892 = vmatprep.subr.bf16.mxu0 0
    %893 = vmatpush2.bf16.msra.mxu0 0
    %894 = vmatprep.subr.bf16.mxu0 0
    %895 = vmatpush2.bf16.msra.mxu0 0
    %896 = vmatprep.mubr.bf16.mxu0 0
    %897 = vmatmul.mubr.bf16.gmra.mxu0 %v862
    %v898 = vpop.f32.mrf.mxu0
    %v899 = vadd.f32 0.0, %v898
    %v900 = vpop.f32.mrf.mxu0
    %v901 = vpop.f32.mrf.mxu0
    %v902 = vpop.f32.mrf.mxu0
    %903 = vdwg.mxu0
    %v904 = vlaneseq
    %v905 = vshrl.u32 %v904, 7
    %v906 = vsub.s32 3, %v905
    %v907 = vrot.slane %v36, %v906
    %v908 = vmul.f32 %v856, %v907
    %v909 = vmul.f32 %v899, %v907
    %v910 = vadd.f32 %v697, %v908
    %v911 = vadd.f32 %v698, %v909
    %v912 = vlaneseq
    %v913 = vshrl.u32 %v912, 7
    %v914 = vsub.s32 2, %v913
    %v915 = vrot.slane %v473, %v914
    %v916 = vmul.bf16 %v465, %v915
    %v917 = vmul.bf16 %v466, %v915
    %v919 = vsel %vm198, %v916, 0
    %921 = vmatprep.subr.bf16.mxu0 0
    %922 = vmatpush1.bf16.xpose.msra.mxu0 0
    %923 = vmatprep.subr.bf16.mxu0 0
    %924 = vmatpush1.bf16.xpose.msra.mxu0 0
    %925 = vmatprep.subr.bf16.mxu0 0
    %926 = vmatpush1.bf16.xpose.msra.mxu0 0
    %927 = vmatprep.subr.bf16.mxu0 0
    %928 = vmatpush1.bf16.xpose.msra.mxu0 0
    %929 = vmatprep.subr.bf16.mxu0 0
    %930 = vmatpush1.bf16.xpose.msra.mxu0 0
    %931 = vmatprep.subr.bf16.mxu0 0
    %932 = vmatpush1.bf16.xpose.msra.mxu0 0
    %933 = vmatprep.subr.bf16.mxu0 0
    %934 = vmatpush1.bf16.xpose.msra.mxu0 0
    %935 = vmatprep.subr.bf16.mxu0 0
    %936 = vmatpush1.bf16.xpose.msra.mxu0 %v485
    %937 = vmatprep.subr.bf16.mxu0 0
    %938 = vmatpush2.bf16.xpose.msra.mxu0 0
    %939 = vmatprep.subr.bf16.mxu0 0
    %940 = vmatpush2.bf16.xpose.msra.mxu0 0
    %941 = vmatprep.subr.bf16.mxu0 0
    %942 = vmatpush2.bf16.xpose.msra.mxu0 0
    %943 = vmatprep.subr.bf16.mxu0 0
    %944 = vmatpush2.bf16.xpose.msra.mxu0 0
    %945 = vmatprep.subr.bf16.mxu0 0
    %946 = vmatpush2.bf16.xpose.msra.mxu0 0
    %947 = vmatprep.subr.bf16.mxu0 0
    %948 = vmatpush2.bf16.xpose.msra.mxu0 0
    %949 = vmatprep.subr.bf16.mxu0 0
    %950 = vmatpush2.bf16.xpose.msra.mxu0 0
    %951 = vmatprep.subr.bf16.mxu0 0
    %952 = vmatpush2.bf16.xpose.msra.mxu0 0
    %953 = vmatprep.mubr.bf16.mxu0 0
    %954 = vmatmul.mubr.bf16.gmra.mxu0 %v919
    %v955 = vpop.f32.mrf.mxu0
    %v956 = vadd.f32 %v38, %v955
    %v957 = vpop.f32.mrf.mxu0
    %v958 = vpop.f32.mrf.mxu0
    %v959 = vpop.f32.mrf.mxu0
    %960 = vdwg.mxu0
    %v962 = vsel %vm198, %v917, 0
    %964 = vmatprep.subr.bf16.mxu0 0
    %965 = vmatpush1.bf16.xpose.msra.mxu0 0
    %966 = vmatprep.subr.bf16.mxu0 0
    %967 = vmatpush1.bf16.xpose.msra.mxu0 0
    %968 = vmatprep.subr.bf16.mxu0 0
    %969 = vmatpush1.bf16.xpose.msra.mxu0 0
    %970 = vmatprep.subr.bf16.mxu0 0
    %971 = vmatpush1.bf16.xpose.msra.mxu0 0
    %972 = vmatprep.subr.bf16.mxu0 0
    %973 = vmatpush1.bf16.xpose.msra.mxu0 0
    %974 = vmatprep.subr.bf16.mxu0 0
    %975 = vmatpush1.bf16.xpose.msra.mxu0 0
    %976 = vmatprep.subr.bf16.mxu0 0
    %977 = vmatpush1.bf16.xpose.msra.mxu0 0
    %978 = vmatprep.subr.bf16.mxu0 0
    %979 = vmatpush1.bf16.xpose.msra.mxu0 %v531
    %980 = vmatprep.subr.bf16.mxu0 0
    %981 = vmatpush2.bf16.xpose.msra.mxu0 0
    %982 = vmatprep.subr.bf16.mxu0 0
    %983 = vmatpush2.bf16.xpose.msra.mxu0 0
    %984 = vmatprep.subr.bf16.mxu0 0
    %985 = vmatpush2.bf16.xpose.msra.mxu0 0
    %986 = vmatprep.subr.bf16.mxu0 0
    %987 = vmatpush2.bf16.xpose.msra.mxu0 0
    %988 = vmatprep.subr.bf16.mxu0 0
    %989 = vmatpush2.bf16.xpose.msra.mxu0 0
    %990 = vmatprep.subr.bf16.mxu0 0
    %991 = vmatpush2.bf16.xpose.msra.mxu0 0
    %992 = vmatprep.subr.bf16.mxu0 0
    %993 = vmatpush2.bf16.xpose.msra.mxu0 0
    %994 = vmatprep.subr.bf16.mxu0 0
    %995 = vmatpush2.bf16.xpose.msra.mxu0 0
    %996 = vmatprep.mubr.bf16.mxu0 0
    %997 = vmatmul.mubr.bf16.gmra.mxu0 %v962
    %v998 = vpop.f32.mrf.mxu0
    %v999 = vadd.f32 %v38, %v998
    %v1000 = vpop.f32.mrf.mxu0
    %v1001 = vpop.f32.mrf.mxu0
    %v1002 = vpop.f32.mrf.mxu0
    %1003 = vdwg.mxu0
    %v1004 = vsel %vm573, %v956, -inf
    %1005 = vmax.xlane.f32.xlu0 %v1004
    %v1006 = vpop.xlane.xlu0 %1005
    %v1007 = vsel %vm573, %v999, -inf
    %1008 = vmax.xlane.f32.xlu0 %v1007
    %v1009 = vpop.xlane.xlu0 %1008
    %v1010 = vsub.f32 %v956, %v1006
    %v1011 = vsub.f32 %v999, %v1009
    %v1012 = vmul.f32 %v1010, 1.442695
    %v1013 = vpow.pop %v1012
    %v1014 = vmul.f32 %v1011, 1.442695
    %v1015 = vpow.pop %v1014
    %v1016 = vsel %vm573, %v1013, 0.0
    %1017 = vadd.xlane.f32.xlu0 %v1016
    %v1018 = vpop.xlane.xlu0 %1017
    %v1019 = vsel %vm573, %v1015, 0.0
    %1020 = vadd.xlane.f32.xlu0 %v1019
    %v1021 = vpop.xlane.xlu0 %1020
    %v1022 = vrcp.pop %v1018
    %v1023 = vrcp.pop %v1021
    %v1024 = vmul.f32 %v1013, %v1022
    %v1025 = vmul.f32 %v1015, %v1023
    %v1026 = vpack.c.bf16 %v1024, %v1024
    %v1027 = vpack.c.bf16 %v1025, %v1025
    %v1029 = vsel %vm573, %v1026, 0
    %1031 = vmatprep.subr.bf16.mxu0 0
    %1032 = vmatpush1.bf16.msra.mxu0 0
    %1033 = vmatprep.subr.bf16.mxu0 0
    %1034 = vmatpush1.bf16.msra.mxu0 0
    %1035 = vmatprep.subr.bf16.mxu0 0
    %1036 = vmatpush1.bf16.msra.mxu0 0
    %1037 = vmatprep.subr.bf16.mxu0 0
    %1038 = vmatpush1.bf16.msra.mxu0 0
    %1039 = vmatprep.subr.bf16.mxu0 0
    %1040 = vmatpush1.bf16.msra.mxu0 0
    %1041 = vmatprep.subr.bf16.mxu0 0
    %1042 = vmatpush1.bf16.msra.mxu0 0
    %1043 = vmatprep.subr.bf16.mxu0 0
    %1044 = vmatpush1.bf16.msra.mxu0 0
    %1045 = vmatprep.subr.bf16.mxu0 0
    %1046 = vmatpush1.bf16.msra.mxu0 %v603
    %1047 = vmatprep.subr.bf16.mxu0 0
    %1048 = vmatpush2.bf16.msra.mxu0 0
    %1049 = vmatprep.subr.bf16.mxu0 0
    %1050 = vmatpush2.bf16.msra.mxu0 0
    %1051 = vmatprep.subr.bf16.mxu0 0
    %1052 = vmatpush2.bf16.msra.mxu0 0
    %1053 = vmatprep.subr.bf16.mxu0 0
    %1054 = vmatpush2.bf16.msra.mxu0 0
    %1055 = vmatprep.subr.bf16.mxu0 0
    %1056 = vmatpush2.bf16.msra.mxu0 0
    %1057 = vmatprep.subr.bf16.mxu0 0
    %1058 = vmatpush2.bf16.msra.mxu0 0
    %1059 = vmatprep.subr.bf16.mxu0 0
    %1060 = vmatpush2.bf16.msra.mxu0 0
    %1061 = vmatprep.subr.bf16.mxu0 0
    %1062 = vmatpush2.bf16.msra.mxu0 0
    %1063 = vmatprep.mubr.bf16.mxu0 0
    %1064 = vmatmul.mubr.bf16.gmra.mxu0 %v1029
    %v1065 = vpop.f32.mrf.mxu0
    %v1066 = vadd.f32 0.0, %v1065
    %v1067 = vpop.f32.mrf.mxu0
    %v1068 = vpop.f32.mrf.mxu0
    %v1069 = vpop.f32.mrf.mxu0
    %1070 = vdwg.mxu0
    %v1072 = vsel %vm573, %v1027, 0
    %1074 = vmatprep.subr.bf16.mxu0 0
    %1075 = vmatpush1.bf16.msra.mxu0 0
    %1076 = vmatprep.subr.bf16.mxu0 0
    %1077 = vmatpush1.bf16.msra.mxu0 0
    %1078 = vmatprep.subr.bf16.mxu0 0
    %1079 = vmatpush1.bf16.msra.mxu0 0
    %1080 = vmatprep.subr.bf16.mxu0 0
    %1081 = vmatpush1.bf16.msra.mxu0 0
    %1082 = vmatprep.subr.bf16.mxu0 0
    %1083 = vmatpush1.bf16.msra.mxu0 0
    %1084 = vmatprep.subr.bf16.mxu0 0
    %1085 = vmatpush1.bf16.msra.mxu0 0
    %1086 = vmatprep.subr.bf16.mxu0 0
    %1087 = vmatpush1.bf16.msra.mxu0 0
    %1088 = vmatprep.subr.bf16.mxu0 0
    %1089 = vmatpush1.bf16.msra.mxu0 %v649
    %1090 = vmatprep.subr.bf16.mxu0 0
    %1091 = vmatpush2.bf16.msra.mxu0 0
    %1092 = vmatprep.subr.bf16.mxu0 0
    %1093 = vmatpush2.bf16.msra.mxu0 0
    %1094 = vmatprep.subr.bf16.mxu0 0
    %1095 = vmatpush2.bf16.msra.mxu0 0
    %1096 = vmatprep.subr.bf16.mxu0 0
    %1097 = vmatpush2.bf16.msra.mxu0 0
    %1098 = vmatprep.subr.bf16.mxu0 0
    %1099 = vmatpush2.bf16.msra.mxu0 0
    %1100 = vmatprep.subr.bf16.mxu0 0
    %1101 = vmatpush2.bf16.msra.mxu0 0
    %1102 = vmatprep.subr.bf16.mxu0 0
    %1103 = vmatpush2.bf16.msra.mxu0 0
    %1104 = vmatprep.subr.bf16.mxu0 0
    %1105 = vmatpush2.bf16.msra.mxu0 0
    %1106 = vmatprep.mubr.bf16.mxu0 0
    %1107 = vmatmul.mubr.bf16.gmra.mxu0 %v1072
    %v1108 = vpop.f32.mrf.mxu0
    %v1109 = vadd.f32 0.0, %v1108
    %v1110 = vpop.f32.mrf.mxu0
    %v1111 = vpop.f32.mrf.mxu0
    %v1112 = vpop.f32.mrf.mxu0
    %1113 = vdwg.mxu0
    %v1114 = vlaneseq
    %v1115 = vshrl.u32 %v1114, 7
    %v1116 = vsub.s32 4, %v1115
    %v1117 = vrot.slane %v36, %v1116
    %v1118 = vmul.f32 %v1066, %v1117
    %v1119 = vmul.f32 %v1109, %v1117
    %v1120 = vadd.f32 %v910, %v1118
    %v1121 = vadd.f32 %v911, %v1119
    %v1122 = vlaneseq
    %v1123 = vshrl.u32 %v1122, 7
    %v1124 = vsub.s32 2, %v1123
    %v1125 = vrot.slane %v700, %v1124
    %v1126 = vmul.bf16 %v465, %v1125
    %v1127 = vmul.bf16 %v466, %v1125
    %v1129 = vsel %vm198, %v1126, 0
    %1131 = vmatprep.subr.bf16.mxu0 0
    %1132 = vmatpush1.bf16.xpose.msra.mxu0 0
    %1133 = vmatprep.subr.bf16.mxu0 0
    %1134 = vmatpush1.bf16.xpose.msra.mxu0 0
    %1135 = vmatprep.subr.bf16.mxu0 0
    %1136 = vmatpush1.bf16.xpose.msra.mxu0 0
    %1137 = vmatprep.subr.bf16.mxu0 0
    %1138 = vmatpush1.bf16.xpose.msra.mxu0 0
    %1139 = vmatprep.subr.bf16.mxu0 0
    %1140 = vmatpush1.bf16.xpose.msra.mxu0 0
    %1141 = vmatprep.subr.bf16.mxu0 0
    %1142 = vmatpush1.bf16.xpose.msra.mxu0 0
    %1143 = vmatprep.subr.bf16.mxu0 0
    %1144 = vmatpush1.bf16.xpose.msra.mxu0 0
    %1145 = vmatprep.subr.bf16.mxu0 0
    %1146 = vmatpush1.bf16.xpose.msra.mxu0 %v485
    %1147 = vmatprep.subr.bf16.mxu0 0
    %1148 = vmatpush2.bf16.xpose.msra.mxu0 0
    %1149 = vmatprep.subr.bf16.mxu0 0
    %1150 = vmatpush2.bf16.xpose.msra.mxu0 0
    %1151 = vmatprep.subr.bf16.mxu0 0
    %1152 = vmatpush2.bf16.xpose.msra.mxu0 0
    %1153 = vmatprep.subr.bf16.mxu0 0
    %1154 = vmatpush2.bf16.xpose.msra.mxu0 0
    %1155 = vmatprep.subr.bf16.mxu0 0
    %1156 = vmatpush2.bf16.xpose.msra.mxu0 0
    %1157 = vmatprep.subr.bf16.mxu0 0
    %1158 = vmatpush2.bf16.xpose.msra.mxu0 0
    %1159 = vmatprep.subr.bf16.mxu0 0
    %1160 = vmatpush2.bf16.xpose.msra.mxu0 0
    %1161 = vmatprep.subr.bf16.mxu0 0
    %1162 = vmatpush2.bf16.xpose.msra.mxu0 0
    %1163 = vmatprep.mubr.bf16.mxu0 0
    %1164 = vmatmul.mubr.bf16.gmra.mxu0 %v1129
    %v1165 = vpop.f32.mrf.mxu0
    %v1166 = vadd.f32 %v38, %v1165
    %v1167 = vpop.f32.mrf.mxu0
    %v1168 = vpop.f32.mrf.mxu0
    %v1169 = vpop.f32.mrf.mxu0
    %1170 = vdwg.mxu0
    %v1172 = vsel %vm198, %v1127, 0
    %1174 = vmatprep.subr.bf16.mxu0 0
    %1175 = vmatpush1.bf16.xpose.msra.mxu0 0
    %1176 = vmatprep.subr.bf16.mxu0 0
    %1177 = vmatpush1.bf16.xpose.msra.mxu0 0
    %1178 = vmatprep.subr.bf16.mxu0 0
    %1179 = vmatpush1.bf16.xpose.msra.mxu0 0
    %1180 = vmatprep.subr.bf16.mxu0 0
    %1181 = vmatpush1.bf16.xpose.msra.mxu0 0
    %1182 = vmatprep.subr.bf16.mxu0 0
    %1183 = vmatpush1.bf16.xpose.msra.mxu0 0
    %1184 = vmatprep.subr.bf16.mxu0 0
    %1185 = vmatpush1.bf16.xpose.msra.mxu0 0
    %1186 = vmatprep.subr.bf16.mxu0 0
    %1187 = vmatpush1.bf16.xpose.msra.mxu0 0
    %1188 = vmatprep.subr.bf16.mxu0 0
    %1189 = vmatpush1.bf16.xpose.msra.mxu0 %v531
    %1190 = vmatprep.subr.bf16.mxu0 0
    %1191 = vmatpush2.bf16.xpose.msra.mxu0 0
    %1192 = vmatprep.subr.bf16.mxu0 0
    %1193 = vmatpush2.bf16.xpose.msra.mxu0 0
    %1194 = vmatprep.subr.bf16.mxu0 0
    %1195 = vmatpush2.bf16.xpose.msra.mxu0 0
    %1196 = vmatprep.subr.bf16.mxu0 0
    %1197 = vmatpush2.bf16.xpose.msra.mxu0 0
    %1198 = vmatprep.subr.bf16.mxu0 0
    %1199 = vmatpush2.bf16.xpose.msra.mxu0 0
    %1200 = vmatprep.subr.bf16.mxu0 0
    %1201 = vmatpush2.bf16.xpose.msra.mxu0 0
    %1202 = vmatprep.subr.bf16.mxu0 0
    %1203 = vmatpush2.bf16.xpose.msra.mxu0 0
    %1204 = vmatprep.subr.bf16.mxu0 0
    %1205 = vmatpush2.bf16.xpose.msra.mxu0 0
    %1206 = vmatprep.mubr.bf16.mxu0 0
    %1207 = vmatmul.mubr.bf16.gmra.mxu0 %v1172
    %v1208 = vpop.f32.mrf.mxu0
    %v1209 = vadd.f32 %v38, %v1208
    %v1210 = vpop.f32.mrf.mxu0
    %v1211 = vpop.f32.mrf.mxu0
    %v1212 = vpop.f32.mrf.mxu0
    %1213 = vdwg.mxu0
    %v1214 = vsel %vm573, %v1166, -inf
    %1215 = vmax.xlane.f32.xlu0 %v1214
    %v1216 = vpop.xlane.xlu0 %1215
    %v1217 = vsel %vm573, %v1209, -inf
    %1218 = vmax.xlane.f32.xlu0 %v1217
    %v1219 = vpop.xlane.xlu0 %1218
    %v1220 = vsub.f32 %v1166, %v1216
    %v1221 = vsub.f32 %v1209, %v1219
    %v1222 = vmul.f32 %v1220, 1.442695
    %v1223 = vpow.pop %v1222
    %v1224 = vmul.f32 %v1221, 1.442695
    %v1225 = vpow.pop %v1224
    %v1226 = vsel %vm573, %v1223, 0.0
    %1227 = vadd.xlane.f32.xlu0 %v1226
    %v1228 = vpop.xlane.xlu0 %1227
    %v1229 = vsel %vm573, %v1225, 0.0
    %1230 = vadd.xlane.f32.xlu0 %v1229
    %v1231 = vpop.xlane.xlu0 %1230
    %v1232 = vrcp.pop %v1228
    %v1233 = vrcp.pop %v1231
    %v1234 = vmul.f32 %v1223, %v1232
    %v1235 = vmul.f32 %v1225, %v1233
    %v1236 = vpack.c.bf16 %v1234, %v1234
    %v1237 = vpack.c.bf16 %v1235, %v1235
    %v1239 = vsel %vm573, %v1236, 0
    %1241 = vmatprep.subr.bf16.mxu0 0
    %1242 = vmatpush1.bf16.msra.mxu0 0
    %1243 = vmatprep.subr.bf16.mxu0 0
    %1244 = vmatpush1.bf16.msra.mxu0 0
    %1245 = vmatprep.subr.bf16.mxu0 0
    %1246 = vmatpush1.bf16.msra.mxu0 0
    %1247 = vmatprep.subr.bf16.mxu0 0
    %1248 = vmatpush1.bf16.msra.mxu0 0
    %1249 = vmatprep.subr.bf16.mxu0 0
    %1250 = vmatpush1.bf16.msra.mxu0 0
    %1251 = vmatprep.subr.bf16.mxu0 0
    %1252 = vmatpush1.bf16.msra.mxu0 0
    %1253 = vmatprep.subr.bf16.mxu0 0
    %1254 = vmatpush1.bf16.msra.mxu0 0
    %1255 = vmatprep.subr.bf16.mxu0 0
    %1256 = vmatpush1.bf16.msra.mxu0 %v603
    %1257 = vmatprep.subr.bf16.mxu0 0
    %1258 = vmatpush2.bf16.msra.mxu0 0
    %1259 = vmatprep.subr.bf16.mxu0 0
    %1260 = vmatpush2.bf16.msra.mxu0 0
    %1261 = vmatprep.subr.bf16.mxu0 0
    %1262 = vmatpush2.bf16.msra.mxu0 0
    %1263 = vmatprep.subr.bf16.mxu0 0
    %1264 = vmatpush2.bf16.msra.mxu0 0
    %1265 = vmatprep.subr.bf16.mxu0 0
    %1266 = vmatpush2.bf16.msra.mxu0 0
    %1267 = vmatprep.subr.bf16.mxu0 0
    %1268 = vmatpush2.bf16.msra.mxu0 0
    %1269 = vmatprep.subr.bf16.mxu0 0
    %1270 = vmatpush2.bf16.msra.mxu0 0
    %1271 = vmatprep.subr.bf16.mxu0 0
    %1272 = vmatpush2.bf16.msra.mxu0 0
    %1273 = vmatprep.mubr.bf16.mxu0 0
    %1274 = vmatmul.mubr.bf16.gmra.mxu0 %v1239
    %v1275 = vpop.f32.mrf.mxu0
    %v1276 = vadd.f32 0.0, %v1275
    %v1277 = vpop.f32.mrf.mxu0
    %v1278 = vpop.f32.mrf.mxu0
    %v1279 = vpop.f32.mrf.mxu0
    %1280 = vdwg.mxu0
    %v1282 = vsel %vm573, %v1237, 0
    %1284 = vmatprep.subr.bf16.mxu0 0
    %1285 = vmatpush1.bf16.msra.mxu0 0
    %1286 = vmatprep.subr.bf16.mxu0 0
    %1287 = vmatpush1.bf16.msra.mxu0 0
    %1288 = vmatprep.subr.bf16.mxu0 0
    %1289 = vmatpush1.bf16.msra.mxu0 0
    %1290 = vmatprep.subr.bf16.mxu0 0
    %1291 = vmatpush1.bf16.msra.mxu0 0
    %1292 = vmatprep.subr.bf16.mxu0 0
    %1293 = vmatpush1.bf16.msra.mxu0 0
    %1294 = vmatprep.subr.bf16.mxu0 0
    %1295 = vmatpush1.bf16.msra.mxu0 0
    %1296 = vmatprep.subr.bf16.mxu0 0
    %1297 = vmatpush1.bf16.msra.mxu0 0
    %1298 = vmatprep.subr.bf16.mxu0 0
    %1299 = vmatpush1.bf16.msra.mxu0 %v649
    %1300 = vmatprep.subr.bf16.mxu0 0
    %1301 = vmatpush2.bf16.msra.mxu0 0
    %1302 = vmatprep.subr.bf16.mxu0 0
    %1303 = vmatpush2.bf16.msra.mxu0 0
    %1304 = vmatprep.subr.bf16.mxu0 0
    %1305 = vmatpush2.bf16.msra.mxu0 0
    %1306 = vmatprep.subr.bf16.mxu0 0
    %1307 = vmatpush2.bf16.msra.mxu0 0
    %1308 = vmatprep.subr.bf16.mxu0 0
    %1309 = vmatpush2.bf16.msra.mxu0 0
    %1310 = vmatprep.subr.bf16.mxu0 0
    %1311 = vmatpush2.bf16.msra.mxu0 0
    %1312 = vmatprep.subr.bf16.mxu0 0
    %1313 = vmatpush2.bf16.msra.mxu0 0
    %1314 = vmatprep.subr.bf16.mxu0 0
    %1315 = vmatpush2.bf16.msra.mxu0 0
    %1316 = vmatprep.mubr.bf16.mxu0 0
    %1317 = vmatmul.mubr.bf16.gmra.mxu0 %v1282
    %v1318 = vpop.f32.mrf.mxu0
    %v1319 = vadd.f32 0.0, %v1318
    %v1320 = vpop.f32.mrf.mxu0
    %v1321 = vpop.f32.mrf.mxu0
    %v1322 = vpop.f32.mrf.mxu0
    %1323 = vdwg.mxu0
    %v1324 = vlaneseq
    %v1325 = vshrl.u32 %v1324, 7
    %v1326 = vsub.s32 5, %v1325
    %v1327 = vrot.slane %v36, %v1326
    %v1328 = vmul.f32 %v1276, %v1327
    %v1329 = vmul.f32 %v1319, %v1327
    %v1330 = vadd.f32 %v1120, %v1328
    %v1331 = vadd.f32 %v1121, %v1329
    %v1332 = vpack.c.bf16 %v1331, %v1330
    %v1333 = vld [vmem:[%s1 + $0x90] sm:$0xf]
    %v1334 = vld [vmem:[%s1 + $0x94] sm:$0xf]
    %v1335 = vld [vmem:[%s1 + $0x98] sm:$0xf]
    %v1336 = vld [vmem:[%s1 + $0x9c] sm:$0xf]
    %v1337 = vlaneseq
    %v1338 = vshrl.u32 %v1337, 7
    %v1339 = vsub.s32 7, %v1338
    %v1340 = vrot.slane %v32, %v1339
    %v1345 = vunpack.c.l.b16 %v1333
    %v1346 = vunpack.c.l.b16 %v1334
    %v1347 = vunpack.c.l.b16 %v1335
    %v1348 = vunpack.c.l.b16 %v1336
    %v1349 = vpack.c.b16 %v1346, %v1345
    %v1350 = vpack.c.b16 %v1348, %v1347
    %v1354 = vsel %vm198, %v1332, 0
    %1356 = vmatprep.subr.bf16.mxu0 0
    %1357 = vmatpush1.bf16.msra.mxu0 0
    %1358 = vmatprep.subr.bf16.mxu0 0
    %1359 = vmatpush1.bf16.msra.mxu0 0
    %1360 = vmatprep.subr.bf16.mxu0 0
    %1361 = vmatpush1.bf16.msra.mxu0 0
    %1362 = vmatprep.subr.bf16.mxu0 0
    %1363 = vmatpush1.bf16.msra.mxu0 0
    %1364 = vmatprep.subr.bf16.mxu0 0
    %1365 = vmatpush1.bf16.msra.mxu0 0
    %1366 = vmatprep.subr.bf16.mxu0 0
    %1367 = vmatpush1.bf16.msra.mxu0 0
    %1368 = vmatprep.subr.bf16.mxu0 0
    %1369 = vmatpush1.bf16.msra.mxu0 %v1350
    %1370 = vmatprep.subr.bf16.mxu0 0
    %1371 = vmatpush1.bf16.msra.mxu0 %v1349
    %1372 = vmatprep.subr.bf16.mxu0 0
    %1373 = vmatpush2.bf16.msra.mxu0 0
    %1374 = vmatprep.subr.bf16.mxu0 0
    %1375 = vmatpush2.bf16.msra.mxu0 0
    %1376 = vmatprep.subr.bf16.mxu0 0
    %1377 = vmatpush2.bf16.msra.mxu0 0
    %1378 = vmatprep.subr.bf16.mxu0 0
    %1379 = vmatpush2.bf16.msra.mxu0 0
    %1380 = vmatprep.subr.bf16.mxu0 0
    %1381 = vmatpush2.bf16.msra.mxu0 0
    %1382 = vmatprep.subr.bf16.mxu0 0
    %1383 = vmatpush2.bf16.msra.mxu0 0
    %1384 = vmatprep.subr.bf16.mxu0 0
    %1385 = vmatpush2.bf16.msra.mxu0 0
    %1386 = vmatprep.subr.bf16.mxu0 0
    %1387 = vmatpush2.bf16.msra.mxu0 0
    %1388 = vmatprep.mubr.bf16.mxu0 0
    %1389 = vmatmul.mubr.bf16.gmra.mxu0 %v1354
    %v1390 = vpop.f32.mrf.mxu0
    %v1391 = vadd.f32 %v1340, %v1390
    %v1392 = vpop.f32.mrf.mxu0
    %v1393 = vpop.f32.mrf.mxu0
    %v1394 = vadd.f32 %v1340, %v1393
    %v1395 = vpop.f32.mrf.mxu0
    %1396 = vdwg.mxu0
    %v1397 = vadd.f32 %v236, %v1391
    %v1398 = vadd.f32 %v237, %v1394
    %v1399 = vsel %vm198, %v1397, 0.0
    %1400 = vadd.xlane.f32.xlu0 %v1399
    %v1401 = vpop.xlane.xlu0 %1400
    %v1402 = vsel %vm198, %v1398, 0.0
    %1403 = vadd.xlane.f32.xlu0 %v1402
    %v1404 = vpop.xlane.xlu0 %1403
    %v1405 = vmul.f32 %v1401, %v205
    %v1406 = vmul.f32 %v1404, %v205
    %v1407 = vsub.f32 %v1397, %v1405
    %v1408 = vsub.f32 %v1398, %v1406
    %v1409 = vmul.f32 %v1407, %v1407
    %v1410 = vmul.f32 %v1408, %v1408
    %v1411 = vsel %vm198, %v1409, 0.0
    %1412 = vadd.xlane.f32.xlu0 %v1411
    %v1413 = vpop.xlane.xlu0 %1412
    %v1414 = vsel %vm198, %v1410, 0.0
    %1415 = vadd.xlane.f32.xlu0 %v1414
    %v1416 = vpop.xlane.xlu0 %1415
    %v1417 = vmul.f32 %v1413, %v205
    %v1418 = vmul.f32 %v1416, %v205
    %v1419 = vadd.f32 %v1417, 1e-05
    %v1420 = vadd.f32 %v1418, 1e-05
    %v1421 = vrsqrt.pop %v1419
    %v1422 = vrsqrt.pop %v1420
    %v1423 = vmul.f32 %v1407, %v1421
    %v1424 = vmul.f32 %v1408, %v1422
    %v1425 = vlaneseq
    %v1426 = vshrl.u32 %v1425, 7
    %v1427 = vsub.s32 0, %v1426
    %v1428 = vrot.slane %v33, %v1427
    %v1429 = vmul.f32 %v1423, %v1428
    %v1430 = vmul.f32 %v1424, %v1428
    %v1431 = vlaneseq
    %v1432 = vshrl.u32 %v1431, 7
    %v1433 = vsub.s32 1, %v1432
    %v1434 = vrot.slane %v33, %v1433
    %v1435 = vadd.f32 %v1429, %v1434
    %v1436 = vadd.f32 %v1430, %v1434
    %v1437 = vpack.c.bf16 %v1436, %v1435
    %v1438 = vld [vmem:[%s2] sm:$0xf]
    %v1439 = vld [vmem:[%s2 + $0x4] sm:$0xf]
    %v1440 = vld [vmem:[%s2 + $0x8] sm:$0xf]
    %v1441 = vld [vmem:[%s2 + $0xc] sm:$0xf]
    %v1442 = vld [vmem:[%s4] sm:$0x1]
    %v1443 = vlaneseq
    %v1444 = vshrl.u32 %v1443, 7
    %v1445 = vsub.s32 0, %v1444
    %v1446 = vrot.slane %v1442, %v1445
    %v1451 = vunpack.c.l.b16 %v1438
    %v1452 = vunpack.c.l.b16 %v1439
    %v1453 = vunpack.c.l.b16 %v1440
    %v1454 = vunpack.c.l.b16 %v1441
    %v1455 = vpack.c.b16 %v1452, %v1451
    %v1456 = vpack.c.b16 %v1454, %v1453
    %v1460 = vsel %vm198, %v1437, 0
    %1462 = vmatprep.subr.bf16.mxu0 0
    %1463 = vmatpush1.bf16.msra.mxu0 0
    %1464 = vmatprep.subr.bf16.mxu0 0
    %1465 = vmatpush1.bf16.msra.mxu0 0
    %1466 = vmatprep.subr.bf16.mxu0 0
    %1467 = vmatpush1.bf16.msra.mxu0 0
    %1468 = vmatprep.subr.bf16.mxu0 0
    %1469 = vmatpush1.bf16.msra.mxu0 0
    %1470 = vmatprep.subr.bf16.mxu0 0
    %1471 = vmatpush1.bf16.msra.mxu0 0
    %1472 = vmatprep.subr.bf16.mxu0 0
    %1473 = vmatpush1.bf16.msra.mxu0 0
    %1474 = vmatprep.subr.bf16.mxu0 0
    %1475 = vmatpush1.bf16.msra.mxu0 %v1456
    %1476 = vmatprep.subr.bf16.mxu0 0
    %1477 = vmatpush1.bf16.msra.mxu0 %v1455
    %1478 = vmatprep.subr.bf16.mxu0 0
    %1479 = vmatpush2.bf16.msra.mxu0 0
    %1480 = vmatprep.subr.bf16.mxu0 0
    %1481 = vmatpush2.bf16.msra.mxu0 0
    %1482 = vmatprep.subr.bf16.mxu0 0
    %1483 = vmatpush2.bf16.msra.mxu0 0
    %1484 = vmatprep.subr.bf16.mxu0 0
    %1485 = vmatpush2.bf16.msra.mxu0 0
    %1486 = vmatprep.subr.bf16.mxu0 0
    %1487 = vmatpush2.bf16.msra.mxu0 0
    %1488 = vmatprep.subr.bf16.mxu0 0
    %1489 = vmatpush2.bf16.msra.mxu0 0
    %1490 = vmatprep.subr.bf16.mxu0 0
    %1491 = vmatpush2.bf16.msra.mxu0 0
    %1492 = vmatprep.subr.bf16.mxu0 0
    %1493 = vmatpush2.bf16.msra.mxu0 0
    %1494 = vmatprep.mubr.bf16.mxu0 0
    %1495 = vmatmul.mubr.bf16.gmra.mxu0 %v1460
    %v1496 = vpop.f32.mrf.mxu0
    %v1497 = vadd.f32 %v1446, %v1496
    %v1498 = vpop.f32.mrf.mxu0
    %v1499 = vpop.f32.mrf.mxu0
    %v1500 = vadd.f32 %v1446, %v1499
    %v1501 = vpop.f32.mrf.mxu0
    %1502 = vdwg.mxu0
    %v1503 = vmul.f32 %v1497, 1.702
    %v1504 = vmul.f32 %v1500, 1.702
    %v1505 = vxor.u32 %v1503, 2147483648
    %v1506 = vxor.u32 %v1504, 2147483648
    %v1507 = vmul.f32 %v1505, 1.442695
    %v1508 = vpow.pop %v1507
    %v1509 = vmul.f32 %v1506, 1.442695
    %v1510 = vpow.pop %v1509
    %v1511 = vadd.f32 %v1508, 1.0
    %v1512 = vadd.f32 %v1510, 1.0
    %v1513 = vrcp.pop %v1511
    %v1514 = vmul.f32 1.0, %v1513
    %v1515 = vrcp.pop %v1512
    %v1516 = vmul.f32 1.0, %v1515
    %v1517 = vmul.f32 %v1497, %v1514
    %v1518 = vmul.f32 %v1500, %v1516
    %v1519 = vpack.c.bf16 %v1518, %v1517
    %v1520 = vld [vmem:[%s1 + $0xa0] sm:$0xf]
    %v1521 = vld [vmem:[%s1 + $0xa4] sm:$0xf]
    %v1522 = vld [vmem:[%s1 + $0xa8] sm:$0xf]
    %v1523 = vld [vmem:[%s1 + $0xac] sm:$0xf]
    %v1524 = vld [vmem:[%s1 + $0xb0] sm:$0xf]
    %v1525 = vld [vmem:[%s1 + $0xb4] sm:$0xf]
    %v1526 = vld [vmem:[%s1 + $0xb8] sm:$0xf]
    %v1527 = vld [vmem:[%s1 + $0xbc] sm:$0xf]
    %v1528 = vld [vmem:[%s1 + $0xc0] sm:$0xf]
    %v1529 = vld [vmem:[%s1 + $0xc4] sm:$0xf]
    %v1530 = vld [vmem:[%s1 + $0xc8] sm:$0xf]
    %v1531 = vld [vmem:[%s1 + $0xcc] sm:$0xf]
    %v1532 = vld [vmem:[%s1 + $0xd0] sm:$0xf]
    %v1533 = vld [vmem:[%s1 + $0xd4] sm:$0xf]
    %v1534 = vld [vmem:[%s1 + $0xd8] sm:$0xf]
    %v1535 = vld [vmem:[%s1 + $0xdc] sm:$0xf]
    %v1536 = vlaneseq
    %v1537 = vshrl.u32 %v1536, 7
    %v1538 = vsub.s32 2, %v1537
    %v1539 = vrot.slane %v33, %v1538
    %v1556 = vunpack.c.l.b16 %v1520
    %v1557 = vunpack.c.l.b16 %v1521
    %v1558 = vunpack.c.l.b16 %v1522
    %v1559 = vunpack.c.l.b16 %v1523
    %v1560 = vunpack.c.l.b16 %v1524
    %v1561 = vunpack.c.l.b16 %v1525
    %v1562 = vunpack.c.l.b16 %v1526
    %v1563 = vunpack.c.l.b16 %v1527
    %v1564 = vunpack.c.l.b16 %v1528
    %v1565 = vunpack.c.l.b16 %v1529
    %v1566 = vunpack.c.l.b16 %v1530
    %v1567 = vunpack.c.l.b16 %v1531
    %v1568 = vunpack.c.l.b16 %v1532
    %v1569 = vunpack.c.l.b16 %v1533
    %v1570 = vunpack.c.l.b16 %v1534
    %v1571 = vunpack.c.l.b16 %v1535
    %v1572 = vpack.c.b16 %v1557, %v1556
    %v1573 = vpack.c.b16 %v1559, %v1558
    %v1574 = vpack.c.b16 %v1561, %v1560
    %v1575 = vpack.c.b16 %v1563, %v1562
    %v1576 = vpack.c.b16 %v1565, %v1564
    %v1577 = vpack.c.b16 %v1567, %v1566
    %v1578 = vpack.c.b16 %v1569, %v1568
    %v1579 = vpack.c.b16 %v1571, %v1570
    %1588 = vmatprep.subr.bf16.mxu0 0
    %1589 = vmatpush1.bf16.msra.mxu0 %v1579
    %1590 = vmatprep.subr.bf16.mxu0 0
    %1591 = vmatpush1.bf16.msra.mxu0 %v1578
    %1592 = vmatprep.subr.bf16.mxu0 0
    %1593 = vmatpush1.bf16.msra.mxu0 %v1577
    %1594 = vmatprep.subr.bf16.mxu0 0
    %1595 = vmatpush1.bf16.msra.mxu0 %v1576
    %1596 = vmatprep.subr.bf16.mxu0 0
    %1597 = vmatpush1.bf16.msra.mxu0 %v1575
    %1598 = vmatprep.subr.bf16.mxu0 0
    %1599 = vmatpush1.bf16.msra.mxu0 %v1574
    %1600 = vmatprep.subr.bf16.mxu0 0
    %1601 = vmatpush1.bf16.msra.mxu0 %v1573
    %1602 = vmatprep.subr.bf16.mxu0 0
    %1603 = vmatpush1.bf16.msra.mxu0 %v1572
    %1604 = vmatprep.subr.bf16.mxu0 0
    %1605 = vmatpush2.bf16.msra.mxu0 0
    %1606 = vmatprep.subr.bf16.mxu0 0
    %1607 = vmatpush2.bf16.msra.mxu0 0
    %1608 = vmatprep.subr.bf16.mxu0 0
    %1609 = vmatpush2.bf16.msra.mxu0 0
    %1610 = vmatprep.subr.bf16.mxu0 0
    %1611 = vmatpush2.bf16.msra.mxu0 0
    %1612 = vmatprep.subr.bf16.mxu0 0
    %1613 = vmatpush2.bf16.msra.mxu0 0
    %1614 = vmatprep.subr.bf16.mxu0 0
    %1615 = vmatpush2.bf16.msra.mxu0 0
    %1616 = vmatprep.subr.bf16.mxu0 0
    %1617 = vmatpush2.bf16.msra.mxu0 0
    %1618 = vmatprep.subr.bf16.mxu0 0
    %1619 = vmatpush2.bf16.msra.mxu0 0
    %1620 = vmatprep.mubr.bf16.mxu0 0
    %1621 = vmatmul.mubr.bf16.gmra.mxu0 %v1519
    %v1622 = vpop.f32.mrf.mxu0
    %v1623 = vadd.f32 %v1539, %v1622
    %v1624 = vpop.f32.mrf.mxu0
    %v1625 = vpop.f32.mrf.mxu0
    %v1626 = vadd.f32 %v1539, %v1625
    %v1627 = vpop.f32.mrf.mxu0
    %1628 = vdwg.mxu0
    %v1629 = vadd.f32 %v1397, %v1623
    %v1630 = vadd.f32 %v1398, %v1626
    %v1633 = vrot.slane %v1630, 7
    %vm1634 = vcmask 1041409
    %v1635 = vsel %vm1634, %v1633, %v1629
    %vm1637 = vcmask 254976
    %v1638 = vsel %vm1637, %v1635, 0.0
    %1639 = vadd.xlane.f32.xlu0 %v1638
    %v1640 = vpop.xlane.xlu0 %1639
    %v1641 = vmul.f32 %v1640, %v205
    %v1643 = vrot.slane %v1641, 1
    %v1646 = vsub.f32 %v1629, %v1641
    %v1647 = vsub.f32 %v1630, %v1643
    %v1648 = vmul.f32 %v1646, %v1646
    %v1649 = vmul.f32 %v1647, %v1647
    %v1652 = vrot.slane %v1649, 7
    %v1653 = vsel %vm1634, %v1652, %v1648
    %v1655 = vsel %vm1637, %v1653, 0.0
    %1656 = vadd.xlane.f32.xlu0 %v1655
    %v1657 = vpop.xlane.xlu0 %1656
    %v1658 = vmul.f32 %v1657, %v205
    %v1659 = vadd.f32 %v1658, 1e-05
    %v1660 = vrsqrt.pop %v1659
    %v1662 = vrot.slane %v1660, 1
    %v1665 = vmul.f32 %v1646, %v1660
    %v1666 = vmul.f32 %v1647, %v1662
    %v1667 = vlaneseq
    %v1668 = vshrl.u32 %v1667, 7
    %v1669 = vsub.s32 3, %v1668
    %v1670 = vrot.slane %v33, %v1669
    %v1671 = vmul.f32 %v1665, %v1670
    %v1672 = vmul.f32 %v1666, %v1670
    %v1673 = vlaneseq
    %v1674 = vshrl.u32 %v1673, 7
    %v1675 = vsub.s32 4, %v1674
    %v1676 = vrot.slane %v33, %v1675
    %v1677 = vadd.f32 %v1671, %v1676
    %v1678 = vadd.f32 %v1672, %v1676
    %v1679 = vpack.c.bf16 %v1677, %v1677
    %v1680 = vpack.c.bf16 %v1678, %v1678
    %v1681 = vld [vmem:[%s1 + $0xe0] sm:$0xf]
    %v1682 = vld [vmem:[%s1 + $0xe4] sm:$0xf]
    %v1683 = vld [vmem:[%s1 + $0xe8] sm:$0xf]
    %v1684 = vld [vmem:[%s1 + $0xec] sm:$0xf]
    %v1687 = vunpack.c.l.b16 %v1679
    %v1688 = vunpack.c.l.b16 %v1680
    %v1689 = vrot.slane %v1688, 7
    %v1690 = vsel %vm1634, %v1689, %v1687
    %v1691 = vpack.c.b16 %v1690, %v1690
    %v1696 = vunpack.c.l.b16 %v1681
    %v1697 = vunpack.c.l.b16 %v1682
    %v1698 = vunpack.c.l.b16 %v1683
    %v1699 = vunpack.c.l.b16 %v1684
    %v1700 = vpack.c.b16 %v1697, %v1696
    %v1701 = vpack.c.b16 %v1699, %v1698
    %v1705 = vsel %vm198, %v1691, 0
    %1707 = vmatprep.subr.bf16.mxu0 0
    %1708 = vmatpush1.bf16.msra.mxu0 0
    %1709 = vmatprep.subr.bf16.mxu0 0
    %1710 = vmatpush1.bf16.msra.mxu0 0
    %1711 = vmatprep.subr.bf16.mxu0 0
    %1712 = vmatpush1.bf16.msra.mxu0 0
    %1713 = vmatprep.subr.bf16.mxu0 0
    %1714 = vmatpush1.bf16.msra.mxu0 0
    %1715 = vmatprep.subr.bf16.mxu0 0
    %1716 = vmatpush1.bf16.msra.mxu0 0
    %1717 = vmatprep.subr.bf16.mxu0 0
    %1718 = vmatpush1.bf16.msra.mxu0 0
    %1719 = vmatprep.subr.bf16.mxu0 0
    %1720 = vmatpush1.bf16.msra.mxu0 %v1701
    %1721 = vmatprep.subr.bf16.mxu0 0
    %1722 = vmatpush1.bf16.msra.mxu0 %v1700
    %1723 = vmatprep.subr.bf16.mxu0 0
    %1724 = vmatpush2.bf16.msra.mxu0 0
    %1725 = vmatprep.subr.bf16.mxu0 0
    %1726 = vmatpush2.bf16.msra.mxu0 0
    %1727 = vmatprep.subr.bf16.mxu0 0
    %1728 = vmatpush2.bf16.msra.mxu0 0
    %1729 = vmatprep.subr.bf16.mxu0 0
    %1730 = vmatpush2.bf16.msra.mxu0 0
    %1731 = vmatprep.subr.bf16.mxu0 0
    %1732 = vmatpush2.bf16.msra.mxu0 0
    %1733 = vmatprep.subr.bf16.mxu0 0
    %1734 = vmatpush2.bf16.msra.mxu0 0
    %1735 = vmatprep.subr.bf16.mxu0 0
    %1736 = vmatpush2.bf16.msra.mxu0 0
    %1737 = vmatprep.subr.bf16.mxu0 0
    %1738 = vmatpush2.bf16.msra.mxu0 0
    %1739 = vmatprep.mubr.bf16.mxu0 0
    %1740 = vmatmul.mubr.bf16.gmra.mxu0 %v1705
    %v1741 = vpop.f32.mrf.mxu0
    %v1742 = vadd.f32 0.0, %v1741
    %v1743 = vpop.f32.mrf.mxu0
    %v1744 = vpop.f32.mrf.mxu0
    %v1745 = vpop.f32.mrf.mxu0
    %1746 = vdwg.mxu0
    %v1747 = vmul.f32 %v1742, %v1742
    %v1748 = vsel %vm1637, %v1747, 0.0
    %1749 = vadd.xlane.f32.xlu0 %v1748
    %v1750 = vpop.xlane.xlu0 %1749
    %v1751 = vadd.f32 %v1750, 1e-12
    %v1752 = vrsqrt.pop %v1751
    %v1753 = vmul.f32 %v1742, %v1752
    %v1754 = vpack.c.bf16 %v1753, %v1753
    %v1755 = vld [vmem:[%s1 + $0x180] sm:$0xf]
    %v1756 = vld [vmem:[%s1 + $0x184] sm:$0xf]
    %v1757 = vld [vmem:[%s1 + $0x188] sm:$0xf]
    %v1758 = vld [vmem:[%s1 + $0x18c] sm:$0xf]
    %v1759 = vlaneseq
    %v1760 = vshrl.u32 %v1759, 7
    %v1761 = vsub.s32 0, %v1760
    %v1762 = vrot.slane %v35, %v1761
    %v1767 = vunpack.c.l.b16 %v1755
    %v1768 = vunpack.c.l.b16 %v1756
    %v1769 = vunpack.c.l.b16 %v1757
    %v1770 = vunpack.c.l.b16 %v1758
    %v1771 = vpack.c.b16 %v1768, %v1767
    %v1772 = vpack.c.b16 %v1770, %v1769
    %v1776 = vsel %vm198, %v1754, 0
    %1778 = vmatprep.subr.bf16.mxu0 0
    %1779 = vmatpush1.bf16.msra.mxu0 0
    %1780 = vmatprep.subr.bf16.mxu0 0
    %1781 = vmatpush1.bf16.msra.mxu0 0
    %1782 = vmatprep.subr.bf16.mxu0 0
    %1783 = vmatpush1.bf16.msra.mxu0 0
    %1784 = vmatprep.subr.bf16.mxu0 0
    %1785 = vmatpush1.bf16.msra.mxu0 0
    %1786 = vmatprep.subr.bf16.mxu0 0
    %1787 = vmatpush1.bf16.msra.mxu0 0
    %1788 = vmatprep.subr.bf16.mxu0 0
    %1789 = vmatpush1.bf16.msra.mxu0 0
    %1790 = vmatprep.subr.bf16.mxu0 0
    %1791 = vmatpush1.bf16.msra.mxu0 %v1772
    %1792 = vmatprep.subr.bf16.mxu0 0
    %1793 = vmatpush1.bf16.msra.mxu0 %v1771
    %1794 = vmatprep.subr.bf16.mxu0 0
    %1795 = vmatpush2.bf16.msra.mxu0 0
    %1796 = vmatprep.subr.bf16.mxu0 0
    %1797 = vmatpush2.bf16.msra.mxu0 0
    %1798 = vmatprep.subr.bf16.mxu0 0
    %1799 = vmatpush2.bf16.msra.mxu0 0
    %1800 = vmatprep.subr.bf16.mxu0 0
    %1801 = vmatpush2.bf16.msra.mxu0 0
    %1802 = vmatprep.subr.bf16.mxu0 0
    %1803 = vmatpush2.bf16.msra.mxu0 0
    %1804 = vmatprep.subr.bf16.mxu0 0
    %1805 = vmatpush2.bf16.msra.mxu0 0
    %1806 = vmatprep.subr.bf16.mxu0 0
    %1807 = vmatpush2.bf16.msra.mxu0 0
    %1808 = vmatprep.subr.bf16.mxu0 0
    %1809 = vmatpush2.bf16.msra.mxu0 0
    %1810 = vmatprep.mubr.bf16.mxu0 0
    %1811 = vmatmul.mubr.bf16.gmra.mxu0 %v1776
    %v1812 = vpop.f32.mrf.mxu0
    %v1813 = vadd.f32 %v1762, %v1812
    %v1814 = vpop.f32.mrf.mxu0
    %v1815 = vpop.f32.mrf.mxu0
    %v1816 = vpop.f32.mrf.mxu0
    %1817 = vdwg.mxu0
    %v1818 = vmax.f32 %v1813, 0.0
    %v1819 = vpack.c.bf16 %v1818, %v1818
    %v1820 = vld [vmem:[%s1 + $0x190] sm:$0xf]
    %v1821 = vld [vmem:[%s1 + $0x194] sm:$0xf]
    %v1822 = vld [vmem:[%s1 + $0x198] sm:$0xf]
    %v1823 = vld [vmem:[%s1 + $0x19c] sm:$0xf]
    %v1824 = vlaneseq
    %v1825 = vshrl.u32 %v1824, 7
    %v1826 = vsub.s32 1, %v1825
    %v1827 = vrot.slane %v35, %v1826
    %v1832 = vunpack.c.l.b16 %v1820
    %v1833 = vunpack.c.l.b16 %v1821
    %v1834 = vunpack.c.l.b16 %v1822
    %v1835 = vunpack.c.l.b16 %v1823
    %v1836 = vpack.c.b16 %v1833, %v1832
    %v1837 = vpack.c.b16 %v1835, %v1834
    %v1841 = vsel %vm198, %v1819, 0
    %1843 = vmatprep.subr.bf16.mxu0 0
    %1844 = vmatpush1.bf16.msra.mxu0 0
    %1845 = vmatprep.subr.bf16.mxu0 0
    %1846 = vmatpush1.bf16.msra.mxu0 0
    %1847 = vmatprep.subr.bf16.mxu0 0
    %1848 = vmatpush1.bf16.msra.mxu0 0
    %1849 = vmatprep.subr.bf16.mxu0 0
    %1850 = vmatpush1.bf16.msra.mxu0 0
    %1851 = vmatprep.subr.bf16.mxu0 0
    %1852 = vmatpush1.bf16.msra.mxu0 0
    %1853 = vmatprep.subr.bf16.mxu0 0
    %1854 = vmatpush1.bf16.msra.mxu0 0
    %1855 = vmatprep.subr.bf16.mxu0 0
    %1856 = vmatpush1.bf16.msra.mxu0 %v1837
    %1857 = vmatprep.subr.bf16.mxu0 0
    %1858 = vmatpush1.bf16.msra.mxu0 %v1836
    %1859 = vmatprep.subr.bf16.mxu0 0
    %1860 = vmatpush2.bf16.msra.mxu0 0
    %1861 = vmatprep.subr.bf16.mxu0 0
    %1862 = vmatpush2.bf16.msra.mxu0 0
    %1863 = vmatprep.subr.bf16.mxu0 0
    %1864 = vmatpush2.bf16.msra.mxu0 0
    %1865 = vmatprep.subr.bf16.mxu0 0
    %1866 = vmatpush2.bf16.msra.mxu0 0
    %1867 = vmatprep.subr.bf16.mxu0 0
    %1868 = vmatpush2.bf16.msra.mxu0 0
    %1869 = vmatprep.subr.bf16.mxu0 0
    %1870 = vmatpush2.bf16.msra.mxu0 0
    %1871 = vmatprep.subr.bf16.mxu0 0
    %1872 = vmatpush2.bf16.msra.mxu0 0
    %1873 = vmatprep.subr.bf16.mxu0 0
    %1874 = vmatpush2.bf16.msra.mxu0 0
    %1875 = vmatprep.mubr.bf16.mxu0 0
    %1876 = vmatmul.mubr.bf16.gmra.mxu0 %v1841
    %v1877 = vpop.f32.mrf.mxu0
    %v1878 = vadd.f32 %v1827, %v1877
    %v1879 = vpop.f32.mrf.mxu0
    %v1880 = vpop.f32.mrf.mxu0
    %v1881 = vpop.f32.mrf.mxu0
    %1882 = vdwg.mxu0
    %v1885 = vunpack.c.l.s4 1966171168
    %v1886 = vunpack.c.0.s8 %v1885
    %v1887 = vlaneseq
    %v1888 = vshrl.u32 %v1887, 7
    %v1889 = vsub.s32 %v1886, %v1888
    %v1890 = vrot.slane %v1878, %v1889
    %v1891 = vcombine.high %v1890, %v1890
    %v1893 = vunpack.c.l.s4 1966171168
    %v1894 = vunpack.c.0.s8 %v1893
    %v1895 = vlaneseq
    %v1896 = vshrl.u32 %v1895, 7
    %v1897 = vsub.s32 %v1894, %v1896
    %v1898 = vrot.slane %v1890, %v1897
    %v1900 = vunpack.c.l.s4 1966171168
    %v1901 = vunpack.c.0.s8 %v1900
    %v1902 = vlaneseq
    %v1903 = vshrl.u32 %v1902, 7
    %v1904 = vsub.s32 %v1901, %v1903
    %v1905 = vrot.slane %v1891, %v1904
    %v1906 = vlaneseq
    %v1907 = vshrl.u32 %v1906, 7
    %v1908 = vsub.s32 0, %v1907
    %v1909 = vrot.slane %v1898, %v1908
    %v1910 = vlaneseq
    %v1911 = vshrl.u32 %v1910, 7
    %v1912 = vsub.s32 0, %v1911
    %v1913 = vrot.slane %v1905, %v1912
    %v1916 = vmul.f32 %v35, %v1909
    %v1917 = vmul.f32 %v36, %v1909
    %v1918 = vmul.f32 %v35, %v1913
    %v1919 = vmul.f32 %v36, %v1913
    %v1920 = vld [vmem:[%s5] sm:$0xff]
    %v1921 = vld [vmem:[%s5 + $0x8] sm:$0xff]
    %v1922 = vld [vmem:[%s5 + $0x10] sm:$0xff]
    %v1923 = vld [vmem:[%s5 + $0x18] sm:$0xff]
    %v1924 = vld [vmem:[%s5 + $0x20] sm:$0xff]
    %v1925 = vld [vmem:[%s5 + $0x28] sm:$0xff]
    %vm1930 = vcmask 1045504
    %v1931 = vrot.slane %v1916, 2
    %v1932 = vrot.slane %v1917, 2
    %v1933 = vsel %vm1930, %v1931, %v1932
    %v1934 = vrot.slane %v1918, 2
    %v1935 = vrot.slane %v1919, 2
    %v1936 = vsel %vm1930, %v1934, %v1935
    %v1939 = vadd.f32 %v1920, %v1933
    %v1940 = vadd.f32 %v1921, %v1933
    %v1941 = vadd.f32 %v1922, %v1933
    %v1942 = vadd.f32 %v1923, %v1933
    %v1943 = vadd.f32 %v1924, %v1933
    %v1944 = vadd.f32 %v1925, %v1933
    %v1945 = vadd.f32 %v1920, %v1936
    %v1946 = vadd.f32 %v1921, %v1936
    %v1947 = vadd.f32 %v1922, %v1936
    %v1948 = vadd.f32 %v1923, %v1936
    %v1949 = vadd.f32 %v1924, %v1936
    %v1950 = vadd.f32 %v1925, %v1936
    %v1951 = vsel %vm198, %v1939, 0.0
    %1952 = vadd.xlane.f32.xlu0 %v1951
    %v1953 = vpop.xlane.xlu0 %1952
    %v1954 = vsel %vm198, %v1940, 0.0
    %1955 = vadd.xlane.f32.xlu0 %v1954
    %v1956 = vpop.xlane.xlu0 %1955
    %v1957 = vsel %vm198, %v1941, 0.0
    %1958 = vadd.xlane.f32.xlu0 %v1957
    %v1959 = vpop.xlane.xlu0 %1958
    %v1960 = vsel %vm198, %v1942, 0.0
    %1961 = vadd.xlane.f32.xlu0 %v1960
    %v1962 = vpop.xlane.xlu0 %1961
    %v1963 = vsel %vm198, %v1943, 0.0
    %1964 = vadd.xlane.f32.xlu0 %v1963
    %v1965 = vpop.xlane.xlu0 %1964
    %v1966 = vsel %vm198, %v1944, 0.0
    %1967 = vadd.xlane.f32.xlu0 %v1966
    %v1968 = vpop.xlane.xlu0 %1967
    %v1969 = vsel %vm198, %v1945, 0.0
    %1970 = vadd.xlane.f32.xlu0 %v1969
    %v1971 = vpop.xlane.xlu0 %1970
    %v1972 = vsel %vm198, %v1946, 0.0
    %1973 = vadd.xlane.f32.xlu0 %v1972
    %v1974 = vpop.xlane.xlu0 %1973
    %v1975 = vsel %vm198, %v1947, 0.0
    %1976 = vadd.xlane.f32.xlu0 %v1975
    %v1977 = vpop.xlane.xlu0 %1976
    %v1978 = vsel %vm198, %v1948, 0.0
    %1979 = vadd.xlane.f32.xlu0 %v1978
    %v1980 = vpop.xlane.xlu0 %1979
    %v1981 = vsel %vm198, %v1949, 0.0
    %1982 = vadd.xlane.f32.xlu0 %v1981
    %v1983 = vpop.xlane.xlu0 %1982
    %v1984 = vsel %vm198, %v1950, 0.0
    %1985 = vadd.xlane.f32.xlu0 %v1984
    %v1986 = vpop.xlane.xlu0 %1985
    %v1987 = vmul.f32 %v1953, %v205
    %v1988 = vmul.f32 %v1956, %v205
    %v1989 = vmul.f32 %v1959, %v205
    %v1990 = vmul.f32 %v1962, %v205
    %v1991 = vmul.f32 %v1965, %v205
    %v1992 = vmul.f32 %v1968, %v205
    %v1993 = vmul.f32 %v1971, %v205
    %v1994 = vmul.f32 %v1974, %v205
    %v1995 = vmul.f32 %v1977, %v205
    %v1996 = vmul.f32 %v1980, %v205
    %v1997 = vmul.f32 %v1983, %v205
    %v1998 = vmul.f32 %v1986, %v205
    %v1999 = vsub.f32 %v1939, %v1987
    %v2000 = vsub.f32 %v1940, %v1988
    %v2001 = vsub.f32 %v1941, %v1989
    %v2002 = vsub.f32 %v1942, %v1990
    %v2003 = vsub.f32 %v1943, %v1991
    %v2004 = vsub.f32 %v1944, %v1992
    %v2005 = vsub.f32 %v1945, %v1993
    %v2006 = vsub.f32 %v1946, %v1994
    %v2007 = vsub.f32 %v1947, %v1995
    %v2008 = vsub.f32 %v1948, %v1996
    %v2009 = vsub.f32 %v1949, %v1997
    %v2010 = vsub.f32 %v1950, %v1998
    %v2011 = vmul.f32 %v1999, %v1999
    %v2012 = vmul.f32 %v2000, %v2000
    %v2013 = vmul.f32 %v2001, %v2001
    %v2014 = vmul.f32 %v2002, %v2002
    %v2015 = vmul.f32 %v2003, %v2003
    %v2016 = vmul.f32 %v2004, %v2004
    %v2017 = vmul.f32 %v2005, %v2005
    %v2018 = vmul.f32 %v2006, %v2006
    %v2019 = vmul.f32 %v2007, %v2007
    %v2020 = vmul.f32 %v2008, %v2008
    %v2021 = vmul.f32 %v2009, %v2009
    %v2022 = vmul.f32 %v2010, %v2010
    %v2023 = vsel %vm198, %v2011, 0.0
    %2024 = vadd.xlane.f32.xlu0 %v2023
    %v2025 = vpop.xlane.xlu0 %2024
    %v2026 = vsel %vm198, %v2012, 0.0
    %2027 = vadd.xlane.f32.xlu0 %v2026
    %v2028 = vpop.xlane.xlu0 %2027
    %v2029 = vsel %vm198, %v2013, 0.0
    %2030 = vadd.xlane.f32.xlu0 %v2029
    %v2031 = vpop.xlane.xlu0 %2030
    %v2032 = vsel %vm198, %v2014, 0.0
    %2033 = vadd.xlane.f32.xlu0 %v2032
    %v2034 = vpop.xlane.xlu0 %2033
    %v2035 = vsel %vm198, %v2015, 0.0
    %2036 = vadd.xlane.f32.xlu0 %v2035
    %v2037 = vpop.xlane.xlu0 %2036
    %v2038 = vsel %vm198, %v2016, 0.0
    %2039 = vadd.xlane.f32.xlu0 %v2038
    %v2040 = vpop.xlane.xlu0 %2039
    %v2041 = vsel %vm198, %v2017, 0.0
    %2042 = vadd.xlane.f32.xlu0 %v2041
    %v2043 = vpop.xlane.xlu0 %2042
    %v2044 = vsel %vm198, %v2018, 0.0
    %2045 = vadd.xlane.f32.xlu0 %v2044
    %v2046 = vpop.xlane.xlu0 %2045
    %v2047 = vsel %vm198, %v2019, 0.0
    %2048 = vadd.xlane.f32.xlu0 %v2047
    %v2049 = vpop.xlane.xlu0 %2048
    %v2050 = vsel %vm198, %v2020, 0.0
    %2051 = vadd.xlane.f32.xlu0 %v2050
    %v2052 = vpop.xlane.xlu0 %2051
    %v2053 = vsel %vm198, %v2021, 0.0
    %2054 = vadd.xlane.f32.xlu0 %v2053
    %v2055 = vpop.xlane.xlu0 %2054
    %v2056 = vsel %vm198, %v2022, 0.0
    %2057 = vadd.xlane.f32.xlu0 %v2056
    %v2058 = vpop.xlane.xlu0 %2057
    %v2059 = vmul.f32 %v2025, %v205
    %v2060 = vmul.f32 %v2028, %v205
    %v2061 = vmul.f32 %v2031, %v205
    %v2062 = vmul.f32 %v2034, %v205
    %v2063 = vmul.f32 %v2037, %v205
    %v2064 = vmul.f32 %v2040, %v205
    %v2065 = vmul.f32 %v2043, %v205
    %v2066 = vmul.f32 %v2046, %v205
    %v2067 = vmul.f32 %v2049, %v205
    %v2068 = vmul.f32 %v2052, %v205
    %v2069 = vmul.f32 %v2055, %v205
    %v2070 = vmul.f32 %v2058, %v205
    %v2071 = vadd.f32 %v2059, 1e-05
    %v2072 = vadd.f32 %v2060, 1e-05
    %v2073 = vadd.f32 %v2061, 1e-05
    %v2074 = vadd.f32 %v2062, 1e-05
    %v2075 = vadd.f32 %v2063, 1e-05
    %v2076 = vadd.f32 %v2064, 1e-05
    %v2077 = vadd.f32 %v2065, 1e-05
    %v2078 = vadd.f32 %v2066, 1e-05
    %v2079 = vadd.f32 %v2067, 1e-05
    %v2080 = vadd.f32 %v2068, 1e-05
    %v2081 = vadd.f32 %v2069, 1e-05
    %v2082 = vadd.f32 %v2070, 1e-05
    %v2083 = vrsqrt.pop %v2071
    %v2084 = vrsqrt.pop %v2072
    %v2085 = vrsqrt.pop %v2073
    %v2086 = vrsqrt.pop %v2074
    %v2087 = vrsqrt.pop %v2075
    %v2088 = vrsqrt.pop %v2076
    %v2089 = vrsqrt.pop %v2077
    %v2090 = vrsqrt.pop %v2078
    %v2091 = vrsqrt.pop %v2079
    %v2092 = vrsqrt.pop %v2080
    %v2093 = vrsqrt.pop %v2081
    %v2094 = vrsqrt.pop %v2082
    %v2095 = vmul.f32 %v1999, %v2083
    %v2096 = vmul.f32 %v2000, %v2084
    %v2097 = vmul.f32 %v2001, %v2085
    %v2098 = vmul.f32 %v2002, %v2086
    %v2099 = vmul.f32 %v2003, %v2087
    %v2100 = vmul.f32 %v2004, %v2088
    %v2101 = vmul.f32 %v2005, %v2089
    %v2102 = vmul.f32 %v2006, %v2090
    %v2103 = vmul.f32 %v2007, %v2091
    %v2104 = vmul.f32 %v2008, %v2092
    %v2105 = vmul.f32 %v2009, %v2093
    %v2106 = vmul.f32 %v2010, %v2094
    %v2107 = vlaneseq
    %v2108 = vshrl.u32 %v2107, 7
    %v2109 = vsub.s32 5, %v2108
    %v2110 = vrot.slane %v33, %v2109
    %v2111 = vmul.f32 %v2095, %v2110
    %v2112 = vmul.f32 %v2096, %v2110
    %v2113 = vmul.f32 %v2097, %v2110
    %v2114 = vmul.f32 %v2098, %v2110
    %v2115 = vmul.f32 %v2099, %v2110
    %v2116 = vmul.f32 %v2100, %v2110
    %v2117 = vmul.f32 %v2101, %v2110
    %v2118 = vmul.f32 %v2102, %v2110
    %v2119 = vmul.f32 %v2103, %v2110
    %v2120 = vmul.f32 %v2104, %v2110
    %v2121 = vmul.f32 %v2105, %v2110
    %v2122 = vmul.f32 %v2106, %v2110
    %v2123 = vlaneseq
    %v2124 = vshrl.u32 %v2123, 7
    %v2125 = vsub.s32 6, %v2124
    %v2126 = vrot.slane %v33, %v2125
    %v2127 = vadd.f32 %v2111, %v2126
    %v2128 = vadd.f32 %v2112, %v2126
    %v2129 = vadd.f32 %v2113, %v2126
    %v2130 = vadd.f32 %v2114, %v2126
    %v2131 = vadd.f32 %v2115, %v2126
    %v2132 = vadd.f32 %v2116, %v2126
    %v2133 = vadd.f32 %v2117, %v2126
    %v2134 = vadd.f32 %v2118, %v2126
    %v2135 = vadd.f32 %v2119, %v2126
    %v2136 = vadd.f32 %v2120, %v2126
    %v2137 = vadd.f32 %v2121, %v2126
    %v2138 = vadd.f32 %v2122, %v2126
    %v2139 = vpack.c.bf16 %v2128, %v2127
    %v2140 = vpack.c.bf16 %v2130, %v2129
    %v2141 = vpack.c.bf16 %v2132, %v2131
    %v2142 = vpack.c.bf16 %v2134, %v2133
    %v2143 = vpack.c.bf16 %v2136, %v2135
    %v2144 = vpack.c.bf16 %v2138, %v2137
    %v2145 = vld [vmem:[%s1 + $0xf0] sm:$0xf]
    %v2146 = vld [vmem:[%s1 + $0xf4] sm:$0xf]
    %v2147 = vld [vmem:[%s1 + $0xf8] sm:$0xf]
    %v2148 = vld [vmem:[%s1 + $0xfc] sm:$0xf]
    %v2149 = vlaneseq
    %v2150 = vshrl.u32 %v2149, 7
    %v2151 = vsub.s32 7, %v2150
    %v2152 = vrot.slane %v33, %v2151
    %v2157 = vunpack.c.l.b16 %v2145
    %v2158 = vunpack.c.l.b16 %v2146
    %v2159 = vunpack.c.l.b16 %v2147
    %v2160 = vunpack.c.l.b16 %v2148
    %v2161 = vpack.c.b16 %v2158, %v2157
    %v2162 = vpack.c.b16 %v2160, %v2159
    %v2166 = vsel %vm198, %v2139, 0
    %v2169 = vsel %vm198, %v2140, 0
    %v2172 = vsel %vm198, %v2141, 0
    %v2175 = vsel %vm198, %v2142, 0
    %v2178 = vsel %vm198, %v2143, 0
    %v2181 = vsel %vm198, %v2144, 0
    %2183 = vmatprep.subr.bf16.mxu0 0
    %2184 = vmatpush1.bf16.msra.mxu0 0
    %2185 = vmatprep.subr.bf16.mxu0 0
    %2186 = vmatpush1.bf16.msra.mxu0 0
    %2187 = vmatprep.subr.bf16.mxu0 0
    %2188 = vmatpush1.bf16.msra.mxu0 0
    %2189 = vmatprep.subr.bf16.mxu0 0
    %2190 = vmatpush1.bf16.msra.mxu0 0
    %2191 = vmatprep.subr.bf16.mxu0 0
    %2192 = vmatpush1.bf16.msra.mxu0 0
    %2193 = vmatprep.subr.bf16.mxu0 0
    %2194 = vmatpush1.bf16.msra.mxu0 0
    %2195 = vmatprep.subr.bf16.mxu0 0
    %2196 = vmatpush1.bf16.msra.mxu0 %v2162
    %2197 = vmatprep.subr.bf16.mxu0 0
    %2198 = vmatpush1.bf16.msra.mxu0 %v2161
    %2199 = vmatprep.subr.bf16.mxu0 0
    %2200 = vmatpush2.bf16.msra.mxu0 0
    %2201 = vmatprep.subr.bf16.mxu0 0
    %2202 = vmatpush2.bf16.msra.mxu0 0
    %2203 = vmatprep.subr.bf16.mxu0 0
    %2204 = vmatpush2.bf16.msra.mxu0 0
    %2205 = vmatprep.subr.bf16.mxu0 0
    %2206 = vmatpush2.bf16.msra.mxu0 0
    %2207 = vmatprep.subr.bf16.mxu0 0
    %2208 = vmatpush2.bf16.msra.mxu0 0
    %2209 = vmatprep.subr.bf16.mxu0 0
    %2210 = vmatpush2.bf16.msra.mxu0 0
    %2211 = vmatprep.subr.bf16.mxu0 0
    %2212 = vmatpush2.bf16.msra.mxu0 0
    %2213 = vmatprep.subr.bf16.mxu0 0
    %2214 = vmatpush2.bf16.msra.mxu0 0
    %2215 = vmatprep.mubr.bf16.mxu0 0
    %2216 = vmatmul.mubr.bf16.gmra.mxu0 %v2166
    %v2217 = vpop.f32.mrf.mxu0
    %v2218 = vadd.f32 %v2152, %v2217
    %v2219 = vpop.f32.mrf.mxu0
    %v2220 = vpop.f32.mrf.mxu0
    %v2221 = vadd.f32 %v2152, %v2220
    %v2222 = vpop.f32.mrf.mxu0
    %2223 = vmatprep.mubr.bf16.mxu0 0
    %2224 = vmatmul.mubr.bf16.gmra.mxu0 %v2169
    %v2225 = vpop.f32.mrf.mxu0
    %v2226 = vadd.f32 %v2152, %v2225
    %v2227 = vpop.f32.mrf.mxu0
    %v2228 = vpop.f32.mrf.mxu0
    %v2229 = vadd.f32 %v2152, %v2228
    %v2230 = vpop.f32.mrf.mxu0
    %2231 = vmatprep.mubr.bf16.mxu0 0
    %2232 = vmatmul.mubr.bf16.gmra.mxu0 %v2172
    %v2233 = vpop.f32.mrf.mxu0
    %v2234 = vadd.f32 %v2152, %v2233
    %v2235 = vpop.f32.mrf.mxu0
    %v2236 = vpop.f32.mrf.mxu0
    %v2237 = vadd.f32 %v2152, %v2236
    %v2238 = vpop.f32.mrf.mxu0
    %2239 = vmatprep.mubr.bf16.mxu0 0
    %2240 = vmatmul.mubr.bf16.gmra.mxu0 %v2175
    %v2241 = vpop.f32.mrf.mxu0
    %v2242 = vadd.f32 %v2152, %v2241
    %v2243 = vpop.f32.mrf.mxu0
    %v2244 = vpop.f32.mrf.mxu0
    %v2245 = vadd.f32 %v2152, %v2244
    %v2246 = vpop.f32.mrf.mxu0
    %2247 = vmatprep.mubr.bf16.mxu0 0
    %2248 = vmatmul.mubr.bf16.gmra.mxu0 %v2178
    %v2249 = vpop.f32.mrf.mxu0
    %v2250 = vadd.f32 %v2152, %v2249
    %v2251 = vpop.f32.mrf.mxu0
    %v2252 = vpop.f32.mrf.mxu0
    %v2253 = vadd.f32 %v2152, %v2252
    %v2254 = vpop.f32.mrf.mxu0
    %2255 = vmatprep.mubr.bf16.mxu0 0
    %2256 = vmatmul.mubr.bf16.gmra.mxu0 %v2181
    %v2257 = vpop.f32.mrf.mxu0
    %v2258 = vadd.f32 %v2152, %v2257
    %v2259 = vpop.f32.mrf.mxu0
    %v2260 = vpop.f32.mrf.mxu0
    %v2261 = vadd.f32 %v2152, %v2260
    %v2262 = vpop.f32.mrf.mxu0
    %2263 = vdwg.mxu0
    %v2264 = vld [vmem:[%s1 + $0x100] sm:$0xf]
    %v2265 = vld [vmem:[%s1 + $0x104] sm:$0xf]
    %v2266 = vld [vmem:[%s1 + $0x108] sm:$0xf]
    %v2267 = vld [vmem:[%s1 + $0x10c] sm:$0xf]
    %v2268 = vlaneseq
    %v2269 = vshrl.u32 %v2268, 7
    %v2270 = vsub.s32 0, %v2269
    %v2271 = vrot.slane %v34, %v2270
    %v2276 = vunpack.c.l.b16 %v2264
    %v2277 = vunpack.c.l.b16 %v2265
    %v2278 = vunpack.c.l.b16 %v2266
    %v2279 = vunpack.c.l.b16 %v2267
    %v2280 = vpack.c.b16 %v2277, %v2276
    %v2281 = vpack.c.b16 %v2279, %v2278
    %2284 = vmatprep.subr.bf16.mxu0 0
    %2285 = vmatpush1.bf16.msra.mxu0 0
    %2286 = vmatprep.subr.bf16.mxu0 0
    %2287 = vmatpush1.bf16.msra.mxu0 0
    %2288 = vmatprep.subr.bf16.mxu0 0
    %2289 = vmatpush1.bf16.msra.mxu0 0
    %2290 = vmatprep.subr.bf16.mxu0 0
    %2291 = vmatpush1.bf16.msra.mxu0 0
    %2292 = vmatprep.subr.bf16.mxu0 0
    %2293 = vmatpush1.bf16.msra.mxu0 0
    %2294 = vmatprep.subr.bf16.mxu0 0
    %2295 = vmatpush1.bf16.msra.mxu0 0
    %2296 = vmatprep.subr.bf16.mxu0 0
    %2297 = vmatpush1.bf16.msra.mxu0 %v2281
    %2298 = vmatprep.subr.bf16.mxu0 0
    %2299 = vmatpush1.bf16.msra.mxu0 %v2280
    %2300 = vmatprep.subr.bf16.mxu0 0
    %2301 = vmatpush2.bf16.msra.mxu0 0
    %2302 = vmatprep.subr.bf16.mxu0 0
    %2303 = vmatpush2.bf16.msra.mxu0 0
    %2304 = vmatprep.subr.bf16.mxu0 0
    %2305 = vmatpush2.bf16.msra.mxu0 0
    %2306 = vmatprep.subr.bf16.mxu0 0
    %2307 = vmatpush2.bf16.msra.mxu0 0
    %2308 = vmatprep.subr.bf16.mxu0 0
    %2309 = vmatpush2.bf16.msra.mxu0 0
    %2310 = vmatprep.subr.bf16.mxu0 0
    %2311 = vmatpush2.bf16.msra.mxu0 0
    %2312 = vmatprep.subr.bf16.mxu0 0
    %2313 = vmatpush2.bf16.msra.mxu0 0
    %2314 = vmatprep.subr.bf16.mxu0 0
    %2315 = vmatpush2.bf16.msra.mxu0 0
    %2316 = vmatprep.mubr.bf16.mxu0 0
    %2317 = vmatmul.mubr.bf16.gmra.mxu0 %v2166
    %v2318 = vpop.f32.mrf.mxu0
    %v2319 = vadd.f32 %v2271, %v2318
    %v2320 = vpop.f32.mrf.mxu0
    %v2321 = vpop.f32.mrf.mxu0
    %v2322 = vadd.f32 %v2271, %v2321
    %v2323 = vpop.f32.mrf.mxu0
    %2324 = vmatprep.mubr.bf16.mxu0 0
    %2325 = vmatmul.mubr.bf16.gmra.mxu0 %v2169
    %v2326 = vpop.f32.mrf.mxu0
    %v2327 = vadd.f32 %v2271, %v2326
    %v2328 = vpop.f32.mrf.mxu0
    %v2329 = vpop.f32.mrf.mxu0
    %v2330 = vadd.f32 %v2271, %v2329
    %v2331 = vpop.f32.mrf.mxu0
    %2332 = vmatprep.mubr.bf16.mxu0 0
    %2333 = vmatmul.mubr.bf16.gmra.mxu0 %v2172
    %v2334 = vpop.f32.mrf.mxu0
    %v2335 = vadd.f32 %v2271, %v2334
    %v2336 = vpop.f32.mrf.mxu0
    %v2337 = vpop.f32.mrf.mxu0
    %v2338 = vadd.f32 %v2271, %v2337
    %v2339 = vpop.f32.mrf.mxu0
    %2340 = vmatprep.mubr.bf16.mxu0 0
    %2341 = vmatmul.mubr.bf16.gmra.mxu0 %v2175
    %v2342 = vpop.f32.mrf.mxu0
    %v2343 = vadd.f32 %v2271, %v2342
    %v2344 = vpop.f32.mrf.mxu0
    %v2345 = vpop.f32.mrf.mxu0
    %v2346 = vadd.f32 %v2271, %v2345
    %v2347 = vpop.f32.mrf.mxu0
    %2348 = vmatprep.mubr.bf16.mxu0 0
    %2349 = vmatmul.mubr.bf16.gmra.mxu0 %v2178
    %v2350 = vpop.f32.mrf.mxu0
    %v2351 = vadd.f32 %v2271, %v2350
    %v2352 = vpop.f32.mrf.mxu0
    %v2353 = vpop.f32.mrf.mxu0
    %v2354 = vadd.f32 %v2271, %v2353
    %v2355 = vpop.f32.mrf.mxu0
    %2356 = vmatprep.mubr.bf16.mxu0 0
    %2357 = vmatmul.mubr.bf16.gmra.mxu0 %v2181
    %v2358 = vpop.f32.mrf.mxu0
    %v2359 = vadd.f32 %v2271, %v2358
    %v2360 = vpop.f32.mrf.mxu0
    %v2361 = vpop.f32.mrf.mxu0
    %v2362 = vadd.f32 %v2271, %v2361
    %v2363 = vpop.f32.mrf.mxu0
    %2364 = vdwg.mxu0
    %v2365 = vld [vmem:[%s1 + $0x110] sm:$0xf]
    %v2366 = vld [vmem:[%s1 + $0x114] sm:$0xf]
    %v2367 = vld [vmem:[%s1 + $0x118] sm:$0xf]
    %v2368 = vld [vmem:[%s1 + $0x11c] sm:$0xf]
    %v2369 = vlaneseq
    %v2370 = vshrl.u32 %v2369, 7
    %v2371 = vsub.s32 1, %v2370
    %v2372 = vrot.slane %v34, %v2371
    %v2377 = vunpack.c.l.b16 %v2365
    %v2378 = vunpack.c.l.b16 %v2366
    %v2379 = vunpack.c.l.b16 %v2367
    %v2380 = vunpack.c.l.b16 %v2368
    %v2381 = vpack.c.b16 %v2378, %v2377
    %v2382 = vpack.c.b16 %v2380, %v2379
    %2385 = vmatprep.subr.bf16.mxu0 0
    %2386 = vmatpush1.bf16.msra.mxu0 0
    %2387 = vmatprep.subr.bf16.mxu0 0
    %2388 = vmatpush1.bf16.msra.mxu0 0
    %2389 = vmatprep.subr.bf16.mxu0 0
    %2390 = vmatpush1.bf16.msra.mxu0 0
    %2391 = vmatprep.subr.bf16.mxu0 0
    %2392 = vmatpush1.bf16.msra.mxu0 0
    %2393 = vmatprep.subr.bf16.mxu0 0
    %2394 = vmatpush1.bf16.msra.mxu0 0
    %2395 = vmatprep.subr.bf16.mxu0 0
    %2396 = vmatpush1.bf16.msra.mxu0 0
    %2397 = vmatprep.subr.bf16.mxu0 0
    %2398 = vmatpush1.bf16.msra.mxu0 %v2382
    %2399 = vmatprep.subr.bf16.mxu0 0
    %2400 = vmatpush1.bf16.msra.mxu0 %v2381
    %2401 = vmatprep.subr.bf16.mxu0 0
    %2402 = vmatpush2.bf16.msra.mxu0 0
    %2403 = vmatprep.subr.bf16.mxu0 0
    %2404 = vmatpush2.bf16.msra.mxu0 0
    %2405 = vmatprep.subr.bf16.mxu0 0
    %2406 = vmatpush2.bf16.msra.mxu0 0
    %2407 = vmatprep.subr.bf16.mxu0 0
    %2408 = vmatpush2.bf16.msra.mxu0 0
    %2409 = vmatprep.subr.bf16.mxu0 0
    %2410 = vmatpush2.bf16.msra.mxu0 0
    %2411 = vmatprep.subr.bf16.mxu0 0
    %2412 = vmatpush2.bf16.msra.mxu0 0
    %2413 = vmatprep.subr.bf16.mxu0 0
    %2414 = vmatpush2.bf16.msra.mxu0 0
    %2415 = vmatprep.subr.bf16.mxu0 0
    %2416 = vmatpush2.bf16.msra.mxu0 0
    %2417 = vmatprep.mubr.bf16.mxu0 0
    %2418 = vmatmul.mubr.bf16.gmra.mxu0 %v2166
    %v2419 = vpop.f32.mrf.mxu0
    %v2420 = vadd.f32 %v2372, %v2419
    %v2421 = vpop.f32.mrf.mxu0
    %v2422 = vpop.f32.mrf.mxu0
    %v2423 = vadd.f32 %v2372, %v2422
    %v2424 = vpop.f32.mrf.mxu0
    %2425 = vmatprep.mubr.bf16.mxu0 0
    %2426 = vmatmul.mubr.bf16.gmra.mxu0 %v2169
    %v2427 = vpop.f32.mrf.mxu0
    %v2428 = vadd.f32 %v2372, %v2427
    %v2429 = vpop.f32.mrf.mxu0
    %v2430 = vpop.f32.mrf.mxu0
    %v2431 = vadd.f32 %v2372, %v2430
    %v2432 = vpop.f32.mrf.mxu0
    %2433 = vmatprep.mubr.bf16.mxu0 0
    %2434 = vmatmul.mubr.bf16.gmra.mxu0 %v2172
    %v2435 = vpop.f32.mrf.mxu0
    %v2436 = vadd.f32 %v2372, %v2435
    %v2437 = vpop.f32.mrf.mxu0
    %v2438 = vpop.f32.mrf.mxu0
    %v2439 = vadd.f32 %v2372, %v2438
    %v2440 = vpop.f32.mrf.mxu0
    %2441 = vmatprep.mubr.bf16.mxu0 0
    %2442 = vmatmul.mubr.bf16.gmra.mxu0 %v2175
    %v2443 = vpop.f32.mrf.mxu0
    %v2444 = vadd.f32 %v2372, %v2443
    %v2445 = vpop.f32.mrf.mxu0
    %v2446 = vpop.f32.mrf.mxu0
    %v2447 = vadd.f32 %v2372, %v2446
    %v2448 = vpop.f32.mrf.mxu0
    %2449 = vmatprep.mubr.bf16.mxu0 0
    %2450 = vmatmul.mubr.bf16.gmra.mxu0 %v2178
    %v2451 = vpop.f32.mrf.mxu0
    %v2452 = vadd.f32 %v2372, %v2451
    %v2453 = vpop.f32.mrf.mxu0
    %v2454 = vpop.f32.mrf.mxu0
    %v2455 = vadd.f32 %v2372, %v2454
    %v2456 = vpop.f32.mrf.mxu0
    %2457 = vmatprep.mubr.bf16.mxu0 0
    %2458 = vmatmul.mubr.bf16.gmra.mxu0 %v2181
    %v2459 = vpop.f32.mrf.mxu0
    %v2460 = vadd.f32 %v2372, %v2459
    %v2461 = vpop.f32.mrf.mxu0
    %v2462 = vpop.f32.mrf.mxu0
    %v2463 = vadd.f32 %v2372, %v2462
    %v2464 = vpop.f32.mrf.mxu0
    %2465 = vdwg.mxu0
    %v2466 = vmul.f32 %v2218, 0.35355338
    %v2467 = vmul.f32 %v2221, 0.35355338
    %v2468 = vmul.f32 %v2226, 0.35355338
    %v2469 = vmul.f32 %v2229, 0.35355338
    %v2470 = vmul.f32 %v2234, 0.35355338
    %v2471 = vmul.f32 %v2237, 0.35355338
    %v2472 = vmul.f32 %v2242, 0.35355338
    %v2473 = vmul.f32 %v2245, 0.35355338
    %v2474 = vmul.f32 %v2250, 0.35355338
    %v2475 = vmul.f32 %v2253, 0.35355338
    %v2476 = vmul.f32 %v2258, 0.35355338
    %v2477 = vmul.f32 %v2261, 0.35355338
    %v2478 = vpack.c.bf16 %v2466, %v2466
    %v2479 = vpack.c.bf16 %v2467, %v2467
    %v2480 = vpack.c.bf16 %v2468, %v2468
    %v2481 = vpack.c.bf16 %v2469, %v2469
    %v2482 = vpack.c.bf16 %v2470, %v2470
    %v2483 = vpack.c.bf16 %v2471, %v2471
    %v2484 = vpack.c.bf16 %v2472, %v2472
    %v2485 = vpack.c.bf16 %v2473, %v2473
    %v2486 = vpack.c.bf16 %v2474, %v2474
    %v2487 = vpack.c.bf16 %v2475, %v2475
    %v2488 = vpack.c.bf16 %v2476, %v2476
    %v2489 = vpack.c.bf16 %v2477, %v2477
    %v2490 = vpack.c.bf16 %v2319, %v2319
    %v2491 = vpack.c.bf16 %v2322, %v2322
    %v2492 = vpack.c.bf16 %v2327, %v2327
    %v2493 = vpack.c.bf16 %v2330, %v2330
    %v2494 = vpack.c.bf16 %v2335, %v2335
    %v2495 = vpack.c.bf16 %v2338, %v2338
    %v2496 = vpack.c.bf16 %v2343, %v2343
    %v2497 = vpack.c.bf16 %v2346, %v2346
    %v2498 = vpack.c.bf16 %v2351, %v2351
    %v2499 = vpack.c.bf16 %v2354, %v2354
    %v2500 = vpack.c.bf16 %v2359, %v2359
    %v2501 = vpack.c.bf16 %v2362, %v2362
    %v2502 = vpack.c.bf16 %v2420, %v2420
    %v2503 = vpack.c.bf16 %v2423, %v2423
    %v2504 = vpack.c.bf16 %v2428, %v2428
    %v2505 = vpack.c.bf16 %v2431, %v2431
    %v2506 = vpack.c.bf16 %v2436, %v2436
    %v2507 = vpack.c.bf16 %v2439, %v2439
    %v2508 = vpack.c.bf16 %v2444, %v2444
    %v2509 = vpack.c.bf16 %v2447, %v2447
    %v2510 = vpack.c.bf16 %v2452, %v2452
    %v2511 = vpack.c.bf16 %v2455, %v2455
    %v2512 = vpack.c.bf16 %v2460, %v2460
    %v2513 = vpack.c.bf16 %v2463, %v2463
    %v2514 = vmul.bf16 %v2478, %v478
    %v2515 = vmul.bf16 %v2479, %v478
    %v2516 = vmul.bf16 %v2480, %v478
    %v2517 = vmul.bf16 %v2481, %v478
    %v2518 = vmul.bf16 %v2482, %v478
    %v2519 = vmul.bf16 %v2483, %v478
    %v2520 = vmul.bf16 %v2484, %v478
    %v2521 = vmul.bf16 %v2485, %v478
    %v2522 = vmul.bf16 %v2486, %v478
    %v2523 = vmul.bf16 %v2487, %v478
    %v2524 = vmul.bf16 %v2488, %v478
    %v2525 = vmul.bf16 %v2489, %v478
    %v2527 = vsel %vm198, %v2514, 0
    %v2530 = vsel %vm198, %v2490, 0
    %2532 = vmatprep.subr.bf16.mxu0 0
    %2533 = vmatpush1.bf16.xpose.msra.mxu0 0
    %2534 = vmatprep.subr.bf16.mxu0 0
    %2535 = vmatpush1.bf16.xpose.msra.mxu0 0
    %2536 = vmatprep.subr.bf16.mxu0 0
    %2537 = vmatpush1.bf16.xpose.msra.mxu0 0
    %2538 = vmatprep.subr.bf16.mxu0 0
    %2539 = vmatpush1.bf16.xpose.msra.mxu0 0
    %2540 = vmatprep.subr.bf16.mxu0 0
    %2541 = vmatpush1.bf16.xpose.msra.mxu0 0
    %2542 = vmatprep.subr.bf16.mxu0 0
    %2543 = vmatpush1.bf16.xpose.msra.mxu0 0
    %2544 = vmatprep.subr.bf16.mxu0 0
    %2545 = vmatpush1.bf16.xpose.msra.mxu0 0
    %2546 = vmatprep.subr.bf16.mxu0 0
    %2547 = vmatpush1.bf16.xpose.msra.mxu0 %v2530
    %2548 = vmatprep.subr.bf16.mxu0 0
    %2549 = vmatpush2.bf16.xpose.msra.mxu0 0
    %2550 = vmatprep.subr.bf16.mxu0 0
    %2551 = vmatpush2.bf16.xpose.msra.mxu0 0
    %2552 = vmatprep.subr.bf16.mxu0 0
    %2553 = vmatpush2.bf16.xpose.msra.mxu0 0
    %2554 = vmatprep.subr.bf16.mxu0 0
    %2555 = vmatpush2.bf16.xpose.msra.mxu0 0
    %2556 = vmatprep.subr.bf16.mxu0 0
    %2557 = vmatpush2.bf16.xpose.msra.mxu0 0
    %2558 = vmatprep.subr.bf16.mxu0 0
    %2559 = vmatpush2.bf16.xpose.msra.mxu0 0
    %2560 = vmatprep.subr.bf16.mxu0 0
    %2561 = vmatpush2.bf16.xpose.msra.mxu0 0
    %2562 = vmatprep.subr.bf16.mxu0 0
    %2563 = vmatpush2.bf16.xpose.msra.mxu0 0
    %2564 = vmatprep.mubr.bf16.mxu0 0
    %2565 = vmatmul.mubr.bf16.gmra.mxu0 %v2527
    %v2566 = vpop.f32.mrf.mxu0
    %v2567 = vadd.f32 %v39, %v2566
    %v2568 = vpop.f32.mrf.mxu0
    %v2569 = vpop.f32.mrf.mxu0
    %v2570 = vpop.f32.mrf.mxu0
    %2571 = vdwg.mxu0
    %v2573 = vsel %vm198, %v2515, 0
    %v2576 = vsel %vm198, %v2491, 0
    %2578 = vmatprep.subr.bf16.mxu0 0
    %2579 = vmatpush1.bf16.xpose.msra.mxu0 0
    %2580 = vmatprep.subr.bf16.mxu0 0
    %2581 = vmatpush1.bf16.xpose.msra.mxu0 0
    %2582 = vmatprep.subr.bf16.mxu0 0
    %2583 = vmatpush1.bf16.xpose.msra.mxu0 0
    %2584 = vmatprep.subr.bf16.mxu0 0
    %2585 = vmatpush1.bf16.xpose.msra.mxu0 0
    %2586 = vmatprep.subr.bf16.mxu0 0
    %2587 = vmatpush1.bf16.xpose.msra.mxu0 0
    %2588 = vmatprep.subr.bf16.mxu0 0
    %2589 = vmatpush1.bf16.xpose.msra.mxu0 0
    %2590 = vmatprep.subr.bf16.mxu0 0
    %2591 = vmatpush1.bf16.xpose.msra.mxu0 0
    %2592 = vmatprep.subr.bf16.mxu0 0
    %2593 = vmatpush1.bf16.xpose.msra.mxu0 %v2576
    %2594 = vmatprep.subr.bf16.mxu0 0
    %2595 = vmatpush2.bf16.xpose.msra.mxu0 0
    %2596 = vmatprep.subr.bf16.mxu0 0
    %2597 = vmatpush2.bf16.xpose.msra.mxu0 0
    %2598 = vmatprep.subr.bf16.mxu0 0
    %2599 = vmatpush2.bf16.xpose.msra.mxu0 0
    %2600 = vmatprep.subr.bf16.mxu0 0
    %2601 = vmatpush2.bf16.xpose.msra.mxu0 0
    %2602 = vmatprep.subr.bf16.mxu0 0
    %2603 = vmatpush2.bf16.xpose.msra.mxu0 0
    %2604 = vmatprep.subr.bf16.mxu0 0
    %2605 = vmatpush2.bf16.xpose.msra.mxu0 0
    %2606 = vmatprep.subr.bf16.mxu0 0
    %2607 = vmatpush2.bf16.xpose.msra.mxu0 0
    %2608 = vmatprep.subr.bf16.mxu0 0
    %2609 = vmatpush2.bf16.xpose.msra.mxu0 0
    %2610 = vmatprep.mubr.bf16.mxu0 0
    %2611 = vmatmul.mubr.bf16.gmra.mxu0 %v2573
    %v2612 = vpop.f32.mrf.mxu0
    %v2613 = vadd.f32 %v39, %v2612
    %v2614 = vpop.f32.mrf.mxu0
    %v2615 = vpop.f32.mrf.mxu0
    %v2616 = vpop.f32.mrf.mxu0
    %2617 = vdwg.mxu0
    %v2619 = vsel %vm198, %v2516, 0
    %v2622 = vsel %vm198, %v2492, 0
    %2624 = vmatprep.subr.bf16.mxu0 0
    %2625 = vmatpush1.bf16.xpose.msra.mxu0 0
    %2626 = vmatprep.subr.bf16.mxu0 0
    %2627 = vmatpush1.bf16.xpose.msra.mxu0 0
    %2628 = vmatprep.subr.bf16.mxu0 0
    %2629 = vmatpush1.bf16.xpose.msra.mxu0 0
    %2630 = vmatprep.subr.bf16.mxu0 0
    %2631 = vmatpush1.bf16.xpose.msra.mxu0 0
    %2632 = vmatprep.subr.bf16.mxu0 0
    %2633 = vmatpush1.bf16.xpose.msra.mxu0 0
    %2634 = vmatprep.subr.bf16.mxu0 0
    %2635 = vmatpush1.bf16.xpose.msra.mxu0 0
    %2636 = vmatprep.subr.bf16.mxu0 0
    %2637 = vmatpush1.bf16.xpose.msra.mxu0 0
    %2638 = vmatprep.subr.bf16.mxu0 0
    %2639 = vmatpush1.bf16.xpose.msra.mxu0 %v2622
    %2640 = vmatprep.subr.bf16.mxu0 0
    %2641 = vmatpush2.bf16.xpose.msra.mxu0 0
    %2642 = vmatprep.subr.bf16.mxu0 0
    %2643 = vmatpush2.bf16.xpose.msra.mxu0 0
    %2644 = vmatprep.subr.bf16.mxu0 0
    %2645 = vmatpush2.bf16.xpose.msra.mxu0 0
    %2646 = vmatprep.subr.bf16.mxu0 0
    %2647 = vmatpush2.bf16.xpose.msra.mxu0 0
    %2648 = vmatprep.subr.bf16.mxu0 0
    %2649 = vmatpush2.bf16.xpose.msra.mxu0 0
    %2650 = vmatprep.subr.bf16.mxu0 0
    %2651 = vmatpush2.bf16.xpose.msra.mxu0 0
    %2652 = vmatprep.subr.bf16.mxu0 0
    %2653 = vmatpush2.bf16.xpose.msra.mxu0 0
    %2654 = vmatprep.subr.bf16.mxu0 0
    %2655 = vmatpush2.bf16.xpose.msra.mxu0 0
    %2656 = vmatprep.mubr.bf16.mxu0 0
    %2657 = vmatmul.mubr.bf16.gmra.mxu0 %v2619
    %v2658 = vpop.f32.mrf.mxu0
    %v2659 = vadd.f32 %v39, %v2658
    %v2660 = vpop.f32.mrf.mxu0
    %v2661 = vpop.f32.mrf.mxu0
    %v2662 = vpop.f32.mrf.mxu0
    %2663 = vdwg.mxu0
    %v2665 = vsel %vm198, %v2517, 0
    %v2668 = vsel %vm198, %v2493, 0
    %2670 = vmatprep.subr.bf16.mxu0 0
    %2671 = vmatpush1.bf16.xpose.msra.mxu0 0
    %2672 = vmatprep.subr.bf16.mxu0 0
    %2673 = vmatpush1.bf16.xpose.msra.mxu0 0
    %2674 = vmatprep.subr.bf16.mxu0 0
    %2675 = vmatpush1.bf16.xpose.msra.mxu0 0
    %2676 = vmatprep.subr.bf16.mxu0 0
    %2677 = vmatpush1.bf16.xpose.msra.mxu0 0
    %2678 = vmatprep.subr.bf16.mxu0 0
    %2679 = vmatpush1.bf16.xpose.msra.mxu0 0
    %2680 = vmatprep.subr.bf16.mxu0 0
    %2681 = vmatpush1.bf16.xpose.msra.mxu0 0
    %2682 = vmatprep.subr.bf16.mxu0 0
    %2683 = vmatpush1.bf16.xpose.msra.mxu0 0
    %2684 = vmatprep.subr.bf16.mxu0 0
    %2685 = vmatpush1.bf16.xpose.msra.mxu0 %v2668
    %2686 = vmatprep.subr.bf16.mxu0 0
    %2687 = vmatpush2.bf16.xpose.msra.mxu0 0
    %2688 = vmatprep.subr.bf16.mxu0 0
    %2689 = vmatpush2.bf16.xpose.msra.mxu0 0
    %2690 = vmatprep.subr.bf16.mxu0 0
    %2691 = vmatpush2.bf16.xpose.msra.mxu0 0
    %2692 = vmatprep.subr.bf16.mxu0 0
    %2693 = vmatpush2.bf16.xpose.msra.mxu0 0
    %2694 = vmatprep.subr.bf16.mxu0 0
    %2695 = vmatpush2.bf16.xpose.msra.mxu0 0
    %2696 = vmatprep.subr.bf16.mxu0 0
    %2697 = vmatpush2.bf16.xpose.msra.mxu0 0
    %2698 = vmatprep.subr.bf16.mxu0 0
    %2699 = vmatpush2.bf16.xpose.msra.mxu0 0
    %2700 = vmatprep.subr.bf16.mxu0 0
    %2701 = vmatpush2.bf16.xpose.msra.mxu0 0
    %2702 = vmatprep.mubr.bf16.mxu0 0
    %2703 = vmatmul.mubr.bf16.gmra.mxu0 %v2665
    %v2704 = vpop.f32.mrf.mxu0
    %v2705 = vadd.f32 %v39, %v2704
    %v2706 = vpop.f32.mrf.mxu0
    %v2707 = vpop.f32.mrf.mxu0
    %v2708 = vpop.f32.mrf.mxu0
    %2709 = vdwg.mxu0
    %v2711 = vsel %vm198, %v2518, 0
    %v2714 = vsel %vm198, %v2494, 0
    %2716 = vmatprep.subr.bf16.mxu0 0
    %2717 = vmatpush1.bf16.xpose.msra.mxu0 0
    %2718 = vmatprep.subr.bf16.mxu0 0
    %2719 = vmatpush1.bf16.xpose.msra.mxu0 0
    %2720 = vmatprep.subr.bf16.mxu0 0
    %2721 = vmatpush1.bf16.xpose.msra.mxu0 0
    %2722 = vmatprep.subr.bf16.mxu0 0
    %2723 = vmatpush1.bf16.xpose.msra.mxu0 0
    %2724 = vmatprep.subr.bf16.mxu0 0
    %2725 = vmatpush1.bf16.xpose.msra.mxu0 0
    %2726 = vmatprep.subr.bf16.mxu0 0
    %2727 = vmatpush1.bf16.xpose.msra.mxu0 0
    %2728 = vmatprep.subr.bf16.mxu0 0
    %2729 = vmatpush1.bf16.xpose.msra.mxu0 0
    %2730 = vmatprep.subr.bf16.mxu0 0
    %2731 = vmatpush1.bf16.xpose.msra.mxu0 %v2714
    %2732 = vmatprep.subr.bf16.mxu0 0
    %2733 = vmatpush2.bf16.xpose.msra.mxu0 0
    %2734 = vmatprep.subr.bf16.mxu0 0
    %2735 = vmatpush2.bf16.xpose.msra.mxu0 0
    %2736 = vmatprep.subr.bf16.mxu0 0
    %2737 = vmatpush2.bf16.xpose.msra.mxu0 0
    %2738 = vmatprep.subr.bf16.mxu0 0
    %2739 = vmatpush2.bf16.xpose.msra.mxu0 0
    %2740 = vmatprep.subr.bf16.mxu0 0
    %2741 = vmatpush2.bf16.xpose.msra.mxu0 0
    %2742 = vmatprep.subr.bf16.mxu0 0
    %2743 = vmatpush2.bf16.xpose.msra.mxu0 0
    %2744 = vmatprep.subr.bf16.mxu0 0
    %2745 = vmatpush2.bf16.xpose.msra.mxu0 0
    %2746 = vmatprep.subr.bf16.mxu0 0
    %2747 = vmatpush2.bf16.xpose.msra.mxu0 0
    %2748 = vmatprep.mubr.bf16.mxu0 0
    %2749 = vmatmul.mubr.bf16.gmra.mxu0 %v2711
    %v2750 = vpop.f32.mrf.mxu0
    %v2751 = vadd.f32 %v39, %v2750
    %v2752 = vpop.f32.mrf.mxu0
    %v2753 = vpop.f32.mrf.mxu0
    %v2754 = vpop.f32.mrf.mxu0
    %2755 = vdwg.mxu0
    %v2757 = vsel %vm198, %v2519, 0
    %v2760 = vsel %vm198, %v2495, 0
    %2762 = vmatprep.subr.bf16.mxu0 0
    %2763 = vmatpush1.bf16.xpose.msra.mxu0 0
    %2764 = vmatprep.subr.bf16.mxu0 0
    %2765 = vmatpush1.bf16.xpose.msra.mxu0 0
    %2766 = vmatprep.subr.bf16.mxu0 0
    %2767 = vmatpush1.bf16.xpose.msra.mxu0 0
    %2768 = vmatprep.subr.bf16.mxu0 0
    %2769 = vmatpush1.bf16.xpose.msra.mxu0 0
    %2770 = vmatprep.subr.bf16.mxu0 0
    %2771 = vmatpush1.bf16.xpose.msra.mxu0 0
    %2772 = vmatprep.subr.bf16.mxu0 0
    %2773 = vmatpush1.bf16.xpose.msra.mxu0 0
    %2774 = vmatprep.subr.bf16.mxu0 0
    %2775 = vmatpush1.bf16.xpose.msra.mxu0 0
    %2776 = vmatprep.subr.bf16.mxu0 0
    %2777 = vmatpush1.bf16.xpose.msra.mxu0 %v2760
    %2778 = vmatprep.subr.bf16.mxu0 0
    %2779 = vmatpush2.bf16.xpose.msra.mxu0 0
    %2780 = vmatprep.subr.bf16.mxu0 0
    %2781 = vmatpush2.bf16.xpose.msra.mxu0 0
    %2782 = vmatprep.subr.bf16.mxu0 0
    %2783 = vmatpush2.bf16.xpose.msra.mxu0 0
    %2784 = vmatprep.subr.bf16.mxu0 0
    %2785 = vmatpush2.bf16.xpose.msra.mxu0 0
    %2786 = vmatprep.subr.bf16.mxu0 0
    %2787 = vmatpush2.bf16.xpose.msra.mxu0 0
    %2788 = vmatprep.subr.bf16.mxu0 0
    %2789 = vmatpush2.bf16.xpose.msra.mxu0 0
    %2790 = vmatprep.subr.bf16.mxu0 0
    %2791 = vmatpush2.bf16.xpose.msra.mxu0 0
    %2792 = vmatprep.subr.bf16.mxu0 0
    %2793 = vmatpush2.bf16.xpose.msra.mxu0 0
    %2794 = vmatprep.mubr.bf16.mxu0 0
    %2795 = vmatmul.mubr.bf16.gmra.mxu0 %v2757
    %v2796 = vpop.f32.mrf.mxu0
    %v2797 = vadd.f32 %v39, %v2796
    %v2798 = vpop.f32.mrf.mxu0
    %v2799 = vpop.f32.mrf.mxu0
    %v2800 = vpop.f32.mrf.mxu0
    %2801 = vdwg.mxu0
    %v2803 = vsel %vm198, %v2520, 0
    %v2806 = vsel %vm198, %v2496, 0
    %2808 = vmatprep.subr.bf16.mxu0 0
    %2809 = vmatpush1.bf16.xpose.msra.mxu0 0
    %2810 = vmatprep.subr.bf16.mxu0 0
    %2811 = vmatpush1.bf16.xpose.msra.mxu0 0
    %2812 = vmatprep.subr.bf16.mxu0 0
    %2813 = vmatpush1.bf16.xpose.msra.mxu0 0
    %2814 = vmatprep.subr.bf16.mxu0 0
    %2815 = vmatpush1.bf16.xpose.msra.mxu0 0
    %2816 = vmatprep.subr.bf16.mxu0 0
    %2817 = vmatpush1.bf16.xpose.msra.mxu0 0
    %2818 = vmatprep.subr.bf16.mxu0 0
    %2819 = vmatpush1.bf16.xpose.msra.mxu0 0
    %2820 = vmatprep.subr.bf16.mxu0 0
    %2821 = vmatpush1.bf16.xpose.msra.mxu0 0
    %2822 = vmatprep.subr.bf16.mxu0 0
    %2823 = vmatpush1.bf16.xpose.msra.mxu0 %v2806
    %2824 = vmatprep.subr.bf16.mxu0 0
    %2825 = vmatpush2.bf16.xpose.msra.mxu0 0
    %2826 = vmatprep.subr.bf16.mxu0 0
    %2827 = vmatpush2.bf16.xpose.msra.mxu0 0
    %2828 = vmatprep.subr.bf16.mxu0 0
    %2829 = vmatpush2.bf16.xpose.msra.mxu0 0
    %2830 = vmatprep.subr.bf16.mxu0 0
    %2831 = vmatpush2.bf16.xpose.msra.mxu0 0
    %2832 = vmatprep.subr.bf16.mxu0 0
    %2833 = vmatpush2.bf16.xpose.msra.mxu0 0
    %2834 = vmatprep.subr.bf16.mxu0 0
    %2835 = vmatpush2.bf16.xpose.msra.mxu0 0
    %2836 = vmatprep.subr.bf16.mxu0 0
    %2837 = vmatpush2.bf16.xpose.msra.mxu0 0
    %2838 = vmatprep.subr.bf16.mxu0 0
    %2839 = vmatpush2.bf16.xpose.msra.mxu0 0
    %2840 = vmatprep.mubr.bf16.mxu0 0
    %2841 = vmatmul.mubr.bf16.gmra.mxu0 %v2803
    %v2842 = vpop.f32.mrf.mxu0
    %v2843 = vadd.f32 %v39, %v2842
    %v2844 = vpop.f32.mrf.mxu0
    %v2845 = vpop.f32.mrf.mxu0
    %v2846 = vpop.f32.mrf.mxu0
    %2847 = vdwg.mxu0
    %v2849 = vsel %vm198, %v2521, 0
    %v2852 = vsel %vm198, %v2497, 0
    %2854 = vmatprep.subr.bf16.mxu0 0
    %2855 = vmatpush1.bf16.xpose.msra.mxu0 0
    %2856 = vmatprep.subr.bf16.mxu0 0
    %2857 = vmatpush1.bf16.xpose.msra.mxu0 0
    %2858 = vmatprep.subr.bf16.mxu0 0
    %2859 = vmatpush1.bf16.xpose.msra.mxu0 0
    %2860 = vmatprep.subr.bf16.mxu0 0
    %2861 = vmatpush1.bf16.xpose.msra.mxu0 0
    %2862 = vmatprep.subr.bf16.mxu0 0
    %2863 = vmatpush1.bf16.xpose.msra.mxu0 0
    %2864 = vmatprep.subr.bf16.mxu0 0
    %2865 = vmatpush1.bf16.xpose.msra.mxu0 0
    %2866 = vmatprep.subr.bf16.mxu0 0
    %2867 = vmatpush1.bf16.xpose.msra.mxu0 0
    %2868 = vmatprep.subr.bf16.mxu0 0
    %2869 = vmatpush1.bf16.xpose.msra.mxu0 %v2852
    %2870 = vmatprep.subr.bf16.mxu0 0
    %2871 = vmatpush2.bf16.xpose.msra.mxu0 0
    %2872 = vmatprep.subr.bf16.mxu0 0
    %2873 = vmatpush2.bf16.xpose.msra.mxu0 0
    %2874 = vmatprep.subr.bf16.mxu0 0
    %2875 = vmatpush2.bf16.xpose.msra.mxu0 0
    %2876 = vmatprep.subr.bf16.mxu0 0
    %2877 = vmatpush2.bf16.xpose.msra.mxu0 0
    %2878 = vmatprep.subr.bf16.mxu0 0
    %2879 = vmatpush2.bf16.xpose.msra.mxu0 0
    %2880 = vmatprep.subr.bf16.mxu0 0
    %2881 = vmatpush2.bf16.xpose.msra.mxu0 0
    %2882 = vmatprep.subr.bf16.mxu0 0
    %2883 = vmatpush2.bf16.xpose.msra.mxu0 0
    %2884 = vmatprep.subr.bf16.mxu0 0
    %2885 = vmatpush2.bf16.xpose.msra.mxu0 0
    %2886 = vmatprep.mubr.bf16.mxu0 0
    %2887 = vmatmul.mubr.bf16.gmra.mxu0 %v2849
    %v2888 = vpop.f32.mrf.mxu0
    %v2889 = vadd.f32 %v39, %v2888
    %v2890 = vpop.f32.mrf.mxu0
    %v2891 = vpop.f32.mrf.mxu0
    %v2892 = vpop.f32.mrf.mxu0
    %2893 = vdwg.mxu0
    %v2895 = vsel %vm198, %v2522, 0
    %v2898 = vsel %vm198, %v2498, 0
    %2900 = vmatprep.subr.bf16.mxu0 0
    %2901 = vmatpush1.bf16.xpose.msra.mxu0 0
    %2902 = vmatprep.subr.bf16.mxu0 0
    %2903 = vmatpush1.bf16.xpose.msra.mxu0 0
    %2904 = vmatprep.subr.bf16.mxu0 0
    %2905 = vmatpush1.bf16.xpose.msra.mxu0 0
    %2906 = vmatprep.subr.bf16.mxu0 0
    %2907 = vmatpush1.bf16.xpose.msra.mxu0 0
    %2908 = vmatprep.subr.bf16.mxu0 0
    %2909 = vmatpush1.bf16.xpose.msra.mxu0 0
    %2910 = vmatprep.subr.bf16.mxu0 0
    %2911 = vmatpush1.bf16.xpose.msra.mxu0 0
    %2912 = vmatprep.subr.bf16.mxu0 0
    %2913 = vmatpush1.bf16.xpose.msra.mxu0 0
    %2914 = vmatprep.subr.bf16.mxu0 0
    %2915 = vmatpush1.bf16.xpose.msra.mxu0 %v2898
    %2916 = vmatprep.subr.bf16.mxu0 0
    %2917 = vmatpush2.bf16.xpose.msra.mxu0 0
    %2918 = vmatprep.subr.bf16.mxu0 0
    %2919 = vmatpush2.bf16.xpose.msra.mxu0 0
    %2920 = vmatprep.subr.bf16.mxu0 0
    %2921 = vmatpush2.bf16.xpose.msra.mxu0 0
    %2922 = vmatprep.subr.bf16.mxu0 0
    %2923 = vmatpush2.bf16.xpose.msra.mxu0 0
    %2924 = vmatprep.subr.bf16.mxu0 0
    %2925 = vmatpush2.bf16.xpose.msra.mxu0 0
    %2926 = vmatprep.subr.bf16.mxu0 0
    %2927 = vmatpush2.bf16.xpose.msra.mxu0 0
    %2928 = vmatprep.subr.bf16.mxu0 0
    %2929 = vmatpush2.bf16.xpose.msra.mxu0 0
    %2930 = vmatprep.subr.bf16.mxu0 0
    %2931 = vmatpush2.bf16.xpose.msra.mxu0 0
    %2932 = vmatprep.mubr.bf16.mxu0 0
    %2933 = vmatmul.mubr.bf16.gmra.mxu0 %v2895
    %v2934 = vpop.f32.mrf.mxu0
    %v2935 = vadd.f32 %v39, %v2934
    %v2936 = vpop.f32.mrf.mxu0
    %v2937 = vpop.f32.mrf.mxu0
    %v2938 = vpop.f32.mrf.mxu0
    %2939 = vdwg.mxu0
    %v2941 = vsel %vm198, %v2523, 0
    %v2944 = vsel %vm198, %v2499, 0
    %2946 = vmatprep.subr.bf16.mxu0 0
    %2947 = vmatpush1.bf16.xpose.msra.mxu0 0
    %2948 = vmatprep.subr.bf16.mxu0 0
    %2949 = vmatpush1.bf16.xpose.msra.mxu0 0
    %2950 = vmatprep.subr.bf16.mxu0 0
    %2951 = vmatpush1.bf16.xpose.msra.mxu0 0
    %2952 = vmatprep.subr.bf16.mxu0 0
    %2953 = vmatpush1.bf16.xpose.msra.mxu0 0
    %2954 = vmatprep.subr.bf16.mxu0 0
    %2955 = vmatpush1.bf16.xpose.msra.mxu0 0
    %2956 = vmatprep.subr.bf16.mxu0 0
    %2957 = vmatpush1.bf16.xpose.msra.mxu0 0
    %2958 = vmatprep.subr.bf16.mxu0 0
    %2959 = vmatpush1.bf16.xpose.msra.mxu0 0
    %2960 = vmatprep.subr.bf16.mxu0 0
    %2961 = vmatpush1.bf16.xpose.msra.mxu0 %v2944
    %2962 = vmatprep.subr.bf16.mxu0 0
    %2963 = vmatpush2.bf16.xpose.msra.mxu0 0
    %2964 = vmatprep.subr.bf16.mxu0 0
    %2965 = vmatpush2.bf16.xpose.msra.mxu0 0
    %2966 = vmatprep.subr.bf16.mxu0 0
    %2967 = vmatpush2.bf16.xpose.msra.mxu0 0
    %2968 = vmatprep.subr.bf16.mxu0 0
    %2969 = vmatpush2.bf16.xpose.msra.mxu0 0
    %2970 = vmatprep.subr.bf16.mxu0 0
    %2971 = vmatpush2.bf16.xpose.msra.mxu0 0
    %2972 = vmatprep.subr.bf16.mxu0 0
    %2973 = vmatpush2.bf16.xpose.msra.mxu0 0
    %2974 = vmatprep.subr.bf16.mxu0 0
    %2975 = vmatpush2.bf16.xpose.msra.mxu0 0
    %2976 = vmatprep.subr.bf16.mxu0 0
    %2977 = vmatpush2.bf16.xpose.msra.mxu0 0
    %2978 = vmatprep.mubr.bf16.mxu0 0
    %2979 = vmatmul.mubr.bf16.gmra.mxu0 %v2941
    %v2980 = vpop.f32.mrf.mxu0
    %v2981 = vadd.f32 %v39, %v2980
    %v2982 = vpop.f32.mrf.mxu0
    %v2983 = vpop.f32.mrf.mxu0
    %v2984 = vpop.f32.mrf.mxu0
    %2985 = vdwg.mxu0
    %v2987 = vsel %vm198, %v2524, 0
    %v2990 = vsel %vm198, %v2500, 0
    %2992 = vmatprep.subr.bf16.mxu0 0
    %2993 = vmatpush1.bf16.xpose.msra.mxu0 0
    %2994 = vmatprep.subr.bf16.mxu0 0
    %2995 = vmatpush1.bf16.xpose.msra.mxu0 0
    %2996 = vmatprep.subr.bf16.mxu0 0
    %2997 = vmatpush1.bf16.xpose.msra.mxu0 0
    %2998 = vmatprep.subr.bf16.mxu0 0
    %2999 = vmatpush1.bf16.xpose.msra.mxu0 0
    %3000 = vmatprep.subr.bf16.mxu0 0
    %3001 = vmatpush1.bf16.xpose.msra.mxu0 0
    %3002 = vmatprep.subr.bf16.mxu0 0
    %3003 = vmatpush1.bf16.xpose.msra.mxu0 0
    %3004 = vmatprep.subr.bf16.mxu0 0
    %3005 = vmatpush1.bf16.xpose.msra.mxu0 0
    %3006 = vmatprep.subr.bf16.mxu0 0
    %3007 = vmatpush1.bf16.xpose.msra.mxu0 %v2990
    %3008 = vmatprep.subr.bf16.mxu0 0
    %3009 = vmatpush2.bf16.xpose.msra.mxu0 0
    %3010 = vmatprep.subr.bf16.mxu0 0
    %3011 = vmatpush2.bf16.xpose.msra.mxu0 0
    %3012 = vmatprep.subr.bf16.mxu0 0
    %3013 = vmatpush2.bf16.xpose.msra.mxu0 0
    %3014 = vmatprep.subr.bf16.mxu0 0
    %3015 = vmatpush2.bf16.xpose.msra.mxu0 0
    %3016 = vmatprep.subr.bf16.mxu0 0
    %3017 = vmatpush2.bf16.xpose.msra.mxu0 0
    %3018 = vmatprep.subr.bf16.mxu0 0
    %3019 = vmatpush2.bf16.xpose.msra.mxu0 0
    %3020 = vmatprep.subr.bf16.mxu0 0
    %3021 = vmatpush2.bf16.xpose.msra.mxu0 0
    %3022 = vmatprep.subr.bf16.mxu0 0
    %3023 = vmatpush2.bf16.xpose.msra.mxu0 0
    %3024 = vmatprep.mubr.bf16.mxu0 0
    %3025 = vmatmul.mubr.bf16.gmra.mxu0 %v2987
    %v3026 = vpop.f32.mrf.mxu0
    %v3027 = vadd.f32 %v39, %v3026
    %v3028 = vpop.f32.mrf.mxu0
    %v3029 = vpop.f32.mrf.mxu0
    %v3030 = vpop.f32.mrf.mxu0
    %3031 = vdwg.mxu0
    %v3033 = vsel %vm198, %v2525, 0
    %v3036 = vsel %vm198, %v2501, 0
    %3038 = vmatprep.subr.bf16.mxu0 0
    %3039 = vmatpush1.bf16.xpose.msra.mxu0 0
    %3040 = vmatprep.subr.bf16.mxu0 0
    %3041 = vmatpush1.bf16.xpose.msra.mxu0 0
    %3042 = vmatprep.subr.bf16.mxu0 0
    %3043 = vmatpush1.bf16.xpose.msra.mxu0 0
    %3044 = vmatprep.subr.bf16.mxu0 0
    %3045 = vmatpush1.bf16.xpose.msra.mxu0 0
    %3046 = vmatprep.subr.bf16.mxu0 0
    %3047 = vmatpush1.bf16.xpose.msra.mxu0 0
    %3048 = vmatprep.subr.bf16.mxu0 0
    %3049 = vmatpush1.bf16.xpose.msra.mxu0 0
    %3050 = vmatprep.subr.bf16.mxu0 0
    %3051 = vmatpush1.bf16.xpose.msra.mxu0 0
    %3052 = vmatprep.subr.bf16.mxu0 0
    %3053 = vmatpush1.bf16.xpose.msra.mxu0 %v3036
    %3054 = vmatprep.subr.bf16.mxu0 0
    %3055 = vmatpush2.bf16.xpose.msra.mxu0 0
    %3056 = vmatprep.subr.bf16.mxu0 0
    %3057 = vmatpush2.bf16.xpose.msra.mxu0 0
    %3058 = vmatprep.subr.bf16.mxu0 0
    %3059 = vmatpush2.bf16.xpose.msra.mxu0 0
    %3060 = vmatprep.subr.bf16.mxu0 0
    %3061 = vmatpush2.bf16.xpose.msra.mxu0 0
    %3062 = vmatprep.subr.bf16.mxu0 0
    %3063 = vmatpush2.bf16.xpose.msra.mxu0 0
    %3064 = vmatprep.subr.bf16.mxu0 0
    %3065 = vmatpush2.bf16.xpose.msra.mxu0 0
    %3066 = vmatprep.subr.bf16.mxu0 0
    %3067 = vmatpush2.bf16.xpose.msra.mxu0 0
    %3068 = vmatprep.subr.bf16.mxu0 0
    %3069 = vmatpush2.bf16.xpose.msra.mxu0 0
    %3070 = vmatprep.mubr.bf16.mxu0 0
    %3071 = vmatmul.mubr.bf16.gmra.mxu0 %v3033
    %v3072 = vpop.f32.mrf.mxu0
    %v3073 = vadd.f32 %v39, %v3072
    %v3074 = vpop.f32.mrf.mxu0
    %v3075 = vpop.f32.mrf.mxu0
    %v3076 = vpop.f32.mrf.mxu0
    %3077 = vdwg.mxu0
    %v3078 = vsel %vm573, %v2567, -inf
    %3079 = vmax.xlane.f32.xlu0 %v3078
    %v3080 = vpop.xlane.xlu0 %3079
    %v3081 = vsel %vm573, %v2613, -inf
    %3082 = vmax.xlane.f32.xlu0 %v3081
    %v3083 = vpop.xlane.xlu0 %3082
    %v3084 = vsel %vm573, %v2659, -inf
    %3085 = vmax.xlane.f32.xlu0 %v3084
    %v3086 = vpop.xlane.xlu0 %3085
    %v3087 = vsel %vm573, %v2705, -inf
    %3088 = vmax.xlane.f32.xlu0 %v3087
    %v3089 = vpop.xlane.xlu0 %3088
    %v3090 = vsel %vm573, %v2751, -inf
    %3091 = vmax.xlane.f32.xlu0 %v3090
    %v3092 = vpop.xlane.xlu0 %3091
    %v3093 = vsel %vm573, %v2797, -inf
    %3094 = vmax.xlane.f32.xlu0 %v3093
    %v3095 = vpop.xlane.xlu0 %3094
    %v3096 = vsel %vm573, %v2843, -inf
    %3097 = vmax.xlane.f32.xlu0 %v3096
    %v3098 = vpop.xlane.xlu0 %3097
    %v3099 = vsel %vm573, %v2889, -inf
    %3100 = vmax.xlane.f32.xlu0 %v3099
    %v3101 = vpop.xlane.xlu0 %3100
    %v3102 = vsel %vm573, %v2935, -inf
    %3103 = vmax.xlane.f32.xlu0 %v3102
    %v3104 = vpop.xlane.xlu0 %3103
    %v3105 = vsel %vm573, %v2981, -inf
    %3106 = vmax.xlane.f32.xlu0 %v3105
    %v3107 = vpop.xlane.xlu0 %3106
    %v3108 = vsel %vm573, %v3027, -inf
    %3109 = vmax.xlane.f32.xlu0 %v3108
    %v3110 = vpop.xlane.xlu0 %3109
    %v3111 = vsel %vm573, %v3073, -inf
    %3112 = vmax.xlane.f32.xlu0 %v3111
    %v3113 = vpop.xlane.xlu0 %3112
    %v3114 = vsub.f32 %v2567, %v3080
    %v3115 = vsub.f32 %v2613, %v3083
    %v3116 = vsub.f32 %v2659, %v3086
    %v3117 = vsub.f32 %v2705, %v3089
    %v3118 = vsub.f32 %v2751, %v3092
    %v3119 = vsub.f32 %v2797, %v3095
    %v3120 = vsub.f32 %v2843, %v3098
    %v3121 = vsub.f32 %v2889, %v3101
    %v3122 = vsub.f32 %v2935, %v3104
    %v3123 = vsub.f32 %v2981, %v3107
    %v3124 = vsub.f32 %v3027, %v3110
    %v3125 = vsub.f32 %v3073, %v3113
    %v3126 = vmul.f32 %v3114, 1.442695
    %v3127 = vpow.pop %v3126
    %v3128 = vmul.f32 %v3115, 1.442695
    %v3129 = vpow.pop %v3128
    %v3130 = vmul.f32 %v3116, 1.442695
    %v3131 = vpow.pop %v3130
    %v3132 = vmul.f32 %v3117, 1.442695
    %v3133 = vpow.pop %v3132
    %v3134 = vmul.f32 %v3118, 1.442695
    %v3135 = vpow.pop %v3134
    %v3136 = vmul.f32 %v3119, 1.442695
    %v3137 = vpow.pop %v3136
    %v3138 = vmul.f32 %v3120, 1.442695
    %v3139 = vpow.pop %v3138
    %v3140 = vmul.f32 %v3121, 1.442695
    %v3141 = vpow.pop %v3140
    %v3142 = vmul.f32 %v3122, 1.442695
    %v3143 = vpow.pop %v3142
    %v3144 = vmul.f32 %v3123, 1.442695
    %v3145 = vpow.pop %v3144
    %v3146 = vmul.f32 %v3124, 1.442695
    %v3147 = vpow.pop %v3146
    %v3148 = vmul.f32 %v3125, 1.442695
    %v3149 = vpow.pop %v3148
    %v3150 = vsel %vm573, %v3127, 0.0
    %3151 = vadd.xlane.f32.xlu0 %v3150
    %v3152 = vpop.xlane.xlu0 %3151
    %v3153 = vsel %vm573, %v3129, 0.0
    %3154 = vadd.xlane.f32.xlu0 %v3153
    %v3155 = vpop.xlane.xlu0 %3154
    %v3156 = vsel %vm573, %v3131, 0.0
    %3157 = vadd.xlane.f32.xlu0 %v3156
    %v3158 = vpop.xlane.xlu0 %3157
    %v3159 = vsel %vm573, %v3133, 0.0
    %3160 = vadd.xlane.f32.xlu0 %v3159
    %v3161 = vpop.xlane.xlu0 %3160
    %v3162 = vsel %vm573, %v3135, 0.0
    %3163 = vadd.xlane.f32.xlu0 %v3162
    %v3164 = vpop.xlane.xlu0 %3163
    %v3165 = vsel %vm573, %v3137, 0.0
    %3166 = vadd.xlane.f32.xlu0 %v3165
    %v3167 = vpop.xlane.xlu0 %3166
    %v3168 = vsel %vm573, %v3139, 0.0
    %3169 = vadd.xlane.f32.xlu0 %v3168
    %v3170 = vpop.xlane.xlu0 %3169
    %v3171 = vsel %vm573, %v3141, 0.0
    %3172 = vadd.xlane.f32.xlu0 %v3171
    %v3173 = vpop.xlane.xlu0 %3172
    %v3174 = vsel %vm573, %v3143, 0.0
    %3175 = vadd.xlane.f32.xlu0 %v3174
    %v3176 = vpop.xlane.xlu0 %3175
    %v3177 = vsel %vm573, %v3145, 0.0
    %3178 = vadd.xlane.f32.xlu0 %v3177
    %v3179 = vpop.xlane.xlu0 %3178
    %v3180 = vsel %vm573, %v3147, 0.0
    %3181 = vadd.xlane.f32.xlu0 %v3180
    %v3182 = vpop.xlane.xlu0 %3181
    %v3183 = vsel %vm573, %v3149, 0.0
    %3184 = vadd.xlane.f32.xlu0 %v3183
    %v3185 = vpop.xlane.xlu0 %3184
    %v3186 = vrcp.pop %v3152
    %v3187 = vrcp.pop %v3155
    %v3188 = vrcp.pop %v3158
    %v3189 = vrcp.pop %v3161
    %v3190 = vrcp.pop %v3164
    %v3191 = vrcp.pop %v3167
    %v3192 = vrcp.pop %v3170
    %v3193 = vrcp.pop %v3173
    %v3194 = vrcp.pop %v3176
    %v3195 = vrcp.pop %v3179
    %v3196 = vrcp.pop %v3182
    %v3197 = vrcp.pop %v3185
    %v3198 = vmul.f32 %v3127, %v3186
    %v3199 = vmul.f32 %v3129, %v3187
    %v3200 = vmul.f32 %v3131, %v3188
    %v3201 = vmul.f32 %v3133, %v3189
    %v3202 = vmul.f32 %v3135, %v3190
    %v3203 = vmul.f32 %v3137, %v3191
    %v3204 = vmul.f32 %v3139, %v3192
    %v3205 = vmul.f32 %v3141, %v3193
    %v3206 = vmul.f32 %v3143, %v3194
    %v3207 = vmul.f32 %v3145, %v3195
    %v3208 = vmul.f32 %v3147, %v3196
    %v3209 = vmul.f32 %v3149, %v3197
    %v3210 = vpack.c.bf16 %v3198, %v3198
    %v3211 = vpack.c.bf16 %v3199, %v3199
    %v3212 = vpack.c.bf16 %v3200, %v3200
    %v3213 = vpack.c.bf16 %v3201, %v3201
    %v3214 = vpack.c.bf16 %v3202, %v3202
    %v3215 = vpack.c.bf16 %v3203, %v3203
    %v3216 = vpack.c.bf16 %v3204, %v3204
    %v3217 = vpack.c.bf16 %v3205, %v3205
    %v3218 = vpack.c.bf16 %v3206, %v3206
    %v3219 = vpack.c.bf16 %v3207, %v3207
    %v3220 = vpack.c.bf16 %v3208, %v3208
    %v3221 = vpack.c.bf16 %v3209, %v3209
    %v3223 = vsel %vm573, %v3210, 0
    %v3226 = vsel %vm601, %v2502, 0
    %3228 = vmatprep.subr.bf16.mxu0 0
    %3229 = vmatpush1.bf16.msra.mxu0 0
    %3230 = vmatprep.subr.bf16.mxu0 0
    %3231 = vmatpush1.bf16.msra.mxu0 0
    %3232 = vmatprep.subr.bf16.mxu0 0
    %3233 = vmatpush1.bf16.msra.mxu0 0
    %3234 = vmatprep.subr.bf16.mxu0 0
    %3235 = vmatpush1.bf16.msra.mxu0 0
    %3236 = vmatprep.subr.bf16.mxu0 0
    %3237 = vmatpush1.bf16.msra.mxu0 0
    %3238 = vmatprep.subr.bf16.mxu0 0
    %3239 = vmatpush1.bf16.msra.mxu0 0
    %3240 = vmatprep.subr.bf16.mxu0 0
    %3241 = vmatpush1.bf16.msra.mxu0 0
    %3242 = vmatprep.subr.bf16.mxu0 0
    %3243 = vmatpush1.bf16.msra.mxu0 %v3226
    %3244 = vmatprep.subr.bf16.mxu0 0
    %3245 = vmatpush2.bf16.msra.mxu0 0
    %3246 = vmatprep.subr.bf16.mxu0 0
    %3247 = vmatpush2.bf16.msra.mxu0 0
    %3248 = vmatprep.subr.bf16.mxu0 0
    %3249 = vmatpush2.bf16.msra.mxu0 0
    %3250 = vmatprep.subr.bf16.mxu0 0
    %3251 = vmatpush2.bf16.msra.mxu0 0
    %3252 = vmatprep.subr.bf16.mxu0 0
    %3253 = vmatpush2.bf16.msra.mxu0 0
    %3254 = vmatprep.subr.bf16.mxu0 0
    %3255 = vmatpush2.bf16.msra.mxu0 0
    %3256 = vmatprep.subr.bf16.mxu0 0
    %3257 = vmatpush2.bf16.msra.mxu0 0
    %3258 = vmatprep.subr.bf16.mxu0 0
    %3259 = vmatpush2.bf16.msra.mxu0 0
    %3260 = vmatprep.mubr.bf16.mxu0 0
    %3261 = vmatmul.mubr.bf16.gmra.mxu0 %v3223
    %v3262 = vpop.f32.mrf.mxu0
    %v3263 = vadd.f32 0.0, %v3262
    %v3264 = vpop.f32.mrf.mxu0
    %v3265 = vpop.f32.mrf.mxu0
    %v3266 = vpop.f32.mrf.mxu0
    %3267 = vdwg.mxu0
    %v3269 = vsel %vm573, %v3211, 0
    %v3272 = vsel %vm601, %v2503, 0
    %3274 = vmatprep.subr.bf16.mxu0 0
    %3275 = vmatpush1.bf16.msra.mxu0 0
    %3276 = vmatprep.subr.bf16.mxu0 0
    %3277 = vmatpush1.bf16.msra.mxu0 0
    %3278 = vmatprep.subr.bf16.mxu0 0
    %3279 = vmatpush1.bf16.msra.mxu0 0
    %3280 = vmatprep.subr.bf16.mxu0 0
    %3281 = vmatpush1.bf16.msra.mxu0 0
    %3282 = vmatprep.subr.bf16.mxu0 0
    %3283 = vmatpush1.bf16.msra.mxu0 0
    %3284 = vmatprep.subr.bf16.mxu0 0
    %3285 = vmatpush1.bf16.msra.mxu0 0
    %3286 = vmatprep.subr.bf16.mxu0 0
    %3287 = vmatpush1.bf16.msra.mxu0 0
    %3288 = vmatprep.subr.bf16.mxu0 0
    %3289 = vmatpush1.bf16.msra.mxu0 %v3272
    %3290 = vmatprep.subr.bf16.mxu0 0
    %3291 = vmatpush2.bf16.msra.mxu0 0
    %3292 = vmatprep.subr.bf16.mxu0 0
    %3293 = vmatpush2.bf16.msra.mxu0 0
    %3294 = vmatprep.subr.bf16.mxu0 0
    %3295 = vmatpush2.bf16.msra.mxu0 0
    %3296 = vmatprep.subr.bf16.mxu0 0
    %3297 = vmatpush2.bf16.msra.mxu0 0
    %3298 = vmatprep.subr.bf16.mxu0 0
    %3299 = vmatpush2.bf16.msra.mxu0 0
    %3300 = vmatprep.subr.bf16.mxu0 0
    %3301 = vmatpush2.bf16.msra.mxu0 0
    %3302 = vmatprep.subr.bf16.mxu0 0
    %3303 = vmatpush2.bf16.msra.mxu0 0
    %3304 = vmatprep.subr.bf16.mxu0 0
    %3305 = vmatpush2.bf16.msra.mxu0 0
    %3306 = vmatprep.mubr.bf16.mxu0 0
    %3307 = vmatmul.mubr.bf16.gmra.mxu0 %v3269
    %v3308 = vpop.f32.mrf.mxu0
    %v3309 = vadd.f32 0.0, %v3308
    %v3310 = vpop.f32.mrf.mxu0
    %v3311 = vpop.f32.mrf.mxu0
    %v3312 = vpop.f32.mrf.mxu0
    %3313 = vdwg.mxu0
    %v3315 = vsel %vm573, %v3212, 0
    %v3318 = vsel %vm601, %v2504, 0
    %3320 = vmatprep.subr.bf16.mxu0 0
    %3321 = vmatpush1.bf16.msra.mxu0 0
    %3322 = vmatprep.subr.bf16.mxu0 0
    %3323 = vmatpush1.bf16.msra.mxu0 0
    %3324 = vmatprep.subr.bf16.mxu0 0
    %3325 = vmatpush1.bf16.msra.mxu0 0
    %3326 = vmatprep.subr.bf16.mxu0 0
    %3327 = vmatpush1.bf16.msra.mxu0 0
    %3328 = vmatprep.subr.bf16.mxu0 0
    %3329 = vmatpush1.bf16.msra.mxu0 0
    %3330 = vmatprep.subr.bf16.mxu0 0
    %3331 = vmatpush1.bf16.msra.mxu0 0
    %3332 = vmatprep.subr.bf16.mxu0 0
    %3333 = vmatpush1.bf16.msra.mxu0 0
    %3334 = vmatprep.subr.bf16.mxu0 0
    %3335 = vmatpush1.bf16.msra.mxu0 %v3318
    %3336 = vmatprep.subr.bf16.mxu0 0
    %3337 = vmatpush2.bf16.msra.mxu0 0
    %3338 = vmatprep.subr.bf16.mxu0 0
    %3339 = vmatpush2.bf16.msra.mxu0 0
    %3340 = vmatprep.subr.bf16.mxu0 0
    %3341 = vmatpush2.bf16.msra.mxu0 0
    %3342 = vmatprep.subr.bf16.mxu0 0
    %3343 = vmatpush2.bf16.msra.mxu0 0
    %3344 = vmatprep.subr.bf16.mxu0 0
    %3345 = vmatpush2.bf16.msra.mxu0 0
    %3346 = vmatprep.subr.bf16.mxu0 0
    %3347 = vmatpush2.bf16.msra.mxu0 0
    %3348 = vmatprep.subr.bf16.mxu0 0
    %3349 = vmatpush2.bf16.msra.mxu0 0
    %3350 = vmatprep.subr.bf16.mxu0 0
    %3351 = vmatpush2.bf16.msra.mxu0 0
    %3352 = vmatprep.mubr.bf16.mxu0 0
    %3353 = vmatmul.mubr.bf16.gmra.mxu0 %v3315
    %v3354 = vpop.f32.mrf.mxu0
    %v3355 = vadd.f32 0.0, %v3354
    %v3356 = vpop.f32.mrf.mxu0
    %v3357 = vpop.f32.mrf.mxu0
    %v3358 = vpop.f32.mrf.mxu0
    %3359 = vdwg.mxu0
    %v3361 = vsel %vm573, %v3213, 0
    %v3364 = vsel %vm601, %v2505, 0
    %3366 = vmatprep.subr.bf16.mxu0 0
    %3367 = vmatpush1.bf16.msra.mxu0 0
    %3368 = vmatprep.subr.bf16.mxu0 0
    %3369 = vmatpush1.bf16.msra.mxu0 0
    %3370 = vmatprep.subr.bf16.mxu0 0
    %3371 = vmatpush1.bf16.msra.mxu0 0
    %3372 = vmatprep.subr.bf16.mxu0 0
    %3373 = vmatpush1.bf16.msra.mxu0 0
    %3374 = vmatprep.subr.bf16.mxu0 0
    %3375 = vmatpush1.bf16.msra.mxu0 0
    %3376 = vmatprep.subr.bf16.mxu0 0
    %3377 = vmatpush1.bf16.msra.mxu0 0
    %3378 = vmatprep.subr.bf16.mxu0 0
    %3379 = vmatpush1.bf16.msra.mxu0 0
    %3380 = vmatprep.subr.bf16.mxu0 0
    %3381 = vmatpush1.bf16.msra.mxu0 %v3364
    %3382 = vmatprep.subr.bf16.mxu0 0
    %3383 = vmatpush2.bf16.msra.mxu0 0
    %3384 = vmatprep.subr.bf16.mxu0 0
    %3385 = vmatpush2.bf16.msra.mxu0 0
    %3386 = vmatprep.subr.bf16.mxu0 0
    %3387 = vmatpush2.bf16.msra.mxu0 0
    %3388 = vmatprep.subr.bf16.mxu0 0
    %3389 = vmatpush2.bf16.msra.mxu0 0
    %3390 = vmatprep.subr.bf16.mxu0 0
    %3391 = vmatpush2.bf16.msra.mxu0 0
    %3392 = vmatprep.subr.bf16.mxu0 0
    %3393 = vmatpush2.bf16.msra.mxu0 0
    %3394 = vmatprep.subr.bf16.mxu0 0
    %3395 = vmatpush2.bf16.msra.mxu0 0
    %3396 = vmatprep.subr.bf16.mxu0 0
    %3397 = vmatpush2.bf16.msra.mxu0 0
    %3398 = vmatprep.mubr.bf16.mxu0 0
    %3399 = vmatmul.mubr.bf16.gmra.mxu0 %v3361
    %v3400 = vpop.f32.mrf.mxu0
    %v3401 = vadd.f32 0.0, %v3400
    %v3402 = vpop.f32.mrf.mxu0
    %v3403 = vpop.f32.mrf.mxu0
    %v3404 = vpop.f32.mrf.mxu0
    %3405 = vdwg.mxu0
    %v3407 = vsel %vm573, %v3214, 0
    %v3410 = vsel %vm601, %v2506, 0
    %3412 = vmatprep.subr.bf16.mxu0 0
    %3413 = vmatpush1.bf16.msra.mxu0 0
    %3414 = vmatprep.subr.bf16.mxu0 0
    %3415 = vmatpush1.bf16.msra.mxu0 0
    %3416 = vmatprep.subr.bf16.mxu0 0
    %3417 = vmatpush1.bf16.msra.mxu0 0
    %3418 = vmatprep.subr.bf16.mxu0 0
    %3419 = vmatpush1.bf16.msra.mxu0 0
    %3420 = vmatprep.subr.bf16.mxu0 0
    %3421 = vmatpush1.bf16.msra.mxu0 0
    %3422 = vmatprep.subr.bf16.mxu0 0
    %3423 = vmatpush1.bf16.msra.mxu0 0
    %3424 = vmatprep.subr.bf16.mxu0 0
    %3425 = vmatpush1.bf16.msra.mxu0 0
    %3426 = vmatprep.subr.bf16.mxu0 0
    %3427 = vmatpush1.bf16.msra.mxu0 %v3410
    %3428 = vmatprep.subr.bf16.mxu0 0
    %3429 = vmatpush2.bf16.msra.mxu0 0
    %3430 = vmatprep.subr.bf16.mxu0 0
    %3431 = vmatpush2.bf16.msra.mxu0 0
    %3432 = vmatprep.subr.bf16.mxu0 0
    %3433 = vmatpush2.bf16.msra.mxu0 0
    %3434 = vmatprep.subr.bf16.mxu0 0
    %3435 = vmatpush2.bf16.msra.mxu0 0
    %3436 = vmatprep.subr.bf16.mxu0 0
    %3437 = vmatpush2.bf16.msra.mxu0 0
    %3438 = vmatprep.subr.bf16.mxu0 0
    %3439 = vmatpush2.bf16.msra.mxu0 0
    %3440 = vmatprep.subr.bf16.mxu0 0
    %3441 = vmatpush2.bf16.msra.mxu0 0
    %3442 = vmatprep.subr.bf16.mxu0 0
    %3443 = vmatpush2.bf16.msra.mxu0 0
    %3444 = vmatprep.mubr.bf16.mxu0 0
    %3445 = vmatmul.mubr.bf16.gmra.mxu0 %v3407
    %v3446 = vpop.f32.mrf.mxu0
    %v3447 = vadd.f32 0.0, %v3446
    %v3448 = vpop.f32.mrf.mxu0
    %v3449 = vpop.f32.mrf.mxu0
    %v3450 = vpop.f32.mrf.mxu0
    %3451 = vdwg.mxu0
    %v3453 = vsel %vm573, %v3215, 0
    %v3456 = vsel %vm601, %v2507, 0
    %3458 = vmatprep.subr.bf16.mxu0 0
    %3459 = vmatpush1.bf16.msra.mxu0 0
    %3460 = vmatprep.subr.bf16.mxu0 0
    %3461 = vmatpush1.bf16.msra.mxu0 0
    %3462 = vmatprep.subr.bf16.mxu0 0
    %3463 = vmatpush1.bf16.msra.mxu0 0
    %3464 = vmatprep.subr.bf16.mxu0 0
    %3465 = vmatpush1.bf16.msra.mxu0 0
    %3466 = vmatprep.subr.bf16.mxu0 0
    %3467 = vmatpush1.bf16.msra.mxu0 0
    %3468 = vmatprep.subr.bf16.mxu0 0
    %3469 = vmatpush1.bf16.msra.mxu0 0
    %3470 = vmatprep.subr.bf16.mxu0 0
    %3471 = vmatpush1.bf16.msra.mxu0 0
    %3472 = vmatprep.subr.bf16.mxu0 0
    %3473 = vmatpush1.bf16.msra.mxu0 %v3456
    %3474 = vmatprep.subr.bf16.mxu0 0
    %3475 = vmatpush2.bf16.msra.mxu0 0
    %3476 = vmatprep.subr.bf16.mxu0 0
    %3477 = vmatpush2.bf16.msra.mxu0 0
    %3478 = vmatprep.subr.bf16.mxu0 0
    %3479 = vmatpush2.bf16.msra.mxu0 0
    %3480 = vmatprep.subr.bf16.mxu0 0
    %3481 = vmatpush2.bf16.msra.mxu0 0
    %3482 = vmatprep.subr.bf16.mxu0 0
    %3483 = vmatpush2.bf16.msra.mxu0 0
    %3484 = vmatprep.subr.bf16.mxu0 0
    %3485 = vmatpush2.bf16.msra.mxu0 0
    %3486 = vmatprep.subr.bf16.mxu0 0
    %3487 = vmatpush2.bf16.msra.mxu0 0
    %3488 = vmatprep.subr.bf16.mxu0 0
    %3489 = vmatpush2.bf16.msra.mxu0 0
    %3490 = vmatprep.mubr.bf16.mxu0 0
    %3491 = vmatmul.mubr.bf16.gmra.mxu0 %v3453
    %v3492 = vpop.f32.mrf.mxu0
    %v3493 = vadd.f32 0.0, %v3492
    %v3494 = vpop.f32.mrf.mxu0
    %v3495 = vpop.f32.mrf.mxu0
    %v3496 = vpop.f32.mrf.mxu0
    %3497 = vdwg.mxu0
    %v3499 = vsel %vm573, %v3216, 0
    %v3502 = vsel %vm601, %v2508, 0
    %3504 = vmatprep.subr.bf16.mxu0 0
    %3505 = vmatpush1.bf16.msra.mxu0 0
    %3506 = vmatprep.subr.bf16.mxu0 0
    %3507 = vmatpush1.bf16.msra.mxu0 0
    %3508 = vmatprep.subr.bf16.mxu0 0
    %3509 = vmatpush1.bf16.msra.mxu0 0
    %3510 = vmatprep.subr.bf16.mxu0 0
    %3511 = vmatpush1.bf16.msra.mxu0 0
    %3512 = vmatprep.subr.bf16.mxu0 0
    %3513 = vmatpush1.bf16.msra.mxu0 0
    %3514 = vmatprep.subr.bf16.mxu0 0
    %3515 = vmatpush1.bf16.msra.mxu0 0
    %3516 = vmatprep.subr.bf16.mxu0 0
    %3517 = vmatpush1.bf16.msra.mxu0 0
    %3518 = vmatprep.subr.bf16.mxu0 0
    %3519 = vmatpush1.bf16.msra.mxu0 %v3502
    %3520 = vmatprep.subr.bf16.mxu0 0
    %3521 = vmatpush2.bf16.msra.mxu0 0
    %3522 = vmatprep.subr.bf16.mxu0 0
    %3523 = vmatpush2.bf16.msra.mxu0 0
    %3524 = vmatprep.subr.bf16.mxu0 0
    %3525 = vmatpush2.bf16.msra.mxu0 0
    %3526 = vmatprep.subr.bf16.mxu0 0
    %3527 = vmatpush2.bf16.msra.mxu0 0
    %3528 = vmatprep.subr.bf16.mxu0 0
    %3529 = vmatpush2.bf16.msra.mxu0 0
    %3530 = vmatprep.subr.bf16.mxu0 0
    %3531 = vmatpush2.bf16.msra.mxu0 0
    %3532 = vmatprep.subr.bf16.mxu0 0
    %3533 = vmatpush2.bf16.msra.mxu0 0
    %3534 = vmatprep.subr.bf16.mxu0 0
    %3535 = vmatpush2.bf16.msra.mxu0 0
    %3536 = vmatprep.mubr.bf16.mxu0 0
    %3537 = vmatmul.mubr.bf16.gmra.mxu0 %v3499
    %v3538 = vpop.f32.mrf.mxu0
    %v3539 = vadd.f32 0.0, %v3538
    %v3540 = vpop.f32.mrf.mxu0
    %v3541 = vpop.f32.mrf.mxu0
    %v3542 = vpop.f32.mrf.mxu0
    %3543 = vdwg.mxu0
    %v3545 = vsel %vm573, %v3217, 0
    %v3548 = vsel %vm601, %v2509, 0
    %3550 = vmatprep.subr.bf16.mxu0 0
    %3551 = vmatpush1.bf16.msra.mxu0 0
    %3552 = vmatprep.subr.bf16.mxu0 0
    %3553 = vmatpush1.bf16.msra.mxu0 0
    %3554 = vmatprep.subr.bf16.mxu0 0
    %3555 = vmatpush1.bf16.msra.mxu0 0
    %3556 = vmatprep.subr.bf16.mxu0 0
    %3557 = vmatpush1.bf16.msra.mxu0 0
    %3558 = vmatprep.subr.bf16.mxu0 0
    %3559 = vmatpush1.bf16.msra.mxu0 0
    %3560 = vmatprep.subr.bf16.mxu0 0
    %3561 = vmatpush1.bf16.msra.mxu0 0
    %3562 = vmatprep.subr.bf16.mxu0 0
    %3563 = vmatpush1.bf16.msra.mxu0 0
    %3564 = vmatprep.subr.bf16.mxu0 0
    %3565 = vmatpush1.bf16.msra.mxu0 %v3548
    %3566 = vmatprep.subr.bf16.mxu0 0
    %3567 = vmatpush2.bf16.msra.mxu0 0
    %3568 = vmatprep.subr.bf16.mxu0 0
    %3569 = vmatpush2.bf16.msra.mxu0 0
    %3570 = vmatprep.subr.bf16.mxu0 0
    %3571 = vmatpush2.bf16.msra.mxu0 0
    %3572 = vmatprep.subr.bf16.mxu0 0
    %3573 = vmatpush2.bf16.msra.mxu0 0
    %3574 = vmatprep.subr.bf16.mxu0 0
    %3575 = vmatpush2.bf16.msra.mxu0 0
    %3576 = vmatprep.subr.bf16.mxu0 0
    %3577 = vmatpush2.bf16.msra.mxu0 0
    %3578 = vmatprep.subr.bf16.mxu0 0
    %3579 = vmatpush2.bf16.msra.mxu0 0
    %3580 = vmatprep.subr.bf16.mxu0 0
    %3581 = vmatpush2.bf16.msra.mxu0 0
    %3582 = vmatprep.mubr.bf16.mxu0 0
    %3583 = vmatmul.mubr.bf16.gmra.mxu0 %v3545
    %v3584 = vpop.f32.mrf.mxu0
    %v3585 = vadd.f32 0.0, %v3584
    %v3586 = vpop.f32.mrf.mxu0
    %v3587 = vpop.f32.mrf.mxu0
    %v3588 = vpop.f32.mrf.mxu0
    %3589 = vdwg.mxu0
    %v3591 = vsel %vm573, %v3218, 0
    %v3594 = vsel %vm601, %v2510, 0
    %3596 = vmatprep.subr.bf16.mxu0 0
    %3597 = vmatpush1.bf16.msra.mxu0 0
    %3598 = vmatprep.subr.bf16.mxu0 0
    %3599 = vmatpush1.bf16.msra.mxu0 0
    %3600 = vmatprep.subr.bf16.mxu0 0
    %3601 = vmatpush1.bf16.msra.mxu0 0
    %3602 = vmatprep.subr.bf16.mxu0 0
    %3603 = vmatpush1.bf16.msra.mxu0 0
    %3604 = vmatprep.subr.bf16.mxu0 0
    %3605 = vmatpush1.bf16.msra.mxu0 0
    %3606 = vmatprep.subr.bf16.mxu0 0
    %3607 = vmatpush1.bf16.msra.mxu0 0
    %3608 = vmatprep.subr.bf16.mxu0 0
    %3609 = vmatpush1.bf16.msra.mxu0 0
    %3610 = vmatprep.subr.bf16.mxu0 0
    %3611 = vmatpush1.bf16.msra.mxu0 %v3594
    %3612 = vmatprep.subr.bf16.mxu0 0
    %3613 = vmatpush2.bf16.msra.mxu0 0
    %3614 = vmatprep.subr.bf16.mxu0 0
    %3615 = vmatpush2.bf16.msra.mxu0 0
    %3616 = vmatprep.subr.bf16.mxu0 0
    %3617 = vmatpush2.bf16.msra.mxu0 0
    %3618 = vmatprep.subr.bf16.mxu0 0
    %3619 = vmatpush2.bf16.msra.mxu0 0
    %3620 = vmatprep.subr.bf16.mxu0 0
    %3621 = vmatpush2.bf16.msra.mxu0 0
    %3622 = vmatprep.subr.bf16.mxu0 0
    %3623 = vmatpush2.bf16.msra.mxu0 0
    %3624 = vmatprep.subr.bf16.mxu0 0
    %3625 = vmatpush2.bf16.msra.mxu0 0
    %3626 = vmatprep.subr.bf16.mxu0 0
    %3627 = vmatpush2.bf16.msra.mxu0 0
    %3628 = vmatprep.mubr.bf16.mxu0 0
    %3629 = vmatmul.mubr.bf16.gmra.mxu0 %v3591
    %v3630 = vpop.f32.mrf.mxu0
    %v3631 = vadd.f32 0.0, %v3630
    %v3632 = vpop.f32.mrf.mxu0
    %v3633 = vpop.f32.mrf.mxu0
    %v3634 = vpop.f32.mrf.mxu0
    %3635 = vdwg.mxu0
    %v3637 = vsel %vm573, %v3219, 0
    %v3640 = vsel %vm601, %v2511, 0
    %3642 = vmatprep.subr.bf16.mxu0 0
    %3643 = vmatpush1.bf16.msra.mxu0 0
    %3644 = vmatprep.subr.bf16.mxu0 0
    %3645 = vmatpush1.bf16.msra.mxu0 0
    %3646 = vmatprep.subr.bf16.mxu0 0
    %3647 = vmatpush1.bf16.msra.mxu0 0
    %3648 = vmatprep.subr.bf16.mxu0 0
    %3649 = vmatpush1.bf16.msra.mxu0 0
    %3650 = vmatprep.subr.bf16.mxu0 0
    %3651 = vmatpush1.bf16.msra.mxu0 0
    %3652 = vmatprep.subr.bf16.mxu0 0
    %3653 = vmatpush1.bf16.msra.mxu0 0
    %3654 = vmatprep.subr.bf16.mxu0 0
    %3655 = vmatpush1.bf16.msra.mxu0 0
    %3656 = vmatprep.subr.bf16.mxu0 0
    %3657 = vmatpush1.bf16.msra.mxu0 %v3640
    %3658 = vmatprep.subr.bf16.mxu0 0
    %3659 = vmatpush2.bf16.msra.mxu0 0
    %3660 = vmatprep.subr.bf16.mxu0 0
    %3661 = vmatpush2.bf16.msra.mxu0 0
    %3662 = vmatprep.subr.bf16.mxu0 0
    %3663 = vmatpush2.bf16.msra.mxu0 0
    %3664 = vmatprep.subr.bf16.mxu0 0
    %3665 = vmatpush2.bf16.msra.mxu0 0
    %3666 = vmatprep.subr.bf16.mxu0 0
    %3667 = vmatpush2.bf16.msra.mxu0 0
    %3668 = vmatprep.subr.bf16.mxu0 0
    %3669 = vmatpush2.bf16.msra.mxu0 0
    %3670 = vmatprep.subr.bf16.mxu0 0
    %3671 = vmatpush2.bf16.msra.mxu0 0
    %3672 = vmatprep.subr.bf16.mxu0 0
    %3673 = vmatpush2.bf16.msra.mxu0 0
    %3674 = vmatprep.mubr.bf16.mxu0 0
    %3675 = vmatmul.mubr.bf16.gmra.mxu0 %v3637
    %v3676 = vpop.f32.mrf.mxu0
    %v3677 = vadd.f32 0.0, %v3676
    %v3678 = vpop.f32.mrf.mxu0
    %v3679 = vpop.f32.mrf.mxu0
    %v3680 = vpop.f32.mrf.mxu0
    %3681 = vdwg.mxu0
    %v3683 = vsel %vm573, %v3220, 0
    %v3686 = vsel %vm601, %v2512, 0
    %3688 = vmatprep.subr.bf16.mxu0 0
    %3689 = vmatpush1.bf16.msra.mxu0 0
    %3690 = vmatprep.subr.bf16.mxu0 0
    %3691 = vmatpush1.bf16.msra.mxu0 0
    %3692 = vmatprep.subr.bf16.mxu0 0
    %3693 = vmatpush1.bf16.msra.mxu0 0
    %3694 = vmatprep.subr.bf16.mxu0 0
    %3695 = vmatpush1.bf16.msra.mxu0 0
    %3696 = vmatprep.subr.bf16.mxu0 0
    %3697 = vmatpush1.bf16.msra.mxu0 0
    %3698 = vmatprep.subr.bf16.mxu0 0
    %3699 = vmatpush1.bf16.msra.mxu0 0
    %3700 = vmatprep.subr.bf16.mxu0 0
    %3701 = vmatpush1.bf16.msra.mxu0 0
    %3702 = vmatprep.subr.bf16.mxu0 0
    %3703 = vmatpush1.bf16.msra.mxu0 %v3686
    %3704 = vmatprep.subr.bf16.mxu0 0
    %3705 = vmatpush2.bf16.msra.mxu0 0
    %3706 = vmatprep.subr.bf16.mxu0 0
    %3707 = vmatpush2.bf16.msra.mxu0 0
    %3708 = vmatprep.subr.bf16.mxu0 0
    %3709 = vmatpush2.bf16.msra.mxu0 0
    %3710 = vmatprep.subr.bf16.mxu0 0
    %3711 = vmatpush2.bf16.msra.mxu0 0
    %3712 = vmatprep.subr.bf16.mxu0 0
    %3713 = vmatpush2.bf16.msra.mxu0 0
    %3714 = vmatprep.subr.bf16.mxu0 0
    %3715 = vmatpush2.bf16.msra.mxu0 0
    %3716 = vmatprep.subr.bf16.mxu0 0
    %3717 = vmatpush2.bf16.msra.mxu0 0
    %3718 = vmatprep.subr.bf16.mxu0 0
    %3719 = vmatpush2.bf16.msra.mxu0 0
    %3720 = vmatprep.mubr.bf16.mxu0 0
    %3721 = vmatmul.mubr.bf16.gmra.mxu0 %v3683
    %v3722 = vpop.f32.mrf.mxu0
    %v3723 = vadd.f32 0.0, %v3722
    %v3724 = vpop.f32.mrf.mxu0
    %v3725 = vpop.f32.mrf.mxu0
    %v3726 = vpop.f32.mrf.mxu0
    %3727 = vdwg.mxu0
    %v3729 = vsel %vm573, %v3221, 0
    %v3732 = vsel %vm601, %v2513, 0
    %3734 = vmatprep.subr.bf16.mxu0 0
    %3735 = vmatpush1.bf16.msra.mxu0 0
    %3736 = vmatprep.subr.bf16.mxu0 0
    %3737 = vmatpush1.bf16.msra.mxu0 0
    %3738 = vmatprep.subr.bf16.mxu0 0
    %3739 = vmatpush1.bf16.msra.mxu0 0
    %3740 = vmatprep.subr.bf16.mxu0 0
    %3741 = vmatpush1.bf16.msra.mxu0 0
    %3742 = vmatprep.subr.bf16.mxu0 0
    %3743 = vmatpush1.bf16.msra.mxu0 0
    %3744 = vmatprep.subr.bf16.mxu0 0
    %3745 = vmatpush1.bf16.msra.mxu0 0
    %3746 = vmatprep.subr.bf16.mxu0 0
    %3747 = vmatpush1.bf16.msra.mxu0 0
    %3748 = vmatprep.subr.bf16.mxu0 0
    %3749 = vmatpush1.bf16.msra.mxu0 %v3732
    %3750 = vmatprep.subr.bf16.mxu0 0
    %3751 = vmatpush2.bf16.msra.mxu0 0
    %3752 = vmatprep.subr.bf16.mxu0 0
    %3753 = vmatpush2.bf16.msra.mxu0 0
    %3754 = vmatprep.subr.bf16.mxu0 0
    %3755 = vmatpush2.bf16.msra.mxu0 0
    %3756 = vmatprep.subr.bf16.mxu0 0
    %3757 = vmatpush2.bf16.msra.mxu0 0
    %3758 = vmatprep.subr.bf16.mxu0 0
    %3759 = vmatpush2.bf16.msra.mxu0 0
    %3760 = vmatprep.subr.bf16.mxu0 0
    %3761 = vmatpush2.bf16.msra.mxu0 0
    %3762 = vmatprep.subr.bf16.mxu0 0
    %3763 = vmatpush2.bf16.msra.mxu0 0
    %3764 = vmatprep.subr.bf16.mxu0 0
    %3765 = vmatpush2.bf16.msra.mxu0 0
    %3766 = vmatprep.mubr.bf16.mxu0 0
    %3767 = vmatmul.mubr.bf16.gmra.mxu0 %v3729
    %v3768 = vpop.f32.mrf.mxu0
    %v3769 = vadd.f32 0.0, %v3768
    %v3770 = vpop.f32.mrf.mxu0
    %v3771 = vpop.f32.mrf.mxu0
    %v3772 = vpop.f32.mrf.mxu0
    %3773 = vdwg.mxu0
    %v3774 = vmul.f32 %v3263, %v694
    %v3775 = vmul.f32 %v3309, %v694
    %v3776 = vmul.f32 %v3355, %v694
    %v3777 = vmul.f32 %v3401, %v694
    %v3778 = vmul.f32 %v3447, %v694
    %v3779 = vmul.f32 %v3493, %v694
    %v3780 = vmul.f32 %v3539, %v694
    %v3781 = vmul.f32 %v3585, %v694
    %v3782 = vmul.f32 %v3631, %v694
    %v3783 = vmul.f32 %v3677, %v694
    %v3784 = vmul.f32 %v3723, %v694
    %v3785 = vmul.f32 %v3769, %v694
    %v3786 = vadd.f32 %v3774, 0.0
    %v3787 = vadd.f32 %v3775, 0.0
    %v3788 = vadd.f32 %v3776, 0.0
    %v3789 = vadd.f32 %v3777, 0.0
    %v3790 = vadd.f32 %v3778, 0.0
    %v3791 = vadd.f32 %v3779, 0.0
    %v3792 = vadd.f32 %v3780, 0.0
    %v3793 = vadd.f32 %v3781, 0.0
    %v3794 = vadd.f32 %v3782, 0.0
    %v3795 = vadd.f32 %v3783, 0.0
    %v3796 = vadd.f32 %v3784, 0.0
    %v3797 = vadd.f32 %v3785, 0.0
    %v3798 = vmul.bf16 %v2478, %v705
    %v3799 = vmul.bf16 %v2479, %v705
    %v3800 = vmul.bf16 %v2480, %v705
    %v3801 = vmul.bf16 %v2481, %v705
    %v3802 = vmul.bf16 %v2482, %v705
    %v3803 = vmul.bf16 %v2483, %v705
    %v3804 = vmul.bf16 %v2484, %v705
    %v3805 = vmul.bf16 %v2485, %v705
    %v3806 = vmul.bf16 %v2486, %v705
    %v3807 = vmul.bf16 %v2487, %v705
    %v3808 = vmul.bf16 %v2488, %v705
    %v3809 = vmul.bf16 %v2489, %v705
    %v3811 = vsel %vm198, %v3798, 0
    %3813 = vmatprep.subr.bf16.mxu0 0
    %3814 = vmatpush1.bf16.xpose.msra.mxu0 0
    %3815 = vmatprep.subr.bf16.mxu0 0
    %3816 = vmatpush1.bf16.xpose.msra.mxu0 0
    %3817 = vmatprep.subr.bf16.mxu0 0
    %3818 = vmatpush1.bf16.xpose.msra.mxu0 0
    %3819 = vmatprep.subr.bf16.mxu0 0
    %3820 = vmatpush1.bf16.xpose.msra.mxu0 0
    %3821 = vmatprep.subr.bf16.mxu0 0
    %3822 = vmatpush1.bf16.xpose.msra.mxu0 0
    %3823 = vmatprep.subr.bf16.mxu0 0
    %3824 = vmatpush1.bf16.xpose.msra.mxu0 0
    %3825 = vmatprep.subr.bf16.mxu0 0
    %3826 = vmatpush1.bf16.xpose.msra.mxu0 0
    %3827 = vmatprep.subr.bf16.mxu0 0
    %3828 = vmatpush1.bf16.xpose.msra.mxu0 %v2530
    %3829 = vmatprep.subr.bf16.mxu0 0
    %3830 = vmatpush2.bf16.xpose.msra.mxu0 0
    %3831 = vmatprep.subr.bf16.mxu0 0
    %3832 = vmatpush2.bf16.xpose.msra.mxu0 0
    %3833 = vmatprep.subr.bf16.mxu0 0
    %3834 = vmatpush2.bf16.xpose.msra.mxu0 0
    %3835 = vmatprep.subr.bf16.mxu0 0
    %3836 = vmatpush2.bf16.xpose.msra.mxu0 0
    %3837 = vmatprep.subr.bf16.mxu0 0
    %3838 = vmatpush2.bf16.xpose.msra.mxu0 0
    %3839 = vmatprep.subr.bf16.mxu0 0
    %3840 = vmatpush2.bf16.xpose.msra.mxu0 0
    %3841 = vmatprep.subr.bf16.mxu0 0
    %3842 = vmatpush2.bf16.xpose.msra.mxu0 0
    %3843 = vmatprep.subr.bf16.mxu0 0
    %3844 = vmatpush2.bf16.xpose.msra.mxu0 0
    %3845 = vmatprep.mubr.bf16.mxu0 0
    %3846 = vmatmul.mubr.bf16.gmra.mxu0 %v3811
    %v3847 = vpop.f32.mrf.mxu0
    %v3848 = vadd.f32 %v39, %v3847
    %v3849 = vpop.f32.mrf.mxu0
    %v3850 = vpop.f32.mrf.mxu0
    %v3851 = vpop.f32.mrf.mxu0
    %3852 = vdwg.mxu0
    %v3854 = vsel %vm198, %v3799, 0
    %3856 = vmatprep.subr.bf16.mxu0 0
    %3857 = vmatpush1.bf16.xpose.msra.mxu0 0
    %3858 = vmatprep.subr.bf16.mxu0 0
    %3859 = vmatpush1.bf16.xpose.msra.mxu0 0
    %3860 = vmatprep.subr.bf16.mxu0 0
    %3861 = vmatpush1.bf16.xpose.msra.mxu0 0
    %3862 = vmatprep.subr.bf16.mxu0 0
    %3863 = vmatpush1.bf16.xpose.msra.mxu0 0
    %3864 = vmatprep.subr.bf16.mxu0 0
    %3865 = vmatpush1.bf16.xpose.msra.mxu0 0
    %3866 = vmatprep.subr.bf16.mxu0 0
    %3867 = vmatpush1.bf16.xpose.msra.mxu0 0
    %3868 = vmatprep.subr.bf16.mxu0 0
    %3869 = vmatpush1.bf16.xpose.msra.mxu0 0
    %3870 = vmatprep.subr.bf16.mxu0 0
    %3871 = vmatpush1.bf16.xpose.msra.mxu0 %v2576
    %3872 = vmatprep.subr.bf16.mxu0 0
    %3873 = vmatpush2.bf16.xpose.msra.mxu0 0
    %3874 = vmatprep.subr.bf16.mxu0 0
    %3875 = vmatpush2.bf16.xpose.msra.mxu0 0
    %3876 = vmatprep.subr.bf16.mxu0 0
    %3877 = vmatpush2.bf16.xpose.msra.mxu0 0
    %3878 = vmatprep.subr.bf16.mxu0 0
    %3879 = vmatpush2.bf16.xpose.msra.mxu0 0
    %3880 = vmatprep.subr.bf16.mxu0 0
    %3881 = vmatpush2.bf16.xpose.msra.mxu0 0
    %3882 = vmatprep.subr.bf16.mxu0 0
    %3883 = vmatpush2.bf16.xpose.msra.mxu0 0
    %3884 = vmatprep.subr.bf16.mxu0 0
    %3885 = vmatpush2.bf16.xpose.msra.mxu0 0
    %3886 = vmatprep.subr.bf16.mxu0 0
    %3887 = vmatpush2.bf16.xpose.msra.mxu0 0
    %3888 = vmatprep.mubr.bf16.mxu0 0
    %3889 = vmatmul.mubr.bf16.gmra.mxu0 %v3854
    %v3890 = vpop.f32.mrf.mxu0
    %v3891 = vadd.f32 %v39, %v3890
    %v3892 = vpop.f32.mrf.mxu0
    %v3893 = vpop.f32.mrf.mxu0
    %v3894 = vpop.f32.mrf.mxu0
    %3895 = vdwg.mxu0
    %v3897 = vsel %vm198, %v3800, 0
    %3899 = vmatprep.subr.bf16.mxu0 0
    %3900 = vmatpush1.bf16.xpose.msra.mxu0 0
    %3901 = vmatprep.subr.bf16.mxu0 0
    %3902 = vmatpush1.bf16.xpose.msra.mxu0 0
    %3903 = vmatprep.subr.bf16.mxu0 0
    %3904 = vmatpush1.bf16.xpose.msra.mxu0 0
    %3905 = vmatprep.subr.bf16.mxu0 0
    %3906 = vmatpush1.bf16.xpose.msra.mxu0 0
    %3907 = vmatprep.subr.bf16.mxu0 0
    %3908 = vmatpush1.bf16.xpose.msra.mxu0 0
    %3909 = vmatprep.subr.bf16.mxu0 0
    %3910 = vmatpush1.bf16.xpose.msra.mxu0 0
    %3911 = vmatprep.subr.bf16.mxu0 0
    %3912 = vmatpush1.bf16.xpose.msra.mxu0 0
    %3913 = vmatprep.subr.bf16.mxu0 0
    %3914 = vmatpush1.bf16.xpose.msra.mxu0 %v2622
    %3915 = vmatprep.subr.bf16.mxu0 0
    %3916 = vmatpush2.bf16.xpose.msra.mxu0 0
    %3917 = vmatprep.subr.bf16.mxu0 0
    %3918 = vmatpush2.bf16.xpose.msra.mxu0 0
    %3919 = vmatprep.subr.bf16.mxu0 0
    %3920 = vmatpush2.bf16.xpose.msra.mxu0 0
    %3921 = vmatprep.subr.bf16.mxu0 0
    %3922 = vmatpush2.bf16.xpose.msra.mxu0 0
    %3923 = vmatprep.subr.bf16.mxu0 0
    %3924 = vmatpush2.bf16.xpose.msra.mxu0 0
    %3925 = vmatprep.subr.bf16.mxu0 0
    %3926 = vmatpush2.bf16.xpose.msra.mxu0 0
    %3927 = vmatprep.subr.bf16.mxu0 0
    %3928 = vmatpush2.bf16.xpose.msra.mxu0 0
    %3929 = vmatprep.subr.bf16.mxu0 0
    %3930 = vmatpush2.bf16.xpose.msra.mxu0 0
    %3931 = vmatprep.mubr.bf16.mxu0 0
    %3932 = vmatmul.mubr.bf16.gmra.mxu0 %v3897
    %v3933 = vpop.f32.mrf.mxu0
    %v3934 = vadd.f32 %v39, %v3933
    %v3935 = vpop.f32.mrf.mxu0
    %v3936 = vpop.f32.mrf.mxu0
    %v3937 = vpop.f32.mrf.mxu0
    %3938 = vdwg.mxu0
    %v3940 = vsel %vm198, %v3801, 0
    %3942 = vmatprep.subr.bf16.mxu0 0
    %3943 = vmatpush1.bf16.xpose.msra.mxu0 0
    %3944 = vmatprep.subr.bf16.mxu0 0
    %3945 = vmatpush1.bf16.xpose.msra.mxu0 0
    %3946 = vmatprep.subr.bf16.mxu0 0
    %3947 = vmatpush1.bf16.xpose.msra.mxu0 0
    %3948 = vmatprep.subr.bf16.mxu0 0
    %3949 = vmatpush1.bf16.xpose.msra.mxu0 0
    %3950 = vmatprep.subr.bf16.mxu0 0
    %3951 = vmatpush1.bf16.xpose.msra.mxu0 0
    %3952 = vmatprep.subr.bf16.mxu0 0
    %3953 = vmatpush1.bf16.xpose.msra.mxu0 0
    %3954 = vmatprep.subr.bf16.mxu0 0
    %3955 = vmatpush1.bf16.xpose.msra.mxu0 0
    %3956 = vmatprep.subr.bf16.mxu0 0
    %3957 = vmatpush1.bf16.xpose.msra.mxu0 %v2668
    %3958 = vmatprep.subr.bf16.mxu0 0
    %3959 = vmatpush2.bf16.xpose.msra.mxu0 0
    %3960 = vmatprep.subr.bf16.mxu0 0
    %3961 = vmatpush2.bf16.xpose.msra.mxu0 0
    %3962 = vmatprep.subr.bf16.mxu0 0
    %3963 = vmatpush2.bf16.xpose.msra.mxu0 0
    %3964 = vmatprep.subr.bf16.mxu0 0
    %3965 = vmatpush2.bf16.xpose.msra.mxu0 0
    %3966 = vmatprep.subr.bf16.mxu0 0
    %3967 = vmatpush2.bf16.xpose.msra.mxu0 0
    %3968 = vmatprep.subr.bf16.mxu0 0
    %3969 = vmatpush2.bf16.xpose.msra.mxu0 0
    %3970 = vmatprep.subr.bf16.mxu0 0
    %3971 = vmatpush2.bf16.xpose.msra.mxu0 0
    %3972 = vmatprep.subr.bf16.mxu0 0
    %3973 = vmatpush2.bf16.xpose.msra.mxu0 0
    %3974 = vmatprep.mubr.bf16.mxu0 0
    %3975 = vmatmul.mubr.bf16.gmra.mxu0 %v3940
    %v3976 = vpop.f32.mrf.mxu0
    %v3977 = vadd.f32 %v39, %v3976
    %v3978 = vpop.f32.mrf.mxu0
    %v3979 = vpop.f32.mrf.mxu0
    %v3980 = vpop.f32.mrf.mxu0
    %3981 = vdwg.mxu0
    %v3983 = vsel %vm198, %v3802, 0
    %3985 = vmatprep.subr.bf16.mxu0 0
    %3986 = vmatpush1.bf16.xpose.msra.mxu0 0
    %3987 = vmatprep.subr.bf16.mxu0 0
    %3988 = vmatpush1.bf16.xpose.msra.mxu0 0
    %3989 = vmatprep.subr.bf16.mxu0 0
    %3990 = vmatpush1.bf16.xpose.msra.mxu0 0
    %3991 = vmatprep.subr.bf16.mxu0 0
    %3992 = vmatpush1.bf16.xpose.msra.mxu0 0
    %3993 = vmatprep.subr.bf16.mxu0 0
    %3994 = vmatpush1.bf16.xpose.msra.mxu0 0
    %3995 = vmatprep.subr.bf16.mxu0 0
    %3996 = vmatpush1.bf16.xpose.msra.mxu0 0
    %3997 = vmatprep.subr.bf16.mxu0 0
    %3998 = vmatpush1.bf16.xpose.msra.mxu0 0
    %3999 = vmatprep.subr.bf16.mxu0 0
    %4000 = vmatpush1.bf16.xpose.msra.mxu0 %v2714
    %4001 = vmatprep.subr.bf16.mxu0 0
    %4002 = vmatpush2.bf16.xpose.msra.mxu0 0
    %4003 = vmatprep.subr.bf16.mxu0 0
    %4004 = vmatpush2.bf16.xpose.msra.mxu0 0
    %4005 = vmatprep.subr.bf16.mxu0 0
    %4006 = vmatpush2.bf16.xpose.msra.mxu0 0
    %4007 = vmatprep.subr.bf16.mxu0 0
    %4008 = vmatpush2.bf16.xpose.msra.mxu0 0
    %4009 = vmatprep.subr.bf16.mxu0 0
    %4010 = vmatpush2.bf16.xpose.msra.mxu0 0
    %4011 = vmatprep.subr.bf16.mxu0 0
    %4012 = vmatpush2.bf16.xpose.msra.mxu0 0
    %4013 = vmatprep.subr.bf16.mxu0 0
    %4014 = vmatpush2.bf16.xpose.msra.mxu0 0
    %4015 = vmatprep.subr.bf16.mxu0 0
    %4016 = vmatpush2.bf16.xpose.msra.mxu0 0
    %4017 = vmatprep.mubr.bf16.mxu0 0
    %4018 = vmatmul.mubr.bf16.gmra.mxu0 %v3983
    %v4019 = vpop.f32.mrf.mxu0
    %v4020 = vadd.f32 %v39, %v4019
    %v4021 = vpop.f32.mrf.mxu0
    %v4022 = vpop.f32.mrf.mxu0
    %v4023 = vpop.f32.mrf.mxu0
    %4024 = vdwg.mxu0
    %v4026 = vsel %vm198, %v3803, 0
    %4028 = vmatprep.subr.bf16.mxu0 0
    %4029 = vmatpush1.bf16.xpose.msra.mxu0 0
    %4030 = vmatprep.subr.bf16.mxu0 0
    %4031 = vmatpush1.bf16.xpose.msra.mxu0 0
    %4032 = vmatprep.subr.bf16.mxu0 0
    %4033 = vmatpush1.bf16.xpose.msra.mxu0 0
    %4034 = vmatprep.subr.bf16.mxu0 0
    %4035 = vmatpush1.bf16.xpose.msra.mxu0 0
    %4036 = vmatprep.subr.bf16.mxu0 0
    %4037 = vmatpush1.bf16.xpose.msra.mxu0 0
    %4038 = vmatprep.subr.bf16.mxu0 0
    %4039 = vmatpush1.bf16.xpose.msra.mxu0 0
    %4040 = vmatprep.subr.bf16.mxu0 0
    %4041 = vmatpush1.bf16.xpose.msra.mxu0 0
    %4042 = vmatprep.subr.bf16.mxu0 0
    %4043 = vmatpush1.bf16.xpose.msra.mxu0 %v2760
    %4044 = vmatprep.subr.bf16.mxu0 0
    %4045 = vmatpush2.bf16.xpose.msra.mxu0 0
    %4046 = vmatprep.subr.bf16.mxu0 0
    %4047 = vmatpush2.bf16.xpose.msra.mxu0 0
    %4048 = vmatprep.subr.bf16.mxu0 0
    %4049 = vmatpush2.bf16.xpose.msra.mxu0 0
    %4050 = vmatprep.subr.bf16.mxu0 0
    %4051 = vmatpush2.bf16.xpose.msra.mxu0 0
    %4052 = vmatprep.subr.bf16.mxu0 0
    %4053 = vmatpush2.bf16.xpose.msra.mxu0 0
    %4054 = vmatprep.subr.bf16.mxu0 0
    %4055 = vmatpush2.bf16.xpose.msra.mxu0 0
    %4056 = vmatprep.subr.bf16.mxu0 0
    %4057 = vmatpush2.bf16.xpose.msra.mxu0 0
    %4058 = vmatprep.subr.bf16.mxu0 0
    %4059 = vmatpush2.bf16.xpose.msra.mxu0 0
    %4060 = vmatprep.mubr.bf16.mxu0 0
    %4061 = vmatmul.mubr.bf16.gmra.mxu0 %v4026
    %v4062 = vpop.f32.mrf.mxu0
    %v4063 = vadd.f32 %v39, %v4062
    %v4064 = vpop.f32.mrf.mxu0
    %v4065 = vpop.f32.mrf.mxu0
    %v4066 = vpop.f32.mrf.mxu0
    %4067 = vdwg.mxu0
    %v4069 = vsel %vm198, %v3804, 0
    %4071 = vmatprep.subr.bf16.mxu0 0
    %4072 = vmatpush1.bf16.xpose.msra.mxu0 0
    %4073 = vmatprep.subr.bf16.mxu0 0
    %4074 = vmatpush1.bf16.xpose.msra.mxu0 0
    %4075 = vmatprep.subr.bf16.mxu0 0
    %4076 = vmatpush1.bf16.xpose.msra.mxu0 0
    %4077 = vmatprep.subr.bf16.mxu0 0
    %4078 = vmatpush1.bf16.xpose.msra.mxu0 0
    %4079 = vmatprep.subr.bf16.mxu0 0
    %4080 = vmatpush1.bf16.xpose.msra.mxu0 0
    %4081 = vmatprep.subr.bf16.mxu0 0
    %4082 = vmatpush1.bf16.xpose.msra.mxu0 0
    %4083 = vmatprep.subr.bf16.mxu0 0
    %4084 = vmatpush1.bf16.xpose.msra.mxu0 0
    %4085 = vmatprep.subr.bf16.mxu0 0
    %4086 = vmatpush1.bf16.xpose.msra.mxu0 %v2806
    %4087 = vmatprep.subr.bf16.mxu0 0
    %4088 = vmatpush2.bf16.xpose.msra.mxu0 0
    %4089 = vmatprep.subr.bf16.mxu0 0
    %4090 = vmatpush2.bf16.xpose.msra.mxu0 0
    %4091 = vmatprep.subr.bf16.mxu0 0
    %4092 = vmatpush2.bf16.xpose.msra.mxu0 0
    %4093 = vmatprep.subr.bf16.mxu0 0
    %4094 = vmatpush2.bf16.xpose.msra.mxu0 0
    %4095 = vmatprep.subr.bf16.mxu0 0
    %4096 = vmatpush2.bf16.xpose.msra.mxu0 0
    %4097 = vmatprep.subr.bf16.mxu0 0
    %4098 = vmatpush2.bf16.xpose.msra.mxu0 0
    %4099 = vmatprep.subr.bf16.mxu0 0
    %4100 = vmatpush2.bf16.xpose.msra.mxu0 0
    %4101 = vmatprep.subr.bf16.mxu0 0
    %4102 = vmatpush2.bf16.xpose.msra.mxu0 0
    %4103 = vmatprep.mubr.bf16.mxu0 0
    %4104 = vmatmul.mubr.bf16.gmra.mxu0 %v4069
    %v4105 = vpop.f32.mrf.mxu0
    %v4106 = vadd.f32 %v39, %v4105
    %v4107 = vpop.f32.mrf.mxu0
    %v4108 = vpop.f32.mrf.mxu0
    %v4109 = vpop.f32.mrf.mxu0
    %4110 = vdwg.mxu0
    %v4112 = vsel %vm198, %v3805, 0
    %4114 = vmatprep.subr.bf16.mxu0 0
    %4115 = vmatpush1.bf16.xpose.msra.mxu0 0
    %4116 = vmatprep.subr.bf16.mxu0 0
    %4117 = vmatpush1.bf16.xpose.msra.mxu0 0
    %4118 = vmatprep.subr.bf16.mxu0 0
    %4119 = vmatpush1.bf16.xpose.msra.mxu0 0
    %4120 = vmatprep.subr.bf16.mxu0 0
    %4121 = vmatpush1.bf16.xpose.msra.mxu0 0
    %4122 = vmatprep.subr.bf16.mxu0 0
    %4123 = vmatpush1.bf16.xpose.msra.mxu0 0
    %4124 = vmatprep.subr.bf16.mxu0 0
    %4125 = vmatpush1.bf16.xpose.msra.mxu0 0
    %4126 = vmatprep.subr.bf16.mxu0 0
    %4127 = vmatpush1.bf16.xpose.msra.mxu0 0
    %4128 = vmatprep.subr.bf16.mxu0 0
    %4129 = vmatpush1.bf16.xpose.msra.mxu0 %v2852
    %4130 = vmatprep.subr.bf16.mxu0 0
    %4131 = vmatpush2.bf16.xpose.msra.mxu0 0
    %4132 = vmatprep.subr.bf16.mxu0 0
    %4133 = vmatpush2.bf16.xpose.msra.mxu0 0
    %4134 = vmatprep.subr.bf16.mxu0 0
    %4135 = vmatpush2.bf16.xpose.msra.mxu0 0
    %4136 = vmatprep.subr.bf16.mxu0 0
    %4137 = vmatpush2.bf16.xpose.msra.mxu0 0
    %4138 = vmatprep.subr.bf16.mxu0 0
    %4139 = vmatpush2.bf16.xpose.msra.mxu0 0
    %4140 = vmatprep.subr.bf16.mxu0 0
    %4141 = vmatpush2.bf16.xpose.msra.mxu0 0
    %4142 = vmatprep.subr.bf16.mxu0 0
    %4143 = vmatpush2.bf16.xpose.msra.mxu0 0
    %4144 = vmatprep.subr.bf16.mxu0 0
    %4145 = vmatpush2.bf16.xpose.msra.mxu0 0
    %4146 = vmatprep.mubr.bf16.mxu0 0
    %4147 = vmatmul.mubr.bf16.gmra.mxu0 %v4112
    %v4148 = vpop.f32.mrf.mxu0
    %v4149 = vadd.f32 %v39, %v4148
    %v4150 = vpop.f32.mrf.mxu0
    %v4151 = vpop.f32.mrf.mxu0
    %v4152 = vpop.f32.mrf.mxu0
    %4153 = vdwg.mxu0
    %v4155 = vsel %vm198, %v3806, 0
    %4157 = vmatprep.subr.bf16.mxu0 0
    %4158 = vmatpush1.bf16.xpose.msra.mxu0 0
    %4159 = vmatprep.subr.bf16.mxu0 0
    %4160 = vmatpush1.bf16.xpose.msra.mxu0 0
    %4161 = vmatprep.subr.bf16.mxu0 0
    %4162 = vmatpush1.bf16.xpose.msra.mxu0 0
    %4163 = vmatprep.subr.bf16.mxu0 0
    %4164 = vmatpush1.bf16.xpose.msra.mxu0 0
    %4165 = vmatprep.subr.bf16.mxu0 0
    %4166 = vmatpush1.bf16.xpose.msra.mxu0 0
    %4167 = vmatprep.subr.bf16.mxu0 0
    %4168 = vmatpush1.bf16.xpose.msra.mxu0 0
    %4169 = vmatprep.subr.bf16.mxu0 0
    %4170 = vmatpush1.bf16.xpose.msra.mxu0 0
    %4171 = vmatprep.subr.bf16.mxu0 0
    %4172 = vmatpush1.bf16.xpose.msra.mxu0 %v2898
    %4173 = vmatprep.subr.bf16.mxu0 0
    %4174 = vmatpush2.bf16.xpose.msra.mxu0 0
    %4175 = vmatprep.subr.bf16.mxu0 0
    %4176 = vmatpush2.bf16.xpose.msra.mxu0 0
    %4177 = vmatprep.subr.bf16.mxu0 0
    %4178 = vmatpush2.bf16.xpose.msra.mxu0 0
    %4179 = vmatprep.subr.bf16.mxu0 0
    %4180 = vmatpush2.bf16.xpose.msra.mxu0 0
    %4181 = vmatprep.subr.bf16.mxu0 0
    %4182 = vmatpush2.bf16.xpose.msra.mxu0 0
    %4183 = vmatprep.subr.bf16.mxu0 0
    %4184 = vmatpush2.bf16.xpose.msra.mxu0 0
    %4185 = vmatprep.subr.bf16.mxu0 0
    %4186 = vmatpush2.bf16.xpose.msra.mxu0 0
    %4187 = vmatprep.subr.bf16.mxu0 0
    %4188 = vmatpush2.bf16.xpose.msra.mxu0 0
    %4189 = vmatprep.mubr.bf16.mxu0 0
    %4190 = vmatmul.mubr.bf16.gmra.mxu0 %v4155
    %v4191 = vpop.f32.mrf.mxu0
    %v4192 = vadd.f32 %v39, %v4191
    %v4193 = vpop.f32.mrf.mxu0
    %v4194 = vpop.f32.mrf.mxu0
    %v4195 = vpop.f32.mrf.mxu0
    %4196 = vdwg.mxu0
    %v4198 = vsel %vm198, %v3807, 0
    %4200 = vmatprep.subr.bf16.mxu0 0
    %4201 = vmatpush1.bf16.xpose.msra.mxu0 0
    %4202 = vmatprep.subr.bf16.mxu0 0
    %4203 = vmatpush1.bf16.xpose.msra.mxu0 0
    %4204 = vmatprep.subr.bf16.mxu0 0
    %4205 = vmatpush1.bf16.xpose.msra.mxu0 0
    %4206 = vmatprep.subr.bf16.mxu0 0
    %4207 = vmatpush1.bf16.xpose.msra.mxu0 0
    %4208 = vmatprep.subr.bf16.mxu0 0
    %4209 = vmatpush1.bf16.xpose.msra.mxu0 0
    %4210 = vmatprep.subr.bf16.mxu0 0
    %4211 = vmatpush1.bf16.xpose.msra.mxu0 0
    %4212 = vmatprep.subr.bf16.mxu0 0
    %4213 = vmatpush1.bf16.xpose.msra.mxu0 0
    %4214 = vmatprep.subr.bf16.mxu0 0
    %4215 = vmatpush1.bf16.xpose.msra.mxu0 %v2944
    %4216 = vmatprep.subr.bf16.mxu0 0
    %4217 = vmatpush2.bf16.xpose.msra.mxu0 0
    %4218 = vmatprep.subr.bf16.mxu0 0
    %4219 = vmatpush2.bf16.xpose.msra.mxu0 0
    %4220 = vmatprep.subr.bf16.mxu0 0
    %4221 = vmatpush2.bf16.xpose.msra.mxu0 0
    %4222 = vmatprep.subr.bf16.mxu0 0
    %4223 = vmatpush2.bf16.xpose.msra.mxu0 0
    %4224 = vmatprep.subr.bf16.mxu0 0
    %4225 = vmatpush2.bf16.xpose.msra.mxu0 0
    %4226 = vmatprep.subr.bf16.mxu0 0
    %4227 = vmatpush2.bf16.xpose.msra.mxu0 0
    %4228 = vmatprep.subr.bf16.mxu0 0
    %4229 = vmatpush2.bf16.xpose.msra.mxu0 0
    %4230 = vmatprep.subr.bf16.mxu0 0
    %4231 = vmatpush2.bf16.xpose.msra.mxu0 0
    %4232 = vmatprep.mubr.bf16.mxu0 0
    %4233 = vmatmul.mubr.bf16.gmra.mxu0 %v4198
    %v4234 = vpop.f32.mrf.mxu0
    %v4235 = vadd.f32 %v39, %v4234
    %v4236 = vpop.f32.mrf.mxu0
    %v4237 = vpop.f32.mrf.mxu0
    %v4238 = vpop.f32.mrf.mxu0
    %4239 = vdwg.mxu0
    %v4241 = vsel %vm198, %v3808, 0
    %4243 = vmatprep.subr.bf16.mxu0 0
    %4244 = vmatpush1.bf16.xpose.msra.mxu0 0
    %4245 = vmatprep.subr.bf16.mxu0 0
    %4246 = vmatpush1.bf16.xpose.msra.mxu0 0
    %4247 = vmatprep.subr.bf16.mxu0 0
    %4248 = vmatpush1.bf16.xpose.msra.mxu0 0
    %4249 = vmatprep.subr.bf16.mxu0 0
    %4250 = vmatpush1.bf16.xpose.msra.mxu0 0
    %4251 = vmatprep.subr.bf16.mxu0 0
    %4252 = vmatpush1.bf16.xpose.msra.mxu0 0
    %4253 = vmatprep.subr.bf16.mxu0 0
    %4254 = vmatpush1.bf16.xpose.msra.mxu0 0
    %4255 = vmatprep.subr.bf16.mxu0 0
    %4256 = vmatpush1.bf16.xpose.msra.mxu0 0
    %4257 = vmatprep.subr.bf16.mxu0 0
    %4258 = vmatpush1.bf16.xpose.msra.mxu0 %v2990
    %4259 = vmatprep.subr.bf16.mxu0 0
    %4260 = vmatpush2.bf16.xpose.msra.mxu0 0
    %4261 = vmatprep.subr.bf16.mxu0 0
    %4262 = vmatpush2.bf16.xpose.msra.mxu0 0
    %4263 = vmatprep.subr.bf16.mxu0 0
    %4264 = vmatpush2.bf16.xpose.msra.mxu0 0
    %4265 = vmatprep.subr.bf16.mxu0 0
    %4266 = vmatpush2.bf16.xpose.msra.mxu0 0
    %4267 = vmatprep.subr.bf16.mxu0 0
    %4268 = vmatpush2.bf16.xpose.msra.mxu0 0
    %4269 = vmatprep.subr.bf16.mxu0 0
    %4270 = vmatpush2.bf16.xpose.msra.mxu0 0
    %4271 = vmatprep.subr.bf16.mxu0 0
    %4272 = vmatpush2.bf16.xpose.msra.mxu0 0
    %4273 = vmatprep.subr.bf16.mxu0 0
    %4274 = vmatpush2.bf16.xpose.msra.mxu0 0
    %4275 = vmatprep.mubr.bf16.mxu0 0
    %4276 = vmatmul.mubr.bf16.gmra.mxu0 %v4241
    %v4277 = vpop.f32.mrf.mxu0
    %v4278 = vadd.f32 %v39, %v4277
    %v4279 = vpop.f32.mrf.mxu0
    %v4280 = vpop.f32.mrf.mxu0
    %v4281 = vpop.f32.mrf.mxu0
    %4282 = vdwg.mxu0
    %v4284 = vsel %vm198, %v3809, 0
    %4286 = vmatprep.subr.bf16.mxu0 0
    %4287 = vmatpush1.bf16.xpose.msra.mxu0 0
    %4288 = vmatprep.subr.bf16.mxu0 0
    %4289 = vmatpush1.bf16.xpose.msra.mxu0 0
    %4290 = vmatprep.subr.bf16.mxu0 0
    %4291 = vmatpush1.bf16.xpose.msra.mxu0 0
    %4292 = vmatprep.subr.bf16.mxu0 0
    %4293 = vmatpush1.bf16.xpose.msra.mxu0 0
    %4294 = vmatprep.subr.bf16.mxu0 0
    %4295 = vmatpush1.bf16.xpose.msra.mxu0 0
    %4296 = vmatprep.subr.bf16.mxu0 0
    %4297 = vmatpush1.bf16.xpose.msra.mxu0 0
    %4298 = vmatprep.subr.bf16.mxu0 0
    %4299 = vmatpush1.bf16.xpose.msra.mxu0 0
    %4300 = vmatprep.subr.bf16.mxu0 0
    %4301 = vmatpush1.bf16.xpose.msra.mxu0 %v3036
    %4302 = vmatprep.subr.bf16.mxu0 0
    %4303 = vmatpush2.bf16.xpose.msra.mxu0 0
    %4304 = vmatprep.subr.bf16.mxu0 0
    %4305 = vmatpush2.bf16.xpose.msra.mxu0 0
    %4306 = vmatprep.subr.bf16.mxu0 0
    %4307 = vmatpush2.bf16.xpose.msra.mxu0 0
    %4308 = vmatprep.subr.bf16.mxu0 0
    %4309 = vmatpush2.bf16.xpose.msra.mxu0 0
    %4310 = vmatprep.subr.bf16.mxu0 0
    %4311 = vmatpush2.bf16.xpose.msra.mxu0 0
    %4312 = vmatprep.subr.bf16.mxu0 0
    %4313 = vmatpush2.bf16.xpose.msra.mxu0 0
    %4314 = vmatprep.subr.bf16.mxu0 0
    %4315 = vmatpush2.bf16.xpose.msra.mxu0 0
    %4316 = vmatprep.subr.bf16.mxu0 0
    %4317 = vmatpush2.bf16.xpose.msra.mxu0 0
    %4318 = vmatprep.mubr.bf16.mxu0 0
    %4319 = vmatmul.mubr.bf16.gmra.mxu0 %v4284
    %v4320 = vpop.f32.mrf.mxu0
    %v4321 = vadd.f32 %v39, %v4320
    %v4322 = vpop.f32.mrf.mxu0
    %v4323 = vpop.f32.mrf.mxu0
    %v4324 = vpop.f32.mrf.mxu0
    %4325 = vdwg.mxu0
    %v4326 = vsel %vm573, %v3848, -inf
    %4327 = vmax.xlane.f32.xlu0 %v4326
    %v4328 = vpop.xlane.xlu0 %4327
    %v4329 = vsel %vm573, %v3891, -inf
    %4330 = vmax.xlane.f32.xlu0 %v4329
    %v4331 = vpop.xlane.xlu0 %4330
    %v4332 = vsel %vm573, %v3934, -inf
    %4333 = vmax.xlane.f32.xlu0 %v4332
    %v4334 = vpop.xlane.xlu0 %4333
    %v4335 = vsel %vm573, %v3977, -inf
    %4336 = vmax.xlane.f32.xlu0 %v4335
    %v4337 = vpop.xlane.xlu0 %4336
    %v4338 = vsel %vm573, %v4020, -inf
    %4339 = vmax.xlane.f32.xlu0 %v4338
    %v4340 = vpop.xlane.xlu0 %4339
    %v4341 = vsel %vm573, %v4063, -inf
    %4342 = vmax.xlane.f32.xlu0 %v4341
    %v4343 = vpop.xlane.xlu0 %4342
    %v4344 = vsel %vm573, %v4106, -inf
    %4345 = vmax.xlane.f32.xlu0 %v4344
    %v4346 = vpop.xlane.xlu0 %4345
    %v4347 = vsel %vm573, %v4149, -inf
    %4348 = vmax.xlane.f32.xlu0 %v4347
    %v4349 = vpop.xlane.xlu0 %4348
    %v4350 = vsel %vm573, %v4192, -inf
    %4351 = vmax.xlane.f32.xlu0 %v4350
    %v4352 = vpop.xlane.xlu0 %4351
    %v4353 = vsel %vm573, %v4235, -inf
    %4354 = vmax.xlane.f32.xlu0 %v4353
    %v4355 = vpop.xlane.xlu0 %4354
    %v4356 = vsel %vm573, %v4278, -inf
    %4357 = vmax.xlane.f32.xlu0 %v4356
    %v4358 = vpop.xlane.xlu0 %4357
    %v4359 = vsel %vm573, %v4321, -inf
    %4360 = vmax.xlane.f32.xlu0 %v4359
    %v4361 = vpop.xlane.xlu0 %4360
    %v4362 = vsub.f32 %v3848, %v4328
    %v4363 = vsub.f32 %v3891, %v4331
    %v4364 = vsub.f32 %v3934, %v4334
    %v4365 = vsub.f32 %v3977, %v4337
    %v4366 = vsub.f32 %v4020, %v4340
    %v4367 = vsub.f32 %v4063, %v4343
    %v4368 = vsub.f32 %v4106, %v4346
    %v4369 = vsub.f32 %v4149, %v4349
    %v4370 = vsub.f32 %v4192, %v4352
    %v4371 = vsub.f32 %v4235, %v4355
    %v4372 = vsub.f32 %v4278, %v4358
    %v4373 = vsub.f32 %v4321, %v4361
    %v4374 = vmul.f32 %v4362, 1.442695
    %v4375 = vpow.pop %v4374
    %v4376 = vmul.f32 %v4363, 1.442695
    %v4377 = vpow.pop %v4376
    %v4378 = vmul.f32 %v4364, 1.442695
    %v4379 = vpow.pop %v4378
    %v4380 = vmul.f32 %v4365, 1.442695
    %v4381 = vpow.pop %v4380
    %v4382 = vmul.f32 %v4366, 1.442695
    %v4383 = vpow.pop %v4382
    %v4384 = vmul.f32 %v4367, 1.442695
    %v4385 = vpow.pop %v4384
    %v4386 = vmul.f32 %v4368, 1.442695
    %v4387 = vpow.pop %v4386
    %v4388 = vmul.f32 %v4369, 1.442695
    %v4389 = vpow.pop %v4388
    %v4390 = vmul.f32 %v4370, 1.442695
    %v4391 = vpow.pop %v4390
    %v4392 = vmul.f32 %v4371, 1.442695
    %v4393 = vpow.pop %v4392
    %v4394 = vmul.f32 %v4372, 1.442695
    %v4395 = vpow.pop %v4394
    %v4396 = vmul.f32 %v4373, 1.442695
    %v4397 = vpow.pop %v4396
    %v4398 = vsel %vm573, %v4375, 0.0
    %4399 = vadd.xlane.f32.xlu0 %v4398
    %v4400 = vpop.xlane.xlu0 %4399
    %v4401 = vsel %vm573, %v4377, 0.0
    %4402 = vadd.xlane.f32.xlu0 %v4401
    %v4403 = vpop.xlane.xlu0 %4402
    %v4404 = vsel %vm573, %v4379, 0.0
    %4405 = vadd.xlane.f32.xlu0 %v4404
    %v4406 = vpop.xlane.xlu0 %4405
    %v4407 = vsel %vm573, %v4381, 0.0
    %4408 = vadd.xlane.f32.xlu0 %v4407
    %v4409 = vpop.xlane.xlu0 %4408
    %v4410 = vsel %vm573, %v4383, 0.0
    %4411 = vadd.xlane.f32.xlu0 %v4410
    %v4412 = vpop.xlane.xlu0 %4411
    %v4413 = vsel %vm573, %v4385, 0.0
    %4414 = vadd.xlane.f32.xlu0 %v4413
    %v4415 = vpop.xlane.xlu0 %4414
    %v4416 = vsel %vm573, %v4387, 0.0
    %4417 = vadd.xlane.f32.xlu0 %v4416
    %v4418 = vpop.xlane.xlu0 %4417
    %v4419 = vsel %vm573, %v4389, 0.0
    %4420 = vadd.xlane.f32.xlu0 %v4419
    %v4421 = vpop.xlane.xlu0 %4420
    %v4422 = vsel %vm573, %v4391, 0.0
    %4423 = vadd.xlane.f32.xlu0 %v4422
    %v4424 = vpop.xlane.xlu0 %4423
    %v4425 = vsel %vm573, %v4393, 0.0
    %4426 = vadd.xlane.f32.xlu0 %v4425
    %v4427 = vpop.xlane.xlu0 %4426
    %v4428 = vsel %vm573, %v4395, 0.0
    %4429 = vadd.xlane.f32.xlu0 %v4428
    %v4430 = vpop.xlane.xlu0 %4429
    %v4431 = vsel %vm573, %v4397, 0.0
    %4432 = vadd.xlane.f32.xlu0 %v4431
    %v4433 = vpop.xlane.xlu0 %4432
    %v4434 = vrcp.pop %v4400
    %v4435 = vrcp.pop %v4403
    %v4436 = vrcp.pop %v4406
    %v4437 = vrcp.pop %v4409
    %v4438 = vrcp.pop %v4412
    %v4439 = vrcp.pop %v4415
    %v4440 = vrcp.pop %v4418
    %v4441 = vrcp.pop %v4421
    %v4442 = vrcp.pop %v4424
    %v4443 = vrcp.pop %v4427
    %v4444 = vrcp.pop %v4430
    %v4445 = vrcp.pop %v4433
    %v4446 = vmul.f32 %v4375, %v4434
    %v4447 = vmul.f32 %v4377, %v4435
    %v4448 = vmul.f32 %v4379, %v4436
    %v4449 = vmul.f32 %v4381, %v4437
    %v4450 = vmul.f32 %v4383, %v4438
    %v4451 = vmul.f32 %v4385, %v4439
    %v4452 = vmul.f32 %v4387, %v4440
    %v4453 = vmul.f32 %v4389, %v4441
    %v4454 = vmul.f32 %v4391, %v4442
    %v4455 = vmul.f32 %v4393, %v4443
    %v4456 = vmul.f32 %v4395, %v4444
    %v4457 = vmul.f32 %v4397, %v4445
    %v4458 = vpack.c.bf16 %v4446, %v4446
    %v4459 = vpack.c.bf16 %v4447, %v4447
    %v4460 = vpack.c.bf16 %v4448, %v4448
    %v4461 = vpack.c.bf16 %v4449, %v4449
    %v4462 = vpack.c.bf16 %v4450, %v4450
    %v4463 = vpack.c.bf16 %v4451, %v4451
    %v4464 = vpack.c.bf16 %v4452, %v4452
    %v4465 = vpack.c.bf16 %v4453, %v4453
    %v4466 = vpack.c.bf16 %v4454, %v4454
    %v4467 = vpack.c.bf16 %v4455, %v4455
    %v4468 = vpack.c.bf16 %v4456, %v4456
    %v4469 = vpack.c.bf16 %v4457, %v4457
    %v4471 = vsel %vm573, %v4458, 0
    %4473 = vmatprep.subr.bf16.mxu0 0
    %4474 = vmatpush1.bf16.msra.mxu0 0
    %4475 = vmatprep.subr.bf16.mxu0 0
    %4476 = vmatpush1.bf16.msra.mxu0 0
    %4477 = vmatprep.subr.bf16.mxu0 0
    %4478 = vmatpush1.bf16.msra.mxu0 0
    %4479 = vmatprep.subr.bf16.mxu0 0
    %4480 = vmatpush1.bf16.msra.mxu0 0
    %4481 = vmatprep.subr.bf16.mxu0 0
    %4482 = vmatpush1.bf16.msra.mxu0 0
    %4483 = vmatprep.subr.bf16.mxu0 0
    %4484 = vmatpush1.bf16.msra.mxu0 0
    %4485 = vmatprep.subr.bf16.mxu0 0
    %4486 = vmatpush1.bf16.msra.mxu0 0
    %4487 = vmatprep.subr.bf16.mxu0 0
    %4488 = vmatpush1.bf16.msra.mxu0 %v3226
    %4489 = vmatprep.subr.bf16.mxu0 0
    %4490 = vmatpush2.bf16.msra.mxu0 0
    %4491 = vmatprep.subr.bf16.mxu0 0
    %4492 = vmatpush2.bf16.msra.mxu0 0
    %4493 = vmatprep.subr.bf16.mxu0 0
    %4494 = vmatpush2.bf16.msra.mxu0 0
    %4495 = vmatprep.subr.bf16.mxu0 0
    %4496 = vmatpush2.bf16.msra.mxu0 0
    %4497 = vmatprep.subr.bf16.mxu0 0
    %4498 = vmatpush2.bf16.msra.mxu0 0
    %4499 = vmatprep.subr.bf16.mxu0 0
    %4500 = vmatpush2.bf16.msra.mxu0 0
    %4501 = vmatprep.subr.bf16.mxu0 0
    %4502 = vmatpush2.bf16.msra.mxu0 0
    %4503 = vmatprep.subr.bf16.mxu0 0
    %4504 = vmatpush2.bf16.msra.mxu0 0
    %4505 = vmatprep.mubr.bf16.mxu0 0
    %4506 = vmatmul.mubr.bf16.gmra.mxu0 %v4471
    %v4507 = vpop.f32.mrf.mxu0
    %v4508 = vadd.f32 0.0, %v4507
    %v4509 = vpop.f32.mrf.mxu0
    %v4510 = vpop.f32.mrf.mxu0
    %v4511 = vpop.f32.mrf.mxu0
    %4512 = vdwg.mxu0
    %v4514 = vsel %vm573, %v4459, 0
    %4516 = vmatprep.subr.bf16.mxu0 0
    %4517 = vmatpush1.bf16.msra.mxu0 0
    %4518 = vmatprep.subr.bf16.mxu0 0
    %4519 = vmatpush1.bf16.msra.mxu0 0
    %4520 = vmatprep.subr.bf16.mxu0 0
    %4521 = vmatpush1.bf16.msra.mxu0 0
    %4522 = vmatprep.subr.bf16.mxu0 0
    %4523 = vmatpush1.bf16.msra.mxu0 0
    %4524 = vmatprep.subr.bf16.mxu0 0
    %4525 = vmatpush1.bf16.msra.mxu0 0
    %4526 = vmatprep.subr.bf16.mxu0 0
    %4527 = vmatpush1.bf16.msra.mxu0 0
    %4528 = vmatprep.subr.bf16.mxu0 0
    %4529 = vmatpush1.bf16.msra.mxu0 0
    %4530 = vmatprep.subr.bf16.mxu0 0
    %4531 = vmatpush1.bf16.msra.mxu0 %v3272
    %4532 = vmatprep.subr.bf16.mxu0 0
    %4533 = vmatpush2.bf16.msra.mxu0 0
    %4534 = vmatprep.subr.bf16.mxu0 0
    %4535 = vmatpush2.bf16.msra.mxu0 0
    %4536 = vmatprep.subr.bf16.mxu0 0
    %4537 = vmatpush2.bf16.msra.mxu0 0
    %4538 = vmatprep.subr.bf16.mxu0 0
    %4539 = vmatpush2.bf16.msra.mxu0 0
    %4540 = vmatprep.subr.bf16.mxu0 0
    %4541 = vmatpush2.bf16.msra.mxu0 0
    %4542 = vmatprep.subr.bf16.mxu0 0
    %4543 = vmatpush2.bf16.msra.mxu0 0
    %4544 = vmatprep.subr.bf16.mxu0 0
    %4545 = vmatpush2.bf16.msra.mxu0 0
    %4546 = vmatprep.subr.bf16.mxu0 0
    %4547 = vmatpush2.bf16.msra.mxu0 0
    %4548 = vmatprep.mubr.bf16.mxu0 0
    %4549 = vmatmul.mubr.bf16.gmra.mxu0 %v4514
    %v4550 = vpop.f32.mrf.mxu0
    %v4551 = vadd.f32 0.0, %v4550
    %v4552 = vpop.f32.mrf.mxu0
    %v4553 = vpop.f32.mrf.mxu0
    %v4554 = vpop.f32.mrf.mxu0
    %4555 = vdwg.mxu0
    %v4557 = vsel %vm573, %v4460, 0
    %4559 = vmatprep.subr.bf16.mxu0 0
    %4560 = vmatpush1.bf16.msra.mxu0 0
    %4561 = vmatprep.subr.bf16.mxu0 0
    %4562 = vmatpush1.bf16.msra.mxu0 0
    %4563 = vmatprep.subr.bf16.mxu0 0
    %4564 = vmatpush1.bf16.msra.mxu0 0
    %4565 = vmatprep.subr.bf16.mxu0 0
    %4566 = vmatpush1.bf16.msra.mxu0 0
    %4567 = vmatprep.subr.bf16.mxu0 0
    %4568 = vmatpush1.bf16.msra.mxu0 0
    %4569 = vmatprep.subr.bf16.mxu0 0
    %4570 = vmatpush1.bf16.msra.mxu0 0
    %4571 = vmatprep.subr.bf16.mxu0 0
    %4572 = vmatpush1.bf16.msra.mxu0 0
    %4573 = vmatprep.subr.bf16.mxu0 0
    %4574 = vmatpush1.bf16.msra.mxu0 %v3318
    %4575 = vmatprep.subr.bf16.mxu0 0
    %4576 = vmatpush2.bf16.msra.mxu0 0
    %4577 = vmatprep.subr.bf16.mxu0 0
    %4578 = vmatpush2.bf16.msra.mxu0 0
    %4579 = vmatprep.subr.bf16.mxu0 0
    %4580 = vmatpush2.bf16.msra.mxu0 0
    %4581 = vmatprep.subr.bf16.mxu0 0
    %4582 = vmatpush2.bf16.msra.mxu0 0
    %4583 = vmatprep.subr.bf16.mxu0 0
    %4584 = vmatpush2.bf16.msra.mxu0 0
    %4585 = vmatprep.subr.bf16.mxu0 0
    %4586 = vmatpush2.bf16.msra.mxu0 0
    %4587 = vmatprep.subr.bf16.mxu0 0
    %4588 = vmatpush2.bf16.msra.mxu0 0
    %4589 = vmatprep.subr.bf16.mxu0 0
    %4590 = vmatpush2.bf16.msra.mxu0 0
    %4591 = vmatprep.mubr.bf16.mxu0 0
    %4592 = vmatmul.mubr.bf16.gmra.mxu0 %v4557
    %v4593 = vpop.f32.mrf.mxu0
    %v4594 = vadd.f32 0.0, %v4593
    %v4595 = vpop.f32.mrf.mxu0
    %v4596 = vpop.f32.mrf.mxu0
    %v4597 = vpop.f32.mrf.mxu0
    %4598 = vdwg.mxu0
    %v4600 = vsel %vm573, %v4461, 0
    %4602 = vmatprep.subr.bf16.mxu0 0
    %4603 = vmatpush1.bf16.msra.mxu0 0
    %4604 = vmatprep.subr.bf16.mxu0 0
    %4605 = vmatpush1.bf16.msra.mxu0 0
    %4606 = vmatprep.subr.bf16.mxu0 0
    %4607 = vmatpush1.bf16.msra.mxu0 0
    %4608 = vmatprep.subr.bf16.mxu0 0
    %4609 = vmatpush1.bf16.msra.mxu0 0
    %4610 = vmatprep.subr.bf16.mxu0 0
    %4611 = vmatpush1.bf16.msra.mxu0 0
    %4612 = vmatprep.subr.bf16.mxu0 0
    %4613 = vmatpush1.bf16.msra.mxu0 0
    %4614 = vmatprep.subr.bf16.mxu0 0
    %4615 = vmatpush1.bf16.msra.mxu0 0
    %4616 = vmatprep.subr.bf16.mxu0 0
    %4617 = vmatpush1.bf16.msra.mxu0 %v3364
    %4618 = vmatprep.subr.bf16.mxu0 0
    %4619 = vmatpush2.bf16.msra.mxu0 0
    %4620 = vmatprep.subr.bf16.mxu0 0
    %4621 = vmatpush2.bf16.msra.mxu0 0
    %4622 = vmatprep.subr.bf16.mxu0 0
    %4623 = vmatpush2.bf16.msra.mxu0 0
    %4624 = vmatprep.subr.bf16.mxu0 0
    %4625 = vmatpush2.bf16.msra.mxu0 0
    %4626 = vmatprep.subr.bf16.mxu0 0
    %4627 = vmatpush2.bf16.msra.mxu0 0
    %4628 = vmatprep.subr.bf16.mxu0 0
    %4629 = vmatpush2.bf16.msra.mxu0 0
    %4630 = vmatprep.subr.bf16.mxu0 0
    %4631 = vmatpush2.bf16.msra.mxu0 0
    %4632 = vmatprep.subr.bf16.mxu0 0
    %4633 = vmatpush2.bf16.msra.mxu0 0
    %4634 = vmatprep.mubr.bf16.mxu0 0
    %4635 = vmatmul.mubr.bf16.gmra.mxu0 %v4600
    %v4636 = vpop.f32.mrf.mxu0
    %v4637 = vadd.f32 0.0, %v4636
    %v4638 = vpop.f32.mrf.mxu0
    %v4639 = vpop.f32.mrf.mxu0
    %v4640 = vpop.f32.mrf.mxu0
    %4641 = vdwg.mxu0
    %v4643 = vsel %vm573, %v4462, 0
    %4645 = vmatprep.subr.bf16.mxu0 0
    %4646 = vmatpush1.bf16.msra.mxu0 0
    %4647 = vmatprep.subr.bf16.mxu0 0
    %4648 = vmatpush1.bf16.msra.mxu0 0
    %4649 = vmatprep.subr.bf16.mxu0 0
    %4650 = vmatpush1.bf16.msra.mxu0 0
    %4651 = vmatprep.subr.bf16.mxu0 0
    %4652 = vmatpush1.bf16.msra.mxu0 0
    %4653 = vmatprep.subr.bf16.mxu0 0
    %4654 = vmatpush1.bf16.msra.mxu0 0
    %4655 = vmatprep.subr.bf16.mxu0 0
    %4656 = vmatpush1.bf16.msra.mxu0 0
    %4657 = vmatprep.subr.bf16.mxu0 0
    %4658 = vmatpush1.bf16.msra.mxu0 0
    %4659 = vmatprep.subr.bf16.mxu0 0
    %4660 = vmatpush1.bf16.msra.mxu0 %v3410
    %4661 = vmatprep.subr.bf16.mxu0 0
    %4662 = vmatpush2.bf16.msra.mxu0 0
    %4663 = vmatprep.subr.bf16.mxu0 0
    %4664 = vmatpush2.bf16.msra.mxu0 0
    %4665 = vmatprep.subr.bf16.mxu0 0
    %4666 = vmatpush2.bf16.msra.mxu0 0
    %4667 = vmatprep.subr.bf16.mxu0 0
    %4668 = vmatpush2.bf16.msra.mxu0 0
    %4669 = vmatprep.subr.bf16.mxu0 0
    %4670 = vmatpush2.bf16.msra.mxu0 0
    %4671 = vmatprep.subr.bf16.mxu0 0
    %4672 = vmatpush2.bf16.msra.mxu0 0
    %4673 = vmatprep.subr.bf16.mxu0 0
    %4674 = vmatpush2.bf16.msra.mxu0 0
    %4675 = vmatprep.subr.bf16.mxu0 0
    %4676 = vmatpush2.bf16.msra.mxu0 0
    %4677 = vmatprep.mubr.bf16.mxu0 0
    %4678 = vmatmul.mubr.bf16.gmra.mxu0 %v4643
    %v4679 = vpop.f32.mrf.mxu0
    %v4680 = vadd.f32 0.0, %v4679
    %v4681 = vpop.f32.mrf.mxu0
    %v4682 = vpop.f32.mrf.mxu0
    %v4683 = vpop.f32.mrf.mxu0
    %4684 = vdwg.mxu0
    %v4686 = vsel %vm573, %v4463, 0
    %4688 = vmatprep.subr.bf16.mxu0 0
    %4689 = vmatpush1.bf16.msra.mxu0 0
    %4690 = vmatprep.subr.bf16.mxu0 0
    %4691 = vmatpush1.bf16.msra.mxu0 0
    %4692 = vmatprep.subr.bf16.mxu0 0
    %4693 = vmatpush1.bf16.msra.mxu0 0
    %4694 = vmatprep.subr.bf16.mxu0 0
    %4695 = vmatpush1.bf16.msra.mxu0 0
    %4696 = vmatprep.subr.bf16.mxu0 0
    %4697 = vmatpush1.bf16.msra.mxu0 0
    %4698 = vmatprep.subr.bf16.mxu0 0
    %4699 = vmatpush1.bf16.msra.mxu0 0
    %4700 = vmatprep.subr.bf16.mxu0 0
    %4701 = vmatpush1.bf16.msra.mxu0 0
    %4702 = vmatprep.subr.bf16.mxu0 0
    %4703 = vmatpush1.bf16.msra.mxu0 %v3456
    %4704 = vmatprep.subr.bf16.mxu0 0
    %4705 = vmatpush2.bf16.msra.mxu0 0
    %4706 = vmatprep.subr.bf16.mxu0 0
    %4707 = vmatpush2.bf16.msra.mxu0 0
    %4708 = vmatprep.subr.bf16.mxu0 0
    %4709 = vmatpush2.bf16.msra.mxu0 0
    %4710 = vmatprep.subr.bf16.mxu0 0
    %4711 = vmatpush2.bf16.msra.mxu0 0
    %4712 = vmatprep.subr.bf16.mxu0 0
    %4713 = vmatpush2.bf16.msra.mxu0 0
    %4714 = vmatprep.subr.bf16.mxu0 0
    %4715 = vmatpush2.bf16.msra.mxu0 0
    %4716 = vmatprep.subr.bf16.mxu0 0
    %4717 = vmatpush2.bf16.msra.mxu0 0
    %4718 = vmatprep.subr.bf16.mxu0 0
    %4719 = vmatpush2.bf16.msra.mxu0 0
    %4720 = vmatprep.mubr.bf16.mxu0 0
    %4721 = vmatmul.mubr.bf16.gmra.mxu0 %v4686
    %v4722 = vpop.f32.mrf.mxu0
    %v4723 = vadd.f32 0.0, %v4722
    %v4724 = vpop.f32.mrf.mxu0
    %v4725 = vpop.f32.mrf.mxu0
    %v4726 = vpop.f32.mrf.mxu0
    %4727 = vdwg.mxu0
    %v4729 = vsel %vm573, %v4464, 0
    %4731 = vmatprep.subr.bf16.mxu0 0
    %4732 = vmatpush1.bf16.msra.mxu0 0
    %4733 = vmatprep.subr.bf16.mxu0 0
    %4734 = vmatpush1.bf16.msra.mxu0 0
    %4735 = vmatprep.subr.bf16.mxu0 0
    %4736 = vmatpush1.bf16.msra.mxu0 0
    %4737 = vmatprep.subr.bf16.mxu0 0
    %4738 = vmatpush1.bf16.msra.mxu0 0
    %4739 = vmatprep.subr.bf16.mxu0 0
    %4740 = vmatpush1.bf16.msra.mxu0 0
    %4741 = vmatprep.subr.bf16.mxu0 0
    %4742 = vmatpush1.bf16.msra.mxu0 0
    %4743 = vmatprep.subr.bf16.mxu0 0
    %4744 = vmatpush1.bf16.msra.mxu0 0
    %4745 = vmatprep.subr.bf16.mxu0 0
    %4746 = vmatpush1.bf16.msra.mxu0 %v3502
    %4747 = vmatprep.subr.bf16.mxu0 0
    %4748 = vmatpush2.bf16.msra.mxu0 0
    %4749 = vmatprep.subr.bf16.mxu0 0
    %4750 = vmatpush2.bf16.msra.mxu0 0
    %4751 = vmatprep.subr.bf16.mxu0 0
    %4752 = vmatpush2.bf16.msra.mxu0 0
    %4753 = vmatprep.subr.bf16.mxu0 0
    %4754 = vmatpush2.bf16.msra.mxu0 0
    %4755 = vmatprep.subr.bf16.mxu0 0
    %4756 = vmatpush2.bf16.msra.mxu0 0
    %4757 = vmatprep.subr.bf16.mxu0 0
    %4758 = vmatpush2.bf16.msra.mxu0 0
    %4759 = vmatprep.subr.bf16.mxu0 0
    %4760 = vmatpush2.bf16.msra.mxu0 0
    %4761 = vmatprep.subr.bf16.mxu0 0
    %4762 = vmatpush2.bf16.msra.mxu0 0
    %4763 = vmatprep.mubr.bf16.mxu0 0
    %4764 = vmatmul.mubr.bf16.gmra.mxu0 %v4729
    %v4765 = vpop.f32.mrf.mxu0
    %v4766 = vadd.f32 0.0, %v4765
    %v4767 = vpop.f32.mrf.mxu0
    %v4768 = vpop.f32.mrf.mxu0
    %v4769 = vpop.f32.mrf.mxu0
    %4770 = vdwg.mxu0
    %v4772 = vsel %vm573, %v4465, 0
    %4774 = vmatprep.subr.bf16.mxu0 0
    %4775 = vmatpush1.bf16.msra.mxu0 0
    %4776 = vmatprep.subr.bf16.mxu0 0
    %4777 = vmatpush1.bf16.msra.mxu0 0
    %4778 = vmatprep.subr.bf16.mxu0 0
    %4779 = vmatpush1.bf16.msra.mxu0 0
    %4780 = vmatprep.subr.bf16.mxu0 0
    %4781 = vmatpush1.bf16.msra.mxu0 0
    %4782 = vmatprep.subr.bf16.mxu0 0
    %4783 = vmatpush1.bf16.msra.mxu0 0
    %4784 = vmatprep.subr.bf16.mxu0 0
    %4785 = vmatpush1.bf16.msra.mxu0 0
    %4786 = vmatprep.subr.bf16.mxu0 0
    %4787 = vmatpush1.bf16.msra.mxu0 0
    %4788 = vmatprep.subr.bf16.mxu0 0
    %4789 = vmatpush1.bf16.msra.mxu0 %v3548
    %4790 = vmatprep.subr.bf16.mxu0 0
    %4791 = vmatpush2.bf16.msra.mxu0 0
    %4792 = vmatprep.subr.bf16.mxu0 0
    %4793 = vmatpush2.bf16.msra.mxu0 0
    %4794 = vmatprep.subr.bf16.mxu0 0
    %4795 = vmatpush2.bf16.msra.mxu0 0
    %4796 = vmatprep.subr.bf16.mxu0 0
    %4797 = vmatpush2.bf16.msra.mxu0 0
    %4798 = vmatprep.subr.bf16.mxu0 0
    %4799 = vmatpush2.bf16.msra.mxu0 0
    %4800 = vmatprep.subr.bf16.mxu0 0
    %4801 = vmatpush2.bf16.msra.mxu0 0
    %4802 = vmatprep.subr.bf16.mxu0 0
    %4803 = vmatpush2.bf16.msra.mxu0 0
    %4804 = vmatprep.subr.bf16.mxu0 0
    %4805 = vmatpush2.bf16.msra.mxu0 0
    %4806 = vmatprep.mubr.bf16.mxu0 0
    %4807 = vmatmul.mubr.bf16.gmra.mxu0 %v4772
    %v4808 = vpop.f32.mrf.mxu0
    %v4809 = vadd.f32 0.0, %v4808
    %v4810 = vpop.f32.mrf.mxu0
    %v4811 = vpop.f32.mrf.mxu0
    %v4812 = vpop.f32.mrf.mxu0
    %4813 = vdwg.mxu0
    %v4815 = vsel %vm573, %v4466, 0
    %4817 = vmatprep.subr.bf16.mxu0 0
    %4818 = vmatpush1.bf16.msra.mxu0 0
    %4819 = vmatprep.subr.bf16.mxu0 0
    %4820 = vmatpush1.bf16.msra.mxu0 0
    %4821 = vmatprep.subr.bf16.mxu0 0
    %4822 = vmatpush1.bf16.msra.mxu0 0
    %4823 = vmatprep.subr.bf16.mxu0 0
    %4824 = vmatpush1.bf16.msra.mxu0 0
    %4825 = vmatprep.subr.bf16.mxu0 0
    %4826 = vmatpush1.bf16.msra.mxu0 0
    %4827 = vmatprep.subr.bf16.mxu0 0
    %4828 = vmatpush1.bf16.msra.mxu0 0
    %4829 = vmatprep.subr.bf16.mxu0 0
    %4830 = vmatpush1.bf16.msra.mxu0 0
    %4831 = vmatprep.subr.bf16.mxu0 0
    %4832 = vmatpush1.bf16.msra.mxu0 %v3594
    %4833 = vmatprep.subr.bf16.mxu0 0
    %4834 = vmatpush2.bf16.msra.mxu0 0
    %4835 = vmatprep.subr.bf16.mxu0 0
    %4836 = vmatpush2.bf16.msra.mxu0 0
    %4837 = vmatprep.subr.bf16.mxu0 0
    %4838 = vmatpush2.bf16.msra.mxu0 0
    %4839 = vmatprep.subr.bf16.mxu0 0
    %4840 = vmatpush2.bf16.msra.mxu0 0
    %4841 = vmatprep.subr.bf16.mxu0 0
    %4842 = vmatpush2.bf16.msra.mxu0 0
    %4843 = vmatprep.subr.bf16.mxu0 0
    %4844 = vmatpush2.bf16.msra.mxu0 0
    %4845 = vmatprep.subr.bf16.mxu0 0
    %4846 = vmatpush2.bf16.msra.mxu0 0
    %4847 = vmatprep.subr.bf16.mxu0 0
    %4848 = vmatpush2.bf16.msra.mxu0 0
    %4849 = vmatprep.mubr.bf16.mxu0 0
    %4850 = vmatmul.mubr.bf16.gmra.mxu0 %v4815
    %v4851 = vpop.f32.mrf.mxu0
    %v4852 = vadd.f32 0.0, %v4851
    %v4853 = vpop.f32.mrf.mxu0
    %v4854 = vpop.f32.mrf.mxu0
    %v4855 = vpop.f32.mrf.mxu0
    %4856 = vdwg.mxu0
    %v4858 = vsel %vm573, %v4467, 0
    %4860 = vmatprep.subr.bf16.mxu0 0
    %4861 = vmatpush1.bf16.msra.mxu0 0
    %4862 = vmatprep.subr.bf16.mxu0 0
    %4863 = vmatpush1.bf16.msra.mxu0 0
    %4864 = vmatprep.subr.bf16.mxu0 0
    %4865 = vmatpush1.bf16.msra.mxu0 0
    %4866 = vmatprep.subr.bf16.mxu0 0
    %4867 = vmatpush1.bf16.msra.mxu0 0
    %4868 = vmatprep.subr.bf16.mxu0 0
    %4869 = vmatpush1.bf16.msra.mxu0 0
    %4870 = vmatprep.subr.bf16.mxu0 0
    %4871 = vmatpush1.bf16.msra.mxu0 0
    %4872 = vmatprep.subr.bf16.mxu0 0
    %4873 = vmatpush1.bf16.msra.mxu0 0
    %4874 = vmatprep.subr.bf16.mxu0 0
    %4875 = vmatpush1.bf16.msra.mxu0 %v3640
    %4876 = vmatprep.subr.bf16.mxu0 0
    %4877 = vmatpush2.bf16.msra.mxu0 0
    %4878 = vmatprep.subr.bf16.mxu0 0
    %4879 = vmatpush2.bf16.msra.mxu0 0
    %4880 = vmatprep.subr.bf16.mxu0 0
    %4881 = vmatpush2.bf16.msra.mxu0 0
    %4882 = vmatprep.subr.bf16.mxu0 0
    %4883 = vmatpush2.bf16.msra.mxu0 0
    %4884 = vmatprep.subr.bf16.mxu0 0
    %4885 = vmatpush2.bf16.msra.mxu0 0
    %4886 = vmatprep.subr.bf16.mxu0 0
    %4887 = vmatpush2.bf16.msra.mxu0 0
    %4888 = vmatprep.subr.bf16.mxu0 0
    %4889 = vmatpush2.bf16.msra.mxu0 0
    %4890 = vmatprep.subr.bf16.mxu0 0
    %4891 = vmatpush2.bf16.msra.mxu0 0
    %4892 = vmatprep.mubr.bf16.mxu0 0
    %4893 = vmatmul.mubr.bf16.gmra.mxu0 %v4858
    %v4894 = vpop.f32.mrf.mxu0
    %v4895 = vadd.f32 0.0, %v4894
    %v4896 = vpop.f32.mrf.mxu0
    %v4897 = vpop.f32.mrf.mxu0
    %v4898 = vpop.f32.mrf.mxu0
    %4899 = vdwg.mxu0
    %v4901 = vsel %vm573, %v4468, 0
    %4903 = vmatprep.subr.bf16.mxu0 0
    %4904 = vmatpush1.bf16.msra.mxu0 0
    %4905 = vmatprep.subr.bf16.mxu0 0
    %4906 = vmatpush1.bf16.msra.mxu0 0
    %4907 = vmatprep.subr.bf16.mxu0 0
    %4908 = vmatpush1.bf16.msra.mxu0 0
    %4909 = vmatprep.subr.bf16.mxu0 0
    %4910 = vmatpush1.bf16.msra.mxu0 0
    %4911 = vmatprep.subr.bf16.mxu0 0
    %4912 = vmatpush1.bf16.msra.mxu0 0
    %4913 = vmatprep.subr.bf16.mxu0 0
    %4914 = vmatpush1.bf16.msra.mxu0 0
    %4915 = vmatprep.subr.bf16.mxu0 0
    %4916 = vmatpush1.bf16.msra.mxu0 0
    %4917 = vmatprep.subr.bf16.mxu0 0
    %4918 = vmatpush1.bf16.msra.mxu0 %v3686
    %4919 = vmatprep.subr.bf16.mxu0 0
    %4920 = vmatpush2.bf16.msra.mxu0 0
    %4921 = vmatprep.subr.bf16.mxu0 0
    %4922 = vmatpush2.bf16.msra.mxu0 0
    %4923 = vmatprep.subr.bf16.mxu0 0
    %4924 = vmatpush2.bf16.msra.mxu0 0
    %4925 = vmatprep.subr.bf16.mxu0 0
    %4926 = vmatpush2.bf16.msra.mxu0 0
    %4927 = vmatprep.subr.bf16.mxu0 0
    %4928 = vmatpush2.bf16.msra.mxu0 0
    %4929 = vmatprep.subr.bf16.mxu0 0
    %4930 = vmatpush2.bf16.msra.mxu0 0
    %4931 = vmatprep.subr.bf16.mxu0 0
    %4932 = vmatpush2.bf16.msra.mxu0 0
    %4933 = vmatprep.subr.bf16.mxu0 0
    %4934 = vmatpush2.bf16.msra.mxu0 0
    %4935 = vmatprep.mubr.bf16.mxu0 0
    %4936 = vmatmul.mubr.bf16.gmra.mxu0 %v4901
    %v4937 = vpop.f32.mrf.mxu0
    %v4938 = vadd.f32 0.0, %v4937
    %v4939 = vpop.f32.mrf.mxu0
    %v4940 = vpop.f32.mrf.mxu0
    %v4941 = vpop.f32.mrf.mxu0
    %4942 = vdwg.mxu0
    %v4944 = vsel %vm573, %v4469, 0
    %4946 = vmatprep.subr.bf16.mxu0 0
    %4947 = vmatpush1.bf16.msra.mxu0 0
    %4948 = vmatprep.subr.bf16.mxu0 0
    %4949 = vmatpush1.bf16.msra.mxu0 0
    %4950 = vmatprep.subr.bf16.mxu0 0
    %4951 = vmatpush1.bf16.msra.mxu0 0
    %4952 = vmatprep.subr.bf16.mxu0 0
    %4953 = vmatpush1.bf16.msra.mxu0 0
    %4954 = vmatprep.subr.bf16.mxu0 0
    %4955 = vmatpush1.bf16.msra.mxu0 0
    %4956 = vmatprep.subr.bf16.mxu0 0
    %4957 = vmatpush1.bf16.msra.mxu0 0
    %4958 = vmatprep.subr.bf16.mxu0 0
    %4959 = vmatpush1.bf16.msra.mxu0 0
    %4960 = vmatprep.subr.bf16.mxu0 0
    %4961 = vmatpush1.bf16.msra.mxu0 %v3732
    %4962 = vmatprep.subr.bf16.mxu0 0
    %4963 = vmatpush2.bf16.msra.mxu0 0
    %4964 = vmatprep.subr.bf16.mxu0 0
    %4965 = vmatpush2.bf16.msra.mxu0 0
    %4966 = vmatprep.subr.bf16.mxu0 0
    %4967 = vmatpush2.bf16.msra.mxu0 0
    %4968 = vmatprep.subr.bf16.mxu0 0
    %4969 = vmatpush2.bf16.msra.mxu0 0
    %4970 = vmatprep.subr.bf16.mxu0 0
    %4971 = vmatpush2.bf16.msra.mxu0 0
    %4972 = vmatprep.subr.bf16.mxu0 0
    %4973 = vmatpush2.bf16.msra.mxu0 0
    %4974 = vmatprep.subr.bf16.mxu0 0
    %4975 = vmatpush2.bf16.msra.mxu0 0
    %4976 = vmatprep.subr.bf16.mxu0 0
    %4977 = vmatpush2.bf16.msra.mxu0 0
    %4978 = vmatprep.mubr.bf16.mxu0 0
    %4979 = vmatmul.mubr.bf16.gmra.mxu0 %v4944
    %v4980 = vpop.f32.mrf.mxu0
    %v4981 = vadd.f32 0.0, %v4980
    %v4982 = vpop.f32.mrf.mxu0
    %v4983 = vpop.f32.mrf.mxu0
    %v4984 = vpop.f32.mrf.mxu0
    %4985 = vdwg.mxu0
    %v4986 = vmul.f32 %v4508, %v907
    %v4987 = vmul.f32 %v4551, %v907
    %v4988 = vmul.f32 %v4594, %v907
    %v4989 = vmul.f32 %v4637, %v907
    %v4990 = vmul.f32 %v4680, %v907
    %v4991 = vmul.f32 %v4723, %v907
    %v4992 = vmul.f32 %v4766, %v907
    %v4993 = vmul.f32 %v4809, %v907
    %v4994 = vmul.f32 %v4852, %v907
    %v4995 = vmul.f32 %v4895, %v907
    %v4996 = vmul.f32 %v4938, %v907
    %v4997 = vmul.f32 %v4981, %v907
    %v4998 = vadd.f32 %v3786, %v4986
    %v4999 = vadd.f32 %v3787, %v4987
    %v5000 = vadd.f32 %v3788, %v4988
    %v5001 = vadd.f32 %v3789, %v4989
    %v5002 = vadd.f32 %v3790, %v4990
    %v5003 = vadd.f32 %v3791, %v4991
    %v5004 = vadd.f32 %v3792, %v4992
    %v5005 = vadd.f32 %v3793, %v4993
    %v5006 = vadd.f32 %v3794, %v4994
    %v5007 = vadd.f32 %v3795, %v4995
    %v5008 = vadd.f32 %v3796, %v4996
    %v5009 = vadd.f32 %v3797, %v4997
    %v5010 = vmul.bf16 %v2478, %v915
    %v5011 = vmul.bf16 %v2479, %v915
    %v5012 = vmul.bf16 %v2480, %v915
    %v5013 = vmul.bf16 %v2481, %v915
    %v5014 = vmul.bf16 %v2482, %v915
    %v5015 = vmul.bf16 %v2483, %v915
    %v5016 = vmul.bf16 %v2484, %v915
    %v5017 = vmul.bf16 %v2485, %v915
    %v5018 = vmul.bf16 %v2486, %v915
    %v5019 = vmul.bf16 %v2487, %v915
    %v5020 = vmul.bf16 %v2488, %v915
    %v5021 = vmul.bf16 %v2489, %v915
    %v5023 = vsel %vm198, %v5010, 0
    %5025 = vmatprep.subr.bf16.mxu0 0
    %5026 = vmatpush1.bf16.xpose.msra.mxu0 0
    %5027 = vmatprep.subr.bf16.mxu0 0
    %5028 = vmatpush1.bf16.xpose.msra.mxu0 0
    %5029 = vmatprep.subr.bf16.mxu0 0
    %5030 = vmatpush1.bf16.xpose.msra.mxu0 0
    %5031 = vmatprep.subr.bf16.mxu0 0
    %5032 = vmatpush1.bf16.xpose.msra.mxu0 0
    %5033 = vmatprep.subr.bf16.mxu0 0
    %5034 = vmatpush1.bf16.xpose.msra.mxu0 0
    %5035 = vmatprep.subr.bf16.mxu0 0
    %5036 = vmatpush1.bf16.xpose.msra.mxu0 0
    %5037 = vmatprep.subr.bf16.mxu0 0
    %5038 = vmatpush1.bf16.xpose.msra.mxu0 0
    %5039 = vmatprep.subr.bf16.mxu0 0
    %5040 = vmatpush1.bf16.xpose.msra.mxu0 %v2530
    %5041 = vmatprep.subr.bf16.mxu0 0
    %5042 = vmatpush2.bf16.xpose.msra.mxu0 0
    %5043 = vmatprep.subr.bf16.mxu0 0
    %5044 = vmatpush2.bf16.xpose.msra.mxu0 0
    %5045 = vmatprep.subr.bf16.mxu0 0
    %5046 = vmatpush2.bf16.xpose.msra.mxu0 0
    %5047 = vmatprep.subr.bf16.mxu0 0
    %5048 = vmatpush2.bf16.xpose.msra.mxu0 0
    %5049 = vmatprep.subr.bf16.mxu0 0
    %5050 = vmatpush2.bf16.xpose.msra.mxu0 0
    %5051 = vmatprep.subr.bf16.mxu0 0
    %5052 = vmatpush2.bf16.xpose.msra.mxu0 0
    %5053 = vmatprep.subr.bf16.mxu0 0
    %5054 = vmatpush2.bf16.xpose.msra.mxu0 0
    %5055 = vmatprep.subr.bf16.mxu0 0
    %5056 = vmatpush2.bf16.xpose.msra.mxu0 0
    %5057 = vmatprep.mubr.bf16.mxu0 0
    %5058 = vmatmul.mubr.bf16.gmra.mxu0 %v5023
    %v5059 = vpop.f32.mrf.mxu0
    %v5060 = vadd.f32 %v39, %v5059
    %v5061 = vpop.f32.mrf.mxu0
    %v5062 = vpop.f32.mrf.mxu0
    %v5063 = vpop.f32.mrf.mxu0
    %5064 = vdwg.mxu0
    %v5066 = vsel %vm198, %v5011, 0
    %5068 = vmatprep.subr.bf16.mxu0 0
    %5069 = vmatpush1.bf16.xpose.msra.mxu0 0
    %5070 = vmatprep.subr.bf16.mxu0 0
    %5071 = vmatpush1.bf16.xpose.msra.mxu0 0
    %5072 = vmatprep.subr.bf16.mxu0 0
    %5073 = vmatpush1.bf16.xpose.msra.mxu0 0
    %5074 = vmatprep.subr.bf16.mxu0 0
    %5075 = vmatpush1.bf16.xpose.msra.mxu0 0
    %5076 = vmatprep.subr.bf16.mxu0 0
    %5077 = vmatpush1.bf16.xpose.msra.mxu0 0
    %5078 = vmatprep.subr.bf16.mxu0 0
    %5079 = vmatpush1.bf16.xpose.msra.mxu0 0
    %5080 = vmatprep.subr.bf16.mxu0 0
    %5081 = vmatpush1.bf16.xpose.msra.mxu0 0
    %5082 = vmatprep.subr.bf16.mxu0 0
    %5083 = vmatpush1.bf16.xpose.msra.mxu0 %v2576
    %5084 = vmatprep.subr.bf16.mxu0 0
    %5085 = vmatpush2.bf16.xpose.msra.mxu0 0
    %5086 = vmatprep.subr.bf16.mxu0 0
    %5087 = vmatpush2.bf16.xpose.msra.mxu0 0
    %5088 = vmatprep.subr.bf16.mxu0 0
    %5089 = vmatpush2.bf16.xpose.msra.mxu0 0
    %5090 = vmatprep.subr.bf16.mxu0 0
    %5091 = vmatpush2.bf16.xpose.msra.mxu0 0
    %5092 = vmatprep.subr.bf16.mxu0 0
    %5093 = vmatpush2.bf16.xpose.msra.mxu0 0
    %5094 = vmatprep.subr.bf16.mxu0 0
    %5095 = vmatpush2.bf16.xpose.msra.mxu0 0
    %5096 = vmatprep.subr.bf16.mxu0 0
    %5097 = vmatpush2.bf16.xpose.msra.mxu0 0
    %5098 = vmatprep.subr.bf16.mxu0 0
    %5099 = vmatpush2.bf16.xpose.msra.mxu0 0
    %5100 = vmatprep.mubr.bf16.mxu0 0
    %5101 = vmatmul.mubr.bf16.gmra.mxu0 %v5066
    %v5102 = vpop.f32.mrf.mxu0
    %v5103 = vadd.f32 %v39, %v5102
    %v5104 = vpop.f32.mrf.mxu0
    %v5105 = vpop.f32.mrf.mxu0
    %v5106 = vpop.f32.mrf.mxu0
    %5107 = vdwg.mxu0
    %v5109 = vsel %vm198, %v5012, 0
    %5111 = vmatprep.subr.bf16.mxu0 0
    %5112 = vmatpush1.bf16.xpose.msra.mxu0 0
    %5113 = vmatprep.subr.bf16.mxu0 0
    %5114 = vmatpush1.bf16.xpose.msra.mxu0 0
    %5115 = vmatprep.subr.bf16.mxu0 0
    %5116 = vmatpush1.bf16.xpose.msra.mxu0 0
    %5117 = vmatprep.subr.bf16.mxu0 0
    %5118 = vmatpush1.bf16.xpose.msra.mxu0 0
    %5119 = vmatprep.subr.bf16.mxu0 0
    %5120 = vmatpush1.bf16.xpose.msra.mxu0 0
    %5121 = vmatprep.subr.bf16.mxu0 0
    %5122 = vmatpush1.bf16.xpose.msra.mxu0 0
    %5123 = vmatprep.subr.bf16.mxu0 0
    %5124 = vmatpush1.bf16.xpose.msra.mxu0 0
    %5125 = vmatprep.subr.bf16.mxu0 0
    %5126 = vmatpush1.bf16.xpose.msra.mxu0 %v2622
    %5127 = vmatprep.subr.bf16.mxu0 0
    %5128 = vmatpush2.bf16.xpose.msra.mxu0 0
    %5129 = vmatprep.subr.bf16.mxu0 0
    %5130 = vmatpush2.bf16.xpose.msra.mxu0 0
    %5131 = vmatprep.subr.bf16.mxu0 0
    %5132 = vmatpush2.bf16.xpose.msra.mxu0 0
    %5133 = vmatprep.subr.bf16.mxu0 0
    %5134 = vmatpush2.bf16.xpose.msra.mxu0 0
    %5135 = vmatprep.subr.bf16.mxu0 0
    %5136 = vmatpush2.bf16.xpose.msra.mxu0 0
    %5137 = vmatprep.subr.bf16.mxu0 0
    %5138 = vmatpush2.bf16.xpose.msra.mxu0 0
    %5139 = vmatprep.subr.bf16.mxu0 0
    %5140 = vmatpush2.bf16.xpose.msra.mxu0 0
    %5141 = vmatprep.subr.bf16.mxu0 0
    %5142 = vmatpush2.bf16.xpose.msra.mxu0 0
    %5143 = vmatprep.mubr.bf16.mxu0 0
    %5144 = vmatmul.mubr.bf16.gmra.mxu0 %v5109
    %v5145 = vpop.f32.mrf.mxu0
    %v5146 = vadd.f32 %v39, %v5145
    %v5147 = vpop.f32.mrf.mxu0
    %v5148 = vpop.f32.mrf.mxu0
    %v5149 = vpop.f32.mrf.mxu0
    %5150 = vdwg.mxu0
    %v5152 = vsel %vm198, %v5013, 0
    %5154 = vmatprep.subr.bf16.mxu0 0
    %5155 = vmatpush1.bf16.xpose.msra.mxu0 0
    %5156 = vmatprep.subr.bf16.mxu0 0
    %5157 = vmatpush1.bf16.xpose.msra.mxu0 0
    %5158 = vmatprep.subr.bf16.mxu0 0
    %5159 = vmatpush1.bf16.xpose.msra.mxu0 0
    %5160 = vmatprep.subr.bf16.mxu0 0
    %5161 = vmatpush1.bf16.xpose.msra.mxu0 0
    %5162 = vmatprep.subr.bf16.mxu0 0
    %5163 = vmatpush1.bf16.xpose.msra.mxu0 0
    %5164 = vmatprep.subr.bf16.mxu0 0
    %5165 = vmatpush1.bf16.xpose.msra.mxu0 0
    %5166 = vmatprep.subr.bf16.mxu0 0
    %5167 = vmatpush1.bf16.xpose.msra.mxu0 0
    %5168 = vmatprep.subr.bf16.mxu0 0
    %5169 = vmatpush1.bf16.xpose.msra.mxu0 %v2668
    %5170 = vmatprep.subr.bf16.mxu0 0
    %5171 = vmatpush2.bf16.xpose.msra.mxu0 0
    %5172 = vmatprep.subr.bf16.mxu0 0
    %5173 = vmatpush2.bf16.xpose.msra.mxu0 0
    %5174 = vmatprep.subr.bf16.mxu0 0
    %5175 = vmatpush2.bf16.xpose.msra.mxu0 0
    %5176 = vmatprep.subr.bf16.mxu0 0
    %5177 = vmatpush2.bf16.xpose.msra.mxu0 0
    %5178 = vmatprep.subr.bf16.mxu0 0
    %5179 = vmatpush2.bf16.xpose.msra.mxu0 0
    %5180 = vmatprep.subr.bf16.mxu0 0
    %5181 = vmatpush2.bf16.xpose.msra.mxu0 0
    %5182 = vmatprep.subr.bf16.mxu0 0
    %5183 = vmatpush2.bf16.xpose.msra.mxu0 0
    %5184 = vmatprep.subr.bf16.mxu0 0
    %5185 = vmatpush2.bf16.xpose.msra.mxu0 0
    %5186 = vmatprep.mubr.bf16.mxu0 0
    %5187 = vmatmul.mubr.bf16.gmra.mxu0 %v5152
    %v5188 = vpop.f32.mrf.mxu0
    %v5189 = vadd.f32 %v39, %v5188
    %v5190 = vpop.f32.mrf.mxu0
    %v5191 = vpop.f32.mrf.mxu0
    %v5192 = vpop.f32.mrf.mxu0
    %5193 = vdwg.mxu0
    %v5195 = vsel %vm198, %v5014, 0
    %5197 = vmatprep.subr.bf16.mxu0 0
    %5198 = vmatpush1.bf16.xpose.msra.mxu0 0
    %5199 = vmatprep.subr.bf16.mxu0 0
    %5200 = vmatpush1.bf16.xpose.msra.mxu0 0
    %5201 = vmatprep.subr.bf16.mxu0 0
    %5202 = vmatpush1.bf16.xpose.msra.mxu0 0
    %5203 = vmatprep.subr.bf16.mxu0 0
    %5204 = vmatpush1.bf16.xpose.msra.mxu0 0
    %5205 = vmatprep.subr.bf16.mxu0 0
    %5206 = vmatpush1.bf16.xpose.msra.mxu0 0
    %5207 = vmatprep.subr.bf16.mxu0 0
    %5208 = vmatpush1.bf16.xpose.msra.mxu0 0
    %5209 = vmatprep.subr.bf16.mxu0 0
    %5210 = vmatpush1.bf16.xpose.msra.mxu0 0
    %5211 = vmatprep.subr.bf16.mxu0 0
    %5212 = vmatpush1.bf16.xpose.msra.mxu0 %v2714
    %5213 = vmatprep.subr.bf16.mxu0 0
    %5214 = vmatpush2.bf16.xpose.msra.mxu0 0
    %5215 = vmatprep.subr.bf16.mxu0 0
    %5216 = vmatpush2.bf16.xpose.msra.mxu0 0
    %5217 = vmatprep.subr.bf16.mxu0 0
    %5218 = vmatpush2.bf16.xpose.msra.mxu0 0
    %5219 = vmatprep.subr.bf16.mxu0 0
    %5220 = vmatpush2.bf16.xpose.msra.mxu0 0
    %5221 = vmatprep.subr.bf16.mxu0 0
    %5222 = vmatpush2.bf16.xpose.msra.mxu0 0
    %5223 = vmatprep.subr.bf16.mxu0 0
    %5224 = vmatpush2.bf16.xpose.msra.mxu0 0
    %5225 = vmatprep.subr.bf16.mxu0 0
    %5226 = vmatpush2.bf16.xpose.msra.mxu0 0
    %5227 = vmatprep.subr.bf16.mxu0 0
    %5228 = vmatpush2.bf16.xpose.msra.mxu0 0
    %5229 = vmatprep.mubr.bf16.mxu0 0
    %5230 = vmatmul.mubr.bf16.gmra.mxu0 %v5195
    %v5231 = vpop.f32.mrf.mxu0
    %v5232 = vadd.f32 %v39, %v5231
    %v5233 = vpop.f32.mrf.mxu0
    %v5234 = vpop.f32.mrf.mxu0
    %v5235 = vpop.f32.mrf.mxu0
    %5236 = vdwg.mxu0
    %v5238 = vsel %vm198, %v5015, 0
    %5240 = vmatprep.subr.bf16.mxu0 0
    %5241 = vmatpush1.bf16.xpose.msra.mxu0 0
    %5242 = vmatprep.subr.bf16.mxu0 0
    %5243 = vmatpush1.bf16.xpose.msra.mxu0 0
    %5244 = vmatprep.subr.bf16.mxu0 0
    %5245 = vmatpush1.bf16.xpose.msra.mxu0 0
    %5246 = vmatprep.subr.bf16.mxu0 0
    %5247 = vmatpush1.bf16.xpose.msra.mxu0 0
    %5248 = vmatprep.subr.bf16.mxu0 0
    %5249 = vmatpush1.bf16.xpose.msra.mxu0 0
    %5250 = vmatprep.subr.bf16.mxu0 0
    %5251 = vmatpush1.bf16.xpose.msra.mxu0 0
    %5252 = vmatprep.subr.bf16.mxu0 0
    %5253 = vmatpush1.bf16.xpose.msra.mxu0 0
    %5254 = vmatprep.subr.bf16.mxu0 0
    %5255 = vmatpush1.bf16.xpose.msra.mxu0 %v2760
    %5256 = vmatprep.subr.bf16.mxu0 0
    %5257 = vmatpush2.bf16.xpose.msra.mxu0 0
    %5258 = vmatprep.subr.bf16.mxu0 0
    %5259 = vmatpush2.bf16.xpose.msra.mxu0 0
    %5260 = vmatprep.subr.bf16.mxu0 0
    %5261 = vmatpush2.bf16.xpose.msra.mxu0 0
    %5262 = vmatprep.subr.bf16.mxu0 0
    %5263 = vmatpush2.bf16.xpose.msra.mxu0 0
    %5264 = vmatprep.subr.bf16.mxu0 0
    %5265 = vmatpush2.bf16.xpose.msra.mxu0 0
    %5266 = vmatprep.subr.bf16.mxu0 0
    %5267 = vmatpush2.bf16.xpose.msra.mxu0 0
    %5268 = vmatprep.subr.bf16.mxu0 0
    %5269 = vmatpush2.bf16.xpose.msra.mxu0 0
    %5270 = vmatprep.subr.bf16.mxu0 0
    %5271 = vmatpush2.bf16.xpose.msra.mxu0 0
    %5272 = vmatprep.mubr.bf16.mxu0 0
    %5273 = vmatmul.mubr.bf16.gmra.mxu0 %v5238
    %v5274 = vpop.f32.mrf.mxu0
    %v5275 = vadd.f32 %v39, %v5274
    %v5276 = vpop.f32.mrf.mxu0
    %v5277 = vpop.f32.mrf.mxu0
    %v5278 = vpop.f32.mrf.mxu0
    %5279 = vdwg.mxu0
    %v5281 = vsel %vm198, %v5016, 0
    %5283 = vmatprep.subr.bf16.mxu0 0
    %5284 = vmatpush1.bf16.xpose.msra.mxu0 0
    %5285 = vmatprep.subr.bf16.mxu0 0
    %5286 = vmatpush1.bf16.xpose.msra.mxu0 0
    %5287 = vmatprep.subr.bf16.mxu0 0
    %5288 = vmatpush1.bf16.xpose.msra.mxu0 0
    %5289 = vmatprep.subr.bf16.mxu0 0
    %5290 = vmatpush1.bf16.xpose.msra.mxu0 0
    %5291 = vmatprep.subr.bf16.mxu0 0
    %5292 = vmatpush1.bf16.xpose.msra.mxu0 0
    %5293 = vmatprep.subr.bf16.mxu0 0
    %5294 = vmatpush1.bf16.xpose.msra.mxu0 0
    %5295 = vmatprep.subr.bf16.mxu0 0
    %5296 = vmatpush1.bf16.xpose.msra.mxu0 0
    %5297 = vmatprep.subr.bf16.mxu0 0
    %5298 = vmatpush1.bf16.xpose.msra.mxu0 %v2806
    %5299 = vmatprep.subr.bf16.mxu0 0
    %5300 = vmatpush2.bf16.xpose.msra.mxu0 0
    %5301 = vmatprep.subr.bf16.mxu0 0
    %5302 = vmatpush2.bf16.xpose.msra.mxu0 0
    %5303 = vmatprep.subr.bf16.mxu0 0
    %5304 = vmatpush2.bf16.xpose.msra.mxu0 0
    %5305 = vmatprep.subr.bf16.mxu0 0
    %5306 = vmatpush2.bf16.xpose.msra.mxu0 0
    %5307 = vmatprep.subr.bf16.mxu0 0
    %5308 = vmatpush2.bf16.xpose.msra.mxu0 0
    %5309 = vmatprep.subr.bf16.mxu0 0
    %5310 = vmatpush2.bf16.xpose.msra.mxu0 0
    %5311 = vmatprep.subr.bf16.mxu0 0
    %5312 = vmatpush2.bf16.xpose.msra.mxu0 0
    %5313 = vmatprep.subr.bf16.mxu0 0
    %5314 = vmatpush2.bf16.xpose.msra.mxu0 0
    %5315 = vmatprep.mubr.bf16.mxu0 0
    %5316 = vmatmul.mubr.bf16.gmra.mxu0 %v5281
    %v5317 = vpop.f32.mrf.mxu0
    %v5318 = vadd.f32 %v39, %v5317
    %v5319 = vpop.f32.mrf.mxu0
    %v5320 = vpop.f32.mrf.mxu0
    %v5321 = vpop.f32.mrf.mxu0
    %5322 = vdwg.mxu0
    %v5324 = vsel %vm198, %v5017, 0
    %5326 = vmatprep.subr.bf16.mxu0 0
    %5327 = vmatpush1.bf16.xpose.msra.mxu0 0
    %5328 = vmatprep.subr.bf16.mxu0 0
    %5329 = vmatpush1.bf16.xpose.msra.mxu0 0
    %5330 = vmatprep.subr.bf16.mxu0 0
    %5331 = vmatpush1.bf16.xpose.msra.mxu0 0
    %5332 = vmatprep.subr.bf16.mxu0 0
    %5333 = vmatpush1.bf16.xpose.msra.mxu0 0
    %5334 = vmatprep.subr.bf16.mxu0 0
    %5335 = vmatpush1.bf16.xpose.msra.mxu0 0
    %5336 = vmatprep.subr.bf16.mxu0 0
    %5337 = vmatpush1.bf16.xpose.msra.mxu0 0
    %5338 = vmatprep.subr.bf16.mxu0 0
    %5339 = vmatpush1.bf16.xpose.msra.mxu0 0
    %5340 = vmatprep.subr.bf16.mxu0 0
    %5341 = vmatpush1.bf16.xpose.msra.mxu0 %v2852
    %5342 = vmatprep.subr.bf16.mxu0 0
    %5343 = vmatpush2.bf16.xpose.msra.mxu0 0
    %5344 = vmatprep.subr.bf16.mxu0 0
    %5345 = vmatpush2.bf16.xpose.msra.mxu0 0
    %5346 = vmatprep.subr.bf16.mxu0 0
    %5347 = vmatpush2.bf16.xpose.msra.mxu0 0
    %5348 = vmatprep.subr.bf16.mxu0 0
    %5349 = vmatpush2.bf16.xpose.msra.mxu0 0
    %5350 = vmatprep.subr.bf16.mxu0 0
    %5351 = vmatpush2.bf16.xpose.msra.mxu0 0
    %5352 = vmatprep.subr.bf16.mxu0 0
    %5353 = vmatpush2.bf16.xpose.msra.mxu0 0
    %5354 = vmatprep.subr.bf16.mxu0 0
    %5355 = vmatpush2.bf16.xpose.msra.mxu0 0
    %5356 = vmatprep.subr.bf16.mxu0 0
    %5357 = vmatpush2.bf16.xpose.msra.mxu0 0
    %5358 = vmatprep.mubr.bf16.mxu0 0
    %5359 = vmatmul.mubr.bf16.gmra.mxu0 %v5324
    %v5360 = vpop.f32.mrf.mxu0
    %v5361 = vadd.f32 %v39, %v5360
    %v5362 = vpop.f32.mrf.mxu0
    %v5363 = vpop.f32.mrf.mxu0
    %v5364 = vpop.f32.mrf.mxu0
    %5365 = vdwg.mxu0
    %v5367 = vsel %vm198, %v5018, 0
    %5369 = vmatprep.subr.bf16.mxu0 0
    %5370 = vmatpush1.bf16.xpose.msra.mxu0 0
    %5371 = vmatprep.subr.bf16.mxu0 0
    %5372 = vmatpush1.bf16.xpose.msra.mxu0 0
    %5373 = vmatprep.subr.bf16.mxu0 0
    %5374 = vmatpush1.bf16.xpose.msra.mxu0 0
    %5375 = vmatprep.subr.bf16.mxu0 0
    %5376 = vmatpush1.bf16.xpose.msra.mxu0 0
    %5377 = vmatprep.subr.bf16.mxu0 0
    %5378 = vmatpush1.bf16.xpose.msra.mxu0 0
    %5379 = vmatprep.subr.bf16.mxu0 0
    %5380 = vmatpush1.bf16.xpose.msra.mxu0 0
    %5381 = vmatprep.subr.bf16.mxu0 0
    %5382 = vmatpush1.bf16.xpose.msra.mxu0 0
    %5383 = vmatprep.subr.bf16.mxu0 0
    %5384 = vmatpush1.bf16.xpose.msra.mxu0 %v2898
    %5385 = vmatprep.subr.bf16.mxu0 0
    %5386 = vmatpush2.bf16.xpose.msra.mxu0 0
    %5387 = vmatprep.subr.bf16.mxu0 0
    %5388 = vmatpush2.bf16.xpose.msra.mxu0 0
    %5389 = vmatprep.subr.bf16.mxu0 0
    %5390 = vmatpush2.bf16.xpose.msra.mxu0 0
    %5391 = vmatprep.subr.bf16.mxu0 0
    %5392 = vmatpush2.bf16.xpose.msra.mxu0 0
    %5393 = vmatprep.subr.bf16.mxu0 0
    %5394 = vmatpush2.bf16.xpose.msra.mxu0 0
    %5395 = vmatprep.subr.bf16.mxu0 0
    %5396 = vmatpush2.bf16.xpose.msra.mxu0 0
    %5397 = vmatprep.subr.bf16.mxu0 0
    %5398 = vmatpush2.bf16.xpose.msra.mxu0 0
    %5399 = vmatprep.subr.bf16.mxu0 0
    %5400 = vmatpush2.bf16.xpose.msra.mxu0 0
    %5401 = vmatprep.mubr.bf16.mxu0 0
    %5402 = vmatmul.mubr.bf16.gmra.mxu0 %v5367
    %v5403 = vpop.f32.mrf.mxu0
    %v5404 = vadd.f32 %v39, %v5403
    %v5405 = vpop.f32.mrf.mxu0
    %v5406 = vpop.f32.mrf.mxu0
    %v5407 = vpop.f32.mrf.mxu0
    %5408 = vdwg.mxu0
    %v5410 = vsel %vm198, %v5019, 0
    %5412 = vmatprep.subr.bf16.mxu0 0
    %5413 = vmatpush1.bf16.xpose.msra.mxu0 0
    %5414 = vmatprep.subr.bf16.mxu0 0
    %5415 = vmatpush1.bf16.xpose.msra.mxu0 0
    %5416 = vmatprep.subr.bf16.mxu0 0
    %5417 = vmatpush1.bf16.xpose.msra.mxu0 0
    %5418 = vmatprep.subr.bf16.mxu0 0
    %5419 = vmatpush1.bf16.xpose.msra.mxu0 0
    %5420 = vmatprep.subr.bf16.mxu0 0
    %5421 = vmatpush1.bf16.xpose.msra.mxu0 0
    %5422 = vmatprep.subr.bf16.mxu0 0
    %5423 = vmatpush1.bf16.xpose.msra.mxu0 0
    %5424 = vmatprep.subr.bf16.mxu0 0
    %5425 = vmatpush1.bf16.xpose.msra.mxu0 0
    %5426 = vmatprep.subr.bf16.mxu0 0
    %5427 = vmatpush1.bf16.xpose.msra.mxu0 %v2944
    %5428 = vmatprep.subr.bf16.mxu0 0
    %5429 = vmatpush2.bf16.xpose.msra.mxu0 0
    %5430 = vmatprep.subr.bf16.mxu0 0
    %5431 = vmatpush2.bf16.xpose.msra.mxu0 0
    %5432 = vmatprep.subr.bf16.mxu0 0
    %5433 = vmatpush2.bf16.xpose.msra.mxu0 0
    %5434 = vmatprep.subr.bf16.mxu0 0
    %5435 = vmatpush2.bf16.xpose.msra.mxu0 0
    %5436 = vmatprep.subr.bf16.mxu0 0
    %5437 = vmatpush2.bf16.xpose.msra.mxu0 0
    %5438 = vmatprep.subr.bf16.mxu0 0
    %5439 = vmatpush2.bf16.xpose.msra.mxu0 0
    %5440 = vmatprep.subr.bf16.mxu0 0
    %5441 = vmatpush2.bf16.xpose.msra.mxu0 0
    %5442 = vmatprep.subr.bf16.mxu0 0
    %5443 = vmatpush2.bf16.xpose.msra.mxu0 0
    %5444 = vmatprep.mubr.bf16.mxu0 0
    %5445 = vmatmul.mubr.bf16.gmra.mxu0 %v5410
    %v5446 = vpop.f32.mrf.mxu0
    %v5447 = vadd.f32 %v39, %v5446
    %v5448 = vpop.f32.mrf.mxu0
    %v5449 = vpop.f32.mrf.mxu0
    %v5450 = vpop.f32.mrf.mxu0
    %5451 = vdwg.mxu0
    %v5453 = vsel %vm198, %v5020, 0
    %5455 = vmatprep.subr.bf16.mxu0 0
    %5456 = vmatpush1.bf16.xpose.msra.mxu0 0
    %5457 = vmatprep.subr.bf16.mxu0 0
    %5458 = vmatpush1.bf16.xpose.msra.mxu0 0
    %5459 = vmatprep.subr.bf16.mxu0 0
    %5460 = vmatpush1.bf16.xpose.msra.mxu0 0
    %5461 = vmatprep.subr.bf16.mxu0 0
    %5462 = vmatpush1.bf16.xpose.msra.mxu0 0
    %5463 = vmatprep.subr.bf16.mxu0 0
    %5464 = vmatpush1.bf16.xpose.msra.mxu0 0
    %5465 = vmatprep.subr.bf16.mxu0 0
    %5466 = vmatpush1.bf16.xpose.msra.mxu0 0
    %5467 = vmatprep.subr.bf16.mxu0 0
    %5468 = vmatpush1.bf16.xpose.msra.mxu0 0
    %5469 = vmatprep.subr.bf16.mxu0 0
    %5470 = vmatpush1.bf16.xpose.msra.mxu0 %v2990
    %5471 = vmatprep.subr.bf16.mxu0 0
    %5472 = vmatpush2.bf16.xpose.msra.mxu0 0
    %5473 = vmatprep.subr.bf16.mxu0 0
    %5474 = vmatpush2.bf16.xpose.msra.mxu0 0
    %5475 = vmatprep.subr.bf16.mxu0 0
    %5476 = vmatpush2.bf16.xpose.msra.mxu0 0
    %5477 = vmatprep.subr.bf16.mxu0 0
    %5478 = vmatpush2.bf16.xpose.msra.mxu0 0
    %5479 = vmatprep.subr.bf16.mxu0 0
    %5480 = vmatpush2.bf16.xpose.msra.mxu0 0
    %5481 = vmatprep.subr.bf16.mxu0 0
    %5482 = vmatpush2.bf16.xpose.msra.mxu0 0
    %5483 = vmatprep.subr.bf16.mxu0 0
    %5484 = vmatpush2.bf16.xpose.msra.mxu0 0
    %5485 = vmatprep.subr.bf16.mxu0 0
    %5486 = vmatpush2.bf16.xpose.msra.mxu0 0
    %5487 = vmatprep.mubr.bf16.mxu0 0
    %5488 = vmatmul.mubr.bf16.gmra.mxu0 %v5453
    %v5489 = vpop.f32.mrf.mxu0
    %v5490 = vadd.f32 %v39, %v5489
    %v5491 = vpop.f32.mrf.mxu0
    %v5492 = vpop.f32.mrf.mxu0
    %v5493 = vpop.f32.mrf.mxu0
    %5494 = vdwg.mxu0
    %v5496 = vsel %vm198, %v5021, 0
    %5498 = vmatprep.subr.bf16.mxu0 0
    %5499 = vmatpush1.bf16.xpose.msra.mxu0 0
    %5500 = vmatprep.subr.bf16.mxu0 0
    %5501 = vmatpush1.bf16.xpose.msra.mxu0 0
    %5502 = vmatprep.subr.bf16.mxu0 0
    %5503 = vmatpush1.bf16.xpose.msra.mxu0 0
    %5504 = vmatprep.subr.bf16.mxu0 0
    %5505 = vmatpush1.bf16.xpose.msra.mxu0 0
    %5506 = vmatprep.subr.bf16.mxu0 0
    %5507 = vmatpush1.bf16.xpose.msra.mxu0 0
    %5508 = vmatprep.subr.bf16.mxu0 0
    %5509 = vmatpush1.bf16.xpose.msra.mxu0 0
    %5510 = vmatprep.subr.bf16.mxu0 0
    %5511 = vmatpush1.bf16.xpose.msra.mxu0 0
    %5512 = vmatprep.subr.bf16.mxu0 0
    %5513 = vmatpush1.bf16.xpose.msra.mxu0 %v3036
    %5514 = vmatprep.subr.bf16.mxu0 0
    %5515 = vmatpush2.bf16.xpose.msra.mxu0 0
    %5516 = vmatprep.subr.bf16.mxu0 0
    %5517 = vmatpush2.bf16.xpose.msra.mxu0 0
    %5518 = vmatprep.subr.bf16.mxu0 0
    %5519 = vmatpush2.bf16.xpose.msra.mxu0 0
    %5520 = vmatprep.subr.bf16.mxu0 0
    %5521 = vmatpush2.bf16.xpose.msra.mxu0 0
    %5522 = vmatprep.subr.bf16.mxu0 0
    %5523 = vmatpush2.bf16.xpose.msra.mxu0 0
    %5524 = vmatprep.subr.bf16.mxu0 0
    %5525 = vmatpush2.bf16.xpose.msra.mxu0 0
    %5526 = vmatprep.subr.bf16.mxu0 0
    %5527 = vmatpush2.bf16.xpose.msra.mxu0 0
    %5528 = vmatprep.subr.bf16.mxu0 0
    %5529 = vmatpush2.bf16.xpose.msra.mxu0 0
    %5530 = vmatprep.mubr.bf16.mxu0 0
    %5531 = vmatmul.mubr.bf16.gmra.mxu0 %v5496
    %v5532 = vpop.f32.mrf.mxu0
    %v5533 = vadd.f32 %v39, %v5532
    %v5534 = vpop.f32.mrf.mxu0
    %v5535 = vpop.f32.mrf.mxu0
    %v5536 = vpop.f32.mrf.mxu0
    %5537 = vdwg.mxu0
    %v5538 = vsel %vm573, %v5060, -inf
    %5539 = vmax.xlane.f32.xlu0 %v5538
    %v5540 = vpop.xlane.xlu0 %5539
    %v5541 = vsel %vm573, %v5103, -inf
    %5542 = vmax.xlane.f32.xlu0 %v5541
    %v5543 = vpop.xlane.xlu0 %5542
    %v5544 = vsel %vm573, %v5146, -inf
    %5545 = vmax.xlane.f32.xlu0 %v5544
    %v5546 = vpop.xlane.xlu0 %5545
    %v5547 = vsel %vm573, %v5189, -inf
    %5548 = vmax.xlane.f32.xlu0 %v5547
    %v5549 = vpop.xlane.xlu0 %5548
    %v5550 = vsel %vm573, %v5232, -inf
    %5551 = vmax.xlane.f32.xlu0 %v5550
    %v5552 = vpop.xlane.xlu0 %5551
    %v5553 = vsel %vm573, %v5275, -inf
    %5554 = vmax.xlane.f32.xlu0 %v5553
    %v5555 = vpop.xlane.xlu0 %5554
    %v5556 = vsel %vm573, %v5318, -inf
    %5557 = vmax.xlane.f32.xlu0 %v5556
    %v5558 = vpop.xlane.xlu0 %5557
    %v5559 = vsel %vm573, %v5361, -inf
    %5560 = vmax.xlane.f32.xlu0 %v5559
    %v5561 = vpop.xlane.xlu0 %5560
    %v5562 = vsel %vm573, %v5404, -inf
    %5563 = vmax.xlane.f32.xlu0 %v5562
    %v5564 = vpop.xlane.xlu0 %5563
    %v5565 = vsel %vm573, %v5447, -inf
    %5566 = vmax.xlane.f32.xlu0 %v5565
    %v5567 = vpop.xlane.xlu0 %5566
    %v5568 = vsel %vm573, %v5490, -inf
    %5569 = vmax.xlane.f32.xlu0 %v5568
    %v5570 = vpop.xlane.xlu0 %5569
    %v5571 = vsel %vm573, %v5533, -inf
    %5572 = vmax.xlane.f32.xlu0 %v5571
    %v5573 = vpop.xlane.xlu0 %5572
    %v5574 = vsub.f32 %v5060, %v5540
    %v5575 = vsub.f32 %v5103, %v5543
    %v5576 = vsub.f32 %v5146, %v5546
    %v5577 = vsub.f32 %v5189, %v5549
    %v5578 = vsub.f32 %v5232, %v5552
    %v5579 = vsub.f32 %v5275, %v5555
    %v5580 = vsub.f32 %v5318, %v5558
    %v5581 = vsub.f32 %v5361, %v5561
    %v5582 = vsub.f32 %v5404, %v5564
    %v5583 = vsub.f32 %v5447, %v5567
    %v5584 = vsub.f32 %v5490, %v5570
    %v5585 = vsub.f32 %v5533, %v5573
    %v5586 = vmul.f32 %v5574, 1.442695
    %v5587 = vpow.pop %v5586
    %v5588 = vmul.f32 %v5575, 1.442695
    %v5589 = vpow.pop %v5588
    %v5590 = vmul.f32 %v5576, 1.442695
    %v5591 = vpow.pop %v5590
    %v5592 = vmul.f32 %v5577, 1.442695
    %v5593 = vpow.pop %v5592
    %v5594 = vmul.f32 %v5578, 1.442695
    %v5595 = vpow.pop %v5594
    %v5596 = vmul.f32 %v5579, 1.442695
    %v5597 = vpow.pop %v5596
    %v5598 = vmul.f32 %v5580, 1.442695
    %v5599 = vpow.pop %v5598
    %v5600 = vmul.f32 %v5581, 1.442695
    %v5601 = vpow.pop %v5600
    %v5602 = vmul.f32 %v5582, 1.442695
    %v5603 = vpow.pop %v5602
    %v5604 = vmul.f32 %v5583, 1.442695
    %v5605 = vpow.pop %v5604
    %v5606 = vmul.f32 %v5584, 1.442695
    %v5607 = vpow.pop %v5606
    %v5608 = vmul.f32 %v5585, 1.442695
    %v5609 = vpow.pop %v5608
    %v5610 = vsel %vm573, %v5587, 0.0
    %5611 = vadd.xlane.f32.xlu0 %v5610
    %v5612 = vpop.xlane.xlu0 %5611
    %v5613 = vsel %vm573, %v5589, 0.0
    %5614 = vadd.xlane.f32.xlu0 %v5613
    %v5615 = vpop.xlane.xlu0 %5614
    %v5616 = vsel %vm573, %v5591, 0.0
    %5617 = vadd.xlane.f32.xlu0 %v5616
    %v5618 = vpop.xlane.xlu0 %5617
    %v5619 = vsel %vm573, %v5593, 0.0
    %5620 = vadd.xlane.f32.xlu0 %v5619
    %v5621 = vpop.xlane.xlu0 %5620
    %v5622 = vsel %vm573, %v5595, 0.0
    %5623 = vadd.xlane.f32.xlu0 %v5622
    %v5624 = vpop.xlane.xlu0 %5623
    %v5625 = vsel %vm573, %v5597, 0.0
    %5626 = vadd.xlane.f32.xlu0 %v5625
    %v5627 = vpop.xlane.xlu0 %5626
    %v5628 = vsel %vm573, %v5599, 0.0
    %5629 = vadd.xlane.f32.xlu0 %v5628
    %v5630 = vpop.xlane.xlu0 %5629
    %v5631 = vsel %vm573, %v5601, 0.0
    %5632 = vadd.xlane.f32.xlu0 %v5631
    %v5633 = vpop.xlane.xlu0 %5632
    %v5634 = vsel %vm573, %v5603, 0.0
    %5635 = vadd.xlane.f32.xlu0 %v5634
    %v5636 = vpop.xlane.xlu0 %5635
    %v5637 = vsel %vm573, %v5605, 0.0
    %5638 = vadd.xlane.f32.xlu0 %v5637
    %v5639 = vpop.xlane.xlu0 %5638
    %v5640 = vsel %vm573, %v5607, 0.0
    %5641 = vadd.xlane.f32.xlu0 %v5640
    %v5642 = vpop.xlane.xlu0 %5641
    %v5643 = vsel %vm573, %v5609, 0.0
    %5644 = vadd.xlane.f32.xlu0 %v5643
    %v5645 = vpop.xlane.xlu0 %5644
    %v5646 = vrcp.pop %v5612
    %v5647 = vrcp.pop %v5615
    %v5648 = vrcp.pop %v5618
    %v5649 = vrcp.pop %v5621
    %v5650 = vrcp.pop %v5624
    %v5651 = vrcp.pop %v5627
    %v5652 = vrcp.pop %v5630
    %v5653 = vrcp.pop %v5633
    %v5654 = vrcp.pop %v5636
    %v5655 = vrcp.pop %v5639
    %v5656 = vrcp.pop %v5642
    %v5657 = vrcp.pop %v5645
    %v5658 = vmul.f32 %v5587, %v5646
    %v5659 = vmul.f32 %v5589, %v5647
    %v5660 = vmul.f32 %v5591, %v5648
    %v5661 = vmul.f32 %v5593, %v5649
    %v5662 = vmul.f32 %v5595, %v5650
    %v5663 = vmul.f32 %v5597, %v5651
    %v5664 = vmul.f32 %v5599, %v5652
    %v5665 = vmul.f32 %v5601, %v5653
    %v5666 = vmul.f32 %v5603, %v5654
    %v5667 = vmul.f32 %v5605, %v5655
    %v5668 = vmul.f32 %v5607, %v5656
    %v5669 = vmul.f32 %v5609, %v5657
    %v5670 = vpack.c.bf16 %v5658, %v5658
    %v5671 = vpack.c.bf16 %v5659, %v5659
    %v5672 = vpack.c.bf16 %v5660, %v5660
    %v5673 = vpack.c.bf16 %v5661, %v5661
    %v5674 = vpack.c.bf16 %v5662, %v5662
    %v5675 = vpack.c.bf16 %v5663, %v5663
    %v5676 = vpack.c.bf16 %v5664, %v5664
    %v5677 = vpack.c.bf16 %v5665, %v5665
    %v5678 = vpack.c.bf16 %v5666, %v5666
    %v5679 = vpack.c.bf16 %v5667, %v5667
    %v5680 = vpack.c.bf16 %v5668, %v5668
    %v5681 = vpack.c.bf16 %v5669, %v5669
    %v5683 = vsel %vm573, %v5670, 0
    %5685 = vmatprep.subr.bf16.mxu0 0
    %5686 = vmatpush1.bf16.msra.mxu0 0
    %5687 = vmatprep.subr.bf16.mxu0 0
    %5688 = vmatpush1.bf16.msra.mxu0 0
    %5689 = vmatprep.subr.bf16.mxu0 0
    %5690 = vmatpush1.bf16.msra.mxu0 0
    %5691 = vmatprep.subr.bf16.mxu0 0
    %5692 = vmatpush1.bf16.msra.mxu0 0
    %5693 = vmatprep.subr.bf16.mxu0 0
    %5694 = vmatpush1.bf16.msra.mxu0 0
    %5695 = vmatprep.subr.bf16.mxu0 0
    %5696 = vmatpush1.bf16.msra.mxu0 0
    %5697 = vmatprep.subr.bf16.mxu0 0
    %5698 = vmatpush1.bf16.msra.mxu0 0
    %5699 = vmatprep.subr.bf16.mxu0 0
    %5700 = vmatpush1.bf16.msra.mxu0 %v3226
    %5701 = vmatprep.subr.bf16.mxu0 0
    %5702 = vmatpush2.bf16.msra.mxu0 0
    %5703 = vmatprep.subr.bf16.mxu0 0
    %5704 = vmatpush2.bf16.msra.mxu0 0
    %5705 = vmatprep.subr.bf16.mxu0 0
    %5706 = vmatpush2.bf16.msra.mxu0 0
    %5707 = vmatprep.subr.bf16.mxu0 0
    %5708 = vmatpush2.bf16.msra.mxu0 0
    %5709 = vmatprep.subr.bf16.mxu0 0
    %5710 = vmatpush2.bf16.msra.mxu0 0
    %5711 = vmatprep.subr.bf16.mxu0 0
    %5712 = vmatpush2.bf16.msra.mxu0 0
    %5713 = vmatprep.subr.bf16.mxu0 0
    %5714 = vmatpush2.bf16.msra.mxu0 0
    %5715 = vmatprep.subr.bf16.mxu0 0
    %5716 = vmatpush2.bf16.msra.mxu0 0
    %5717 = vmatprep.mubr.bf16.mxu0 0
    %5718 = vmatmul.mubr.bf16.gmra.mxu0 %v5683
    %v5719 = vpop.f32.mrf.mxu0
    %v5720 = vadd.f32 0.0, %v5719
    %v5721 = vpop.f32.mrf.mxu0
    %v5722 = vpop.f32.mrf.mxu0
    %v5723 = vpop.f32.mrf.mxu0
    %5724 = vdwg.mxu0
    %v5726 = vsel %vm573, %v5671, 0
    %5728 = vmatprep.subr.bf16.mxu0 0
    %5729 = vmatpush1.bf16.msra.mxu0 0
    %5730 = vmatprep.subr.bf16.mxu0 0
    %5731 = vmatpush1.bf16.msra.mxu0 0
    %5732 = vmatprep.subr.bf16.mxu0 0
    %5733 = vmatpush1.bf16.msra.mxu0 0
    %5734 = vmatprep.subr.bf16.mxu0 0
    %5735 = vmatpush1.bf16.msra.mxu0 0
    %5736 = vmatprep.subr.bf16.mxu0 0
    %5737 = vmatpush1.bf16.msra.mxu0 0
    %5738 = vmatprep.subr.bf16.mxu0 0
    %5739 = vmatpush1.bf16.msra.mxu0 0
    %5740 = vmatprep.subr.bf16.mxu0 0
    %5741 = vmatpush1.bf16.msra.mxu0 0
    %5742 = vmatprep.subr.bf16.mxu0 0
    %5743 = vmatpush1.bf16.msra.mxu0 %v3272
    %5744 = vmatprep.subr.bf16.mxu0 0
    %5745 = vmatpush2.bf16.msra.mxu0 0
    %5746 = vmatprep.subr.bf16.mxu0 0
    %5747 = vmatpush2.bf16.msra.mxu0 0
    %5748 = vmatprep.subr.bf16.mxu0 0
    %5749 = vmatpush2.bf16.msra.mxu0 0
    %5750 = vmatprep.subr.bf16.mxu0 0
    %5751 = vmatpush2.bf16.msra.mxu0 0
    %5752 = vmatprep.subr.bf16.mxu0 0
    %5753 = vmatpush2.bf16.msra.mxu0 0
    %5754 = vmatprep.subr.bf16.mxu0 0
    %5755 = vmatpush2.bf16.msra.mxu0 0
    %5756 = vmatprep.subr.bf16.mxu0 0
    %5757 = vmatpush2.bf16.msra.mxu0 0
    %5758 = vmatprep.subr.bf16.mxu0 0
    %5759 = vmatpush2.bf16.msra.mxu0 0
    %5760 = vmatprep.mubr.bf16.mxu0 0
    %5761 = vmatmul.mubr.bf16.gmra.mxu0 %v5726
    %v5762 = vpop.f32.mrf.mxu0
    %v5763 = vadd.f32 0.0, %v5762
    %v5764 = vpop.f32.mrf.mxu0
    %v5765 = vpop.f32.mrf.mxu0
    %v5766 = vpop.f32.mrf.mxu0
    %5767 = vdwg.mxu0
    %v5769 = vsel %vm573, %v5672, 0
    %5771 = vmatprep.subr.bf16.mxu0 0
    %5772 = vmatpush1.bf16.msra.mxu0 0
    %5773 = vmatprep.subr.bf16.mxu0 0
    %5774 = vmatpush1.bf16.msra.mxu0 0
    %5775 = vmatprep.subr.bf16.mxu0 0
    %5776 = vmatpush1.bf16.msra.mxu0 0
    %5777 = vmatprep.subr.bf16.mxu0 0
    %5778 = vmatpush1.bf16.msra.mxu0 0
    %5779 = vmatprep.subr.bf16.mxu0 0
    %5780 = vmatpush1.bf16.msra.mxu0 0
    %5781 = vmatprep.subr.bf16.mxu0 0
    %5782 = vmatpush1.bf16.msra.mxu0 0
    %5783 = vmatprep.subr.bf16.mxu0 0
    %5784 = vmatpush1.bf16.msra.mxu0 0
    %5785 = vmatprep.subr.bf16.mxu0 0
    %5786 = vmatpush1.bf16.msra.mxu0 %v3318
    %5787 = vmatprep.subr.bf16.mxu0 0
    %5788 = vmatpush2.bf16.msra.mxu0 0
    %5789 = vmatprep.subr.bf16.mxu0 0
    %5790 = vmatpush2.bf16.msra.mxu0 0
    %5791 = vmatprep.subr.bf16.mxu0 0
    %5792 = vmatpush2.bf16.msra.mxu0 0
    %5793 = vmatprep.subr.bf16.mxu0 0
    %5794 = vmatpush2.bf16.msra.mxu0 0
    %5795 = vmatprep.subr.bf16.mxu0 0
    %5796 = vmatpush2.bf16.msra.mxu0 0
    %5797 = vmatprep.subr.bf16.mxu0 0
    %5798 = vmatpush2.bf16.msra.mxu0 0
    %5799 = vmatprep.subr.bf16.mxu0 0
    %5800 = vmatpush2.bf16.msra.mxu0 0
    %5801 = vmatprep.subr.bf16.mxu0 0
    %5802 = vmatpush2.bf16.msra.mxu0 0
    %5803 = vmatprep.mubr.bf16.mxu0 0
    %5804 = vmatmul.mubr.bf16.gmra.mxu0 %v5769
    %v5805 = vpop.f32.mrf.mxu0
    %v5806 = vadd.f32 0.0, %v5805
    %v5807 = vpop.f32.mrf.mxu0
    %v5808 = vpop.f32.mrf.mxu0
    %v5809 = vpop.f32.mrf.mxu0
    %5810 = vdwg.mxu0
    %v5812 = vsel %vm573, %v5673, 0
    %5814 = vmatprep.subr.bf16.mxu0 0
    %5815 = vmatpush1.bf16.msra.mxu0 0
    %5816 = vmatprep.subr.bf16.mxu0 0
    %5817 = vmatpush1.bf16.msra.mxu0 0
    %5818 = vmatprep.subr.bf16.mxu0 0
    %5819 = vmatpush1.bf16.msra.mxu0 0
    %5820 = vmatprep.subr.bf16.mxu0 0
    %5821 = vmatpush1.bf16.msra.mxu0 0
    %5822 = vmatprep.subr.bf16.mxu0 0
    %5823 = vmatpush1.bf16.msra.mxu0 0
    %5824 = vmatprep.subr.bf16.mxu0 0
    %5825 = vmatpush1.bf16.msra.mxu0 0
    %5826 = vmatprep.subr.bf16.mxu0 0
    %5827 = vmatpush1.bf16.msra.mxu0 0
    %5828 = vmatprep.subr.bf16.mxu0 0
    %5829 = vmatpush1.bf16.msra.mxu0 %v3364
    %5830 = vmatprep.subr.bf16.mxu0 0
    %5831 = vmatpush2.bf16.msra.mxu0 0
    %5832 = vmatprep.subr.bf16.mxu0 0
    %5833 = vmatpush2.bf16.msra.mxu0 0
    %5834 = vmatprep.subr.bf16.mxu0 0
    %5835 = vmatpush2.bf16.msra.mxu0 0
    %5836 = vmatprep.subr.bf16.mxu0 0
    %5837 = vmatpush2.bf16.msra.mxu0 0
    %5838 = vmatprep.subr.bf16.mxu0 0
    %5839 = vmatpush2.bf16.msra.mxu0 0
    %5840 = vmatprep.subr.bf16.mxu0 0
    %5841 = vmatpush2.bf16.msra.mxu0 0
    %5842 = vmatprep.subr.bf16.mxu0 0
    %5843 = vmatpush2.bf16.msra.mxu0 0
    %5844 = vmatprep.subr.bf16.mxu0 0
    %5845 = vmatpush2.bf16.msra.mxu0 0
    %5846 = vmatprep.mubr.bf16.mxu0 0
    %5847 = vmatmul.mubr.bf16.gmra.mxu0 %v5812
    %v5848 = vpop.f32.mrf.mxu0
    %v5849 = vadd.f32 0.0, %v5848
    %v5850 = vpop.f32.mrf.mxu0
    %v5851 = vpop.f32.mrf.mxu0
    %v5852 = vpop.f32.mrf.mxu0
    %5853 = vdwg.mxu0
    %v5855 = vsel %vm573, %v5674, 0
    %5857 = vmatprep.subr.bf16.mxu0 0
    %5858 = vmatpush1.bf16.msra.mxu0 0
    %5859 = vmatprep.subr.bf16.mxu0 0
    %5860 = vmatpush1.bf16.msra.mxu0 0
    %5861 = vmatprep.subr.bf16.mxu0 0
    %5862 = vmatpush1.bf16.msra.mxu0 0
    %5863 = vmatprep.subr.bf16.mxu0 0
    %5864 = vmatpush1.bf16.msra.mxu0 0
    %5865 = vmatprep.subr.bf16.mxu0 0
    %5866 = vmatpush1.bf16.msra.mxu0 0
    %5867 = vmatprep.subr.bf16.mxu0 0
    %5868 = vmatpush1.bf16.msra.mxu0 0
    %5869 = vmatprep.subr.bf16.mxu0 0
    %5870 = vmatpush1.bf16.msra.mxu0 0
    %5871 = vmatprep.subr.bf16.mxu0 0
    %5872 = vmatpush1.bf16.msra.mxu0 %v3410
    %5873 = vmatprep.subr.bf16.mxu0 0
    %5874 = vmatpush2.bf16.msra.mxu0 0
    %5875 = vmatprep.subr.bf16.mxu0 0
    %5876 = vmatpush2.bf16.msra.mxu0 0
    %5877 = vmatprep.subr.bf16.mxu0 0
    %5878 = vmatpush2.bf16.msra.mxu0 0
    %5879 = vmatprep.subr.bf16.mxu0 0
    %5880 = vmatpush2.bf16.msra.mxu0 0
    %5881 = vmatprep.subr.bf16.mxu0 0
    %5882 = vmatpush2.bf16.msra.mxu0 0
    %5883 = vmatprep.subr.bf16.mxu0 0
    %5884 = vmatpush2.bf16.msra.mxu0 0
    %5885 = vmatprep.subr.bf16.mxu0 0
    %5886 = vmatpush2.bf16.msra.mxu0 0
    %5887 = vmatprep.subr.bf16.mxu0 0
    %5888 = vmatpush2.bf16.msra.mxu0 0
    %5889 = vmatprep.mubr.bf16.mxu0 0
    %5890 = vmatmul.mubr.bf16.gmra.mxu0 %v5855
    %v5891 = vpop.f32.mrf.mxu0
    %v5892 = vadd.f32 0.0, %v5891
    %v5893 = vpop.f32.mrf.mxu0
    %v5894 = vpop.f32.mrf.mxu0
    %v5895 = vpop.f32.mrf.mxu0
    %5896 = vdwg.mxu0
    %v5898 = vsel %vm573, %v5675, 0
    %5900 = vmatprep.subr.bf16.mxu0 0
    %5901 = vmatpush1.bf16.msra.mxu0 0
    %5902 = vmatprep.subr.bf16.mxu0 0
    %5903 = vmatpush1.bf16.msra.mxu0 0
    %5904 = vmatprep.subr.bf16.mxu0 0
    %5905 = vmatpush1.bf16.msra.mxu0 0
    %5906 = vmatprep.subr.bf16.mxu0 0
    %5907 = vmatpush1.bf16.msra.mxu0 0
    %5908 = vmatprep.subr.bf16.mxu0 0
    %5909 = vmatpush1.bf16.msra.mxu0 0
    %5910 = vmatprep.subr.bf16.mxu0 0
    %5911 = vmatpush1.bf16.msra.mxu0 0
    %5912 = vmatprep.subr.bf16.mxu0 0
    %5913 = vmatpush1.bf16.msra.mxu0 0
    %5914 = vmatprep.subr.bf16.mxu0 0
    %5915 = vmatpush1.bf16.msra.mxu0 %v3456
    %5916 = vmatprep.subr.bf16.mxu0 0
    %5917 = vmatpush2.bf16.msra.mxu0 0
    %5918 = vmatprep.subr.bf16.mxu0 0
    %5919 = vmatpush2.bf16.msra.mxu0 0
    %5920 = vmatprep.subr.bf16.mxu0 0
    %5921 = vmatpush2.bf16.msra.mxu0 0
    %5922 = vmatprep.subr.bf16.mxu0 0
    %5923 = vmatpush2.bf16.msra.mxu0 0
    %5924 = vmatprep.subr.bf16.mxu0 0
    %5925 = vmatpush2.bf16.msra.mxu0 0
    %5926 = vmatprep.subr.bf16.mxu0 0
    %5927 = vmatpush2.bf16.msra.mxu0 0
    %5928 = vmatprep.subr.bf16.mxu0 0
    %5929 = vmatpush2.bf16.msra.mxu0 0
    %5930 = vmatprep.subr.bf16.mxu0 0
    %5931 = vmatpush2.bf16.msra.mxu0 0
    %5932 = vmatprep.mubr.bf16.mxu0 0
    %5933 = vmatmul.mubr.bf16.gmra.mxu0 %v5898
    %v5934 = vpop.f32.mrf.mxu0
    %v5935 = vadd.f32 0.0, %v5934
    %v5936 = vpop.f32.mrf.mxu0
    %v5937 = vpop.f32.mrf.mxu0
    %v5938 = vpop.f32.mrf.mxu0
    %5939 = vdwg.mxu0
    %v5941 = vsel %vm573, %v5676, 0
    %5943 = vmatprep.subr.bf16.mxu0 0
    %5944 = vmatpush1.bf16.msra.mxu0 0
    %5945 = vmatprep.subr.bf16.mxu0 0
    %5946 = vmatpush1.bf16.msra.mxu0 0
    %5947 = vmatprep.subr.bf16.mxu0 0
    %5948 = vmatpush1.bf16.msra.mxu0 0
    %5949 = vmatprep.subr.bf16.mxu0 0
    %5950 = vmatpush1.bf16.msra.mxu0 0
    %5951 = vmatprep.subr.bf16.mxu0 0
    %5952 = vmatpush1.bf16.msra.mxu0 0
    %5953 = vmatprep.subr.bf16.mxu0 0
    %5954 = vmatpush1.bf16.msra.mxu0 0
    %5955 = vmatprep.subr.bf16.mxu0 0
    %5956 = vmatpush1.bf16.msra.mxu0 0
    %5957 = vmatprep.subr.bf16.mxu0 0
    %5958 = vmatpush1.bf16.msra.mxu0 %v3502
    %5959 = vmatprep.subr.bf16.mxu0 0
    %5960 = vmatpush2.bf16.msra.mxu0 0
    %5961 = vmatprep.subr.bf16.mxu0 0
    %5962 = vmatpush2.bf16.msra.mxu0 0
    %5963 = vmatprep.subr.bf16.mxu0 0
    %5964 = vmatpush2.bf16.msra.mxu0 0
    %5965 = vmatprep.subr.bf16.mxu0 0
    %5966 = vmatpush2.bf16.msra.mxu0 0
    %5967 = vmatprep.subr.bf16.mxu0 0
    %5968 = vmatpush2.bf16.msra.mxu0 0
    %5969 = vmatprep.subr.bf16.mxu0 0
    %5970 = vmatpush2.bf16.msra.mxu0 0
    %5971 = vmatprep.subr.bf16.mxu0 0
    %5972 = vmatpush2.bf16.msra.mxu0 0
    %5973 = vmatprep.subr.bf16.mxu0 0
    %5974 = vmatpush2.bf16.msra.mxu0 0
    %5975 = vmatprep.mubr.bf16.mxu0 0
    %5976 = vmatmul.mubr.bf16.gmra.mxu0 %v5941
    %v5977 = vpop.f32.mrf.mxu0
    %v5978 = vadd.f32 0.0, %v5977
    %v5979 = vpop.f32.mrf.mxu0
    %v5980 = vpop.f32.mrf.mxu0
    %v5981 = vpop.f32.mrf.mxu0
    %5982 = vdwg.mxu0
    %v5984 = vsel %vm573, %v5677, 0
    %5986 = vmatprep.subr.bf16.mxu0 0
    %5987 = vmatpush1.bf16.msra.mxu0 0
    %5988 = vmatprep.subr.bf16.mxu0 0
    %5989 = vmatpush1.bf16.msra.mxu0 0
    %5990 = vmatprep.subr.bf16.mxu0 0
    %5991 = vmatpush1.bf16.msra.mxu0 0
    %5992 = vmatprep.subr.bf16.mxu0 0
    %5993 = vmatpush1.bf16.msra.mxu0 0
    %5994 = vmatprep.subr.bf16.mxu0 0
    %5995 = vmatpush1.bf16.msra.mxu0 0
    %5996 = vmatprep.subr.bf16.mxu0 0
    %5997 = vmatpush1.bf16.msra.mxu0 0
    %5998 = vmatprep.subr.bf16.mxu0 0
    %5999 = vmatpush1.bf16.msra.mxu0 0
    %6000 = vmatprep.subr.bf16.mxu0 0
    %6001 = vmatpush1.bf16.msra.mxu0 %v3548
    %6002 = vmatprep.subr.bf16.mxu0 0
    %6003 = vmatpush2.bf16.msra.mxu0 0
    %6004 = vmatprep.subr.bf16.mxu0 0
    %6005 = vmatpush2.bf16.msra.mxu0 0
    %6006 = vmatprep.subr.bf16.mxu0 0
    %6007 = vmatpush2.bf16.msra.mxu0 0
    %6008 = vmatprep.subr.bf16.mxu0 0
    %6009 = vmatpush2.bf16.msra.mxu0 0
    %6010 = vmatprep.subr.bf16.mxu0 0
    %6011 = vmatpush2.bf16.msra.mxu0 0
    %6012 = vmatprep.subr.bf16.mxu0 0
    %6013 = vmatpush2.bf16.msra.mxu0 0
    %6014 = vmatprep.subr.bf16.mxu0 0
    %6015 = vmatpush2.bf16.msra.mxu0 0
    %6016 = vmatprep.subr.bf16.mxu0 0
    %6017 = vmatpush2.bf16.msra.mxu0 0
    %6018 = vmatprep.mubr.bf16.mxu0 0
    %6019 = vmatmul.mubr.bf16.gmra.mxu0 %v5984
    %v6020 = vpop.f32.mrf.mxu0
    %v6021 = vadd.f32 0.0, %v6020
    %v6022 = vpop.f32.mrf.mxu0
    %v6023 = vpop.f32.mrf.mxu0
    %v6024 = vpop.f32.mrf.mxu0
    %6025 = vdwg.mxu0
    %v6027 = vsel %vm573, %v5678, 0
    %6029 = vmatprep.subr.bf16.mxu0 0
    %6030 = vmatpush1.bf16.msra.mxu0 0
    %6031 = vmatprep.subr.bf16.mxu0 0
    %6032 = vmatpush1.bf16.msra.mxu0 0
    %6033 = vmatprep.subr.bf16.mxu0 0
    %6034 = vmatpush1.bf16.msra.mxu0 0
    %6035 = vmatprep.subr.bf16.mxu0 0
    %6036 = vmatpush1.bf16.msra.mxu0 0
    %6037 = vmatprep.subr.bf16.mxu0 0
    %6038 = vmatpush1.bf16.msra.mxu0 0
    %6039 = vmatprep.subr.bf16.mxu0 0
    %6040 = vmatpush1.bf16.msra.mxu0 0
    %6041 = vmatprep.subr.bf16.mxu0 0
    %6042 = vmatpush1.bf16.msra.mxu0 0
    %6043 = vmatprep.subr.bf16.mxu0 0
    %6044 = vmatpush1.bf16.msra.mxu0 %v3594
    %6045 = vmatprep.subr.bf16.mxu0 0
    %6046 = vmatpush2.bf16.msra.mxu0 0
    %6047 = vmatprep.subr.bf16.mxu0 0
    %6048 = vmatpush2.bf16.msra.mxu0 0
    %6049 = vmatprep.subr.bf16.mxu0 0
    %6050 = vmatpush2.bf16.msra.mxu0 0
    %6051 = vmatprep.subr.bf16.mxu0 0
    %6052 = vmatpush2.bf16.msra.mxu0 0
    %6053 = vmatprep.subr.bf16.mxu0 0
    %6054 = vmatpush2.bf16.msra.mxu0 0
    %6055 = vmatprep.subr.bf16.mxu0 0
    %6056 = vmatpush2.bf16.msra.mxu0 0
    %6057 = vmatprep.subr.bf16.mxu0 0
    %6058 = vmatpush2.bf16.msra.mxu0 0
    %6059 = vmatprep.subr.bf16.mxu0 0
    %6060 = vmatpush2.bf16.msra.mxu0 0
    %6061 = vmatprep.mubr.bf16.mxu0 0
    %6062 = vmatmul.mubr.bf16.gmra.mxu0 %v6027
    %v6063 = vpop.f32.mrf.mxu0
    %v6064 = vadd.f32 0.0, %v6063
    %v6065 = vpop.f32.mrf.mxu0
    %v6066 = vpop.f32.mrf.mxu0
    %v6067 = vpop.f32.mrf.mxu0
    %6068 = vdwg.mxu0
    %v6070 = vsel %vm573, %v5679, 0
    %6072 = vmatprep.subr.bf16.mxu0 0
    %6073 = vmatpush1.bf16.msra.mxu0 0
    %6074 = vmatprep.subr.bf16.mxu0 0
    %6075 = vmatpush1.bf16.msra.mxu0 0
    %6076 = vmatprep.subr.bf16.mxu0 0
    %6077 = vmatpush1.bf16.msra.mxu0 0
    %6078 = vmatprep.subr.bf16.mxu0 0
    %6079 = vmatpush1.bf16.msra.mxu0 0
    %6080 = vmatprep.subr.bf16.mxu0 0
    %6081 = vmatpush1.bf16.msra.mxu0 0
    %6082 = vmatprep.subr.bf16.mxu0 0
    %6083 = vmatpush1.bf16.msra.mxu0 0
    %6084 = vmatprep.subr.bf16.mxu0 0
    %6085 = vmatpush1.bf16.msra.mxu0 0
    %6086 = vmatprep.subr.bf16.mxu0 0
    %6087 = vmatpush1.bf16.msra.mxu0 %v3640
    %6088 = vmatprep.subr.bf16.mxu0 0
    %6089 = vmatpush2.bf16.msra.mxu0 0
    %6090 = vmatprep.subr.bf16.mxu0 0
    %6091 = vmatpush2.bf16.msra.mxu0 0
    %6092 = vmatprep.subr.bf16.mxu0 0
    %6093 = vmatpush2.bf16.msra.mxu0 0
    %6094 = vmatprep.subr.bf16.mxu0 0
    %6095 = vmatpush2.bf16.msra.mxu0 0
    %6096 = vmatprep.subr.bf16.mxu0 0
    %6097 = vmatpush2.bf16.msra.mxu0 0
    %6098 = vmatprep.subr.bf16.mxu0 0
    %6099 = vmatpush2.bf16.msra.mxu0 0
    %6100 = vmatprep.subr.bf16.mxu0 0
    %6101 = vmatpush2.bf16.msra.mxu0 0
    %6102 = vmatprep.subr.bf16.mxu0 0
    %6103 = vmatpush2.bf16.msra.mxu0 0
    %6104 = vmatprep.mubr.bf16.mxu0 0
    %6105 = vmatmul.mubr.bf16.gmra.mxu0 %v6070
    %v6106 = vpop.f32.mrf.mxu0
    %v6107 = vadd.f32 0.0, %v6106
    %v6108 = vpop.f32.mrf.mxu0
    %v6109 = vpop.f32.mrf.mxu0
    %v6110 = vpop.f32.mrf.mxu0
    %6111 = vdwg.mxu0
    %v6113 = vsel %vm573, %v5680, 0
    %6115 = vmatprep.subr.bf16.mxu0 0
    %6116 = vmatpush1.bf16.msra.mxu0 0
    %6117 = vmatprep.subr.bf16.mxu0 0
    %6118 = vmatpush1.bf16.msra.mxu0 0
    %6119 = vmatprep.subr.bf16.mxu0 0
    %6120 = vmatpush1.bf16.msra.mxu0 0
    %6121 = vmatprep.subr.bf16.mxu0 0
    %6122 = vmatpush1.bf16.msra.mxu0 0
    %6123 = vmatprep.subr.bf16.mxu0 0
    %6124 = vmatpush1.bf16.msra.mxu0 0
    %6125 = vmatprep.subr.bf16.mxu0 0
    %6126 = vmatpush1.bf16.msra.mxu0 0
    %6127 = vmatprep.subr.bf16.mxu0 0
    %6128 = vmatpush1.bf16.msra.mxu0 0
    %6129 = vmatprep.subr.bf16.mxu0 0
    %6130 = vmatpush1.bf16.msra.mxu0 %v3686
    %6131 = vmatprep.subr.bf16.mxu0 0
    %6132 = vmatpush2.bf16.msra.mxu0 0
    %6133 = vmatprep.subr.bf16.mxu0 0
    %6134 = vmatpush2.bf16.msra.mxu0 0
    %6135 = vmatprep.subr.bf16.mxu0 0
    %6136 = vmatpush2.bf16.msra.mxu0 0
    %6137 = vmatprep.subr.bf16.mxu0 0
    %6138 = vmatpush2.bf16.msra.mxu0 0
    %6139 = vmatprep.subr.bf16.mxu0 0
    %6140 = vmatpush2.bf16.msra.mxu0 0
    %6141 = vmatprep.subr.bf16.mxu0 0
    %6142 = vmatpush2.bf16.msra.mxu0 0
    %6143 = vmatprep.subr.bf16.mxu0 0
    %6144 = vmatpush2.bf16.msra.mxu0 0
    %6145 = vmatprep.subr.bf16.mxu0 0
    %6146 = vmatpush2.bf16.msra.mxu0 0
    %6147 = vmatprep.mubr.bf16.mxu0 0
    %6148 = vmatmul.mubr.bf16.gmra.mxu0 %v6113
    %v6149 = vpop.f32.mrf.mxu0
    %v6150 = vadd.f32 0.0, %v6149
    %v6151 = vpop.f32.mrf.mxu0
    %v6152 = vpop.f32.mrf.mxu0
    %v6153 = vpop.f32.mrf.mxu0
    %6154 = vdwg.mxu0
    %v6156 = vsel %vm573, %v5681, 0
    %6158 = vmatprep.subr.bf16.mxu0 0
    %6159 = vmatpush1.bf16.msra.mxu0 0
    %6160 = vmatprep.subr.bf16.mxu0 0
    %6161 = vmatpush1.bf16.msra.mxu0 0
    %6162 = vmatprep.subr.bf16.mxu0 0
    %6163 = vmatpush1.bf16.msra.mxu0 0
    %6164 = vmatprep.subr.bf16.mxu0 0
    %6165 = vmatpush1.bf16.msra.mxu0 0
    %6166 = vmatprep.subr.bf16.mxu0 0
    %6167 = vmatpush1.bf16.msra.mxu0 0
    %6168 = vmatprep.subr.bf16.mxu0 0
    %6169 = vmatpush1.bf16.msra.mxu0 0
    %6170 = vmatprep.subr.bf16.mxu0 0
    %6171 = vmatpush1.bf16.msra.mxu0 0
    %6172 = vmatprep.subr.bf16.mxu0 0
    %6173 = vmatpush1.bf16.msra.mxu0 %v3732
    %6174 = vmatprep.subr.bf16.mxu0 0
    %6175 = vmatpush2.bf16.msra.mxu0 0
    %6176 = vmatprep.subr.bf16.mxu0 0
    %6177 = vmatpush2.bf16.msra.mxu0 0
    %6178 = vmatprep.subr.bf16.mxu0 0
    %6179 = vmatpush2.bf16.msra.mxu0 0
    %6180 = vmatprep.subr.bf16.mxu0 0
    %6181 = vmatpush2.bf16.msra.mxu0 0
    %6182 = vmatprep.subr.bf16.mxu0 0
    %6183 = vmatpush2.bf16.msra.mxu0 0
    %6184 = vmatprep.subr.bf16.mxu0 0
    %6185 = vmatpush2.bf16.msra.mxu0 0
    %6186 = vmatprep.subr.bf16.mxu0 0
    %6187 = vmatpush2.bf16.msra.mxu0 0
    %6188 = vmatprep.subr.bf16.mxu0 0
    %6189 = vmatpush2.bf16.msra.mxu0 0
    %6190 = vmatprep.mubr.bf16.mxu0 0
    %6191 = vmatmul.mubr.bf16.gmra.mxu0 %v6156
    %v6192 = vpop.f32.mrf.mxu0
    %v6193 = vadd.f32 0.0, %v6192
    %v6194 = vpop.f32.mrf.mxu0
    %v6195 = vpop.f32.mrf.mxu0
    %v6196 = vpop.f32.mrf.mxu0
    %6197 = vdwg.mxu0
    %v6198 = vmul.f32 %v5720, %v1117
    %v6199 = vmul.f32 %v5763, %v1117
    %v6200 = vmul.f32 %v5806, %v1117
    %v6201 = vmul.f32 %v5849, %v1117
    %v6202 = vmul.f32 %v5892, %v1117
    %v6203 = vmul.f32 %v5935, %v1117
    %v6204 = vmul.f32 %v5978, %v1117
    %v6205 = vmul.f32 %v6021, %v1117
    %v6206 = vmul.f32 %v6064, %v1117
    %v6207 = vmul.f32 %v6107, %v1117
    %v6208 = vmul.f32 %v6150, %v1117
    %v6209 = vmul.f32 %v6193, %v1117
    %v6210 = vadd.f32 %v4998, %v6198
    %v6211 = vadd.f32 %v4999, %v6199
    %v6212 = vadd.f32 %v5000, %v6200
    %v6213 = vadd.f32 %v5001, %v6201
    %v6214 = vadd.f32 %v5002, %v6202
    %v6215 = vadd.f32 %v5003, %v6203
    %v6216 = vadd.f32 %v5004, %v6204
    %v6217 = vadd.f32 %v5005, %v6205
    %v6218 = vadd.f32 %v5006, %v6206
    %v6219 = vadd.f32 %v5007, %v6207
    %v6220 = vadd.f32 %v5008, %v6208
    %v6221 = vadd.f32 %v5009, %v6209
    %v6222 = vmul.bf16 %v2478, %v1125
    %v6223 = vmul.bf16 %v2479, %v1125
    %v6224 = vmul.bf16 %v2480, %v1125
    %v6225 = vmul.bf16 %v2481, %v1125
    %v6226 = vmul.bf16 %v2482, %v1125
    %v6227 = vmul.bf16 %v2483, %v1125
    %v6228 = vmul.bf16 %v2484, %v1125
    %v6229 = vmul.bf16 %v2485, %v1125
    %v6230 = vmul.bf16 %v2486, %v1125
    %v6231 = vmul.bf16 %v2487, %v1125
    %v6232 = vmul.bf16 %v2488, %v1125
    %v6233 = vmul.bf16 %v2489, %v1125
    %v6235 = vsel %vm198, %v6222, 0
    %6237 = vmatprep.subr.bf16.mxu0 0
    %6238 = vmatpush1.bf16.xpose.msra.mxu0 0
    %6239 = vmatprep.subr.bf16.mxu0 0
    %6240 = vmatpush1.bf16.xpose.msra.mxu0 0
    %6241 = vmatprep.subr.bf16.mxu0 0
    %6242 = vmatpush1.bf16.xpose.msra.mxu0 0
    %6243 = vmatprep.subr.bf16.mxu0 0
    %6244 = vmatpush1.bf16.xpose.msra.mxu0 0
    %6245 = vmatprep.subr.bf16.mxu0 0
    %6246 = vmatpush1.bf16.xpose.msra.mxu0 0
    %6247 = vmatprep.subr.bf16.mxu0 0
    %6248 = vmatpush1.bf16.xpose.msra.mxu0 0
    %6249 = vmatprep.subr.bf16.mxu0 0
    %6250 = vmatpush1.bf16.xpose.msra.mxu0 0
    %6251 = vmatprep.subr.bf16.mxu0 0
    %6252 = vmatpush1.bf16.xpose.msra.mxu0 %v2530
    %6253 = vmatprep.subr.bf16.mxu0 0
    %6254 = vmatpush2.bf16.xpose.msra.mxu0 0
    %6255 = vmatprep.subr.bf16.mxu0 0
    %6256 = vmatpush2.bf16.xpose.msra.mxu0 0
    %6257 = vmatprep.subr.bf16.mxu0 0
    %6258 = vmatpush2.bf16.xpose.msra.mxu0 0
    %6259 = vmatprep.subr.bf16.mxu0 0
    %6260 = vmatpush2.bf16.xpose.msra.mxu0 0
    %6261 = vmatprep.subr.bf16.mxu0 0
    %6262 = vmatpush2.bf16.xpose.msra.mxu0 0
    %6263 = vmatprep.subr.bf16.mxu0 0
    %6264 = vmatpush2.bf16.xpose.msra.mxu0 0
    %6265 = vmatprep.subr.bf16.mxu0 0
    %6266 = vmatpush2.bf16.xpose.msra.mxu0 0
    %6267 = vmatprep.subr.bf16.mxu0 0
    %6268 = vmatpush2.bf16.xpose.msra.mxu0 0
    %6269 = vmatprep.mubr.bf16.mxu0 0
    %6270 = vmatmul.mubr.bf16.gmra.mxu0 %v6235
    %v6271 = vpop.f32.mrf.mxu0
    %v6272 = vadd.f32 %v39, %v6271
    %v6273 = vpop.f32.mrf.mxu0
    %v6274 = vpop.f32.mrf.mxu0
    %v6275 = vpop.f32.mrf.mxu0
    %6276 = vdwg.mxu0
    %v6278 = vsel %vm198, %v6223, 0
    %6280 = vmatprep.subr.bf16.mxu0 0
    %6281 = vmatpush1.bf16.xpose.msra.mxu0 0
    %6282 = vmatprep.subr.bf16.mxu0 0
    %6283 = vmatpush1.bf16.xpose.msra.mxu0 0
    %6284 = vmatprep.subr.bf16.mxu0 0
    %6285 = vmatpush1.bf16.xpose.msra.mxu0 0
    %6286 = vmatprep.subr.bf16.mxu0 0
    %6287 = vmatpush1.bf16.xpose.msra.mxu0 0
    %6288 = vmatprep.subr.bf16.mxu0 0
    %6289 = vmatpush1.bf16.xpose.msra.mxu0 0
    %6290 = vmatprep.subr.bf16.mxu0 0
    %6291 = vmatpush1.bf16.xpose.msra.mxu0 0
    %6292 = vmatprep.subr.bf16.mxu0 0
    %6293 = vmatpush1.bf16.xpose.msra.mxu0 0
    %6294 = vmatprep.subr.bf16.mxu0 0
    %6295 = vmatpush1.bf16.xpose.msra.mxu0 %v2576
    %6296 = vmatprep.subr.bf16.mxu0 0
    %6297 = vmatpush2.bf16.xpose.msra.mxu0 0
    %6298 = vmatprep.subr.bf16.mxu0 0
    %6299 = vmatpush2.bf16.xpose.msra.mxu0 0
    %6300 = vmatprep.subr.bf16.mxu0 0
    %6301 = vmatpush2.bf16.xpose.msra.mxu0 0
    %6302 = vmatprep.subr.bf16.mxu0 0
    %6303 = vmatpush2.bf16.xpose.msra.mxu0 0
    %6304 = vmatprep.subr.bf16.mxu0 0
    %6305 = vmatpush2.bf16.xpose.msra.mxu0 0
    %6306 = vmatprep.subr.bf16.mxu0 0
    %6307 = vmatpush2.bf16.xpose.msra.mxu0 0
    %6308 = vmatprep.subr.bf16.mxu0 0
    %6309 = vmatpush2.bf16.xpose.msra.mxu0 0
    %6310 = vmatprep.subr.bf16.mxu0 0
    %6311 = vmatpush2.bf16.xpose.msra.mxu0 0
    %6312 = vmatprep.mubr.bf16.mxu0 0
    %6313 = vmatmul.mubr.bf16.gmra.mxu0 %v6278
    %v6314 = vpop.f32.mrf.mxu0
    %v6315 = vadd.f32 %v39, %v6314
    %v6316 = vpop.f32.mrf.mxu0
    %v6317 = vpop.f32.mrf.mxu0
    %v6318 = vpop.f32.mrf.mxu0
    %6319 = vdwg.mxu0
    %v6321 = vsel %vm198, %v6224, 0
    %6323 = vmatprep.subr.bf16.mxu0 0
    %6324 = vmatpush1.bf16.xpose.msra.mxu0 0
    %6325 = vmatprep.subr.bf16.mxu0 0
    %6326 = vmatpush1.bf16.xpose.msra.mxu0 0
    %6327 = vmatprep.subr.bf16.mxu0 0
    %6328 = vmatpush1.bf16.xpose.msra.mxu0 0
    %6329 = vmatprep.subr.bf16.mxu0 0
    %6330 = vmatpush1.bf16.xpose.msra.mxu0 0
    %6331 = vmatprep.subr.bf16.mxu0 0
    %6332 = vmatpush1.bf16.xpose.msra.mxu0 0
    %6333 = vmatprep.subr.bf16.mxu0 0
    %6334 = vmatpush1.bf16.xpose.msra.mxu0 0
    %6335 = vmatprep.subr.bf16.mxu0 0
    %6336 = vmatpush1.bf16.xpose.msra.mxu0 0
    %6337 = vmatprep.subr.bf16.mxu0 0
    %6338 = vmatpush1.bf16.xpose.msra.mxu0 %v2622
    %6339 = vmatprep.subr.bf16.mxu0 0
    %6340 = vmatpush2.bf16.xpose.msra.mxu0 0
    %6341 = vmatprep.subr.bf16.mxu0 0
    %6342 = vmatpush2.bf16.xpose.msra.mxu0 0
    %6343 = vmatprep.subr.bf16.mxu0 0
    %6344 = vmatpush2.bf16.xpose.msra.mxu0 0
    %6345 = vmatprep.subr.bf16.mxu0 0
    %6346 = vmatpush2.bf16.xpose.msra.mxu0 0
    %6347 = vmatprep.subr.bf16.mxu0 0
    %6348 = vmatpush2.bf16.xpose.msra.mxu0 0
    %6349 = vmatprep.subr.bf16.mxu0 0
    %6350 = vmatpush2.bf16.xpose.msra.mxu0 0
    %6351 = vmatprep.subr.bf16.mxu0 0
    %6352 = vmatpush2.bf16.xpose.msra.mxu0 0
    %6353 = vmatprep.subr.bf16.mxu0 0
    %6354 = vmatpush2.bf16.xpose.msra.mxu0 0
    %6355 = vmatprep.mubr.bf16.mxu0 0
    %6356 = vmatmul.mubr.bf16.gmra.mxu0 %v6321
    %v6357 = vpop.f32.mrf.mxu0
    %v6358 = vadd.f32 %v39, %v6357
    %v6359 = vpop.f32.mrf.mxu0
    %v6360 = vpop.f32.mrf.mxu0
    %v6361 = vpop.f32.mrf.mxu0
    %6362 = vdwg.mxu0
    %v6364 = vsel %vm198, %v6225, 0
    %6366 = vmatprep.subr.bf16.mxu0 0
    %6367 = vmatpush1.bf16.xpose.msra.mxu0 0
    %6368 = vmatprep.subr.bf16.mxu0 0
    %6369 = vmatpush1.bf16.xpose.msra.mxu0 0
    %6370 = vmatprep.subr.bf16.mxu0 0
    %6371 = vmatpush1.bf16.xpose.msra.mxu0 0
    %6372 = vmatprep.subr.bf16.mxu0 0
    %6373 = vmatpush1.bf16.xpose.msra.mxu0 0
    %6374 = vmatprep.subr.bf16.mxu0 0
    %6375 = vmatpush1.bf16.xpose.msra.mxu0 0
    %6376 = vmatprep.subr.bf16.mxu0 0
    %6377 = vmatpush1.bf16.xpose.msra.mxu0 0
    %6378 = vmatprep.subr.bf16.mxu0 0
    %6379 = vmatpush1.bf16.xpose.msra.mxu0 0
    %6380 = vmatprep.subr.bf16.mxu0 0
    %6381 = vmatpush1.bf16.xpose.msra.mxu0 %v2668
    %6382 = vmatprep.subr.bf16.mxu0 0
    %6383 = vmatpush2.bf16.xpose.msra.mxu0 0
    %6384 = vmatprep.subr.bf16.mxu0 0
    %6385 = vmatpush2.bf16.xpose.msra.mxu0 0
    %6386 = vmatprep.subr.bf16.mxu0 0
    %6387 = vmatpush2.bf16.xpose.msra.mxu0 0
    %6388 = vmatprep.subr.bf16.mxu0 0
    %6389 = vmatpush2.bf16.xpose.msra.mxu0 0
    %6390 = vmatprep.subr.bf16.mxu0 0
    %6391 = vmatpush2.bf16.xpose.msra.mxu0 0
    %6392 = vmatprep.subr.bf16.mxu0 0
    %6393 = vmatpush2.bf16.xpose.msra.mxu0 0
    %6394 = vmatprep.subr.bf16.mxu0 0
    %6395 = vmatpush2.bf16.xpose.msra.mxu0 0
    %6396 = vmatprep.subr.bf16.mxu0 0
    %6397 = vmatpush2.bf16.xpose.msra.mxu0 0
    %6398 = vmatprep.mubr.bf16.mxu0 0
    %6399 = vmatmul.mubr.bf16.gmra.mxu0 %v6364
    %v6400 = vpop.f32.mrf.mxu0
    %v6401 = vadd.f32 %v39, %v6400
    %v6402 = vpop.f32.mrf.mxu0
    %v6403 = vpop.f32.mrf.mxu0
    %v6404 = vpop.f32.mrf.mxu0
    %6405 = vdwg.mxu0
    %v6407 = vsel %vm198, %v6226, 0
    %6409 = vmatprep.subr.bf16.mxu0 0
    %6410 = vmatpush1.bf16.xpose.msra.mxu0 0
    %6411 = vmatprep.subr.bf16.mxu0 0
    %6412 = vmatpush1.bf16.xpose.msra.mxu0 0
    %6413 = vmatprep.subr.bf16.mxu0 0
    %6414 = vmatpush1.bf16.xpose.msra.mxu0 0
    %6415 = vmatprep.subr.bf16.mxu0 0
    %6416 = vmatpush1.bf16.xpose.msra.mxu0 0
    %6417 = vmatprep.subr.bf16.mxu0 0
    %6418 = vmatpush1.bf16.xpose.msra.mxu0 0
    %6419 = vmatprep.subr.bf16.mxu0 0
    %6420 = vmatpush1.bf16.xpose.msra.mxu0 0
    %6421 = vmatprep.subr.bf16.mxu0 0
    %6422 = vmatpush1.bf16.xpose.msra.mxu0 0
    %6423 = vmatprep.subr.bf16.mxu0 0
    %6424 = vmatpush1.bf16.xpose.msra.mxu0 %v2714
    %6425 = vmatprep.subr.bf16.mxu0 0
    %6426 = vmatpush2.bf16.xpose.msra.mxu0 0
    %6427 = vmatprep.subr.bf16.mxu0 0
    %6428 = vmatpush2.bf16.xpose.msra.mxu0 0
    %6429 = vmatprep.subr.bf16.mxu0 0
    %6430 = vmatpush2.bf16.xpose.msra.mxu0 0
    %6431 = vmatprep.subr.bf16.mxu0 0
    %6432 = vmatpush2.bf16.xpose.msra.mxu0 0
    %6433 = vmatprep.subr.bf16.mxu0 0
    %6434 = vmatpush2.bf16.xpose.msra.mxu0 0
    %6435 = vmatprep.subr.bf16.mxu0 0
    %6436 = vmatpush2.bf16.xpose.msra.mxu0 0
    %6437 = vmatprep.subr.bf16.mxu0 0
    %6438 = vmatpush2.bf16.xpose.msra.mxu0 0
    %6439 = vmatprep.subr.bf16.mxu0 0
    %6440 = vmatpush2.bf16.xpose.msra.mxu0 0
    %6441 = vmatprep.mubr.bf16.mxu0 0
    %6442 = vmatmul.mubr.bf16.gmra.mxu0 %v6407
    %v6443 = vpop.f32.mrf.mxu0
    %v6444 = vadd.f32 %v39, %v6443
    %v6445 = vpop.f32.mrf.mxu0
    %v6446 = vpop.f32.mrf.mxu0
    %v6447 = vpop.f32.mrf.mxu0
    %6448 = vdwg.mxu0
    %v6450 = vsel %vm198, %v6227, 0
    %6452 = vmatprep.subr.bf16.mxu0 0
    %6453 = vmatpush1.bf16.xpose.msra.mxu0 0
    %6454 = vmatprep.subr.bf16.mxu0 0
    %6455 = vmatpush1.bf16.xpose.msra.mxu0 0
    %6456 = vmatprep.subr.bf16.mxu0 0
    %6457 = vmatpush1.bf16.xpose.msra.mxu0 0
    %6458 = vmatprep.subr.bf16.mxu0 0
    %6459 = vmatpush1.bf16.xpose.msra.mxu0 0
    %6460 = vmatprep.subr.bf16.mxu0 0
    %6461 = vmatpush1.bf16.xpose.msra.mxu0 0
    %6462 = vmatprep.subr.bf16.mxu0 0
    %6463 = vmatpush1.bf16.xpose.msra.mxu0 0
    %6464 = vmatprep.subr.bf16.mxu0 0
    %6465 = vmatpush1.bf16.xpose.msra.mxu0 0
    %6466 = vmatprep.subr.bf16.mxu0 0
    %6467 = vmatpush1.bf16.xpose.msra.mxu0 %v2760
    %6468 = vmatprep.subr.bf16.mxu0 0
    %6469 = vmatpush2.bf16.xpose.msra.mxu0 0
    %6470 = vmatprep.subr.bf16.mxu0 0
    %6471 = vmatpush2.bf16.xpose.msra.mxu0 0
    %6472 = vmatprep.subr.bf16.mxu0 0
    %6473 = vmatpush2.bf16.xpose.msra.mxu0 0
    %6474 = vmatprep.subr.bf16.mxu0 0
    %6475 = vmatpush2.bf16.xpose.msra.mxu0 0
    %6476 = vmatprep.subr.bf16.mxu0 0
    %6477 = vmatpush2.bf16.xpose.msra.mxu0 0
    %6478 = vmatprep.subr.bf16.mxu0 0
    %6479 = vmatpush2.bf16.xpose.msra.mxu0 0
    %6480 = vmatprep.subr.bf16.mxu0 0
    %6481 = vmatpush2.bf16.xpose.msra.mxu0 0
    %6482 = vmatprep.subr.bf16.mxu0 0
    %6483 = vmatpush2.bf16.xpose.msra.mxu0 0
    %6484 = vmatprep.mubr.bf16.mxu0 0
    %6485 = vmatmul.mubr.bf16.gmra.mxu0 %v6450
    %v6486 = vpop.f32.mrf.mxu0
    %v6487 = vadd.f32 %v39, %v6486
    %v6488 = vpop.f32.mrf.mxu0
    %v6489 = vpop.f32.mrf.mxu0
    %v6490 = vpop.f32.mrf.mxu0
    %6491 = vdwg.mxu0
    %v6493 = vsel %vm198, %v6228, 0
    %6495 = vmatprep.subr.bf16.mxu0 0
    %6496 = vmatpush1.bf16.xpose.msra.mxu0 0
    %6497 = vmatprep.subr.bf16.mxu0 0
    %6498 = vmatpush1.bf16.xpose.msra.mxu0 0
    %6499 = vmatprep.subr.bf16.mxu0 0
    %6500 = vmatpush1.bf16.xpose.msra.mxu0 0
    %6501 = vmatprep.subr.bf16.mxu0 0
    %6502 = vmatpush1.bf16.xpose.msra.mxu0 0
    %6503 = vmatprep.subr.bf16.mxu0 0
    %6504 = vmatpush1.bf16.xpose.msra.mxu0 0
    %6505 = vmatprep.subr.bf16.mxu0 0
    %6506 = vmatpush1.bf16.xpose.msra.mxu0 0
    %6507 = vmatprep.subr.bf16.mxu0 0
    %6508 = vmatpush1.bf16.xpose.msra.mxu0 0
    %6509 = vmatprep.subr.bf16.mxu0 0
    %6510 = vmatpush1.bf16.xpose.msra.mxu0 %v2806
    %6511 = vmatprep.subr.bf16.mxu0 0
    %6512 = vmatpush2.bf16.xpose.msra.mxu0 0
    %6513 = vmatprep.subr.bf16.mxu0 0
    %6514 = vmatpush2.bf16.xpose.msra.mxu0 0
    %6515 = vmatprep.subr.bf16.mxu0 0
    %6516 = vmatpush2.bf16.xpose.msra.mxu0 0
    %6517 = vmatprep.subr.bf16.mxu0 0
    %6518 = vmatpush2.bf16.xpose.msra.mxu0 0
    %6519 = vmatprep.subr.bf16.mxu0 0
    %6520 = vmatpush2.bf16.xpose.msra.mxu0 0
    %6521 = vmatprep.subr.bf16.mxu0 0
    %6522 = vmatpush2.bf16.xpose.msra.mxu0 0
    %6523 = vmatprep.subr.bf16.mxu0 0
    %6524 = vmatpush2.bf16.xpose.msra.mxu0 0
    %6525 = vmatprep.subr.bf16.mxu0 0
    %6526 = vmatpush2.bf16.xpose.msra.mxu0 0
    %6527 = vmatprep.mubr.bf16.mxu0 0
    %6528 = vmatmul.mubr.bf16.gmra.mxu0 %v6493
    %v6529 = vpop.f32.mrf.mxu0
    %v6530 = vadd.f32 %v39, %v6529
    %v6531 = vpop.f32.mrf.mxu0
    %v6532 = vpop.f32.mrf.mxu0
    %v6533 = vpop.f32.mrf.mxu0
    %6534 = vdwg.mxu0
    %v6536 = vsel %vm198, %v6229, 0
    %6538 = vmatprep.subr.bf16.mxu0 0
    %6539 = vmatpush1.bf16.xpose.msra.mxu0 0
    %6540 = vmatprep.subr.bf16.mxu0 0
    %6541 = vmatpush1.bf16.xpose.msra.mxu0 0
    %6542 = vmatprep.subr.bf16.mxu0 0
    %6543 = vmatpush1.bf16.xpose.msra.mxu0 0
    %6544 = vmatprep.subr.bf16.mxu0 0
    %6545 = vmatpush1.bf16.xpose.msra.mxu0 0
    %6546 = vmatprep.subr.bf16.mxu0 0
    %6547 = vmatpush1.bf16.xpose.msra.mxu0 0
    %6548 = vmatprep.subr.bf16.mxu0 0
    %6549 = vmatpush1.bf16.xpose.msra.mxu0 0
    %6550 = vmatprep.subr.bf16.mxu0 0
    %6551 = vmatpush1.bf16.xpose.msra.mxu0 0
    %6552 = vmatprep.subr.bf16.mxu0 0
    %6553 = vmatpush1.bf16.xpose.msra.mxu0 %v2852
    %6554 = vmatprep.subr.bf16.mxu0 0
    %6555 = vmatpush2.bf16.xpose.msra.mxu0 0
    %6556 = vmatprep.subr.bf16.mxu0 0
    %6557 = vmatpush2.bf16.xpose.msra.mxu0 0
    %6558 = vmatprep.subr.bf16.mxu0 0
    %6559 = vmatpush2.bf16.xpose.msra.mxu0 0
    %6560 = vmatprep.subr.bf16.mxu0 0
    %6561 = vmatpush2.bf16.xpose.msra.mxu0 0
    %6562 = vmatprep.subr.bf16.mxu0 0
    %6563 = vmatpush2.bf16.xpose.msra.mxu0 0
    %6564 = vmatprep.subr.bf16.mxu0 0
    %6565 = vmatpush2.bf16.xpose.msra.mxu0 0
    %6566 = vmatprep.subr.bf16.mxu0 0
    %6567 = vmatpush2.bf16.xpose.msra.mxu0 0
    %6568 = vmatprep.subr.bf16.mxu0 0
    %6569 = vmatpush2.bf16.xpose.msra.mxu0 0
    %6570 = vmatprep.mubr.bf16.mxu0 0
    %6571 = vmatmul.mubr.bf16.gmra.mxu0 %v6536
    %v6572 = vpop.f32.mrf.mxu0
    %v6573 = vadd.f32 %v39, %v6572
    %v6574 = vpop.f32.mrf.mxu0
    %v6575 = vpop.f32.mrf.mxu0
    %v6576 = vpop.f32.mrf.mxu0
    %6577 = vdwg.mxu0
    %v6579 = vsel %vm198, %v6230, 0
    %6581 = vmatprep.subr.bf16.mxu0 0
    %6582 = vmatpush1.bf16.xpose.msra.mxu0 0
    %6583 = vmatprep.subr.bf16.mxu0 0
    %6584 = vmatpush1.bf16.xpose.msra.mxu0 0
    %6585 = vmatprep.subr.bf16.mxu0 0
    %6586 = vmatpush1.bf16.xpose.msra.mxu0 0
    %6587 = vmatprep.subr.bf16.mxu0 0
    %6588 = vmatpush1.bf16.xpose.msra.mxu0 0
    %6589 = vmatprep.subr.bf16.mxu0 0
    %6590 = vmatpush1.bf16.xpose.msra.mxu0 0
    %6591 = vmatprep.subr.bf16.mxu0 0
    %6592 = vmatpush1.bf16.xpose.msra.mxu0 0
    %6593 = vmatprep.subr.bf16.mxu0 0
    %6594 = vmatpush1.bf16.xpose.msra.mxu0 0
    %6595 = vmatprep.subr.bf16.mxu0 0
    %6596 = vmatpush1.bf16.xpose.msra.mxu0 %v2898
    %6597 = vmatprep.subr.bf16.mxu0 0
    %6598 = vmatpush2.bf16.xpose.msra.mxu0 0
    %6599 = vmatprep.subr.bf16.mxu0 0
    %6600 = vmatpush2.bf16.xpose.msra.mxu0 0
    %6601 = vmatprep.subr.bf16.mxu0 0
    %6602 = vmatpush2.bf16.xpose.msra.mxu0 0
    %6603 = vmatprep.subr.bf16.mxu0 0
    %6604 = vmatpush2.bf16.xpose.msra.mxu0 0
    %6605 = vmatprep.subr.bf16.mxu0 0
    %6606 = vmatpush2.bf16.xpose.msra.mxu0 0
    %6607 = vmatprep.subr.bf16.mxu0 0
    %6608 = vmatpush2.bf16.xpose.msra.mxu0 0
    %6609 = vmatprep.subr.bf16.mxu0 0
    %6610 = vmatpush2.bf16.xpose.msra.mxu0 0
    %6611 = vmatprep.subr.bf16.mxu0 0
    %6612 = vmatpush2.bf16.xpose.msra.mxu0 0
    %6613 = vmatprep.mubr.bf16.mxu0 0
    %6614 = vmatmul.mubr.bf16.gmra.mxu0 %v6579
    %v6615 = vpop.f32.mrf.mxu0
    %v6616 = vadd.f32 %v39, %v6615
    %v6617 = vpop.f32.mrf.mxu0
    %v6618 = vpop.f32.mrf.mxu0
    %v6619 = vpop.f32.mrf.mxu0
    %6620 = vdwg.mxu0
    %v6622 = vsel %vm198, %v6231, 0
    %6624 = vmatprep.subr.bf16.mxu0 0
    %6625 = vmatpush1.bf16.xpose.msra.mxu0 0
    %6626 = vmatprep.subr.bf16.mxu0 0
    %6627 = vmatpush1.bf16.xpose.msra.mxu0 0
    %6628 = vmatprep.subr.bf16.mxu0 0
    %6629 = vmatpush1.bf16.xpose.msra.mxu0 0
    %6630 = vmatprep.subr.bf16.mxu0 0
    %6631 = vmatpush1.bf16.xpose.msra.mxu0 0
    %6632 = vmatprep.subr.bf16.mxu0 0
    %6633 = vmatpush1.bf16.xpose.msra.mxu0 0
    %6634 = vmatprep.subr.bf16.mxu0 0
    %6635 = vmatpush1.bf16.xpose.msra.mxu0 0
    %6636 = vmatprep.subr.bf16.mxu0 0
    %6637 = vmatpush1.bf16.xpose.msra.mxu0 0
    %6638 = vmatprep.subr.bf16.mxu0 0
    %6639 = vmatpush1.bf16.xpose.msra.mxu0 %v2944
    %6640 = vmatprep.subr.bf16.mxu0 0
    %6641 = vmatpush2.bf16.xpose.msra.mxu0 0
    %6642 = vmatprep.subr.bf16.mxu0 0
    %6643 = vmatpush2.bf16.xpose.msra.mxu0 0
    %6644 = vmatprep.subr.bf16.mxu0 0
    %6645 = vmatpush2.bf16.xpose.msra.mxu0 0
    %6646 = vmatprep.subr.bf16.mxu0 0
    %6647 = vmatpush2.bf16.xpose.msra.mxu0 0
    %6648 = vmatprep.subr.bf16.mxu0 0
    %6649 = vmatpush2.bf16.xpose.msra.mxu0 0
    %6650 = vmatprep.subr.bf16.mxu0 0
    %6651 = vmatpush2.bf16.xpose.msra.mxu0 0
    %6652 = vmatprep.subr.bf16.mxu0 0
    %6653 = vmatpush2.bf16.xpose.msra.mxu0 0
    %6654 = vmatprep.subr.bf16.mxu0 0
    %6655 = vmatpush2.bf16.xpose.msra.mxu0 0
    %6656 = vmatprep.mubr.bf16.mxu0 0
    %6657 = vmatmul.mubr.bf16.gmra.mxu0 %v6622
    %v6658 = vpop.f32.mrf.mxu0
    %v6659 = vadd.f32 %v39, %v6658
    %v6660 = vpop.f32.mrf.mxu0
    %v6661 = vpop.f32.mrf.mxu0
    %v6662 = vpop.f32.mrf.mxu0
    %6663 = vdwg.mxu0
    %v6665 = vsel %vm198, %v6232, 0
    %6667 = vmatprep.subr.bf16.mxu0 0
    %6668 = vmatpush1.bf16.xpose.msra.mxu0 0
    %6669 = vmatprep.subr.bf16.mxu0 0
    %6670 = vmatpush1.bf16.xpose.msra.mxu0 0
    %6671 = vmatprep.subr.bf16.mxu0 0
    %6672 = vmatpush1.bf16.xpose.msra.mxu0 0
    %6673 = vmatprep.subr.bf16.mxu0 0
    %6674 = vmatpush1.bf16.xpose.msra.mxu0 0
    %6675 = vmatprep.subr.bf16.mxu0 0
    %6676 = vmatpush1.bf16.xpose.msra.mxu0 0
    %6677 = vmatprep.subr.bf16.mxu0 0
    %6678 = vmatpush1.bf16.xpose.msra.mxu0 0
    %6679 = vmatprep.subr.bf16.mxu0 0
    %6680 = vmatpush1.bf16.xpose.msra.mxu0 0
    %6681 = vmatprep.subr.bf16.mxu0 0
    %6682 = vmatpush1.bf16.xpose.msra.mxu0 %v2990
    %6683 = vmatprep.subr.bf16.mxu0 0
    %6684 = vmatpush2.bf16.xpose.msra.mxu0 0
    %6685 = vmatprep.subr.bf16.mxu0 0
    %6686 = vmatpush2.bf16.xpose.msra.mxu0 0
    %6687 = vmatprep.subr.bf16.mxu0 0
    %6688 = vmatpush2.bf16.xpose.msra.mxu0 0
    %6689 = vmatprep.subr.bf16.mxu0 0
    %6690 = vmatpush2.bf16.xpose.msra.mxu0 0
    %6691 = vmatprep.subr.bf16.mxu0 0
    %6692 = vmatpush2.bf16.xpose.msra.mxu0 0
    %6693 = vmatprep.subr.bf16.mxu0 0
    %6694 = vmatpush2.bf16.xpose.msra.mxu0 0
    %6695 = vmatprep.subr.bf16.mxu0 0
    %6696 = vmatpush2.bf16.xpose.msra.mxu0 0
    %6697 = vmatprep.subr.bf16.mxu0 0
    %6698 = vmatpush2.bf16.xpose.msra.mxu0 0
    %6699 = vmatprep.mubr.bf16.mxu0 0
    %6700 = vmatmul.mubr.bf16.gmra.mxu0 %v6665
    %v6701 = vpop.f32.mrf.mxu0
    %v6702 = vadd.f32 %v39, %v6701
    %v6703 = vpop.f32.mrf.mxu0
    %v6704 = vpop.f32.mrf.mxu0
    %v6705 = vpop.f32.mrf.mxu0
    %6706 = vdwg.mxu0
    %v6708 = vsel %vm198, %v6233, 0
    %6710 = vmatprep.subr.bf16.mxu0 0
    %6711 = vmatpush1.bf16.xpose.msra.mxu0 0
    %6712 = vmatprep.subr.bf16.mxu0 0
    %6713 = vmatpush1.bf16.xpose.msra.mxu0 0
    %6714 = vmatprep.subr.bf16.mxu0 0
    %6715 = vmatpush1.bf16.xpose.msra.mxu0 0
    %6716 = vmatprep.subr.bf16.mxu0 0
    %6717 = vmatpush1.bf16.xpose.msra.mxu0 0
    %6718 = vmatprep.subr.bf16.mxu0 0
    %6719 = vmatpush1.bf16.xpose.msra.mxu0 0
    %6720 = vmatprep.subr.bf16.mxu0 0
    %6721 = vmatpush1.bf16.xpose.msra.mxu0 0
    %6722 = vmatprep.subr.bf16.mxu0 0
    %6723 = vmatpush1.bf16.xpose.msra.mxu0 0
    %6724 = vmatprep.subr.bf16.mxu0 0
    %6725 = vmatpush1.bf16.xpose.msra.mxu0 %v3036
    %6726 = vmatprep.subr.bf16.mxu0 0
    %6727 = vmatpush2.bf16.xpose.msra.mxu0 0
    %6728 = vmatprep.subr.bf16.mxu0 0
    %6729 = vmatpush2.bf16.xpose.msra.mxu0 0
    %6730 = vmatprep.subr.bf16.mxu0 0
    %6731 = vmatpush2.bf16.xpose.msra.mxu0 0
    %6732 = vmatprep.subr.bf16.mxu0 0
    %6733 = vmatpush2.bf16.xpose.msra.mxu0 0
    %6734 = vmatprep.subr.bf16.mxu0 0
    %6735 = vmatpush2.bf16.xpose.msra.mxu0 0
    %6736 = vmatprep.subr.bf16.mxu0 0
    %6737 = vmatpush2.bf16.xpose.msra.mxu0 0
    %6738 = vmatprep.subr.bf16.mxu0 0
    %6739 = vmatpush2.bf16.xpose.msra.mxu0 0
    %6740 = vmatprep.subr.bf16.mxu0 0
    %6741 = vmatpush2.bf16.xpose.msra.mxu0 0
    %6742 = vmatprep.mubr.bf16.mxu0 0
    %6743 = vmatmul.mubr.bf16.gmra.mxu0 %v6708
    %v6744 = vpop.f32.mrf.mxu0
    %v6745 = vadd.f32 %v39, %v6744
    %v6746 = vpop.f32.mrf.mxu0
    %v6747 = vpop.f32.mrf.mxu0
    %v6748 = vpop.f32.mrf.mxu0
    %6749 = vdwg.mxu0
    %v6750 = vsel %vm573, %v6272, -inf
    %6751 = vmax.xlane.f32.xlu0 %v6750
    %v6752 = vpop.xlane.xlu0 %6751
    %v6753 = vsel %vm573, %v6315, -inf
    %6754 = vmax.xlane.f32.xlu0 %v6753
    %v6755 = vpop.xlane.xlu0 %6754
    %v6756 = vsel %vm573, %v6358, -inf
    %6757 = vmax.xlane.f32.xlu0 %v6756
    %v6758 = vpop.xlane.xlu0 %6757
    %v6759 = vsel %vm573, %v6401, -inf
    %6760 = vmax.xlane.f32.xlu0 %v6759
    %v6761 = vpop.xlane.xlu0 %6760
    %v6762 = vsel %vm573, %v6444, -inf
    %6763 = vmax.xlane.f32.xlu0 %v6762
    %v6764 = vpop.xlane.xlu0 %6763
    %v6765 = vsel %vm573, %v6487, -inf
    %6766 = vmax.xlane.f32.xlu0 %v6765
    %v6767 = vpop.xlane.xlu0 %6766
    %v6768 = vsel %vm573, %v6530, -inf
    %6769 = vmax.xlane.f32.xlu0 %v6768
    %v6770 = vpop.xlane.xlu0 %6769
    %v6771 = vsel %vm573, %v6573, -inf
    %6772 = vmax.xlane.f32.xlu0 %v6771
    %v6773 = vpop.xlane.xlu0 %6772
    %v6774 = vsel %vm573, %v6616, -inf
    %6775 = vmax.xlane.f32.xlu0 %v6774
    %v6776 = vpop.xlane.xlu0 %6775
    %v6777 = vsel %vm573, %v6659, -inf
    %6778 = vmax.xlane.f32.xlu0 %v6777
    %v6779 = vpop.xlane.xlu0 %6778
    %v6780 = vsel %vm573, %v6702, -inf
    %6781 = vmax.xlane.f32.xlu0 %v6780
    %v6782 = vpop.xlane.xlu0 %6781
    %v6783 = vsel %vm573, %v6745, -inf
    %6784 = vmax.xlane.f32.xlu0 %v6783
    %v6785 = vpop.xlane.xlu0 %6784
    %v6786 = vsub.f32 %v6272, %v6752
    %v6787 = vsub.f32 %v6315, %v6755
    %v6788 = vsub.f32 %v6358, %v6758
    %v6789 = vsub.f32 %v6401, %v6761
    %v6790 = vsub.f32 %v6444, %v6764
    %v6791 = vsub.f32 %v6487, %v6767
    %v6792 = vsub.f32 %v6530, %v6770
    %v6793 = vsub.f32 %v6573, %v6773
    %v6794 = vsub.f32 %v6616, %v6776
    %v6795 = vsub.f32 %v6659, %v6779
    %v6796 = vsub.f32 %v6702, %v6782
    %v6797 = vsub.f32 %v6745, %v6785
    %v6798 = vmul.f32 %v6786, 1.442695
    %v6799 = vpow.pop %v6798
    %v6800 = vmul.f32 %v6787, 1.442695
    %v6801 = vpow.pop %v6800
    %v6802 = vmul.f32 %v6788, 1.442695
    %v6803 = vpow.pop %v6802
    %v6804 = vmul.f32 %v6789, 1.442695
    %v6805 = vpow.pop %v6804
    %v6806 = vmul.f32 %v6790, 1.442695
    %v6807 = vpow.pop %v6806
    %v6808 = vmul.f32 %v6791, 1.442695
    %v6809 = vpow.pop %v6808
    %v6810 = vmul.f32 %v6792, 1.442695
    %v6811 = vpow.pop %v6810
    %v6812 = vmul.f32 %v6793, 1.442695
    %v6813 = vpow.pop %v6812
    %v6814 = vmul.f32 %v6794, 1.442695
    %v6815 = vpow.pop %v6814
    %v6816 = vmul.f32 %v6795, 1.442695
    %v6817 = vpow.pop %v6816
    %v6818 = vmul.f32 %v6796, 1.442695
    %v6819 = vpow.pop %v6818
    %v6820 = vmul.f32 %v6797, 1.442695
    %v6821 = vpow.pop %v6820
    %v6822 = vsel %vm573, %v6799, 0.0
    %6823 = vadd.xlane.f32.xlu0 %v6822
    %v6824 = vpop.xlane.xlu0 %6823
    %v6825 = vsel %vm573, %v6801, 0.0
    %6826 = vadd.xlane.f32.xlu0 %v6825
    %v6827 = vpop.xlane.xlu0 %6826
    %v6828 = vsel %vm573, %v6803, 0.0
    %6829 = vadd.xlane.f32.xlu0 %v6828
    %v6830 = vpop.xlane.xlu0 %6829
    %v6831 = vsel %vm573, %v6805, 0.0
    %6832 = vadd.xlane.f32.xlu0 %v6831
    %v6833 = vpop.xlane.xlu0 %6832
    %v6834 = vsel %vm573, %v6807, 0.0
    %6835 = vadd.xlane.f32.xlu0 %v6834
    %v6836 = vpop.xlane.xlu0 %6835
    %v6837 = vsel %vm573, %v6809, 0.0
    %6838 = vadd.xlane.f32.xlu0 %v6837
    %v6839 = vpop.xlane.xlu0 %6838
    %v6840 = vsel %vm573, %v6811, 0.0
    %6841 = vadd.xlane.f32.xlu0 %v6840
    %v6842 = vpop.xlane.xlu0 %6841
    %v6843 = vsel %vm573, %v6813, 0.0
    %6844 = vadd.xlane.f32.xlu0 %v6843
    %v6845 = vpop.xlane.xlu0 %6844
    %v6846 = vsel %vm573, %v6815, 0.0
    %6847 = vadd.xlane.f32.xlu0 %v6846
    %v6848 = vpop.xlane.xlu0 %6847
    %v6849 = vsel %vm573, %v6817, 0.0
    %6850 = vadd.xlane.f32.xlu0 %v6849
    %v6851 = vpop.xlane.xlu0 %6850
    %v6852 = vsel %vm573, %v6819, 0.0
    %6853 = vadd.xlane.f32.xlu0 %v6852
    %v6854 = vpop.xlane.xlu0 %6853
    %v6855 = vsel %vm573, %v6821, 0.0
    %6856 = vadd.xlane.f32.xlu0 %v6855
    %v6857 = vpop.xlane.xlu0 %6856
    %v6858 = vrcp.pop %v6824
    %v6859 = vrcp.pop %v6827
    %v6860 = vrcp.pop %v6830
    %v6861 = vrcp.pop %v6833
    %v6862 = vrcp.pop %v6836
    %v6863 = vrcp.pop %v6839
    %v6864 = vrcp.pop %v6842
    %v6865 = vrcp.pop %v6845
    %v6866 = vrcp.pop %v6848
    %v6867 = vrcp.pop %v6851
    %v6868 = vrcp.pop %v6854
    %v6869 = vrcp.pop %v6857
    %v6870 = vmul.f32 %v6799, %v6858
    %v6871 = vmul.f32 %v6801, %v6859
    %v6872 = vmul.f32 %v6803, %v6860
    %v6873 = vmul.f32 %v6805, %v6861
    %v6874 = vmul.f32 %v6807, %v6862
    %v6875 = vmul.f32 %v6809, %v6863
    %v6876 = vmul.f32 %v6811, %v6864
    %v6877 = vmul.f32 %v6813, %v6865
    %v6878 = vmul.f32 %v6815, %v6866
    %v6879 = vmul.f32 %v6817, %v6867
    %v6880 = vmul.f32 %v6819, %v6868
    %v6881 = vmul.f32 %v6821, %v6869
    %v6882 = vpack.c.bf16 %v6870, %v6870
    %v6883 = vpack.c.bf16 %v6871, %v6871
    %v6884 = vpack.c.bf16 %v6872, %v6872
    %v6885 = vpack.c.bf16 %v6873, %v6873
    %v6886 = vpack.c.bf16 %v6874, %v6874
    %v6887 = vpack.c.bf16 %v6875, %v6875
    %v6888 = vpack.c.bf16 %v6876, %v6876
    %v6889 = vpack.c.bf16 %v6877, %v6877
    %v6890 = vpack.c.bf16 %v6878, %v6878
    %v6891 = vpack.c.bf16 %v6879, %v6879
    %v6892 = vpack.c.bf16 %v6880, %v6880
    %v6893 = vpack.c.bf16 %v6881, %v6881
    %v6895 = vsel %vm573, %v6882, 0
    %6897 = vmatprep.subr.bf16.mxu0 0
    %6898 = vmatpush1.bf16.msra.mxu0 0
    %6899 = vmatprep.subr.bf16.mxu0 0
    %6900 = vmatpush1.bf16.msra.mxu0 0
    %6901 = vmatprep.subr.bf16.mxu0 0
    %6902 = vmatpush1.bf16.msra.mxu0 0
    %6903 = vmatprep.subr.bf16.mxu0 0
    %6904 = vmatpush1.bf16.msra.mxu0 0
    %6905 = vmatprep.subr.bf16.mxu0 0
    %6906 = vmatpush1.bf16.msra.mxu0 0
    %6907 = vmatprep.subr.bf16.mxu0 0
    %6908 = vmatpush1.bf16.msra.mxu0 0
    %6909 = vmatprep.subr.bf16.mxu0 0
    %6910 = vmatpush1.bf16.msra.mxu0 0
    %6911 = vmatprep.subr.bf16.mxu0 0
    %6912 = vmatpush1.bf16.msra.mxu0 %v3226
    %6913 = vmatprep.subr.bf16.mxu0 0
    %6914 = vmatpush2.bf16.msra.mxu0 0
    %6915 = vmatprep.subr.bf16.mxu0 0
    %6916 = vmatpush2.bf16.msra.mxu0 0
    %6917 = vmatprep.subr.bf16.mxu0 0
    %6918 = vmatpush2.bf16.msra.mxu0 0
    %6919 = vmatprep.subr.bf16.mxu0 0
    %6920 = vmatpush2.bf16.msra.mxu0 0
    %6921 = vmatprep.subr.bf16.mxu0 0
    %6922 = vmatpush2.bf16.msra.mxu0 0
    %6923 = vmatprep.subr.bf16.mxu0 0
    %6924 = vmatpush2.bf16.msra.mxu0 0
    %6925 = vmatprep.subr.bf16.mxu0 0
    %6926 = vmatpush2.bf16.msra.mxu0 0
    %6927 = vmatprep.subr.bf16.mxu0 0
    %6928 = vmatpush2.bf16.msra.mxu0 0
    %6929 = vmatprep.mubr.bf16.mxu0 0
    %6930 = vmatmul.mubr.bf16.gmra.mxu0 %v6895
    %v6931 = vpop.f32.mrf.mxu0
    %v6932 = vadd.f32 0.0, %v6931
    %v6933 = vpop.f32.mrf.mxu0
    %v6934 = vpop.f32.mrf.mxu0
    %v6935 = vpop.f32.mrf.mxu0
    %6936 = vdwg.mxu0
    %v6938 = vsel %vm573, %v6883, 0
    %6940 = vmatprep.subr.bf16.mxu0 0
    %6941 = vmatpush1.bf16.msra.mxu0 0
    %6942 = vmatprep.subr.bf16.mxu0 0
    %6943 = vmatpush1.bf16.msra.mxu0 0
    %6944 = vmatprep.subr.bf16.mxu0 0
    %6945 = vmatpush1.bf16.msra.mxu0 0
    %6946 = vmatprep.subr.bf16.mxu0 0
    %6947 = vmatpush1.bf16.msra.mxu0 0
    %6948 = vmatprep.subr.bf16.mxu0 0
    %6949 = vmatpush1.bf16.msra.mxu0 0
    %6950 = vmatprep.subr.bf16.mxu0 0
    %6951 = vmatpush1.bf16.msra.mxu0 0
    %6952 = vmatprep.subr.bf16.mxu0 0
    %6953 = vmatpush1.bf16.msra.mxu0 0
    %6954 = vmatprep.subr.bf16.mxu0 0
    %6955 = vmatpush1.bf16.msra.mxu0 %v3272
    %6956 = vmatprep.subr.bf16.mxu0 0
    %6957 = vmatpush2.bf16.msra.mxu0 0
    %6958 = vmatprep.subr.bf16.mxu0 0
    %6959 = vmatpush2.bf16.msra.mxu0 0
    %6960 = vmatprep.subr.bf16.mxu0 0
    %6961 = vmatpush2.bf16.msra.mxu0 0
    %6962 = vmatprep.subr.bf16.mxu0 0
    %6963 = vmatpush2.bf16.msra.mxu0 0
    %6964 = vmatprep.subr.bf16.mxu0 0
    %6965 = vmatpush2.bf16.msra.mxu0 0
    %6966 = vmatprep.subr.bf16.mxu0 0
    %6967 = vmatpush2.bf16.msra.mxu0 0
    %6968 = vmatprep.subr.bf16.mxu0 0
    %6969 = vmatpush2.bf16.msra.mxu0 0
    %6970 = vmatprep.subr.bf16.mxu0 0
    %6971 = vmatpush2.bf16.msra.mxu0 0
    %6972 = vmatprep.mubr.bf16.mxu0 0
    %6973 = vmatmul.mubr.bf16.gmra.mxu0 %v6938
    %v6974 = vpop.f32.mrf.mxu0
    %v6975 = vadd.f32 0.0, %v6974
    %v6976 = vpop.f32.mrf.mxu0
    %v6977 = vpop.f32.mrf.mxu0
    %v6978 = vpop.f32.mrf.mxu0
    %6979 = vdwg.mxu0
    %v6981 = vsel %vm573, %v6884, 0
    %6983 = vmatprep.subr.bf16.mxu0 0
    %6984 = vmatpush1.bf16.msra.mxu0 0
    %6985 = vmatprep.subr.bf16.mxu0 0
    %6986 = vmatpush1.bf16.msra.mxu0 0
    %6987 = vmatprep.subr.bf16.mxu0 0
    %6988 = vmatpush1.bf16.msra.mxu0 0
    %6989 = vmatprep.subr.bf16.mxu0 0
    %6990 = vmatpush1.bf16.msra.mxu0 0
    %6991 = vmatprep.subr.bf16.mxu0 0
    %6992 = vmatpush1.bf16.msra.mxu0 0
    %6993 = vmatprep.subr.bf16.mxu0 0
    %6994 = vmatpush1.bf16.msra.mxu0 0
    %6995 = vmatprep.subr.bf16.mxu0 0
    %6996 = vmatpush1.bf16.msra.mxu0 0
    %6997 = vmatprep.subr.bf16.mxu0 0
    %6998 = vmatpush1.bf16.msra.mxu0 %v3318
    %6999 = vmatprep.subr.bf16.mxu0 0
    %7000 = vmatpush2.bf16.msra.mxu0 0
    %7001 = vmatprep.subr.bf16.mxu0 0
    %7002 = vmatpush2.bf16.msra.mxu0 0
    %7003 = vmatprep.subr.bf16.mxu0 0
    %7004 = vmatpush2.bf16.msra.mxu0 0
    %7005 = vmatprep.subr.bf16.mxu0 0
    %7006 = vmatpush2.bf16.msra.mxu0 0
    %7007 = vmatprep.subr.bf16.mxu0 0
    %7008 = vmatpush2.bf16.msra.mxu0 0
    %7009 = vmatprep.subr.bf16.mxu0 0
    %7010 = vmatpush2.bf16.msra.mxu0 0
    %7011 = vmatprep.subr.bf16.mxu0 0
    %7012 = vmatpush2.bf16.msra.mxu0 0
    %7013 = vmatprep.subr.bf16.mxu0 0
    %7014 = vmatpush2.bf16.msra.mxu0 0
    %7015 = vmatprep.mubr.bf16.mxu0 0
    %7016 = vmatmul.mubr.bf16.gmra.mxu0 %v6981
    %v7017 = vpop.f32.mrf.mxu0
    %v7018 = vadd.f32 0.0, %v7017
    %v7019 = vpop.f32.mrf.mxu0
    %v7020 = vpop.f32.mrf.mxu0
    %v7021 = vpop.f32.mrf.mxu0
    %7022 = vdwg.mxu0
    %v7024 = vsel %vm573, %v6885, 0
    %7026 = vmatprep.subr.bf16.mxu0 0
    %7027 = vmatpush1.bf16.msra.mxu0 0
    %7028 = vmatprep.subr.bf16.mxu0 0
    %7029 = vmatpush1.bf16.msra.mxu0 0
    %7030 = vmatprep.subr.bf16.mxu0 0
    %7031 = vmatpush1.bf16.msra.mxu0 0
    %7032 = vmatprep.subr.bf16.mxu0 0
    %7033 = vmatpush1.bf16.msra.mxu0 0
    %7034 = vmatprep.subr.bf16.mxu0 0
    %7035 = vmatpush1.bf16.msra.mxu0 0
    %7036 = vmatprep.subr.bf16.mxu0 0
    %7037 = vmatpush1.bf16.msra.mxu0 0
    %7038 = vmatprep.subr.bf16.mxu0 0
    %7039 = vmatpush1.bf16.msra.mxu0 0
    %7040 = vmatprep.subr.bf16.mxu0 0
    %7041 = vmatpush1.bf16.msra.mxu0 %v3364
    %7042 = vmatprep.subr.bf16.mxu0 0
    %7043 = vmatpush2.bf16.msra.mxu0 0
    %7044 = vmatprep.subr.bf16.mxu0 0
    %7045 = vmatpush2.bf16.msra.mxu0 0
    %7046 = vmatprep.subr.bf16.mxu0 0
    %7047 = vmatpush2.bf16.msra.mxu0 0
    %7048 = vmatprep.subr.bf16.mxu0 0
    %7049 = vmatpush2.bf16.msra.mxu0 0
    %7050 = vmatprep.subr.bf16.mxu0 0
    %7051 = vmatpush2.bf16.msra.mxu0 0
    %7052 = vmatprep.subr.bf16.mxu0 0
    %7053 = vmatpush2.bf16.msra.mxu0 0
    %7054 = vmatprep.subr.bf16.mxu0 0
    %7055 = vmatpush2.bf16.msra.mxu0 0
    %7056 = vmatprep.subr.bf16.mxu0 0
    %7057 = vmatpush2.bf16.msra.mxu0 0
    %7058 = vmatprep.mubr.bf16.mxu0 0
    %7059 = vmatmul.mubr.bf16.gmra.mxu0 %v7024
    %v7060 = vpop.f32.mrf.mxu0
    %v7061 = vadd.f32 0.0, %v7060
    %v7062 = vpop.f32.mrf.mxu0
    %v7063 = vpop.f32.mrf.mxu0
    %v7064 = vpop.f32.mrf.mxu0
    %7065 = vdwg.mxu0
    %v7067 = vsel %vm573, %v6886, 0
    %7069 = vmatprep.subr.bf16.mxu0 0
    %7070 = vmatpush1.bf16.msra.mxu0 0
    %7071 = vmatprep.subr.bf16.mxu0 0
    %7072 = vmatpush1.bf16.msra.mxu0 0
    %7073 = vmatprep.subr.bf16.mxu0 0
    %7074 = vmatpush1.bf16.msra.mxu0 0
    %7075 = vmatprep.subr.bf16.mxu0 0
    %7076 = vmatpush1.bf16.msra.mxu0 0
    %7077 = vmatprep.subr.bf16.mxu0 0
    %7078 = vmatpush1.bf16.msra.mxu0 0
    %7079 = vmatprep.subr.bf16.mxu0 0
    %7080 = vmatpush1.bf16.msra.mxu0 0
    %7081 = vmatprep.subr.bf16.mxu0 0
    %7082 = vmatpush1.bf16.msra.mxu0 0
    %7083 = vmatprep.subr.bf16.mxu0 0
    %7084 = vmatpush1.bf16.msra.mxu0 %v3410
    %7085 = vmatprep.subr.bf16.mxu0 0
    %7086 = vmatpush2.bf16.msra.mxu0 0
    %7087 = vmatprep.subr.bf16.mxu0 0
    %7088 = vmatpush2.bf16.msra.mxu0 0
    %7089 = vmatprep.subr.bf16.mxu0 0
    %7090 = vmatpush2.bf16.msra.mxu0 0
    %7091 = vmatprep.subr.bf16.mxu0 0
    %7092 = vmatpush2.bf16.msra.mxu0 0
    %7093 = vmatprep.subr.bf16.mxu0 0
    %7094 = vmatpush2.bf16.msra.mxu0 0
    %7095 = vmatprep.subr.bf16.mxu0 0
    %7096 = vmatpush2.bf16.msra.mxu0 0
    %7097 = vmatprep.subr.bf16.mxu0 0
    %7098 = vmatpush2.bf16.msra.mxu0 0
    %7099 = vmatprep.subr.bf16.mxu0 0
    %7100 = vmatpush2.bf16.msra.mxu0 0
    %7101 = vmatprep.mubr.bf16.mxu0 0
    %7102 = vmatmul.mubr.bf16.gmra.mxu0 %v7067
    %v7103 = vpop.f32.mrf.mxu0
    %v7104 = vadd.f32 0.0, %v7103
    %v7105 = vpop.f32.mrf.mxu0
    %v7106 = vpop.f32.mrf.mxu0
    %v7107 = vpop.f32.mrf.mxu0
    %7108 = vdwg.mxu0
    %v7110 = vsel %vm573, %v6887, 0
    %7112 = vmatprep.subr.bf16.mxu0 0
    %7113 = vmatpush1.bf16.msra.mxu0 0
    %7114 = vmatprep.subr.bf16.mxu0 0
    %7115 = vmatpush1.bf16.msra.mxu0 0
    %7116 = vmatprep.subr.bf16.mxu0 0
    %7117 = vmatpush1.bf16.msra.mxu0 0
    %7118 = vmatprep.subr.bf16.mxu0 0
    %7119 = vmatpush1.bf16.msra.mxu0 0
    %7120 = vmatprep.subr.bf16.mxu0 0
    %7121 = vmatpush1.bf16.msra.mxu0 0
    %7122 = vmatprep.subr.bf16.mxu0 0
    %7123 = vmatpush1.bf16.msra.mxu0 0
    %7124 = vmatprep.subr.bf16.mxu0 0
    %7125 = vmatpush1.bf16.msra.mxu0 0
    %7126 = vmatprep.subr.bf16.mxu0 0
    %7127 = vmatpush1.bf16.msra.mxu0 %v3456
    %7128 = vmatprep.subr.bf16.mxu0 0
    %7129 = vmatpush2.bf16.msra.mxu0 0
    %7130 = vmatprep.subr.bf16.mxu0 0
    %7131 = vmatpush2.bf16.msra.mxu0 0
    %7132 = vmatprep.subr.bf16.mxu0 0
    %7133 = vmatpush2.bf16.msra.mxu0 0
    %7134 = vmatprep.subr.bf16.mxu0 0
    %7135 = vmatpush2.bf16.msra.mxu0 0
    %7136 = vmatprep.subr.bf16.mxu0 0
    %7137 = vmatpush2.bf16.msra.mxu0 0
    %7138 = vmatprep.subr.bf16.mxu0 0
    %7139 = vmatpush2.bf16.msra.mxu0 0
    %7140 = vmatprep.subr.bf16.mxu0 0
    %7141 = vmatpush2.bf16.msra.mxu0 0
    %7142 = vmatprep.subr.bf16.mxu0 0
    %7143 = vmatpush2.bf16.msra.mxu0 0
    %7144 = vmatprep.mubr.bf16.mxu0 0
    %7145 = vmatmul.mubr.bf16.gmra.mxu0 %v7110
    %v7146 = vpop.f32.mrf.mxu0
    %v7147 = vadd.f32 0.0, %v7146
    %v7148 = vpop.f32.mrf.mxu0
    %v7149 = vpop.f32.mrf.mxu0
    %v7150 = vpop.f32.mrf.mxu0
    %7151 = vdwg.mxu0
    %v7153 = vsel %vm573, %v6888, 0
    %7155 = vmatprep.subr.bf16.mxu0 0
    %7156 = vmatpush1.bf16.msra.mxu0 0
    %7157 = vmatprep.subr.bf16.mxu0 0
    %7158 = vmatpush1.bf16.msra.mxu0 0
    %7159 = vmatprep.subr.bf16.mxu0 0
    %7160 = vmatpush1.bf16.msra.mxu0 0
    %7161 = vmatprep.subr.bf16.mxu0 0
    %7162 = vmatpush1.bf16.msra.mxu0 0
    %7163 = vmatprep.subr.bf16.mxu0 0
    %7164 = vmatpush1.bf16.msra.mxu0 0
    %7165 = vmatprep.subr.bf16.mxu0 0
    %7166 = vmatpush1.bf16.msra.mxu0 0
    %7167 = vmatprep.subr.bf16.mxu0 0
    %7168 = vmatpush1.bf16.msra.mxu0 0
    %7169 = vmatprep.subr.bf16.mxu0 0
    %7170 = vmatpush1.bf16.msra.mxu0 %v3502
    %7171 = vmatprep.subr.bf16.mxu0 0
    %7172 = vmatpush2.bf16.msra.mxu0 0
    %7173 = vmatprep.subr.bf16.mxu0 0
    %7174 = vmatpush2.bf16.msra.mxu0 0
    %7175 = vmatprep.subr.bf16.mxu0 0
    %7176 = vmatpush2.bf16.msra.mxu0 0
    %7177 = vmatprep.subr.bf16.mxu0 0
    %7178 = vmatpush2.bf16.msra.mxu0 0
    %7179 = vmatprep.subr.bf16.mxu0 0
    %7180 = vmatpush2.bf16.msra.mxu0 0
    %7181 = vmatprep.subr.bf16.mxu0 0
    %7182 = vmatpush2.bf16.msra.mxu0 0
    %7183 = vmatprep.subr.bf16.mxu0 0
    %7184 = vmatpush2.bf16.msra.mxu0 0
    %7185 = vmatprep.subr.bf16.mxu0 0
    %7186 = vmatpush2.bf16.msra.mxu0 0
    %7187 = vmatprep.mubr.bf16.mxu0 0
    %7188 = vmatmul.mubr.bf16.gmra.mxu0 %v7153
    %v7189 = vpop.f32.mrf.mxu0
    %v7190 = vadd.f32 0.0, %v7189
    %v7191 = vpop.f32.mrf.mxu0
    %v7192 = vpop.f32.mrf.mxu0
    %v7193 = vpop.f32.mrf.mxu0
    %7194 = vdwg.mxu0
    %v7196 = vsel %vm573, %v6889, 0
    %7198 = vmatprep.subr.bf16.mxu0 0
    %7199 = vmatpush1.bf16.msra.mxu0 0
    %7200 = vmatprep.subr.bf16.mxu0 0
    %7201 = vmatpush1.bf16.msra.mxu0 0
    %7202 = vmatprep.subr.bf16.mxu0 0
    %7203 = vmatpush1.bf16.msra.mxu0 0
    %7204 = vmatprep.subr.bf16.mxu0 0
    %7205 = vmatpush1.bf16.msra.mxu0 0
    %7206 = vmatprep.subr.bf16.mxu0 0
    %7207 = vmatpush1.bf16.msra.mxu0 0
    %7208 = vmatprep.subr.bf16.mxu0 0
    %7209 = vmatpush1.bf16.msra.mxu0 0
    %7210 = vmatprep.subr.bf16.mxu0 0
    %7211 = vmatpush1.bf16.msra.mxu0 0
    %7212 = vmatprep.subr.bf16.mxu0 0
    %7213 = vmatpush1.bf16.msra.mxu0 %v3548
    %7214 = vmatprep.subr.bf16.mxu0 0
    %7215 = vmatpush2.bf16.msra.mxu0 0
    %7216 = vmatprep.subr.bf16.mxu0 0
    %7217 = vmatpush2.bf16.msra.mxu0 0
    %7218 = vmatprep.subr.bf16.mxu0 0
    %7219 = vmatpush2.bf16.msra.mxu0 0
    %7220 = vmatprep.subr.bf16.mxu0 0
    %7221 = vmatpush2.bf16.msra.mxu0 0
    %7222 = vmatprep.subr.bf16.mxu0 0
    %7223 = vmatpush2.bf16.msra.mxu0 0
    %7224 = vmatprep.subr.bf16.mxu0 0
    %7225 = vmatpush2.bf16.msra.mxu0 0
    %7226 = vmatprep.subr.bf16.mxu0 0
    %7227 = vmatpush2.bf16.msra.mxu0 0
    %7228 = vmatprep.subr.bf16.mxu0 0
    %7229 = vmatpush2.bf16.msra.mxu0 0
    %7230 = vmatprep.mubr.bf16.mxu0 0
    %7231 = vmatmul.mubr.bf16.gmra.mxu0 %v7196
    %v7232 = vpop.f32.mrf.mxu0
    %v7233 = vadd.f32 0.0, %v7232
    %v7234 = vpop.f32.mrf.mxu0
    %v7235 = vpop.f32.mrf.mxu0
    %v7236 = vpop.f32.mrf.mxu0
    %7237 = vdwg.mxu0
    %v7239 = vsel %vm573, %v6890, 0
    %7241 = vmatprep.subr.bf16.mxu0 0
    %7242 = vmatpush1.bf16.msra.mxu0 0
    %7243 = vmatprep.subr.bf16.mxu0 0
    %7244 = vmatpush1.bf16.msra.mxu0 0
    %7245 = vmatprep.subr.bf16.mxu0 0
    %7246 = vmatpush1.bf16.msra.mxu0 0
    %7247 = vmatprep.subr.bf16.mxu0 0
    %7248 = vmatpush1.bf16.msra.mxu0 0
    %7249 = vmatprep.subr.bf16.mxu0 0
    %7250 = vmatpush1.bf16.msra.mxu0 0
    %7251 = vmatprep.subr.bf16.mxu0 0
    %7252 = vmatpush1.bf16.msra.mxu0 0
    %7253 = vmatprep.subr.bf16.mxu0 0
    %7254 = vmatpush1.bf16.msra.mxu0 0
    %7255 = vmatprep.subr.bf16.mxu0 0
    %7256 = vmatpush1.bf16.msra.mxu0 %v3594
    %7257 = vmatprep.subr.bf16.mxu0 0
    %7258 = vmatpush2.bf16.msra.mxu0 0
    %7259 = vmatprep.subr.bf16.mxu0 0
    %7260 = vmatpush2.bf16.msra.mxu0 0
    %7261 = vmatprep.subr.bf16.mxu0 0
    %7262 = vmatpush2.bf16.msra.mxu0 0
    %7263 = vmatprep.subr.bf16.mxu0 0
    %7264 = vmatpush2.bf16.msra.mxu0 0
    %7265 = vmatprep.subr.bf16.mxu0 0
    %7266 = vmatpush2.bf16.msra.mxu0 0
    %7267 = vmatprep.subr.bf16.mxu0 0
    %7268 = vmatpush2.bf16.msra.mxu0 0
    %7269 = vmatprep.subr.bf16.mxu0 0
    %7270 = vmatpush2.bf16.msra.mxu0 0
    %7271 = vmatprep.subr.bf16.mxu0 0
    %7272 = vmatpush2.bf16.msra.mxu0 0
    %7273 = vmatprep.mubr.bf16.mxu0 0
    %7274 = vmatmul.mubr.bf16.gmra.mxu0 %v7239
    %v7275 = vpop.f32.mrf.mxu0
    %v7276 = vadd.f32 0.0, %v7275
    %v7277 = vpop.f32.mrf.mxu0
    %v7278 = vpop.f32.mrf.mxu0
    %v7279 = vpop.f32.mrf.mxu0
    %7280 = vdwg.mxu0
    %v7282 = vsel %vm573, %v6891, 0
    %7284 = vmatprep.subr.bf16.mxu0 0
    %7285 = vmatpush1.bf16.msra.mxu0 0
    %7286 = vmatprep.subr.bf16.mxu0 0
    %7287 = vmatpush1.bf16.msra.mxu0 0
    %7288 = vmatprep.subr.bf16.mxu0 0
    %7289 = vmatpush1.bf16.msra.mxu0 0
    %7290 = vmatprep.subr.bf16.mxu0 0
    %7291 = vmatpush1.bf16.msra.mxu0 0
    %7292 = vmatprep.subr.bf16.mxu0 0
    %7293 = vmatpush1.bf16.msra.mxu0 0
    %7294 = vmatprep.subr.bf16.mxu0 0
    %7295 = vmatpush1.bf16.msra.mxu0 0
    %7296 = vmatprep.subr.bf16.mxu0 0
    %7297 = vmatpush1.bf16.msra.mxu0 0
    %7298 = vmatprep.subr.bf16.mxu0 0
    %7299 = vmatpush1.bf16.msra.mxu0 %v3640
    %7300 = vmatprep.subr.bf16.mxu0 0
    %7301 = vmatpush2.bf16.msra.mxu0 0
    %7302 = vmatprep.subr.bf16.mxu0 0
    %7303 = vmatpush2.bf16.msra.mxu0 0
    %7304 = vmatprep.subr.bf16.mxu0 0
    %7305 = vmatpush2.bf16.msra.mxu0 0
    %7306 = vmatprep.subr.bf16.mxu0 0
    %7307 = vmatpush2.bf16.msra.mxu0 0
    %7308 = vmatprep.subr.bf16.mxu0 0
    %7309 = vmatpush2.bf16.msra.mxu0 0
    %7310 = vmatprep.subr.bf16.mxu0 0
    %7311 = vmatpush2.bf16.msra.mxu0 0
    %7312 = vmatprep.subr.bf16.mxu0 0
    %7313 = vmatpush2.bf16.msra.mxu0 0
    %7314 = vmatprep.subr.bf16.mxu0 0
    %7315 = vmatpush2.bf16.msra.mxu0 0
    %7316 = vmatprep.mubr.bf16.mxu0 0
    %7317 = vmatmul.mubr.bf16.gmra.mxu0 %v7282
    %v7318 = vpop.f32.mrf.mxu0
    %v7319 = vadd.f32 0.0, %v7318
    %v7320 = vpop.f32.mrf.mxu0
    %v7321 = vpop.f32.mrf.mxu0
    %v7322 = vpop.f32.mrf.mxu0
    %7323 = vdwg.mxu0
    %v7325 = vsel %vm573, %v6892, 0
    %7327 = vmatprep.subr.bf16.mxu0 0
    %7328 = vmatpush1.bf16.msra.mxu0 0
    %7329 = vmatprep.subr.bf16.mxu0 0
    %7330 = vmatpush1.bf16.msra.mxu0 0
    %7331 = vmatprep.subr.bf16.mxu0 0
    %7332 = vmatpush1.bf16.msra.mxu0 0
    %7333 = vmatprep.subr.bf16.mxu0 0
    %7334 = vmatpush1.bf16.msra.mxu0 0
    %7335 = vmatprep.subr.bf16.mxu0 0
    %7336 = vmatpush1.bf16.msra.mxu0 0
    %7337 = vmatprep.subr.bf16.mxu0 0
    %7338 = vmatpush1.bf16.msra.mxu0 0
    %7339 = vmatprep.subr.bf16.mxu0 0
    %7340 = vmatpush1.bf16.msra.mxu0 0
    %7341 = vmatprep.subr.bf16.mxu0 0
    %7342 = vmatpush1.bf16.msra.mxu0 %v3686
    %7343 = vmatprep.subr.bf16.mxu0 0
    %7344 = vmatpush2.bf16.msra.mxu0 0
    %7345 = vmatprep.subr.bf16.mxu0 0
    %7346 = vmatpush2.bf16.msra.mxu0 0
    %7347 = vmatprep.subr.bf16.mxu0 0
    %7348 = vmatpush2.bf16.msra.mxu0 0
    %7349 = vmatprep.subr.bf16.mxu0 0
    %7350 = vmatpush2.bf16.msra.mxu0 0
    %7351 = vmatprep.subr.bf16.mxu0 0
    %7352 = vmatpush2.bf16.msra.mxu0 0
    %7353 = vmatprep.subr.bf16.mxu0 0
    %7354 = vmatpush2.bf16.msra.mxu0 0
    %7355 = vmatprep.subr.bf16.mxu0 0
    %7356 = vmatpush2.bf16.msra.mxu0 0
    %7357 = vmatprep.subr.bf16.mxu0 0
    %7358 = vmatpush2.bf16.msra.mxu0 0
    %7359 = vmatprep.mubr.bf16.mxu0 0
    %7360 = vmatmul.mubr.bf16.gmra.mxu0 %v7325
    %v7361 = vpop.f32.mrf.mxu0
    %v7362 = vadd.f32 0.0, %v7361
    %v7363 = vpop.f32.mrf.mxu0
    %v7364 = vpop.f32.mrf.mxu0
    %v7365 = vpop.f32.mrf.mxu0
    %7366 = vdwg.mxu0
    %v7368 = vsel %vm573, %v6893, 0
    %7370 = vmatprep.subr.bf16.mxu0 0
    %7371 = vmatpush1.bf16.msra.mxu0 0
    %7372 = vmatprep.subr.bf16.mxu0 0
    %7373 = vmatpush1.bf16.msra.mxu0 0
    %7374 = vmatprep.subr.bf16.mxu0 0
    %7375 = vmatpush1.bf16.msra.mxu0 0
    %7376 = vmatprep.subr.bf16.mxu0 0
    %7377 = vmatpush1.bf16.msra.mxu0 0
    %7378 = vmatprep.subr.bf16.mxu0 0
    %7379 = vmatpush1.bf16.msra.mxu0 0
    %7380 = vmatprep.subr.bf16.mxu0 0
    %7381 = vmatpush1.bf16.msra.mxu0 0
    %7382 = vmatprep.subr.bf16.mxu0 0
    %7383 = vmatpush1.bf16.msra.mxu0 0
    %7384 = vmatprep.subr.bf16.mxu0 0
    %7385 = vmatpush1.bf16.msra.mxu0 %v3732
    %7386 = vmatprep.subr.bf16.mxu0 0
    %7387 = vmatpush2.bf16.msra.mxu0 0
    %7388 = vmatprep.subr.bf16.mxu0 0
    %7389 = vmatpush2.bf16.msra.mxu0 0
    %7390 = vmatprep.subr.bf16.mxu0 0
    %7391 = vmatpush2.bf16.msra.mxu0 0
    %7392 = vmatprep.subr.bf16.mxu0 0
    %7393 = vmatpush2.bf16.msra.mxu0 0
    %7394 = vmatprep.subr.bf16.mxu0 0
    %7395 = vmatpush2.bf16.msra.mxu0 0
    %7396 = vmatprep.subr.bf16.mxu0 0
    %7397 = vmatpush2.bf16.msra.mxu0 0
    %7398 = vmatprep.subr.bf16.mxu0 0
    %7399 = vmatpush2.bf16.msra.mxu0 0
    %7400 = vmatprep.subr.bf16.mxu0 0
    %7401 = vmatpush2.bf16.msra.mxu0 0
    %7402 = vmatprep.mubr.bf16.mxu0 0
    %7403 = vmatmul.mubr.bf16.gmra.mxu0 %v7368
    %v7404 = vpop.f32.mrf.mxu0
    %v7405 = vadd.f32 0.0, %v7404
    %v7406 = vpop.f32.mrf.mxu0
    %v7407 = vpop.f32.mrf.mxu0
    %v7408 = vpop.f32.mrf.mxu0
    %7409 = vdwg.mxu0
    %v7410 = vmul.f32 %v6932, %v1327
    %v7411 = vmul.f32 %v6975, %v1327
    %v7412 = vmul.f32 %v7018, %v1327
    %v7413 = vmul.f32 %v7061, %v1327
    %v7414 = vmul.f32 %v7104, %v1327
    %v7415 = vmul.f32 %v7147, %v1327
    %v7416 = vmul.f32 %v7190, %v1327
    %v7417 = vmul.f32 %v7233, %v1327
    %v7418 = vmul.f32 %v7276, %v1327
    %v7419 = vmul.f32 %v7319, %v1327
    %v7420 = vmul.f32 %v7362, %v1327
    %v7421 = vmul.f32 %v7405, %v1327
    %v7422 = vadd.f32 %v6210, %v7410
    %v7423 = vadd.f32 %v6211, %v7411
    %v7424 = vadd.f32 %v6212, %v7412
    %v7425 = vadd.f32 %v6213, %v7413
    %v7426 = vadd.f32 %v6214, %v7414
    %v7427 = vadd.f32 %v6215, %v7415
    %v7428 = vadd.f32 %v6216, %v7416
    %v7429 = vadd.f32 %v6217, %v7417
    %v7430 = vadd.f32 %v6218, %v7418
    %v7431 = vadd.f32 %v6219, %v7419
    %v7432 = vadd.f32 %v6220, %v7420
    %v7433 = vadd.f32 %v6221, %v7421
    %v7434 = vpack.c.bf16 %v7423, %v7422
    %v7435 = vpack.c.bf16 %v7425, %v7424
    %v7436 = vpack.c.bf16 %v7427, %v7426
    %v7437 = vpack.c.bf16 %v7429, %v7428
    %v7438 = vpack.c.bf16 %v7431, %v7430
    %v7439 = vpack.c.bf16 %v7433, %v7432
    %v7440 = vld [vmem:[%s1 + $0x120] sm:$0xf]
    %v7441 = vld [vmem:[%s1 + $0x124] sm:$0xf]
    %v7442 = vld [vmem:[%s1 + $0x128] sm:$0xf]
    %v7443 = vld [vmem:[%s1 + $0x12c] sm:$0xf]
    %v7444 = vlaneseq
    %v7445 = vshrl.u32 %v7444, 7
    %v7446 = vsub.s32 2, %v7445
    %v7447 = vrot.slane %v34, %v7446
    %v7452 = vunpack.c.l.b16 %v7440
    %v7453 = vunpack.c.l.b16 %v7441
    %v7454 = vunpack.c.l.b16 %v7442
    %v7455 = vunpack.c.l.b16 %v7443
    %v7456 = vpack.c.b16 %v7453, %v7452
    %v7457 = vpack.c.b16 %v7455, %v7454
    %v7461 = vsel %vm198, %v7434, 0
    %v7464 = vsel %vm198, %v7435, 0
    %v7467 = vsel %vm198, %v7436, 0
    %v7470 = vsel %vm198, %v7437, 0
    %v7473 = vsel %vm198, %v7438, 0
    %v7476 = vsel %vm198, %v7439, 0
    %7478 = vmatprep.subr.bf16.mxu0 0
    %7479 = vmatpush1.bf16.msra.mxu0 0
    %7480 = vmatprep.subr.bf16.mxu0 0
    %7481 = vmatpush1.bf16.msra.mxu0 0
    %7482 = vmatprep.subr.bf16.mxu0 0
    %7483 = vmatpush1.bf16.msra.mxu0 0
    %7484 = vmatprep.subr.bf16.mxu0 0
    %7485 = vmatpush1.bf16.msra.mxu0 0
    %7486 = vmatprep.subr.bf16.mxu0 0
    %7487 = vmatpush1.bf16.msra.mxu0 0
    %7488 = vmatprep.subr.bf16.mxu0 0
    %7489 = vmatpush1.bf16.msra.mxu0 0
    %7490 = vmatprep.subr.bf16.mxu0 0
    %7491 = vmatpush1.bf16.msra.mxu0 %v7457
    %7492 = vmatprep.subr.bf16.mxu0 0
    %7493 = vmatpush1.bf16.msra.mxu0 %v7456
    %7494 = vmatprep.subr.bf16.mxu0 0
    %7495 = vmatpush2.bf16.msra.mxu0 0
    %7496 = vmatprep.subr.bf16.mxu0 0
    %7497 = vmatpush2.bf16.msra.mxu0 0
    %7498 = vmatprep.subr.bf16.mxu0 0
    %7499 = vmatpush2.bf16.msra.mxu0 0
    %7500 = vmatprep.subr.bf16.mxu0 0
    %7501 = vmatpush2.bf16.msra.mxu0 0
    %7502 = vmatprep.subr.bf16.mxu0 0
    %7503 = vmatpush2.bf16.msra.mxu0 0
    %7504 = vmatprep.subr.bf16.mxu0 0
    %7505 = vmatpush2.bf16.msra.mxu0 0
    %7506 = vmatprep.subr.bf16.mxu0 0
    %7507 = vmatpush2.bf16.msra.mxu0 0
    %7508 = vmatprep.subr.bf16.mxu0 0
    %7509 = vmatpush2.bf16.msra.mxu0 0
    %7510 = vmatprep.mubr.bf16.mxu0 0
    %7511 = vmatmul.mubr.bf16.gmra.mxu0 %v7461
    %v7512 = vpop.f32.mrf.mxu0
    %v7513 = vadd.f32 %v7447, %v7512
    %v7514 = vpop.f32.mrf.mxu0
    %v7515 = vpop.f32.mrf.mxu0
    %v7516 = vadd.f32 %v7447, %v7515
    %v7517 = vpop.f32.mrf.mxu0
    %7518 = vmatprep.mubr.bf16.mxu0 0
    %7519 = vmatmul.mubr.bf16.gmra.mxu0 %v7464
    %v7520 = vpop.f32.mrf.mxu0
    %v7521 = vadd.f32 %v7447, %v7520
    %v7522 = vpop.f32.mrf.mxu0
    %v7523 = vpop.f32.mrf.mxu0
    %v7524 = vadd.f32 %v7447, %v7523
    %v7525 = vpop.f32.mrf.mxu0
    %7526 = vmatprep.mubr.bf16.mxu0 0
    %7527 = vmatmul.mubr.bf16.gmra.mxu0 %v7467
    %v7528 = vpop.f32.mrf.mxu0
    %v7529 = vadd.f32 %v7447, %v7528
    %v7530 = vpop.f32.mrf.mxu0
    %v7531 = vpop.f32.mrf.mxu0
    %v7532 = vadd.f32 %v7447, %v7531
    %v7533 = vpop.f32.mrf.mxu0
    %7534 = vmatprep.mubr.bf16.mxu0 0
    %7535 = vmatmul.mubr.bf16.gmra.mxu0 %v7470
    %v7536 = vpop.f32.mrf.mxu0
    %v7537 = vadd.f32 %v7447, %v7536
    %v7538 = vpop.f32.mrf.mxu0
    %v7539 = vpop.f32.mrf.mxu0
    %v7540 = vadd.f32 %v7447, %v7539
    %v7541 = vpop.f32.mrf.mxu0
    %7542 = vmatprep.mubr.bf16.mxu0 0
    %7543 = vmatmul.mubr.bf16.gmra.mxu0 %v7473
    %v7544 = vpop.f32.mrf.mxu0
    %v7545 = vadd.f32 %v7447, %v7544
    %v7546 = vpop.f32.mrf.mxu0
    %v7547 = vpop.f32.mrf.mxu0
    %v7548 = vadd.f32 %v7447, %v7547
    %v7549 = vpop.f32.mrf.mxu0
    %7550 = vmatprep.mubr.bf16.mxu0 0
    %7551 = vmatmul.mubr.bf16.gmra.mxu0 %v7476
    %v7552 = vpop.f32.mrf.mxu0
    %v7553 = vadd.f32 %v7447, %v7552
    %v7554 = vpop.f32.mrf.mxu0
    %v7555 = vpop.f32.mrf.mxu0
    %v7556 = vadd.f32 %v7447, %v7555
    %v7557 = vpop.f32.mrf.mxu0
    %7558 = vdwg.mxu0
    %v7559 = vadd.f32 %v1939, %v7513
    %v7560 = vadd.f32 %v1940, %v7516
    %v7561 = vadd.f32 %v1941, %v7521
    %v7562 = vadd.f32 %v1942, %v7524
    %v7563 = vadd.f32 %v1943, %v7529
    %v7564 = vadd.f32 %v1944, %v7532
    %v7565 = vadd.f32 %v1945, %v7537
    %v7566 = vadd.f32 %v1946, %v7540
    %v7567 = vadd.f32 %v1947, %v7545
    %v7568 = vadd.f32 %v1948, %v7548
    %v7569 = vadd.f32 %v1949, %v7553
    %v7570 = vadd.f32 %v1950, %v7556
    %v7571 = vsel %vm198, %v7559, 0.0
    %7572 = vadd.xlane.f32.xlu0 %v7571
    %v7573 = vpop.xlane.xlu0 %7572
    %v7574 = vsel %vm198, %v7560, 0.0
    %7575 = vadd.xlane.f32.xlu0 %v7574
    %v7576 = vpop.xlane.xlu0 %7575
    %v7577 = vsel %vm198, %v7561, 0.0
    %7578 = vadd.xlane.f32.xlu0 %v7577
    %v7579 = vpop.xlane.xlu0 %7578
    %v7580 = vsel %vm198, %v7562, 0.0
    %7581 = vadd.xlane.f32.xlu0 %v7580
    %v7582 = vpop.xlane.xlu0 %7581
    %v7583 = vsel %vm198, %v7563, 0.0
    %7584 = vadd.xlane.f32.xlu0 %v7583
    %v7585 = vpop.xlane.xlu0 %7584
    %v7586 = vsel %vm198, %v7564, 0.0
    %7587 = vadd.xlane.f32.xlu0 %v7586
    %v7588 = vpop.xlane.xlu0 %7587
    %v7589 = vsel %vm198, %v7565, 0.0
    %7590 = vadd.xlane.f32.xlu0 %v7589
    %v7591 = vpop.xlane.xlu0 %7590
    %v7592 = vsel %vm198, %v7566, 0.0
    %7593 = vadd.xlane.f32.xlu0 %v7592
    %v7594 = vpop.xlane.xlu0 %7593
    %v7595 = vsel %vm198, %v7567, 0.0
    %7596 = vadd.xlane.f32.xlu0 %v7595
    %v7597 = vpop.xlane.xlu0 %7596
    %v7598 = vsel %vm198, %v7568, 0.0
    %7599 = vadd.xlane.f32.xlu0 %v7598
    %v7600 = vpop.xlane.xlu0 %7599
    %v7601 = vsel %vm198, %v7569, 0.0
    %7602 = vadd.xlane.f32.xlu0 %v7601
    %v7603 = vpop.xlane.xlu0 %7602
    %v7604 = vsel %vm198, %v7570, 0.0
    %7605 = vadd.xlane.f32.xlu0 %v7604
    %v7606 = vpop.xlane.xlu0 %7605
    %v7607 = vmul.f32 %v7573, %v205
    %v7608 = vmul.f32 %v7576, %v205
    %v7609 = vmul.f32 %v7579, %v205
    %v7610 = vmul.f32 %v7582, %v205
    %v7611 = vmul.f32 %v7585, %v205
    %v7612 = vmul.f32 %v7588, %v205
    %v7613 = vmul.f32 %v7591, %v205
    %v7614 = vmul.f32 %v7594, %v205
    %v7615 = vmul.f32 %v7597, %v205
    %v7616 = vmul.f32 %v7600, %v205
    %v7617 = vmul.f32 %v7603, %v205
    %v7618 = vmul.f32 %v7606, %v205
    %v7619 = vsub.f32 %v7559, %v7607
    %v7620 = vsub.f32 %v7560, %v7608
    %v7621 = vsub.f32 %v7561, %v7609
    %v7622 = vsub.f32 %v7562, %v7610
    %v7623 = vsub.f32 %v7563, %v7611
    %v7624 = vsub.f32 %v7564, %v7612
    %v7625 = vsub.f32 %v7565, %v7613
    %v7626 = vsub.f32 %v7566, %v7614
    %v7627 = vsub.f32 %v7567, %v7615
    %v7628 = vsub.f32 %v7568, %v7616
    %v7629 = vsub.f32 %v7569, %v7617
    %v7630 = vsub.f32 %v7570, %v7618
    %v7631 = vmul.f32 %v7619, %v7619
    %v7632 = vmul.f32 %v7620, %v7620
    %v7633 = vmul.f32 %v7621, %v7621
    %v7634 = vmul.f32 %v7622, %v7622
    %v7635 = vmul.f32 %v7623, %v7623
    %v7636 = vmul.f32 %v7624, %v7624
    %v7637 = vmul.f32 %v7625, %v7625
    %v7638 = vmul.f32 %v7626, %v7626
    %v7639 = vmul.f32 %v7627, %v7627
    %v7640 = vmul.f32 %v7628, %v7628
    %v7641 = vmul.f32 %v7629, %v7629
    %v7642 = vmul.f32 %v7630, %v7630
    %v7643 = vsel %vm198, %v7631, 0.0
    %7644 = vadd.xlane.f32.xlu0 %v7643
    %v7645 = vpop.xlane.xlu0 %7644
    %v7646 = vsel %vm198, %v7632, 0.0
    %7647 = vadd.xlane.f32.xlu0 %v7646
    %v7648 = vpop.xlane.xlu0 %7647
    %v7649 = vsel %vm198, %v7633, 0.0
    %7650 = vadd.xlane.f32.xlu0 %v7649
    %v7651 = vpop.xlane.xlu0 %7650
    %v7652 = vsel %vm198, %v7634, 0.0
    %7653 = vadd.xlane.f32.xlu0 %v7652
    %v7654 = vpop.xlane.xlu0 %7653
    %v7655 = vsel %vm198, %v7635, 0.0
    %7656 = vadd.xlane.f32.xlu0 %v7655
    %v7657 = vpop.xlane.xlu0 %7656
    %v7658 = vsel %vm198, %v7636, 0.0
    %7659 = vadd.xlane.f32.xlu0 %v7658
    %v7660 = vpop.xlane.xlu0 %7659
    %v7661 = vsel %vm198, %v7637, 0.0
    %7662 = vadd.xlane.f32.xlu0 %v7661
    %v7663 = vpop.xlane.xlu0 %7662
    %v7664 = vsel %vm198, %v7638, 0.0
    %7665 = vadd.xlane.f32.xlu0 %v7664
    %v7666 = vpop.xlane.xlu0 %7665
    %v7667 = vsel %vm198, %v7639, 0.0
    %7668 = vadd.xlane.f32.xlu0 %v7667
    %v7669 = vpop.xlane.xlu0 %7668
    %v7670 = vsel %vm198, %v7640, 0.0
    %7671 = vadd.xlane.f32.xlu0 %v7670
    %v7672 = vpop.xlane.xlu0 %7671
    %v7673 = vsel %vm198, %v7641, 0.0
    %7674 = vadd.xlane.f32.xlu0 %v7673
    %v7675 = vpop.xlane.xlu0 %7674
    %v7676 = vsel %vm198, %v7642, 0.0
    %7677 = vadd.xlane.f32.xlu0 %v7676
    %v7678 = vpop.xlane.xlu0 %7677
    %v7679 = vmul.f32 %v7645, %v205
    %v7680 = vmul.f32 %v7648, %v205
    %v7681 = vmul.f32 %v7651, %v205
    %v7682 = vmul.f32 %v7654, %v205
    %v7683 = vmul.f32 %v7657, %v205
    %v7684 = vmul.f32 %v7660, %v205
    %v7685 = vmul.f32 %v7663, %v205
    %v7686 = vmul.f32 %v7666, %v205
    %v7687 = vmul.f32 %v7669, %v205
    %v7688 = vmul.f32 %v7672, %v205
    %v7689 = vmul.f32 %v7675, %v205
    %v7690 = vmul.f32 %v7678, %v205
    %v7691 = vadd.f32 %v7679, 1e-05
    %v7692 = vadd.f32 %v7680, 1e-05
    %v7693 = vadd.f32 %v7681, 1e-05
    %v7694 = vadd.f32 %v7682, 1e-05
    %v7695 = vadd.f32 %v7683, 1e-05
    %v7696 = vadd.f32 %v7684, 1e-05
    %v7697 = vadd.f32 %v7685, 1e-05
    %v7698 = vadd.f32 %v7686, 1e-05
    %v7699 = vadd.f32 %v7687, 1e-05
    %v7700 = vadd.f32 %v7688, 1e-05
    %v7701 = vadd.f32 %v7689, 1e-05
    %v7702 = vadd.f32 %v7690, 1e-05
    %v7703 = vrsqrt.pop %v7691
    %v7704 = vrsqrt.pop %v7692
    %v7705 = vrsqrt.pop %v7693
    %v7706 = vrsqrt.pop %v7694
    %v7707 = vrsqrt.pop %v7695
    %v7708 = vrsqrt.pop %v7696
    %v7709 = vrsqrt.pop %v7697
    %v7710 = vrsqrt.pop %v7698
    %v7711 = vrsqrt.pop %v7699
    %v7712 = vrsqrt.pop %v7700
    %v7713 = vrsqrt.pop %v7701
    %v7714 = vrsqrt.pop %v7702
    %v7715 = vmul.f32 %v7619, %v7703
    %v7716 = vmul.f32 %v7620, %v7704
    %v7717 = vmul.f32 %v7621, %v7705
    %v7718 = vmul.f32 %v7622, %v7706
    %v7719 = vmul.f32 %v7623, %v7707
    %v7720 = vmul.f32 %v7624, %v7708
    %v7721 = vmul.f32 %v7625, %v7709
    %v7722 = vmul.f32 %v7626, %v7710
    %v7723 = vmul.f32 %v7627, %v7711
    %v7724 = vmul.f32 %v7628, %v7712
    %v7725 = vmul.f32 %v7629, %v7713
    %v7726 = vmul.f32 %v7630, %v7714
    %v7727 = vlaneseq
    %v7728 = vshrl.u32 %v7727, 7
    %v7729 = vsub.s32 3, %v7728
    %v7730 = vrot.slane %v34, %v7729
    %v7731 = vmul.f32 %v7715, %v7730
    %v7732 = vmul.f32 %v7716, %v7730
    %v7733 = vmul.f32 %v7717, %v7730
    %v7734 = vmul.f32 %v7718, %v7730
    %v7735 = vmul.f32 %v7719, %v7730
    %v7736 = vmul.f32 %v7720, %v7730
    %v7737 = vmul.f32 %v7721, %v7730
    %v7738 = vmul.f32 %v7722, %v7730
    %v7739 = vmul.f32 %v7723, %v7730
    %v7740 = vmul.f32 %v7724, %v7730
    %v7741 = vmul.f32 %v7725, %v7730
    %v7742 = vmul.f32 %v7726, %v7730
    %v7743 = vlaneseq
    %v7744 = vshrl.u32 %v7743, 7
    %v7745 = vsub.s32 4, %v7744
    %v7746 = vrot.slane %v34, %v7745
    %v7747 = vadd.f32 %v7731, %v7746
    %v7748 = vadd.f32 %v7732, %v7746
    %v7749 = vadd.f32 %v7733, %v7746
    %v7750 = vadd.f32 %v7734, %v7746
    %v7751 = vadd.f32 %v7735, %v7746
    %v7752 = vadd.f32 %v7736, %v7746
    %v7753 = vadd.f32 %v7737, %v7746
    %v7754 = vadd.f32 %v7738, %v7746
    %v7755 = vadd.f32 %v7739, %v7746
    %v7756 = vadd.f32 %v7740, %v7746
    %v7757 = vadd.f32 %v7741, %v7746
    %v7758 = vadd.f32 %v7742, %v7746
    %v7759 = vpack.c.bf16 %v7748, %v7747
    %v7760 = vpack.c.bf16 %v7750, %v7749
    %v7761 = vpack.c.bf16 %v7752, %v7751
    %v7762 = vpack.c.bf16 %v7754, %v7753
    %v7763 = vpack.c.bf16 %v7756, %v7755
    %v7764 = vpack.c.bf16 %v7758, %v7757
    %v7765 = vld [vmem:[%s2 + $0x10] sm:$0xf]
    %v7766 = vld [vmem:[%s2 + $0x14] sm:$0xf]
    %v7767 = vld [vmem:[%s2 + $0x18] sm:$0xf]
    %v7768 = vld [vmem:[%s2 + $0x1c] sm:$0xf]
    %v7769 = vld [vmem:[%s4 + $0x1] sm:$0x1]
    %v7770 = vlaneseq
    %v7771 = vshrl.u32 %v7770, 7
    %v7772 = vsub.s32 0, %v7771
    %v7773 = vrot.slane %v7769, %v7772
    %v7778 = vunpack.c.l.b16 %v7765
    %v7779 = vunpack.c.l.b16 %v7766
    %v7780 = vunpack.c.l.b16 %v7767
    %v7781 = vunpack.c.l.b16 %v7768
    %v7782 = vpack.c.b16 %v7779, %v7778
    %v7783 = vpack.c.b16 %v7781, %v7780
    %v7787 = vsel %vm198, %v7759, 0
    %v7790 = vsel %vm198, %v7760, 0
    %v7793 = vsel %vm198, %v7761, 0
    %v7796 = vsel %vm198, %v7762, 0
    %v7799 = vsel %vm198, %v7763, 0
    %v7802 = vsel %vm198, %v7764, 0
    %7804 = vmatprep.subr.bf16.mxu0 0
    %7805 = vmatpush1.bf16.msra.mxu0 0
    %7806 = vmatprep.subr.bf16.mxu0 0
    %7807 = vmatpush1.bf16.msra.mxu0 0
    %7808 = vmatprep.subr.bf16.mxu0 0
    %7809 = vmatpush1.bf16.msra.mxu0 0
    %7810 = vmatprep.subr.bf16.mxu0 0
    %7811 = vmatpush1.bf16.msra.mxu0 0
    %7812 = vmatprep.subr.bf16.mxu0 0
    %7813 = vmatpush1.bf16.msra.mxu0 0
    %7814 = vmatprep.subr.bf16.mxu0 0
    %7815 = vmatpush1.bf16.msra.mxu0 0
    %7816 = vmatprep.subr.bf16.mxu0 0
    %7817 = vmatpush1.bf16.msra.mxu0 %v7783
    %7818 = vmatprep.subr.bf16.mxu0 0
    %7819 = vmatpush1.bf16.msra.mxu0 %v7782
    %7820 = vmatprep.subr.bf16.mxu0 0
    %7821 = vmatpush2.bf16.msra.mxu0 0
    %7822 = vmatprep.subr.bf16.mxu0 0
    %7823 = vmatpush2.bf16.msra.mxu0 0
    %7824 = vmatprep.subr.bf16.mxu0 0
    %7825 = vmatpush2.bf16.msra.mxu0 0
    %7826 = vmatprep.subr.bf16.mxu0 0
    %7827 = vmatpush2.bf16.msra.mxu0 0
    %7828 = vmatprep.subr.bf16.mxu0 0
    %7829 = vmatpush2.bf16.msra.mxu0 0
    %7830 = vmatprep.subr.bf16.mxu0 0
    %7831 = vmatpush2.bf16.msra.mxu0 0
    %7832 = vmatprep.subr.bf16.mxu0 0
    %7833 = vmatpush2.bf16.msra.mxu0 0
    %7834 = vmatprep.subr.bf16.mxu0 0
    %7835 = vmatpush2.bf16.msra.mxu0 0
    %7836 = vmatprep.mubr.bf16.mxu0 0
    %7837 = vmatmul.mubr.bf16.gmra.mxu0 %v7787
    %v7838 = vpop.f32.mrf.mxu0
    %v7839 = vadd.f32 %v7773, %v7838
    %v7840 = vpop.f32.mrf.mxu0
    %v7841 = vpop.f32.mrf.mxu0
    %v7842 = vadd.f32 %v7773, %v7841
    %v7843 = vpop.f32.mrf.mxu0
    %7844 = vmatprep.mubr.bf16.mxu0 0
    %7845 = vmatmul.mubr.bf16.gmra.mxu0 %v7790
    %v7846 = vpop.f32.mrf.mxu0
    %v7847 = vadd.f32 %v7773, %v7846
    %v7848 = vpop.f32.mrf.mxu0
    %v7849 = vpop.f32.mrf.mxu0
    %v7850 = vadd.f32 %v7773, %v7849
    %v7851 = vpop.f32.mrf.mxu0
    %7852 = vmatprep.mubr.bf16.mxu0 0
    %7853 = vmatmul.mubr.bf16.gmra.mxu0 %v7793
    %v7854 = vpop.f32.mrf.mxu0
    %v7855 = vadd.f32 %v7773, %v7854
    %v7856 = vpop.f32.mrf.mxu0
    %v7857 = vpop.f32.mrf.mxu0
    %v7858 = vadd.f32 %v7773, %v7857
    %v7859 = vpop.f32.mrf.mxu0
    %7860 = vmatprep.mubr.bf16.mxu0 0
    %7861 = vmatmul.mubr.bf16.gmra.mxu0 %v7796
    %v7862 = vpop.f32.mrf.mxu0
    %v7863 = vadd.f32 %v7773, %v7862
    %v7864 = vpop.f32.mrf.mxu0
    %v7865 = vpop.f32.mrf.mxu0
    %v7866 = vadd.f32 %v7773, %v7865
    %v7867 = vpop.f32.mrf.mxu0
    %7868 = vmatprep.mubr.bf16.mxu0 0
    %7869 = vmatmul.mubr.bf16.gmra.mxu0 %v7799
    %v7870 = vpop.f32.mrf.mxu0
    %v7871 = vadd.f32 %v7773, %v7870
    %v7872 = vpop.f32.mrf.mxu0
    %v7873 = vpop.f32.mrf.mxu0
    %v7874 = vadd.f32 %v7773, %v7873
    %v7875 = vpop.f32.mrf.mxu0
    %7876 = vmatprep.mubr.bf16.mxu0 0
    %7877 = vmatmul.mubr.bf16.gmra.mxu0 %v7802
    %v7878 = vpop.f32.mrf.mxu0
    %v7879 = vadd.f32 %v7773, %v7878
    %v7880 = vpop.f32.mrf.mxu0
    %v7881 = vpop.f32.mrf.mxu0
    %v7882 = vadd.f32 %v7773, %v7881
    %v7883 = vpop.f32.mrf.mxu0
    %7884 = vdwg.mxu0
    %v7885 = vmul.f32 %v7839, 1.702
    %v7886 = vmul.f32 %v7842, 1.702
    %v7887 = vmul.f32 %v7847, 1.702
    %v7888 = vmul.f32 %v7850, 1.702
    %v7889 = vmul.f32 %v7855, 1.702
    %v7890 = vmul.f32 %v7858, 1.702
    %v7891 = vmul.f32 %v7863, 1.702
    %v7892 = vmul.f32 %v7866, 1.702
    %v7893 = vmul.f32 %v7871, 1.702
    %v7894 = vmul.f32 %v7874, 1.702
    %v7895 = vmul.f32 %v7879, 1.702
    %v7896 = vmul.f32 %v7882, 1.702
    %v7897 = vxor.u32 %v7885, 2147483648
    %v7898 = vxor.u32 %v7886, 2147483648
    %v7899 = vxor.u32 %v7887, 2147483648
    %v7900 = vxor.u32 %v7888, 2147483648
    %v7901 = vxor.u32 %v7889, 2147483648
    %v7902 = vxor.u32 %v7890, 2147483648
    %v7903 = vxor.u32 %v7891, 2147483648
    %v7904 = vxor.u32 %v7892, 2147483648
    %v7905 = vxor.u32 %v7893, 2147483648
    %v7906 = vxor.u32 %v7894, 2147483648
    %v7907 = vxor.u32 %v7895, 2147483648
    %v7908 = vxor.u32 %v7896, 2147483648
    %v7909 = vmul.f32 %v7897, 1.442695
    %v7910 = vpow.pop %v7909
    %v7911 = vmul.f32 %v7898, 1.442695
    %v7912 = vpow.pop %v7911
    %v7913 = vmul.f32 %v7899, 1.442695
    %v7914 = vpow.pop %v7913
    %v7915 = vmul.f32 %v7900, 1.442695
    %v7916 = vpow.pop %v7915
    %v7917 = vmul.f32 %v7901, 1.442695
    %v7918 = vpow.pop %v7917
    %v7919 = vmul.f32 %v7902, 1.442695
    %v7920 = vpow.pop %v7919
    %v7921 = vmul.f32 %v7903, 1.442695
    %v7922 = vpow.pop %v7921
    %v7923 = vmul.f32 %v7904, 1.442695
    %v7924 = vpow.pop %v7923
    %v7925 = vmul.f32 %v7905, 1.442695
    %v7926 = vpow.pop %v7925
    %v7927 = vmul.f32 %v7906, 1.442695
    %v7928 = vpow.pop %v7927
    %v7929 = vmul.f32 %v7907, 1.442695
    %v7930 = vpow.pop %v7929
    %v7931 = vmul.f32 %v7908, 1.442695
    %v7932 = vpow.pop %v7931
    %v7933 = vadd.f32 %v7910, 1.0
    %v7934 = vadd.f32 %v7912, 1.0
    %v7935 = vadd.f32 %v7914, 1.0
    %v7936 = vadd.f32 %v7916, 1.0
    %v7937 = vadd.f32 %v7918, 1.0
    %v7938 = vadd.f32 %v7920, 1.0
    %v7939 = vadd.f32 %v7922, 1.0
    %v7940 = vadd.f32 %v7924, 1.0
    %v7941 = vadd.f32 %v7926, 1.0
    %v7942 = vadd.f32 %v7928, 1.0
    %v7943 = vadd.f32 %v7930, 1.0
    %v7944 = vadd.f32 %v7932, 1.0
    %v7945 = vrcp.pop %v7933
    %v7946 = vmul.f32 1.0, %v7945
    %v7947 = vrcp.pop %v7934
    %v7948 = vmul.f32 1.0, %v7947
    %v7949 = vrcp.pop %v7935
    %v7950 = vmul.f32 1.0, %v7949
    %v7951 = vrcp.pop %v7936
    %v7952 = vmul.f32 1.0, %v7951
    %v7953 = vrcp.pop %v7937
    %v7954 = vmul.f32 1.0, %v7953
    %v7955 = vrcp.pop %v7938
    %v7956 = vmul.f32 1.0, %v7955
    %v7957 = vrcp.pop %v7939
    %v7958 = vmul.f32 1.0, %v7957
    %v7959 = vrcp.pop %v7940
    %v7960 = vmul.f32 1.0, %v7959
    %v7961 = vrcp.pop %v7941
    %v7962 = vmul.f32 1.0, %v7961
    %v7963 = vrcp.pop %v7942
    %v7964 = vmul.f32 1.0, %v7963
    %v7965 = vrcp.pop %v7943
    %v7966 = vmul.f32 1.0, %v7965
    %v7967 = vrcp.pop %v7944
    %v7968 = vmul.f32 1.0, %v7967
    %v7969 = vmul.f32 %v7839, %v7946
    %v7970 = vmul.f32 %v7842, %v7948
    %v7971 = vmul.f32 %v7847, %v7950
    %v7972 = vmul.f32 %v7850, %v7952
    %v7973 = vmul.f32 %v7855, %v7954
    %v7974 = vmul.f32 %v7858, %v7956
    %v7975 = vmul.f32 %v7863, %v7958
    %v7976 = vmul.f32 %v7866, %v7960
    %v7977 = vmul.f32 %v7871, %v7962
    %v7978 = vmul.f32 %v7874, %v7964
    %v7979 = vmul.f32 %v7879, %v7966
    %v7980 = vmul.f32 %v7882, %v7968
    %v7981 = vpack.c.bf16 %v7970, %v7969
    %v7982 = vpack.c.bf16 %v7972, %v7971
    %v7983 = vpack.c.bf16 %v7974, %v7973
    %v7984 = vpack.c.bf16 %v7976, %v7975
    %v7985 = vpack.c.bf16 %v7978, %v7977
    %v7986 = vpack.c.bf16 %v7980, %v7979
    %v7987 = vld [vmem:[%s1 + $0x130] sm:$0xf]
    %v7988 = vld [vmem:[%s1 + $0x134] sm:$0xf]
    %v7989 = vld [vmem:[%s1 + $0x138] sm:$0xf]
    %v7990 = vld [vmem:[%s1 + $0x13c] sm:$0xf]
    %v7991 = vld [vmem:[%s1 + $0x140] sm:$0xf]
    %v7992 = vld [vmem:[%s1 + $0x144] sm:$0xf]
    %v7993 = vld [vmem:[%s1 + $0x148] sm:$0xf]
    %v7994 = vld [vmem:[%s1 + $0x14c] sm:$0xf]
    %v7995 = vld [vmem:[%s1 + $0x150] sm:$0xf]
    %v7996 = vld [vmem:[%s1 + $0x154] sm:$0xf]
    %v7997 = vld [vmem:[%s1 + $0x158] sm:$0xf]
    %v7998 = vld [vmem:[%s1 + $0x15c] sm:$0xf]
    %v7999 = vld [vmem:[%s1 + $0x160] sm:$0xf]
    %v8000 = vld [vmem:[%s1 + $0x164] sm:$0xf]
    %v8001 = vld [vmem:[%s1 + $0x168] sm:$0xf]
    %v8002 = vld [vmem:[%s1 + $0x16c] sm:$0xf]
    %v8003 = vlaneseq
    %v8004 = vshrl.u32 %v8003, 7
    %v8005 = vsub.s32 5, %v8004
    %v8006 = vrot.slane %v34, %v8005
    %v8023 = vunpack.c.l.b16 %v7987
    %v8024 = vunpack.c.l.b16 %v7988
    %v8025 = vunpack.c.l.b16 %v7989
    %v8026 = vunpack.c.l.b16 %v7990
    %v8027 = vunpack.c.l.b16 %v7991
    %v8028 = vunpack.c.l.b16 %v7992
    %v8029 = vunpack.c.l.b16 %v7993
    %v8030 = vunpack.c.l.b16 %v7994
    %v8031 = vunpack.c.l.b16 %v7995
    %v8032 = vunpack.c.l.b16 %v7996
    %v8033 = vunpack.c.l.b16 %v7997
    %v8034 = vunpack.c.l.b16 %v7998
    %v8035 = vunpack.c.l.b16 %v7999
    %v8036 = vunpack.c.l.b16 %v8000
    %v8037 = vunpack.c.l.b16 %v8001
    %v8038 = vunpack.c.l.b16 %v8002
    %v8039 = vpack.c.b16 %v8024, %v8023
    %v8040 = vpack.c.b16 %v8026, %v8025
    %v8041 = vpack.c.b16 %v8028, %v8027
    %v8042 = vpack.c.b16 %v8030, %v8029
    %v8043 = vpack.c.b16 %v8032, %v8031
    %v8044 = vpack.c.b16 %v8034, %v8033
    %v8045 = vpack.c.b16 %v8036, %v8035
    %v8046 = vpack.c.b16 %v8038, %v8037
    %8055 = vmatprep.subr.bf16.mxu0 0
    %8056 = vmatpush1.bf16.msra.mxu0 %v8046
    %8057 = vmatprep.subr.bf16.mxu0 0
    %8058 = vmatpush1.bf16.msra.mxu0 %v8045
    %8059 = vmatprep.subr.bf16.mxu0 0
    %8060 = vmatpush1.bf16.msra.mxu0 %v8044
    %8061 = vmatprep.subr.bf16.mxu0 0
    %8062 = vmatpush1.bf16.msra.mxu0 %v8043
    %8063 = vmatprep.subr.bf16.mxu0 0
    %8064 = vmatpush1.bf16.msra.mxu0 %v8042
    %8065 = vmatprep.subr.bf16.mxu0 0
    %8066 = vmatpush1.bf16.msra.mxu0 %v8041
    %8067 = vmatprep.subr.bf16.mxu0 0
    %8068 = vmatpush1.bf16.msra.mxu0 %v8040
    %8069 = vmatprep.subr.bf16.mxu0 0
    %8070 = vmatpush1.bf16.msra.mxu0 %v8039
    %8071 = vmatprep.subr.bf16.mxu0 0
    %8072 = vmatpush2.bf16.msra.mxu0 0
    %8073 = vmatprep.subr.bf16.mxu0 0
    %8074 = vmatpush2.bf16.msra.mxu0 0
    %8075 = vmatprep.subr.bf16.mxu0 0
    %8076 = vmatpush2.bf16.msra.mxu0 0
    %8077 = vmatprep.subr.bf16.mxu0 0
    %8078 = vmatpush2.bf16.msra.mxu0 0
    %8079 = vmatprep.subr.bf16.mxu0 0
    %8080 = vmatpush2.bf16.msra.mxu0 0
    %8081 = vmatprep.subr.bf16.mxu0 0
    %8082 = vmatpush2.bf16.msra.mxu0 0
    %8083 = vmatprep.subr.bf16.mxu0 0
    %8084 = vmatpush2.bf16.msra.mxu0 0
    %8085 = vmatprep.subr.bf16.mxu0 0
    %8086 = vmatpush2.bf16.msra.mxu0 0
    %8087 = vmatprep.mubr.bf16.mxu0 0
    %8088 = vmatmul.mubr.bf16.gmra.mxu0 %v7981
    %v8089 = vpop.f32.mrf.mxu0
    %v8090 = vadd.f32 %v8006, %v8089
    %v8091 = vpop.f32.mrf.mxu0
    %v8092 = vpop.f32.mrf.mxu0
    %v8093 = vadd.f32 %v8006, %v8092
    %v8094 = vpop.f32.mrf.mxu0
    %8095 = vmatprep.mubr.bf16.mxu0 0
    %8096 = vmatmul.mubr.bf16.gmra.mxu0 %v7982
    %v8097 = vpop.f32.mrf.mxu0
    %v8098 = vadd.f32 %v8006, %v8097
    %v8099 = vpop.f32.mrf.mxu0
    %v8100 = vpop.f32.mrf.mxu0
    %v8101 = vadd.f32 %v8006, %v8100
    %v8102 = vpop.f32.mrf.mxu0
    %8103 = vmatprep.mubr.bf16.mxu0 0
    %8104 = vmatmul.mubr.bf16.gmra.mxu0 %v7983
    %v8105 = vpop.f32.mrf.mxu0
    %v8106 = vadd.f32 %v8006, %v8105
    %v8107 = vpop.f32.mrf.mxu0
    %v8108 = vpop.f32.mrf.mxu0
    %v8109 = vadd.f32 %v8006, %v8108
    %v8110 = vpop.f32.mrf.mxu0
    %8111 = vmatprep.mubr.bf16.mxu0 0
    %8112 = vmatmul.mubr.bf16.gmra.mxu0 %v7984
    %v8113 = vpop.f32.mrf.mxu0
    %v8114 = vadd.f32 %v8006, %v8113
    %v8115 = vpop.f32.mrf.mxu0
    %v8116 = vpop.f32.mrf.mxu0
    %v8117 = vadd.f32 %v8006, %v8116
    %v8118 = vpop.f32.mrf.mxu0
    %8119 = vmatprep.mubr.bf16.mxu0 0
    %8120 = vmatmul.mubr.bf16.gmra.mxu0 %v7985
    %v8121 = vpop.f32.mrf.mxu0
    %v8122 = vadd.f32 %v8006, %v8121
    %v8123 = vpop.f32.mrf.mxu0
    %v8124 = vpop.f32.mrf.mxu0
    %v8125 = vadd.f32 %v8006, %v8124
    %v8126 = vpop.f32.mrf.mxu0
    %8127 = vmatprep.mubr.bf16.mxu0 0
    %8128 = vmatmul.mubr.bf16.gmra.mxu0 %v7986
    %v8129 = vpop.f32.mrf.mxu0
    %v8130 = vadd.f32 %v8006, %v8129
    %v8131 = vpop.f32.mrf.mxu0
    %v8132 = vpop.f32.mrf.mxu0
    %v8133 = vadd.f32 %v8006, %v8132
    %v8134 = vpop.f32.mrf.mxu0
    %8135 = vdwg.mxu0
    %v8136 = vadd.f32 %v7559, %v8090
    %v8137 = vadd.f32 %v7560, %v8093
    %v8138 = vadd.f32 %v7561, %v8098
    %v8139 = vadd.f32 %v7562, %v8101
    %v8140 = vadd.f32 %v7563, %v8106
    %v8141 = vadd.f32 %v7564, %v8109
    %v8142 = vadd.f32 %v7565, %v8114
    %v8143 = vadd.f32 %v7566, %v8117
    %v8144 = vadd.f32 %v7567, %v8122
    %v8145 = vadd.f32 %v7568, %v8125
    %v8146 = vadd.f32 %v7569, %v8130
    %v8147 = vadd.f32 %v7570, %v8133
    %v8148 = vsel %vm198, %v8136, 0.0
    %8149 = vadd.xlane.f32.xlu0 %v8148
    %v8150 = vpop.xlane.xlu0 %8149
    %v8151 = vsel %vm198, %v8137, 0.0
    %8152 = vadd.xlane.f32.xlu0 %v8151
    %v8153 = vpop.xlane.xlu0 %8152
    %v8154 = vsel %vm198, %v8138, 0.0
    %8155 = vadd.xlane.f32.xlu0 %v8154
    %v8156 = vpop.xlane.xlu0 %8155
    %v8157 = vsel %vm198, %v8139, 0.0
    %8158 = vadd.xlane.f32.xlu0 %v8157
    %v8159 = vpop.xlane.xlu0 %8158
    %v8160 = vsel %vm198, %v8140, 0.0
    %8161 = vadd.xlane.f32.xlu0 %v8160
    %v8162 = vpop.xlane.xlu0 %8161
    %v8163 = vsel %vm198, %v8141, 0.0
    %8164 = vadd.xlane.f32.xlu0 %v8163
    %v8165 = vpop.xlane.xlu0 %8164
    %v8166 = vsel %vm198, %v8142, 0.0
    %8167 = vadd.xlane.f32.xlu0 %v8166
    %v8168 = vpop.xlane.xlu0 %8167
    %v8169 = vsel %vm198, %v8143, 0.0
    %8170 = vadd.xlane.f32.xlu0 %v8169
    %v8171 = vpop.xlane.xlu0 %8170
    %v8172 = vsel %vm198, %v8144, 0.0
    %8173 = vadd.xlane.f32.xlu0 %v8172
    %v8174 = vpop.xlane.xlu0 %8173
    %v8175 = vsel %vm198, %v8145, 0.0
    %8176 = vadd.xlane.f32.xlu0 %v8175
    %v8177 = vpop.xlane.xlu0 %8176
    %v8178 = vsel %vm198, %v8146, 0.0
    %8179 = vadd.xlane.f32.xlu0 %v8178
    %v8180 = vpop.xlane.xlu0 %8179
    %v8181 = vsel %vm198, %v8147, 0.0
    %8182 = vadd.xlane.f32.xlu0 %v8181
    %v8183 = vpop.xlane.xlu0 %8182
    %v8184 = vmul.f32 %v8150, %v205
    %v8185 = vmul.f32 %v8153, %v205
    %v8186 = vmul.f32 %v8156, %v205
    %v8187 = vmul.f32 %v8159, %v205
    %v8188 = vmul.f32 %v8162, %v205
    %v8189 = vmul.f32 %v8165, %v205
    %v8190 = vmul.f32 %v8168, %v205
    %v8191 = vmul.f32 %v8171, %v205
    %v8192 = vmul.f32 %v8174, %v205
    %v8193 = vmul.f32 %v8177, %v205
    %v8194 = vmul.f32 %v8180, %v205
    %v8195 = vmul.f32 %v8183, %v205
    %v8196 = vsub.f32 %v8136, %v8184
    %v8197 = vsub.f32 %v8137, %v8185
    %v8198 = vsub.f32 %v8138, %v8186
    %v8199 = vsub.f32 %v8139, %v8187
    %v8200 = vsub.f32 %v8140, %v8188
    %v8201 = vsub.f32 %v8141, %v8189
    %v8202 = vsub.f32 %v8142, %v8190
    %v8203 = vsub.f32 %v8143, %v8191
    %v8204 = vsub.f32 %v8144, %v8192
    %v8205 = vsub.f32 %v8145, %v8193
    %v8206 = vsub.f32 %v8146, %v8194
    %v8207 = vsub.f32 %v8147, %v8195
    %v8208 = vmul.f32 %v8196, %v8196
    %v8209 = vmul.f32 %v8197, %v8197
    %v8210 = vmul.f32 %v8198, %v8198
    %v8211 = vmul.f32 %v8199, %v8199
    %v8212 = vmul.f32 %v8200, %v8200
    %v8213 = vmul.f32 %v8201, %v8201
    %v8214 = vmul.f32 %v8202, %v8202
    %v8215 = vmul.f32 %v8203, %v8203
    %v8216 = vmul.f32 %v8204, %v8204
    %v8217 = vmul.f32 %v8205, %v8205
    %v8218 = vmul.f32 %v8206, %v8206
    %v8219 = vmul.f32 %v8207, %v8207
    %v8220 = vsel %vm198, %v8208, 0.0
    %8221 = vadd.xlane.f32.xlu0 %v8220
    %v8222 = vpop.xlane.xlu0 %8221
    %v8223 = vsel %vm198, %v8209, 0.0
    %8224 = vadd.xlane.f32.xlu0 %v8223
    %v8225 = vpop.xlane.xlu0 %8224
    %v8226 = vsel %vm198, %v8210, 0.0
    %8227 = vadd.xlane.f32.xlu0 %v8226
    %v8228 = vpop.xlane.xlu0 %8227
    %v8229 = vsel %vm198, %v8211, 0.0
    %8230 = vadd.xlane.f32.xlu0 %v8229
    %v8231 = vpop.xlane.xlu0 %8230
    %v8232 = vsel %vm198, %v8212, 0.0
    %8233 = vadd.xlane.f32.xlu0 %v8232
    %v8234 = vpop.xlane.xlu0 %8233
    %v8235 = vsel %vm198, %v8213, 0.0
    %8236 = vadd.xlane.f32.xlu0 %v8235
    %v8237 = vpop.xlane.xlu0 %8236
    %v8238 = vsel %vm198, %v8214, 0.0
    %8239 = vadd.xlane.f32.xlu0 %v8238
    %v8240 = vpop.xlane.xlu0 %8239
    %v8241 = vsel %vm198, %v8215, 0.0
    %8242 = vadd.xlane.f32.xlu0 %v8241
    %v8243 = vpop.xlane.xlu0 %8242
    %v8244 = vsel %vm198, %v8216, 0.0
    %8245 = vadd.xlane.f32.xlu0 %v8244
    %v8246 = vpop.xlane.xlu0 %8245
    %v8247 = vsel %vm198, %v8217, 0.0
    %8248 = vadd.xlane.f32.xlu0 %v8247
    %v8249 = vpop.xlane.xlu0 %8248
    %v8250 = vsel %vm198, %v8218, 0.0
    %8251 = vadd.xlane.f32.xlu0 %v8250
    %v8252 = vpop.xlane.xlu0 %8251
    %v8253 = vsel %vm198, %v8219, 0.0
    %8254 = vadd.xlane.f32.xlu0 %v8253
    %v8255 = vpop.xlane.xlu0 %8254
    %v8256 = vmul.f32 %v8222, %v205
    %v8257 = vmul.f32 %v8225, %v205
    %v8258 = vmul.f32 %v8228, %v205
    %v8259 = vmul.f32 %v8231, %v205
    %v8260 = vmul.f32 %v8234, %v205
    %v8261 = vmul.f32 %v8237, %v205
    %v8262 = vmul.f32 %v8240, %v205
    %v8263 = vmul.f32 %v8243, %v205
    %v8264 = vmul.f32 %v8246, %v205
    %v8265 = vmul.f32 %v8249, %v205
    %v8266 = vmul.f32 %v8252, %v205
    %v8267 = vmul.f32 %v8255, %v205
    %v8268 = vadd.f32 %v8256, 1e-05
    %v8269 = vadd.f32 %v8257, 1e-05
    %v8270 = vadd.f32 %v8258, 1e-05
    %v8271 = vadd.f32 %v8259, 1e-05
    %v8272 = vadd.f32 %v8260, 1e-05
    %v8273 = vadd.f32 %v8261, 1e-05
    %v8274 = vadd.f32 %v8262, 1e-05
    %v8275 = vadd.f32 %v8263, 1e-05
    %v8276 = vadd.f32 %v8264, 1e-05
    %v8277 = vadd.f32 %v8265, 1e-05
    %v8278 = vadd.f32 %v8266, 1e-05
    %v8279 = vadd.f32 %v8267, 1e-05
    %v8280 = vrsqrt.pop %v8268
    %v8281 = vrsqrt.pop %v8269
    %v8282 = vrsqrt.pop %v8270
    %v8283 = vrsqrt.pop %v8271
    %v8284 = vrsqrt.pop %v8272
    %v8285 = vrsqrt.pop %v8273
    %v8286 = vrsqrt.pop %v8274
    %v8287 = vrsqrt.pop %v8275
    %v8288 = vrsqrt.pop %v8276
    %v8289 = vrsqrt.pop %v8277
    %v8290 = vrsqrt.pop %v8278
    %v8291 = vrsqrt.pop %v8279
    %v8292 = vmul.f32 %v8196, %v8280
    %v8293 = vmul.f32 %v8197, %v8281
    %v8294 = vmul.f32 %v8198, %v8282
    %v8295 = vmul.f32 %v8199, %v8283
    %v8296 = vmul.f32 %v8200, %v8284
    %v8297 = vmul.f32 %v8201, %v8285
    %v8298 = vmul.f32 %v8202, %v8286
    %v8299 = vmul.f32 %v8203, %v8287
    %v8300 = vmul.f32 %v8204, %v8288
    %v8301 = vmul.f32 %v8205, %v8289
    %v8302 = vmul.f32 %v8206, %v8290
    %v8303 = vmul.f32 %v8207, %v8291
    %v8304 = vlaneseq
    %v8305 = vshrl.u32 %v8304, 7
    %v8306 = vsub.s32 6, %v8305
    %v8307 = vrot.slane %v34, %v8306
    %v8308 = vmul.f32 %v8292, %v8307
    %v8309 = vmul.f32 %v8293, %v8307
    %v8310 = vmul.f32 %v8294, %v8307
    %v8311 = vmul.f32 %v8295, %v8307
    %v8312 = vmul.f32 %v8296, %v8307
    %v8313 = vmul.f32 %v8297, %v8307
    %v8314 = vmul.f32 %v8298, %v8307
    %v8315 = vmul.f32 %v8299, %v8307
    %v8316 = vmul.f32 %v8300, %v8307
    %v8317 = vmul.f32 %v8301, %v8307
    %v8318 = vmul.f32 %v8302, %v8307
    %v8319 = vmul.f32 %v8303, %v8307
    %v8320 = vlaneseq
    %v8321 = vshrl.u32 %v8320, 7
    %v8322 = vsub.s32 7, %v8321
    %v8323 = vrot.slane %v34, %v8322
    %v8324 = vadd.f32 %v8308, %v8323
    %v8325 = vadd.f32 %v8309, %v8323
    %v8326 = vadd.f32 %v8310, %v8323
    %v8327 = vadd.f32 %v8311, %v8323
    %v8328 = vadd.f32 %v8312, %v8323
    %v8329 = vadd.f32 %v8313, %v8323
    %v8330 = vadd.f32 %v8314, %v8323
    %v8331 = vadd.f32 %v8315, %v8323
    %v8332 = vadd.f32 %v8316, %v8323
    %v8333 = vadd.f32 %v8317, %v8323
    %v8334 = vadd.f32 %v8318, %v8323
    %v8335 = vadd.f32 %v8319, %v8323
    %v8336 = vlaneseq
    %v8337 = vshrl.u32 %v8336, 7
    %v8338 = vsub.s32 0, %v8337
    %v8339 = vrot.slane %v40, %v8338
    %8341 = vbcast.lane.b32.xlu0 %v8339, 256
    %v8342 = vpop.permute.xlu0 %8341
    %v8343 = vlaneseq
    %v8344 = vshrl.u32 %v8343, 7
    %v8345 = vsub.s32 1, %v8344
    %v8346 = vrot.slane %v40, %v8345
    %8348 = vbcast.lane.b32.xlu0 %v8346, 256
    %v8349 = vpop.permute.xlu0 %8348
    %v8350 = vlaneseq
    %v8351 = vshrl.u32 %v8350, 7
    %v8352 = vsub.s32 2, %v8351
    %v8353 = vrot.slane %v40, %v8352
    %8355 = vbcast.lane.b32.xlu0 %v8353, 256
    %v8356 = vpop.permute.xlu0 %8355
    %v8357 = vlaneseq
    %v8358 = vshrl.u32 %v8357, 7
    %v8359 = vsub.s32 3, %v8358
    %v8360 = vrot.slane %v40, %v8359
    %8362 = vbcast.lane.b32.xlu0 %v8360, 256
    %v8363 = vpop.permute.xlu0 %8362
    %v8364 = vlaneseq
    %v8365 = vshrl.u32 %v8364, 7
    %v8366 = vsub.s32 4, %v8365
    %v8367 = vrot.slane %v40, %v8366
    %8369 = vbcast.lane.b32.xlu0 %v8367, 256
    %v8370 = vpop.permute.xlu0 %8369
    %v8371 = vlaneseq
    %v8372 = vshrl.u32 %v8371, 7
    %v8373 = vsub.s32 5, %v8372
    %v8374 = vrot.slane %v40, %v8373
    %8376 = vbcast.lane.b32.xlu0 %v8374, 256
    %v8377 = vpop.permute.xlu0 %8376
    %v8378 = vlaneseq
    %v8379 = vshrl.u32 %v8378, 7
    %v8380 = vsub.s32 6, %v8379
    %v8381 = vrot.slane %v40, %v8380
    %8383 = vbcast.lane.b32.xlu0 %v8381, 256
    %v8384 = vpop.permute.xlu0 %8383
    %v8385 = vlaneseq
    %v8386 = vshrl.u32 %v8385, 7
    %v8387 = vsub.s32 7, %v8386
    %v8388 = vrot.slane %v40, %v8387
    %8390 = vbcast.lane.b32.xlu0 %v8388, 256
    %v8391 = vpop.permute.xlu0 %8390
    %v8392 = vlaneseq
    %v8393 = vshrl.u32 %v8392, 7
    %v8394 = vsub.s32 0, %v8393
    %v8395 = vrot.slane %v41, %v8394
    %8397 = vbcast.lane.b32.xlu0 %v8395, 256
    %v8398 = vpop.permute.xlu0 %8397
    %v8399 = vlaneseq
    %v8400 = vshrl.u32 %v8399, 7
    %v8401 = vsub.s32 1, %v8400
    %v8402 = vrot.slane %v41, %v8401
    %8404 = vbcast.lane.b32.xlu0 %v8402, 256
    %v8405 = vpop.permute.xlu0 %8404
    %v8406 = vlaneseq
    %v8407 = vshrl.u32 %v8406, 7
    %v8408 = vsub.s32 2, %v8407
    %v8409 = vrot.slane %v41, %v8408
    %8411 = vbcast.lane.b32.xlu0 %v8409, 256
    %v8412 = vpop.permute.xlu0 %8411
    %v8413 = vlaneseq
    %v8414 = vshrl.u32 %v8413, 7
    %v8415 = vsub.s32 3, %v8414
    %v8416 = vrot.slane %v41, %v8415
    %8418 = vbcast.lane.b32.xlu0 %v8416, 256
    %v8419 = vpop.permute.xlu0 %8418
    %v8420 = vmul.f32 %v8324, %v8342
    %v8421 = vmul.f32 %v8325, %v8349
    %v8422 = vmul.f32 %v8326, %v8356
    %v8423 = vmul.f32 %v8327, %v8363
    %v8424 = vmul.f32 %v8328, %v8370
    %v8425 = vmul.f32 %v8329, %v8377
    %v8426 = vmul.f32 %v8330, %v8384
    %v8427 = vmul.f32 %v8331, %v8391
    %v8428 = vmul.f32 %v8332, %v8398
    %v8429 = vmul.f32 %v8333, %v8405
    %v8430 = vmul.f32 %v8334, %v8412
    %v8431 = vmul.f32 %v8335, %v8419
    %v8432 = vsel %vm198, %v8420, 0.0
    %v8433 = vrot.slane %v8432, 4
    %v8434 = vadd.f32 %v8432, %v8433
    %v8435 = vrot.slane %v8434, 2
    %v8436 = vadd.f32 %v8434, %v8435
    %v8437 = vrot.slane %v8436, 1
    %v8438 = vadd.f32 %v8436, %v8437
    %v8439 = vsel %vm198, %v8421, 0.0
    %v8440 = vrot.slane %v8439, 4
    %v8441 = vadd.f32 %v8439, %v8440
    %v8442 = vrot.slane %v8441, 2
    %v8443 = vadd.f32 %v8441, %v8442
    %v8444 = vrot.slane %v8443, 1
    %v8445 = vadd.f32 %v8443, %v8444
    %v8446 = vsel %vm198, %v8422, 0.0
    %v8447 = vrot.slane %v8446, 4
    %v8448 = vadd.f32 %v8446, %v8447
    %v8449 = vrot.slane %v8448, 2
    %v8450 = vadd.f32 %v8448, %v8449
    %v8451 = vrot.slane %v8450, 1
    %v8452 = vadd.f32 %v8450, %v8451
    %v8453 = vsel %vm198, %v8423, 0.0
    %v8454 = vrot.slane %v8453, 4
    %v8455 = vadd.f32 %v8453, %v8454
    %v8456 = vrot.slane %v8455, 2
    %v8457 = vadd.f32 %v8455, %v8456
    %v8458 = vrot.slane %v8457, 1
    %v8459 = vadd.f32 %v8457, %v8458
    %v8460 = vsel %vm198, %v8424, 0.0
    %v8461 = vrot.slane %v8460, 4
    %v8462 = vadd.f32 %v8460, %v8461
    %v8463 = vrot.slane %v8462, 2
    %v8464 = vadd.f32 %v8462, %v8463
    %v8465 = vrot.slane %v8464, 1
    %v8466 = vadd.f32 %v8464, %v8465
    %v8467 = vsel %vm198, %v8425, 0.0
    %v8468 = vrot.slane %v8467, 4
    %v8469 = vadd.f32 %v8467, %v8468
    %v8470 = vrot.slane %v8469, 2
    %v8471 = vadd.f32 %v8469, %v8470
    %v8472 = vrot.slane %v8471, 1
    %v8473 = vadd.f32 %v8471, %v8472
    %v8474 = vsel %vm198, %v8426, 0.0
    %v8475 = vrot.slane %v8474, 4
    %v8476 = vadd.f32 %v8474, %v8475
    %v8477 = vrot.slane %v8476, 2
    %v8478 = vadd.f32 %v8476, %v8477
    %v8479 = vrot.slane %v8478, 1
    %v8480 = vadd.f32 %v8478, %v8479
    %v8481 = vsel %vm198, %v8427, 0.0
    %v8482 = vrot.slane %v8481, 4
    %v8483 = vadd.f32 %v8481, %v8482
    %v8484 = vrot.slane %v8483, 2
    %v8485 = vadd.f32 %v8483, %v8484
    %v8486 = vrot.slane %v8485, 1
    %v8487 = vadd.f32 %v8485, %v8486
    %v8488 = vsel %vm198, %v8428, 0.0
    %v8489 = vrot.slane %v8488, 4
    %v8490 = vadd.f32 %v8488, %v8489
    %v8491 = vrot.slane %v8490, 2
    %v8492 = vadd.f32 %v8490, %v8491
    %v8493 = vrot.slane %v8492, 1
    %v8494 = vadd.f32 %v8492, %v8493
    %v8495 = vsel %vm198, %v8429, 0.0
    %v8496 = vrot.slane %v8495, 4
    %v8497 = vadd.f32 %v8495, %v8496
    %v8498 = vrot.slane %v8497, 2
    %v8499 = vadd.f32 %v8497, %v8498
    %v8500 = vrot.slane %v8499, 1
    %v8501 = vadd.f32 %v8499, %v8500
    %v8502 = vsel %vm198, %v8430, 0.0
    %v8503 = vrot.slane %v8502, 4
    %v8504 = vadd.f32 %v8502, %v8503
    %v8505 = vrot.slane %v8504, 2
    %v8506 = vadd.f32 %v8504, %v8505
    %v8507 = vrot.slane %v8506, 1
    %v8508 = vadd.f32 %v8506, %v8507
    %v8509 = vsel %vm198, %v8431, 0.0
    %v8510 = vrot.slane %v8509, 4
    %v8511 = vadd.f32 %v8509, %v8510
    %v8512 = vrot.slane %v8511, 2
    %v8513 = vadd.f32 %v8511, %v8512
    %v8514 = vrot.slane %v8513, 1
    %v8515 = vadd.f32 %v8513, %v8514
    %v8516 = vpack.c.bf16 %v8438, %v8438
    %v8517 = vpack.c.bf16 %v8445, %v8445
    %v8518 = vpack.c.bf16 %v8452, %v8452
    %v8519 = vpack.c.bf16 %v8459, %v8459
    %v8520 = vpack.c.bf16 %v8466, %v8466
    %v8521 = vpack.c.bf16 %v8473, %v8473
    %v8522 = vpack.c.bf16 %v8480, %v8480
    %v8523 = vpack.c.bf16 %v8487, %v8487
    %v8524 = vpack.c.bf16 %v8494, %v8494
    %v8525 = vpack.c.bf16 %v8501, %v8501
    %v8526 = vpack.c.bf16 %v8508, %v8508
    %v8527 = vpack.c.bf16 %v8515, %v8515
    %v8528 = vld [vmem:[%s1 + $0x170] sm:$0xf]
    %v8529 = vld [vmem:[%s1 + $0x174] sm:$0xf]
    %v8530 = vld [vmem:[%s1 + $0x178] sm:$0xf]
    %v8531 = vld [vmem:[%s1 + $0x17c] sm:$0xf]
    %v8544 = vunpack.c.l.b16 %v8516
    %v8545 = vunpack.c.l.b16 %v8517
    %v8546 = vunpack.c.l.b16 %v8518
    %v8547 = vunpack.c.l.b16 %v8519
    %v8548 = vunpack.c.l.b16 %v8520
    %v8549 = vunpack.c.l.b16 %v8521
    %v8550 = vunpack.c.l.b16 %v8522
    %v8551 = vunpack.c.l.b16 %v8523
    %v8552 = vunpack.c.l.b16 %v8524
    %v8553 = vunpack.c.l.b16 %v8525
    %v8554 = vunpack.c.l.b16 %v8526
    %v8555 = vunpack.c.l.b16 %v8527
    %v8556 = vsel %vm1634, %v8545, %v8544
    %vm8557 = vcmask 1042434
    %v8558 = vsel %vm8557, %v8546, %v8556
    %vm8559 = vcmask 1043459
    %v8560 = vsel %vm8559, %v8547, %v8558
    %vm8561 = vcmask 1044484
    %v8562 = vsel %vm8561, %v8548, %v8560
    %vm8563 = vcmask 1045509
    %v8564 = vsel %vm8563, %v8549, %v8562
    %vm8565 = vcmask 1046534
    %v8566 = vsel %vm8565, %v8550, %v8564
    %vm8567 = vcmask 1047559
    %v8568 = vsel %vm8567, %v8551, %v8566
    %v8569 = vsel %vm1634, %v8553, %v8552
    %v8570 = vsel %vm8557, %v8554, %v8569
    %v8571 = vsel %vm8559, %v8555, %v8570
    %v8572 = vpack.c.b16 %v8571, %v8568
    %v8577 = vunpack.c.l.b16 %v8528
    %v8578 = vunpack.c.l.b16 %v8529
    %v8579 = vunpack.c.l.b16 %v8530
    %v8580 = vunpack.c.l.b16 %v8531
    %v8581 = vpack.c.b16 %v8578, %v8577
    %v8582 = vpack.c.b16 %v8580, %v8579
    %v8586 = vsel %vm198, %v8572, 0
    %8588 = vmatprep.subr.bf16.mxu0 0
    %8589 = vmatpush1.bf16.msra.mxu0 0
    %8590 = vmatprep.subr.bf16.mxu0 0
    %8591 = vmatpush1.bf16.msra.mxu0 0
    %8592 = vmatprep.subr.bf16.mxu0 0
    %8593 = vmatpush1.bf16.msra.mxu0 0
    %8594 = vmatprep.subr.bf16.mxu0 0
    %8595 = vmatpush1.bf16.msra.mxu0 0
    %8596 = vmatprep.subr.bf16.mxu0 0
    %8597 = vmatpush1.bf16.msra.mxu0 0
    %8598 = vmatprep.subr.bf16.mxu0 0
    %8599 = vmatpush1.bf16.msra.mxu0 0
    %8600 = vmatprep.subr.bf16.mxu0 0
    %8601 = vmatpush1.bf16.msra.mxu0 %v8582
    %8602 = vmatprep.subr.bf16.mxu0 0
    %8603 = vmatpush1.bf16.msra.mxu0 %v8581
    %8604 = vmatprep.subr.bf16.mxu0 0
    %8605 = vmatpush2.bf16.msra.mxu0 0
    %8606 = vmatprep.subr.bf16.mxu0 0
    %8607 = vmatpush2.bf16.msra.mxu0 0
    %8608 = vmatprep.subr.bf16.mxu0 0
    %8609 = vmatpush2.bf16.msra.mxu0 0
    %8610 = vmatprep.subr.bf16.mxu0 0
    %8611 = vmatpush2.bf16.msra.mxu0 0
    %8612 = vmatprep.subr.bf16.mxu0 0
    %8613 = vmatpush2.bf16.msra.mxu0 0
    %8614 = vmatprep.subr.bf16.mxu0 0
    %8615 = vmatpush2.bf16.msra.mxu0 0
    %8616 = vmatprep.subr.bf16.mxu0 0
    %8617 = vmatpush2.bf16.msra.mxu0 0
    %8618 = vmatprep.subr.bf16.mxu0 0
    %8619 = vmatpush2.bf16.msra.mxu0 0
    %8620 = vmatprep.mubr.bf16.mxu0 0
    %8621 = vmatmul.mubr.bf16.gmra.mxu0 %v8586
    %v8622 = vpop.f32.mrf.mxu0
    %v8623 = vadd.f32 0.0, %v8622
    %v8624 = vpop.f32.mrf.mxu0
    %v8625 = vpop.f32.mrf.mxu0
    %v8626 = vadd.f32 0.0, %v8625
    %v8627 = vpop.f32.mrf.mxu0
    %8628 = vdwg.mxu0
    %v8629 = vmul.f32 %v8623, %v8623
    %v8630 = vmul.f32 %v8626, %v8626
    %v8631 = vsel %vm198, %v8629, 0.0
    %8632 = vadd.xlane.f32.xlu0 %v8631
    %v8633 = vpop.xlane.xlu0 %8632
    %vm8634 = vcmask 257024
    %v8635 = vsel %vm8634, %v8630, 0.0
    %8636 = vadd.xlane.f32.xlu0 %v8635
    %v8637 = vpop.xlane.xlu0 %8636
    %v8638 = vadd.f32 %v8633, 1e-12
    %v8639 = vadd.f32 %v8637, 1e-12
    %v8640 = vrsqrt.pop %v8638
    %v8641 = vrsqrt.pop %v8639
    %v8642 = vmul.f32 %v8623, %v8640
    %v8643 = vmul.f32 %v8626, %v8641
    %v8646 = vcombine.high %v8642, %v8642
    %v8648 = vunpack.c.l.s4 1983009808
    %v8649 = vunpack.c.0.s8 %v8648
    %v8650 = vlaneseq
    %v8651 = vshrl.u32 %v8650, 7
    %v8652 = vsub.s32 %v8649, %v8651
    %v8653 = vrot.slane %v8642, %v8652
    %v8655 = vunpack.c.l.s4 1983009808
    %v8656 = vunpack.c.0.s8 %v8655
    %v8657 = vlaneseq
    %v8658 = vshrl.u32 %v8657, 7
    %v8659 = vsub.s32 %v8656, %v8658
    %v8660 = vrot.slane %v8646, %v8659
    %v8661 = vcombine.high %v8653, %v8653
    %v8662 = vcombine.high %v8660, %v8660
    %v8664 = vunpack.c.l.s4 1983009808
    %v8665 = vunpack.c.0.s8 %v8664
    %v8666 = vlaneseq
    %v8667 = vshrl.u32 %v8666, 7
    %v8668 = vsub.s32 %v8665, %v8667
    %v8669 = vrot.slane %v8643, %v8668
    %v8670 = vcombine.high %v8669, %v8669
    %s8671 = sld [smem:[#allocation2]]
    %v8674 = vunpack.c.l.s4 1966171168
    %v8675 = vunpack.c.0.s8 %v8674
    %v8676 = vlaneseq
    %v8677 = vshrl.u32 %v8676, 7
    %v8678 = vsub.s32 %v8675, %v8677
    %v8679 = vrot.slane %v1753, %v8678
    %v8680 = vcombine.high %v8679, %v8679
    %v8682 = vunpack.c.l.s4 1966171168
    %v8683 = vunpack.c.0.s8 %v8682
    %v8684 = vlaneseq
    %v8685 = vshrl.u32 %v8684, 7
    %v8686 = vsub.s32 %v8683, %v8685
    %v8687 = vrot.slane %v8679, %v8686
    %v8689 = vunpack.c.l.s4 1966171168
    %v8690 = vunpack.c.0.s8 %v8689
    %v8691 = vlaneseq
    %v8692 = vshrl.u32 %v8691, 7
    %v8693 = vsub.s32 %v8690, %v8692
    %v8694 = vrot.slane %v8680, %v8693
    %v8695 = vlaneseq
    %v8696 = vshrl.u32 %v8695, 7
    %v8697 = vsub.s32 0, %v8696
    %v8698 = vrot.slane %v8687, %v8697
    %v8699 = vlaneseq
    %v8700 = vshrl.u32 %v8699, 7
    %v8701 = vsub.s32 0, %v8700
    %v8702 = vrot.slane %v8694, %v8701
    %v8705 = vcombine.low %v8653, %v8661
    %v8707 = vunpack.c.l.s4 1983009808
    %v8708 = vunpack.c.0.s8 %v8707
    %v8709 = vlaneseq
    %v8710 = vshrl.u32 %v8709, 7
    %v8711 = vsub.s32 %v8708, %v8710
    %v8712 = vrot.slane %v8705, %v8711
    %v8714 = vunpack.c.l.s4 1983009808
    %v8715 = vunpack.c.0.s8 %v8714
    %v8716 = vlaneseq
    %v8717 = vshrl.u32 %v8716, 7
    %v8718 = vsub.s32 %v8715, %v8717
    %v8719 = vrot.slane %v8660, %v8718
    %v8720 = vcombine.low %v8712, %v8719
    %v8721 = vcombine.low %v8662, %v8669
    %v8723 = vunpack.c.l.s4 1983009808
    %v8724 = vunpack.c.0.s8 %v8723
    %v8725 = vlaneseq
    %v8726 = vshrl.u32 %v8725, 7
    %v8727 = vsub.s32 %v8724, %v8726
    %v8728 = vrot.slane %v8721, %v8727
    %v8730 = vunpack.c.l.s4 1983009808
    %v8731 = vunpack.c.0.s8 %v8730
    %v8732 = vlaneseq
    %v8733 = vshrl.u32 %v8732, 7
    %v8734 = vsub.s32 %v8731, %v8733
    %v8735 = vrot.slane %v8670, %v8734
    %v8736 = vcombine.low %v8728, %v8735
    %v8739 = vmul.f32 %v8698, %v8720
    %v8740 = vmul.f32 %v8702, %v8736
    %vm8741 = vcmask 259072
    %v8742 = vsel %vm8741, %v8739, 0.0
    %8743 = vadd.xlane.f32.xlu0 %v8742
    %v8744 = vpop.xlane.xlu0 %8743
    %v8745 = vsel %vm8741, %v8740, 0.0
    %8746 = vadd.xlane.f32.xlu0 %v8745
    %v8747 = vpop.xlane.xlu0 %8746
    %v8748 = vstv %s8671
    %v8749 = vmul.f32 %v8748, %v8744
    %v8750 = vmul.f32 %v8748, %v8747
    %v8753 = vlaneseq
    %v8754 = vand.u32 %v8753, 127
    %v8755 = vlaneseq
    %v8756 = vshrl.u32 %v8755, 7
    %v8757 = vsub.s32 %v8754, %v8756
    %v8758 = vrot.slane %v8749, %v8757
    %v8759 = vlaneseq
    %v8760 = vshrl.u32 %v8759, 7
    %v8761 = vsub.s32 %v8754, %v8760
    %v8762 = vrot.slane %v8750, %v8761
    %v8763 = vsel %vm1634, %v8762, %v8758
    %vm8765 = vcmask 41984
    %8766 = vst.msk [vmem:[#allocation3] sm:$0x3] %vm8765, %v8763
    // Predicated region
    $region34: #{custom_clip_forward.1} parent=1 // pred_check
      _
    $region35: #{custom_clip_forward.1} parent=1 // pred_check_branch
      %8768 = sbr.rel (0) target = $region37
    $region36: #{custom_clip_forward.1} parent=1 // pred_region
      %s8770 = ssub.s32 32, 32
      %8771 = vsyncadd [#allocation4], %s8770
      %s8773 = sshll.u32 [#allocation3], 4
      %s8774 = int_to_ptr.vmem [resolvable:$true] %s8773
      %8776 = dma.vmem_to_hbm [thread:$0]  %s8774, 32, %s8, [#allocation4]
    $region37: #{custom_clip_forward.1} parent=1 // pred_fallthru
      _
    // Predicated region
    $region38: #{custom_clip_forward.1} parent=1 // pred_check
      _
    $region39: #{custom_clip_forward.1} parent=1 // pred_check_branch
      %8778 = sbr.rel (0) target = $region41
    $region40: #{custom_clip_forward.1} parent=1 // pred_region
      %8779 = dma.done [#allocation4], 32
    $region41: #{custom_clip_forward.1} parent=1 // pred_fallthru
      _
    %8780 = vsyncpa [#allocation4], 1

</llo_original>
